<compile_context>
chip_gen: v5e
topology: v5e:2x2
jax: 0.10.0
libtpu: 0.0.40
codegen_flags: <defaults>
</compile_context>

<pallas_src>
import numpy as np

import jax
import jax.numpy as jnp
from jax.experimental import pallas as pl
from jax.experimental.pallas import tpu as pltpu


# ----------------------------------------------------------------------------
# Host-side one-time weight preparation (pure constant preprocessing).
# ----------------------------------------------------------------------------
def _sel_matrix(h_in, oh):
    """S[kh, o, h] = 1 if h == 2*o + kh - 1 (padding rows are simply absent)."""
    s = np.zeros((3, oh, h_in), np.float32)
    for kh in range(3):
        for o in range(oh):
            h = 2 * o + kh - 1
            if 0 <= h < h_in:
                s[kh, o, h] = 1.0
    return s


def _gather_weight(w, w_in, ow_out):
    """G[kh, w*Cin+ci, ow*Cout+co] = conv weight for tap (kh, kw=2*ow... ) .

    Folds kw taps, stride-2 column subsampling and zero padding into a single
    (W*Cin, OW*Cout) matrix per kernel row kh.  w is torch (Cout, Cin, 3, 3).
    """
    c_out, c_in = w.shape[0], w.shape[1]
    g = np.zeros((3, w_in * c_in, ow_out * c_out), np.float32)
    for kh in range(3):
        for kw in range(3):
            for ow in range(ow_out):
                wi = 2 * ow + kw - 1
                if 0 <= wi < w_in:
                    g[kh, wi * c_in:(wi + 1) * c_in,
                      ow * c_out:(ow + 1) * c_out] = w[:, :, kh, kw].T
    return g


def prepare_params(params, output_size=56):
    f32 = np.float32
    bf16 = jnp.bfloat16
    w1 = np.asarray(params["w1"], f32); b1 = np.asarray(params["b1"], f32)
    w2 = np.asarray(params["w2"], f32); b2 = np.asarray(params["b2"], f32)
    w3 = np.asarray(params["w3"], f32); b3 = np.asarray(params["b3"], f32)
    fc1_w = np.asarray(params["fc1_w"], f32); fc1_b = np.asarray(params["fc1_b"], f32)
    fc2_w = np.asarray(params["fc2_w"], f32); fc2_b = np.asarray(params["fc2_b"], f32)

    prep = {}
    # conv1: 28x28x1 -> 14x14x32
    prep["s1"] = jnp.asarray(_sel_matrix(28, 14), bf16)            # (3, 14, 28)
    prep["g1"] = jnp.asarray(_gather_weight(w1, 28, 14), bf16)     # (3, 28, 448)
    prep["bb1"] = jnp.asarray(np.tile(b1, 14)[None, :], jnp.float32)   # (1, 448)
    # conv2: 14x14x32 -> 7x7x64
    prep["s2"] = jnp.asarray(_sel_matrix(14, 7), bf16)             # (3, 7, 14)
    prep["g2"] = jnp.asarray(_gather_weight(w2, 14, 7), bf16)      # (3, 448, 448)
    prep["bb2"] = jnp.asarray(np.tile(b2, 7)[None, :], jnp.float32)    # (1, 448)
    # conv3: 7x7x64 -> 4x4x128
    prep["s3"] = jnp.asarray(_sel_matrix(7, 4), bf16)              # (3, 4, 7)
    prep["g3"] = jnp.asarray(_gather_weight(w3, 7, 4), bf16)       # (3, 448, 512)
    prep["bb3"] = jnp.asarray(np.tile(b3, 4)[None, :], jnp.float32)    # (1, 512)

    # fc1: permute input columns from torch's NCHW flatten (c, oh, ow) to our
    # channels-last (oh, ow, c) flatten, and store in (K, N) layout.
    idx = np.arange(128 * 4 * 4)
    oh_i = idx // (4 * 128)
    ow_i = (idx % (4 * 128)) // 128
    c_i = idx % 128
    k_old = c_i * 16 + oh_i * 4 + ow_i
    prep["fc1_w"] = jnp.asarray(fc1_w[:, k_old].T, bf16)           # (2048, 128)
    prep["fc1_b"] = jnp.asarray(fc1_b[None, :], jnp.float32)       # (1, 128)

    # fc2: (K, N) layout, N zero-padded to 128 lanes.
    n_pad = 128
    w2p = np.zeros((128, n_pad), f32); w2p[:, :output_size] = fc2_w.T
    b2p = np.zeros((1, n_pad), f32); b2p[0, :output_size] = fc2_b
    prep["fc2_w"] = jnp.asarray(w2p, bf16)                         # (128, 128)
    prep["fc2_b"] = jnp.asarray(b2p, jnp.float32)                  # (1, 128)
    prep["output_size"] = output_size
    return prep


# ----------------------------------------------------------------------------
# Fused encoder kernel: one grid step == one batch element.
# ----------------------------------------------------------------------------
def _encoder_kernel(x_ref,
                    s1_ref, g1_ref, bb1_ref,
                    s2_ref, g2_ref, bb2_ref,
                    s3_ref, g3_ref, bb3_ref,
                    fc1w_ref, fc1b_ref, fc2w_ref, fc2b_ref,
                    out_ref):
    def conv(xu, s_ref, g_ref, b_ref):
        oh = s_ref.shape[1]
        n = g_ref.shape[2]
        acc = jnp.zeros((oh, n), jnp.float32)
        for kh in range(3):
            rows = jnp.dot(s_ref[kh], xu, preferred_element_type=jnp.float32)
            acc = acc + jnp.dot(rows.astype(jnp.bfloat16), g_ref[kh],
                                preferred_element_type=jnp.float32)
        acc = jnp.maximum(acc + b_ref[...], 0.0)        # bias + ReLU in f32
        return acc.astype(jnp.bfloat16)

    x = x_ref[0].astype(jnp.bfloat16)                   # (28, 28)
    z = conv(x, s1_ref, g1_ref, bb1_ref)                # (14, 448)  = 14x14x32
    z = conv(z, s2_ref, g2_ref, bb2_ref)                # (7, 448)   = 7x7x64
    z = conv(z, s3_ref, g3_ref, bb3_ref)                # (4, 512)   = 4x4x128

    # fc1: flatten (oh, ow, c) is done by summing 4 row-block matmuls.
    h = jnp.zeros((1, 128), jnp.float32)
    for i in range(4):
        h = h + jnp.dot(z[i:i + 1, :], fc1w_ref[i * 512:(i + 1) * 512, :],
                        preferred_element_type=jnp.float32)
    h = jnp.maximum(h + fc1b_ref[...], 0.0).astype(jnp.bfloat16)   # (1, 128)

    # fc2 (N padded to 128 lanes).
    out = jnp.dot(h, fc2w_ref[...], preferred_element_type=jnp.float32)
    out = out + fc2b_ref[...]                           # (1, 128) f32
    out_ref[0] = out


def cnn_encoder_forward(x_nchw, prep):
    B, C, H, W = x_nchw.shape
    assert (C, H, W) == (1, 28, 28), (C, H, W)
    x3 = x_nchw.reshape(B, 28, 28).astype(jnp.float32)
    n_pad = 128

    inputs = (x3,
              prep["s1"], prep["g1"], prep["bb1"],
              prep["s2"], prep["g2"], prep["bb2"],
              prep["s3"], prep["g3"], prep["bb3"],
              prep["fc1_w"], prep["fc1_b"], prep["fc2_w"], prep["fc2_b"])

    def const_spec(a):
        shp = a.shape
        return pl.BlockSpec(shp, lambda b, _s=shp: (0,) * len(_s))

    in_specs = [pl.BlockSpec((1, 28, 28), lambda b: (b, 0, 0))]
    in_specs += [const_spec(a) for a in inputs[1:]]

    bytes_accessed = int(sum(a.size * a.dtype.itemsize for a in inputs)
                         + B * n_pad * 4)
    flops = int(B * 16_000_000)     # ~8 MMAC/sample (convs + FCs), x2 for FLOPs

    out = pl.pallas_call(
        _encoder_kernel,
        out_shape=jax.ShapeDtypeStruct((B, 1, n_pad), jnp.float32),
        grid=(B,),
        in_specs=in_specs,
        out_specs=pl.BlockSpec((1, 1, n_pad), lambda b: (b, 0, 0)),
        compiler_params=pltpu.CompilerParams(
            dimension_semantics=("parallel",)),
        cost_estimate=pl.CostEstimate(flops=flops, transcendentals=0,
                                      bytes_accessed=bytes_accessed),
    )(*inputs)
    return out[:, 0, :prep["output_size"]]


# ----------------------------------------------------------------------------
# Plain-JAX reference (f32) used only for a correctness check.
# ----------------------------------------------------------------------------
def reference_forward(x_nchw, params):
    z = x_nchw
    for wk, bk in (("w1", "b1"), ("w2", "b2"), ("w3", "b3")):
        z = jax.lax.conv_general_dilated(
            z, params[wk], window_strides=(2, 2), padding=((1, 1), (1, 1)),
            dimension_numbers=("NCHW", "OIHW", "NCHW"))
        z = jnp.maximum(z + params[bk][None, :, None, None], 0.0)
    B = z.shape[0]
    z = z.reshape(B, -1)
    h = jnp.maximum(z @ params["fc1_w"].T + params["fc1_b"], 0.0)
    return h @ params["fc2_w"].T + params["fc2_b"]


def init_params(key, output_size=56):
    ks = jax.random.split(key, 10)
    s = 0.05
    return {
        "w1": s * jax.random.normal(ks[0], (32, 1, 3, 3), jnp.float32),
        "b1": s * jax.random.normal(ks[1], (32,), jnp.float32),
        "w2": s * jax.random.normal(ks[2], (64, 32, 3, 3), jnp.float32),
        "b2": s * jax.random.normal(ks[3], (64,), jnp.float32),
        "w3": s * jax.random.normal(ks[4], (128, 64, 3, 3), jnp.float32),
        "b3": s * jax.random.normal(ks[5], (128,), jnp.float32),
        "fc1_w": s * jax.random.normal(ks[6], (128, 128 * 4 * 4), jnp.float32),
        "fc1_b": s * jax.random.normal(ks[7], (128,), jnp.float32),
        "fc2_w": s * jax.random.normal(ks[8], (output_size, 128), jnp.float32),
        "fc2_b": s * jax.random.normal(ks[9], (output_size,), jnp.float32),
    }


if __name__ == "__main__":
    key = jax.random.PRNGKey(0)
    k_x, k_p = jax.random.split(key)
    # Module hard-codes 1x28x28 inputs (flatten is 128*4*4); batch=2.
    x = jax.random.normal(k_x, (2, 1, 28, 28), jnp.float32)
    params = init_params(k_p, output_size=56)
    prep = prepare_params(params, output_size=56)

    out = cnn_encoder_forward(x, prep)
    out = jax.block_until_ready(out)
    assert out.shape == (2, 56), out.shape
    assert bool(jnp.all(jnp.isfinite(out)))

    # Correctness vs f32 reference (bf16 MXU inputs -> loose-but-meaningful tol).
    ref = jax.block_until_ready(reference_forward(x, params))
    err = float(jnp.max(jnp.abs(out - ref)))
    assert err < 3e-2, f"max abs err vs reference: {err}"

    print("KERNEL_OK")
</pallas_src>

<mosaic_0001>
module attributes {stable_mosaic.version = 11 : i64} {
  func.func @_encoder_kernel(%arg0: i32, %arg1: memref<1x28x28xf32, #tpu.memory_space<vmem>>, %arg2: memref<3x14x28xbf16, #tpu.memory_space<vmem>>, %arg3: memref<3x28x448xbf16, #tpu.memory_space<vmem>>, %arg4: memref<1x448xf32, #tpu.memory_space<vmem>>, %arg5: memref<3x7x14xbf16, #tpu.memory_space<vmem>>, %arg6: memref<3x448x448xbf16, #tpu.memory_space<vmem>>, %arg7: memref<1x448xf32, #tpu.memory_space<vmem>>, %arg8: memref<3x4x7xbf16, #tpu.memory_space<vmem>>, %arg9: memref<3x448x512xbf16, #tpu.memory_space<vmem>>, %arg10: memref<1x512xf32, #tpu.memory_space<vmem>>, %arg11: memref<2048x128xbf16, #tpu.memory_space<vmem>>, %arg12: memref<1x128xf32, #tpu.memory_space<vmem>>, %arg13: memref<128x128xbf16, #tpu.memory_space<vmem>>, %arg14: memref<1x128xf32, #tpu.memory_space<vmem>>, %arg15: memref<1x1x128xf32, #tpu.memory_space<vmem>>) attributes {dimension_semantics = [#tpu.dimension_semantics<parallel>], iteration_bounds = array<i64: 2>, scalar_prefetch = 0 : i64, scratch_operands = 0 : i64, tpu.core_type = #tpu.core_type<tc>, window_params = [{transform_indices = @transform_0, window_bounds = array<i64: 1, 28, 28>}, {pipeline_mode = #tpu.pipeline_mode<synchronous>, transform_indices = @transform_1, window_bounds = array<i64: 3, 14, 28>}, {pipeline_mode = #tpu.pipeline_mode<synchronous>, transform_indices = @transform_2, window_bounds = array<i64: 3, 28, 448>}, {pipeline_mode = #tpu.pipeline_mode<synchronous>, transform_indices = @transform_3, window_bounds = array<i64: 1, 448>}, {pipeline_mode = #tpu.pipeline_mode<synchronous>, transform_indices = @transform_4, window_bounds = array<i64: 3, 7, 14>}, {pipeline_mode = #tpu.pipeline_mode<synchronous>, transform_indices = @transform_5, window_bounds = array<i64: 3, 448, 448>}, {pipeline_mode = #tpu.pipeline_mode<synchronous>, transform_indices = @transform_6, window_bounds = array<i64: 1, 448>}, {pipeline_mode = #tpu.pipeline_mode<synchronous>, transform_indices = @transform_7, window_bounds = array<i64: 3, 4, 7>}, {pipeline_mode = #tpu.pipeline_mode<synchronous>, transform_indices = @transform_8, window_bounds = array<i64: 3, 448, 512>}, {pipeline_mode = #tpu.pipeline_mode<synchronous>, transform_indices = @transform_9, window_bounds = array<i64: 1, 512>}, {pipeline_mode = #tpu.pipeline_mode<synchronous>, transform_indices = @transform_10, window_bounds = array<i64: 2048, 128>}, {pipeline_mode = #tpu.pipeline_mode<synchronous>, transform_indices = @transform_11, window_bounds = array<i64: 1, 128>}, {pipeline_mode = #tpu.pipeline_mode<synchronous>, transform_indices = @transform_12, window_bounds = array<i64: 128, 128>}, {pipeline_mode = #tpu.pipeline_mode<synchronous>, transform_indices = @transform_13, window_bounds = array<i64: 1, 128>}, {transform_indices = @transform_14, window_bounds = array<i64: 1, 1, 128>}]} {
    %c0 = arith.constant 0 : index
    %c0_0 = arith.constant 0 : index
    %c0_1 = arith.constant 0 : index
    %0 = vector.load %arg1[%c0, %c0_0, %c0_1] : memref<1x28x28xf32, #tpu.memory_space<vmem>>, vector<1x28x28xf32>
    %1 = vector.shape_cast %0 : vector<1x28x28xf32> to vector<28x28xf32>
    %2 = arith.truncf %1 : vector<28x28xf32> to vector<28x28xbf16>
    %cst = arith.constant 0.000000e+00 : f32
    %3 = vector.broadcast %cst : f32 to vector<14x448xf32>
    %c0_2 = arith.constant 0 : index
    %c0_3 = arith.constant 0 : index
    %c0_4 = arith.constant 0 : index
    %4 = vector.load %arg2[%c0_2, %c0_3, %c0_4] : memref<3x14x28xbf16, #tpu.memory_space<vmem>>, vector<1x14x28xbf16>
    %5 = vector.shape_cast %4 : vector<1x14x28xbf16> to vector<14x28xbf16>
    %cst_5 = arith.constant dense<0.000000e+00> : vector<14x28xf32>
    %6 = tpu.matmul %5, %2, %cst_5 {dimension_numbers = #tpu.dot_dimension_numbers<[1], [0], [0], [1], [0, 0, 1, 1], [], []>} : vector<14x28xbf16>, vector<28x28xbf16>, vector<14x28xf32> -> vector<14x28xf32>
    %7 = arith.truncf %6 : vector<14x28xf32> to vector<14x28xbf16>
    %c0_6 = arith.constant 0 : index
    %c0_7 = arith.constant 0 : index
    %c0_8 = arith.constant 0 : index
    %8 = vector.load %arg3[%c0_6, %c0_7, %c0_8] : memref<3x28x448xbf16, #tpu.memory_space<vmem>>, vector<1x28x448xbf16>
    %9 = vector.shape_cast %8 : vector<1x28x448xbf16> to vector<28x448xbf16>
    %cst_9 = arith.constant dense<0.000000e+00> : vector<14x448xf32>
    %10 = tpu.matmul %7, %9, %cst_9 {dimension_numbers = #tpu.dot_dimension_numbers<[1], [0], [0], [1], [0, 0, 1, 1], [], []>} : vector<14x28xbf16>, vector<28x448xbf16>, vector<14x448xf32> -> vector<14x448xf32>
    %11 = arith.addf %3, %10 : vector<14x448xf32>
    %c1 = arith.constant 1 : index
    %c0_10 = arith.constant 0 : index
    %c0_11 = arith.constant 0 : index
    %12 = vector.load %arg2[%c1, %c0_10, %c0_11] : memref<3x14x28xbf16, #tpu.memory_space<vmem>>, vector<1x14x28xbf16>
    %13 = vector.shape_cast %12 : vector<1x14x28xbf16> to vector<14x28xbf16>
    %cst_12 = arith.constant dense<0.000000e+00> : vector<14x28xf32>
    %14 = tpu.matmul %13, %2, %cst_12 {dimension_numbers = #tpu.dot_dimension_numbers<[1], [0], [0], [1], [0, 0, 1, 1], [], []>} : vector<14x28xbf16>, vector<28x28xbf16>, vector<14x28xf32> -> vector<14x28xf32>
    %15 = arith.truncf %14 : vector<14x28xf32> to vector<14x28xbf16>
    %c1_13 = arith.constant 1 : index
    %c0_14 = arith.constant 0 : index
    %c0_15 = arith.constant 0 : index
    %16 = vector.load %arg3[%c1_13, %c0_14, %c0_15] : memref<3x28x448xbf16, #tpu.memory_space<vmem>>, vector<1x28x448xbf16>
    %17 = vector.shape_cast %16 : vector<1x28x448xbf16> to vector<28x448xbf16>
    %cst_16 = arith.constant dense<0.000000e+00> : vector<14x448xf32>
    %18 = tpu.matmul %15, %17, %cst_16 {dimension_numbers = #tpu.dot_dimension_numbers<[1], [0], [0], [1], [0, 0, 1, 1], [], []>} : vector<14x28xbf16>, vector<28x448xbf16>, vector<14x448xf32> -> vector<14x448xf32>
    %19 = arith.addf %11, %18 : vector<14x448xf32>
    %c2 = arith.constant 2 : index
    %c0_17 = arith.constant 0 : index
    %c0_18 = arith.constant 0 : index
    %20 = vector.load %arg2[%c2, %c0_17, %c0_18] : memref<3x14x28xbf16, #tpu.memory_space<vmem>>, vector<1x14x28xbf16>
    %21 = vector.shape_cast %20 : vector<1x14x28xbf16> to vector<14x28xbf16>
    %cst_19 = arith.constant dense<0.000000e+00> : vector<14x28xf32>
    %22 = tpu.matmul %21, %2, %cst_19 {dimension_numbers = #tpu.dot_dimension_numbers<[1], [0], [0], [1], [0, 0, 1, 1], [], []>} : vector<14x28xbf16>, vector<28x28xbf16>, vector<14x28xf32> -> vector<14x28xf32>
    %23 = arith.truncf %22 : vector<14x28xf32> to vector<14x28xbf16>
    %c2_20 = arith.constant 2 : index
    %c0_21 = arith.constant 0 : index
    %c0_22 = arith.constant 0 : index
    %24 = vector.load %arg3[%c2_20, %c0_21, %c0_22] : memref<3x28x448xbf16, #tpu.memory_space<vmem>>, vector<1x28x448xbf16>
    %25 = vector.shape_cast %24 : vector<1x28x448xbf16> to vector<28x448xbf16>
    %cst_23 = arith.constant dense<0.000000e+00> : vector<14x448xf32>
    %26 = tpu.matmul %23, %25, %cst_23 {dimension_numbers = #tpu.dot_dimension_numbers<[1], [0], [0], [1], [0, 0, 1, 1], [], []>} : vector<14x28xbf16>, vector<28x448xbf16>, vector<14x448xf32> -> vector<14x448xf32>
    %27 = arith.addf %19, %26 : vector<14x448xf32>
    %c0_24 = arith.constant 0 : index
    %c0_25 = arith.constant 0 : index
    %28 = vector.load %arg4[%c0_24, %c0_25] : memref<1x448xf32, #tpu.memory_space<vmem>>, vector<1x448xf32>
    %29 = vector.broadcast %28 : vector<1x448xf32> to vector<14x448xf32>
    %30 = arith.addf %27, %29 : vector<14x448xf32>
    %cst_26 = arith.constant 0.000000e+00 : f32
    %31 = vector.broadcast %cst_26 : f32 to vector<14x448xf32>
    %32 = arith.maximumf %30, %31 : vector<14x448xf32>
    %33 = arith.truncf %32 : vector<14x448xf32> to vector<14x448xbf16>
    %cst_27 = arith.constant 0.000000e+00 : f32
    %34 = vector.broadcast %cst_27 : f32 to vector<7x448xf32>
    %c0_28 = arith.constant 0 : index
    %c0_29 = arith.constant 0 : index
    %c0_30 = arith.constant 0 : index
    %35 = vector.load %arg5[%c0_28, %c0_29, %c0_30] : memref<3x7x14xbf16, #tpu.memory_space<vmem>>, vector<1x7x14xbf16>
    %36 = vector.shape_cast %35 : vector<1x7x14xbf16> to vector<7x14xbf16>
    %cst_31 = arith.constant dense<0.000000e+00> : vector<7x448xf32>
    %37 = tpu.matmul %36, %33, %cst_31 {dimension_numbers = #tpu.dot_dimension_numbers<[1], [0], [0], [1], [0, 0, 1, 1], [], []>} : vector<7x14xbf16>, vector<14x448xbf16>, vector<7x448xf32> -> vector<7x448xf32>
    %38 = arith.truncf %37 : vector<7x448xf32> to vector<7x448xbf16>
    %c0_32 = arith.constant 0 : index
    %c0_33 = arith.constant 0 : index
    %c0_34 = arith.constant 0 : index
    %39 = vector.load %arg6[%c0_32, %c0_33, %c0_34] : memref<3x448x448xbf16, #tpu.memory_space<vmem>>, vector<1x448x448xbf16>
    %40 = vector.shape_cast %39 : vector<1x448x448xbf16> to vector<448x448xbf16>
    %cst_35 = arith.constant dense<0.000000e+00> : vector<7x448xf32>
    %41 = tpu.matmul %38, %40, %cst_35 {dimension_numbers = #tpu.dot_dimension_numbers<[1], [0], [0], [1], [0, 0, 1, 1], [], []>} : vector<7x448xbf16>, vector<448x448xbf16>, vector<7x448xf32> -> vector<7x448xf32>
    %42 = arith.addf %34, %41 : vector<7x448xf32>
    %c1_36 = arith.constant 1 : index
    %c0_37 = arith.constant 0 : index
    %c0_38 = arith.constant 0 : index
    %43 = vector.load %arg5[%c1_36, %c0_37, %c0_38] : memref<3x7x14xbf16, #tpu.memory_space<vmem>>, vector<1x7x14xbf16>
    %44 = vector.shape_cast %43 : vector<1x7x14xbf16> to vector<7x14xbf16>
    %cst_39 = arith.constant dense<0.000000e+00> : vector<7x448xf32>
    %45 = tpu.matmul %44, %33, %cst_39 {dimension_numbers = #tpu.dot_dimension_numbers<[1], [0], [0], [1], [0, 0, 1, 1], [], []>} : vector<7x14xbf16>, vector<14x448xbf16>, vector<7x448xf32> -> vector<7x448xf32>
    %46 = arith.truncf %45 : vector<7x448xf32> to vector<7x448xbf16>
    %c1_40 = arith.constant 1 : index
    %c0_41 = arith.constant 0 : index
    %c0_42 = arith.constant 0 : index
    %47 = vector.load %arg6[%c1_40, %c0_41, %c0_42] : memref<3x448x448xbf16, #tpu.memory_space<vmem>>, vector<1x448x448xbf16>
    %48 = vector.shape_cast %47 : vector<1x448x448xbf16> to vector<448x448xbf16>
    %cst_43 = arith.constant dense<0.000000e+00> : vector<7x448xf32>
    %49 = tpu.matmul %46, %48, %cst_43 {dimension_numbers = #tpu.dot_dimension_numbers<[1], [0], [0], [1], [0, 0, 1, 1], [], []>} : vector<7x448xbf16>, vector<448x448xbf16>, vector<7x448xf32> -> vector<7x448xf32>
    %50 = arith.addf %42, %49 : vector<7x448xf32>
    %c2_44 = arith.constant 2 : index
    %c0_45 = arith.constant 0 : index
    %c0_46 = arith.constant 0 : index
    %51 = vector.load %arg5[%c2_44, %c0_45, %c0_46] : memref<3x7x14xbf16, #tpu.memory_space<vmem>>, vector<1x7x14xbf16>
    %52 = vector.shape_cast %51 : vector<1x7x14xbf16> to vector<7x14xbf16>
    %cst_47 = arith.constant dense<0.000000e+00> : vector<7x448xf32>
    %53 = tpu.matmul %52, %33, %cst_47 {dimension_numbers = #tpu.dot_dimension_numbers<[1], [0], [0], [1], [0, 0, 1, 1], [], []>} : vector<7x14xbf16>, vector<14x448xbf16>, vector<7x448xf32> -> vector<7x448xf32>
    %54 = arith.truncf %53 : vector<7x448xf32> to vector<7x448xbf16>
    %c2_48 = arith.constant 2 : index
    %c0_49 = arith.constant 0 : index
    %c0_50 = arith.constant 0 : index
    %55 = vector.load %arg6[%c2_48, %c0_49, %c0_50] : memref<3x448x448xbf16, #tpu.memory_space<vmem>>, vector<1x448x448xbf16>
    %56 = vector.shape_cast %55 : vector<1x448x448xbf16> to vector<448x448xbf16>
    %cst_51 = arith.constant dense<0.000000e+00> : vector<7x448xf32>
    %57 = tpu.matmul %54, %56, %cst_51 {dimension_numbers = #tpu.dot_dimension_numbers<[1], [0], [0], [1], [0, 0, 1, 1], [], []>} : vector<7x448xbf16>, vector<448x448xbf16>, vector<7x448xf32> -> vector<7x448xf32>
    %58 = arith.addf %50, %57 : vector<7x448xf32>
    %c0_52 = arith.constant 0 : index
    %c0_53 = arith.constant 0 : index
    %59 = vector.load %arg7[%c0_52, %c0_53] : memref<1x448xf32, #tpu.memory_space<vmem>>, vector<1x448xf32>
    %60 = vector.broadcast %59 : vector<1x448xf32> to vector<7x448xf32>
    %61 = arith.addf %58, %60 : vector<7x448xf32>
    %cst_54 = arith.constant 0.000000e+00 : f32
    %62 = vector.broadcast %cst_54 : f32 to vector<7x448xf32>
    %63 = arith.maximumf %61, %62 : vector<7x448xf32>
    %64 = arith.truncf %63 : vector<7x448xf32> to vector<7x448xbf16>
    %cst_55 = arith.constant 0.000000e+00 : f32
    %65 = vector.broadcast %cst_55 : f32 to vector<4x512xf32>
    %c0_56 = arith.constant 0 : index
    %c0_57 = arith.constant 0 : index
    %c0_58 = arith.constant 0 : index
    %66 = vector.load %arg8[%c0_56, %c0_57, %c0_58] : memref<3x4x7xbf16, #tpu.memory_space<vmem>>, vector<1x4x7xbf16>
    %67 = vector.shape_cast %66 : vector<1x4x7xbf16> to vector<4x7xbf16>
    %cst_59 = arith.constant dense<0.000000e+00> : vector<4x448xf32>
    %68 = tpu.matmul %67, %64, %cst_59 {dimension_numbers = #tpu.dot_dimension_numbers<[1], [0], [0], [1], [0, 0, 1, 1], [], []>} : vector<4x7xbf16>, vector<7x448xbf16>, vector<4x448xf32> -> vector<4x448xf32>
    %69 = arith.truncf %68 : vector<4x448xf32> to vector<4x448xbf16>
    %c0_60 = arith.constant 0 : index
    %c0_61 = arith.constant 0 : index
    %c0_62 = arith.constant 0 : index
    %70 = vector.load %arg9[%c0_60, %c0_61, %c0_62] : memref<3x448x512xbf16, #tpu.memory_space<vmem>>, vector<1x448x512xbf16>
    %71 = vector.shape_cast %70 : vector<1x448x512xbf16> to vector<448x512xbf16>
    %cst_63 = arith.constant dense<0.000000e+00> : vector<4x512xf32>
    %72 = tpu.matmul %69, %71, %cst_63 {dimension_numbers = #tpu.dot_dimension_numbers<[1], [0], [0], [1], [0, 0, 1, 1], [], []>} : vector<4x448xbf16>, vector<448x512xbf16>, vector<4x512xf32> -> vector<4x512xf32>
    %73 = arith.addf %65, %72 : vector<4x512xf32>
    %c1_64 = arith.constant 1 : index
    %c0_65 = arith.constant 0 : index
    %c0_66 = arith.constant 0 : index
    %74 = vector.load %arg8[%c1_64, %c0_65, %c0_66] : memref<3x4x7xbf16, #tpu.memory_space<vmem>>, vector<1x4x7xbf16>
    %75 = vector.shape_cast %74 : vector<1x4x7xbf16> to vector<4x7xbf16>
    %cst_67 = arith.constant dense<0.000000e+00> : vector<4x448xf32>
    %76 = tpu.matmul %75, %64, %cst_67 {dimension_numbers = #tpu.dot_dimension_numbers<[1], [0], [0], [1], [0, 0, 1, 1], [], []>} : vector<4x7xbf16>, vector<7x448xbf16>, vector<4x448xf32> -> vector<4x448xf32>
    %77 = arith.truncf %76 : vector<4x448xf32> to vector<4x448xbf16>
    %c1_68 = arith.constant 1 : index
    %c0_69 = arith.constant 0 : index
    %c0_70 = arith.constant 0 : index
    %78 = vector.load %arg9[%c1_68, %c0_69, %c0_70] : memref<3x448x512xbf16, #tpu.memory_space<vmem>>, vector<1x448x512xbf16>
    %79 = vector.shape_cast %78 : vector<1x448x512xbf16> to vector<448x512xbf16>
    %cst_71 = arith.constant dense<0.000000e+00> : vector<4x512xf32>
    %80 = tpu.matmul %77, %79, %cst_71 {dimension_numbers = #tpu.dot_dimension_numbers<[1], [0], [0], [1], [0, 0, 1, 1], [], []>} : vector<4x448xbf16>, vector<448x512xbf16>, vector<4x512xf32> -> vector<4x512xf32>
    %81 = arith.addf %73, %80 : vector<4x512xf32>
    %c2_72 = arith.constant 2 : index
    %c0_73 = arith.constant 0 : index
    %c0_74 = arith.constant 0 : index
    %82 = vector.load %arg8[%c2_72, %c0_73, %c0_74] : memref<3x4x7xbf16, #tpu.memory_space<vmem>>, vector<1x4x7xbf16>
    %83 = vector.shape_cast %82 : vector<1x4x7xbf16> to vector<4x7xbf16>
    %cst_75 = arith.constant dense<0.000000e+00> : vector<4x448xf32>
    %84 = tpu.matmul %83, %64, %cst_75 {dimension_numbers = #tpu.dot_dimension_numbers<[1], [0], [0], [1], [0, 0, 1, 1], [], []>} : vector<4x7xbf16>, vector<7x448xbf16>, vector<4x448xf32> -> vector<4x448xf32>
    %85 = arith.truncf %84 : vector<4x448xf32> to vector<4x448xbf16>
    %c2_76 = arith.constant 2 : index
    %c0_77 = arith.constant 0 : index
    %c0_78 = arith.constant 0 : index
    %86 = vector.load %arg9[%c2_76, %c0_77, %c0_78] : memref<3x448x512xbf16, #tpu.memory_space<vmem>>, vector<1x448x512xbf16>
    %87 = vector.shape_cast %86 : vector<1x448x512xbf16> to vector<448x512xbf16>
    %cst_79 = arith.constant dense<0.000000e+00> : vector<4x512xf32>
    %88 = tpu.matmul %85, %87, %cst_79 {dimension_numbers = #tpu.dot_dimension_numbers<[1], [0], [0], [1], [0, 0, 1, 1], [], []>} : vector<4x448xbf16>, vector<448x512xbf16>, vector<4x512xf32> -> vector<4x512xf32>
    %89 = arith.addf %81, %88 : vector<4x512xf32>
    %c0_80 = arith.constant 0 : index
    %c0_81 = arith.constant 0 : index
    %90 = vector.load %arg10[%c0_80, %c0_81] : memref<1x512xf32, #tpu.memory_space<vmem>>, vector<1x512xf32>
    %91 = vector.broadcast %90 : vector<1x512xf32> to vector<4x512xf32>
    %92 = arith.addf %89, %91 : vector<4x512xf32>
    %cst_82 = arith.constant 0.000000e+00 : f32
    %93 = vector.broadcast %cst_82 : f32 to vector<4x512xf32>
    %94 = arith.maximumf %92, %93 : vector<4x512xf32>
    %95 = arith.truncf %94 : vector<4x512xf32> to vector<4x512xbf16>
    %cst_83 = arith.constant 0.000000e+00 : f32
    %96 = vector.broadcast %cst_83 : f32 to vector<1x128xf32>
    %97 = vector.extract_strided_slice %95 {offsets = [0, 0], sizes = [1, 512], strides = [1, 1]} : vector<4x512xbf16> to vector<1x512xbf16>
    %c0_84 = arith.constant 0 : index
    %c0_85 = arith.constant 0 : index
    %98 = vector.load %arg11[%c0_84, %c0_85] : memref<2048x128xbf16, #tpu.memory_space<vmem>>, vector<512x128xbf16>
    %cst_86 = arith.constant dense<0.000000e+00> : vector<1x128xf32>
    %99 = tpu.matmul %97, %98, %cst_86 {dimension_numbers = #tpu.dot_dimension_numbers<[1], [0], [0], [1], [0, 0, 1, 1], [], []>} : vector<1x512xbf16>, vector<512x128xbf16>, vector<1x128xf32> -> vector<1x128xf32>
    %100 = arith.addf %96, %99 : vector<1x128xf32>
    %101 = vector.extract_strided_slice %95 {offsets = [1, 0], sizes = [1, 512], strides = [1, 1]} : vector<4x512xbf16> to vector<1x512xbf16>
    %c512 = arith.constant 512 : index
    %c0_87 = arith.constant 0 : index
    %102 = vector.load %arg11[%c512, %c0_87] : memref<2048x128xbf16, #tpu.memory_space<vmem>>, vector<512x128xbf16>
    %cst_88 = arith.constant dense<0.000000e+00> : vector<1x128xf32>
    %103 = tpu.matmul %101, %102, %cst_88 {dimension_numbers = #tpu.dot_dimension_numbers<[1], [0], [0], [1], [0, 0, 1, 1], [], []>} : vector<1x512xbf16>, vector<512x128xbf16>, vector<1x128xf32> -> vector<1x128xf32>
    %104 = arith.addf %100, %103 : vector<1x128xf32>
    %105 = vector.extract_strided_slice %95 {offsets = [2, 0], sizes = [1, 512], strides = [1, 1]} : vector<4x512xbf16> to vector<1x512xbf16>
    %c1024 = arith.constant 1024 : index
    %c0_89 = arith.constant 0 : index
    %106 = vector.load %arg11[%c1024, %c0_89] : memref<2048x128xbf16, #tpu.memory_space<vmem>>, vector<512x128xbf16>
    %cst_90 = arith.constant dense<0.000000e+00> : vector<1x128xf32>
    %107 = tpu.matmul %105, %106, %cst_90 {dimension_numbers = #tpu.dot_dimension_numbers<[1], [0], [0], [1], [0, 0, 1, 1], [], []>} : vector<1x512xbf16>, vector<512x128xbf16>, vector<1x128xf32> -> vector<1x128xf32>
    %108 = arith.addf %104, %107 : vector<1x128xf32>
    %109 = vector.extract_strided_slice %95 {offsets = [3, 0], sizes = [1, 512], strides = [1, 1]} : vector<4x512xbf16> to vector<1x512xbf16>
    %c1536 = arith.constant 1536 : index
    %c0_91 = arith.constant 0 : index
    %110 = vector.load %arg11[%c1536, %c0_91] : memref<2048x128xbf16, #tpu.memory_space<vmem>>, vector<512x128xbf16>
    %cst_92 = arith.constant dense<0.000000e+00> : vector<1x128xf32>
    %111 = tpu.matmul %109, %110, %cst_92 {dimension_numbers = #tpu.dot_dimension_numbers<[1], [0], [0], [1], [0, 0, 1, 1], [], []>} : vector<1x512xbf16>, vector<512x128xbf16>, vector<1x128xf32> -> vector<1x128xf32>
    %112 = arith.addf %108, %111 : vector<1x128xf32>
    %c0_93 = arith.constant 0 : index
    %c0_94 = arith.constant 0 : index
    %113 = vector.load %arg12[%c0_93, %c0_94] : memref<1x128xf32, #tpu.memory_space<vmem>>, vector<1x128xf32>
    %114 = arith.addf %112, %113 : vector<1x128xf32>
    %cst_95 = arith.constant 0.000000e+00 : f32
    %115 = vector.broadcast %cst_95 : f32 to vector<1x128xf32>
    %116 = arith.maximumf %114, %115 : vector<1x128xf32>
    %117 = arith.truncf %116 : vector<1x128xf32> to vector<1x128xbf16>
    %c0_96 = arith.constant 0 : index
    %c0_97 = arith.constant 0 : index
    %118 = vector.load %arg13[%c0_96, %c0_97] : memref<128x128xbf16, #tpu.memory_space<vmem>>, vector<128x128xbf16>
    %cst_98 = arith.constant dense<0.000000e+00> : vector<1x128xf32>
    %119 = tpu.matmul %117, %118, %cst_98 {dimension_numbers = #tpu.dot_dimension_numbers<[1], [0], [0], [1], [0, 0, 1, 1], [], []>} : vector<1x128xbf16>, vector<128x128xbf16>, vector<1x128xf32> -> vector<1x128xf32>
    %c0_99 = arith.constant 0 : index
    %c0_100 = arith.constant 0 : index
    %120 = vector.load %arg14[%c0_99, %c0_100] : memref<1x128xf32, #tpu.memory_space<vmem>>, vector<1x128xf32>
    %121 = arith.addf %119, %120 : vector<1x128xf32>
    %c0_101 = arith.constant 0 : index
    %c0_102 = arith.constant 0 : index
    %c0_103 = arith.constant 0 : index
    %122 = vector.load %arg15[%c0_101, %c0_102, %c0_103] : memref<1x1x128xf32, #tpu.memory_space<vmem>>, vector<1x1x128xf32>
    %123 = vector.shape_cast %122 : vector<1x1x128xf32> to vector<1x128xf32>
    %124 = vector.shape_cast %121 : vector<1x128xf32> to vector<1x1x128xf32>
    tpu.vector_store %arg15[%c0_101, %c0_102, %c0_103], %124 {strides = array<i32>} : memref<1x1x128xf32, #tpu.memory_space<vmem>>, vector<1x1x128xf32>,
    return
  }
  func.func @transform_0(%arg0: i32) -> (i32, i32, i32) {
    %c0_i32 = arith.constant 0 : i32
    %c0_i32_0 = arith.constant 0 : i32
    %c0_i32_1 = arith.constant 0 : i32
    return %arg0, %c0_i32, %c0_i32_0 : i32, i32, i32
  }
  func.func @transform_1(%arg0: i32) -> (i32, i32, i32) {
    %c0_i32 = arith.constant 0 : i32
    %c0_i32_0 = arith.constant 0 : i32
    %c0_i32_1 = arith.constant 0 : i32
    %c0_i32_2 = arith.constant 0 : i32
    return %c0_i32, %c0_i32_0, %c0_i32_1 : i32, i32, i32
  }
  func.func @transform_2(%arg0: i32) -> (i32, i32, i32) {
    %c0_i32 = arith.constant 0 : i32
    %c0_i32_0 = arith.constant 0 : i32
    %c0_i32_1 = arith.constant 0 : i32
    %c0_i32_2 = arith.constant 0 : i32
    return %c0_i32, %c0_i32_0, %c0_i32_1 : i32, i32, i32
  }
  func.func @transform_3(%arg0: i32) -> (i32, i32) {
    %c0_i32 = arith.constant 0 : i32
    %c0_i32_0 = arith.constant 0 : i32
    %c0_i32_1 = arith.constant 0 : i32
    return %c0_i32, %c0_i32_0 : i32, i32
  }
  func.func @transform_4(%arg0: i32) -> (i32, i32, i32) {
    %c0_i32 = arith.constant 0 : i32
    %c0_i32_0 = arith.constant 0 : i32
    %c0_i32_1 = arith.constant 0 : i32
    %c0_i32_2 = arith.constant 0 : i32
    return %c0_i32, %c0_i32_0, %c0_i32_1 : i32, i32, i32
  }
  func.func @transform_5(%arg0: i32) -> (i32, i32, i32) {
    %c0_i32 = arith.constant 0 : i32
    %c0_i32_0 = arith.constant 0 : i32
    %c0_i32_1 = arith.constant 0 : i32
    %c0_i32_2 = arith.constant 0 : i32
    return %c0_i32, %c0_i32_0, %c0_i32_1 : i32, i32, i32
  }
  func.func @transform_6(%arg0: i32) -> (i32, i32) {
    %c0_i32 = arith.constant 0 : i32
    %c0_i32_0 = arith.constant 0 : i32
    %c0_i32_1 = arith.constant 0 : i32
    return %c0_i32, %c0_i32_0 : i32, i32
  }
  func.func @transform_7(%arg0: i32) -> (i32, i32, i32) {
    %c0_i32 = arith.constant 0 : i32
    %c0_i32_0 = arith.constant 0 : i32
    %c0_i32_1 = arith.constant 0 : i32
    %c0_i32_2 = arith.constant 0 : i32
    return %c0_i32, %c0_i32_0, %c0_i32_1 : i32, i32, i32
  }
  func.func @transform_8(%arg0: i32) -> (i32, i32, i32) {
    %c0_i32 = arith.constant 0 : i32
    %c0_i32_0 = arith.constant 0 : i32
    %c0_i32_1 = arith.constant 0 : i32
    %c0_i32_2 = arith.constant 0 : i32
    return %c0_i32, %c0_i32_0, %c0_i32_1 : i32, i32, i32
  }
  func.func @transform_9(%arg0: i32) -> (i32, i32) {
    %c0_i32 = arith.constant 0 : i32
    %c0_i32_0 = arith.constant 0 : i32
    %c0_i32_1 = arith.constant 0 : i32
    return %c0_i32, %c0_i32_0 : i32, i32
  }
  func.func @transform_10(%arg0: i32) -> (i32, i32) {
    %c0_i32 = arith.constant 0 : i32
    %c0_i32_0 = arith.constant 0 : i32
    %c0_i32_1 = arith.constant 0 : i32
    return %c0_i32, %c0_i32_0 : i32, i32
  }
  func.func @transform_11(%arg0: i32) -> (i32, i32) {
    %c0_i32 = arith.constant 0 : i32
    %c0_i32_0 = arith.constant 0 : i32
    %c0_i32_1 = arith.constant 0 : i32
    return %c0_i32, %c0_i32_0 : i32, i32
  }
  func.func @transform_12(%arg0: i32) -> (i32, i32) {
    %c0_i32 = arith.constant 0 : i32
    %c0_i32_0 = arith.constant 0 : i32
    %c0_i32_1 = arith.constant 0 : i32
    return %c0_i32, %c0_i32_0 : i32, i32
  }
  func.func @transform_13(%arg0: i32) -> (i32, i32) {
    %c0_i32 = arith.constant 0 : i32
    %c0_i32_0 = arith.constant 0 : i32
    %c0_i32_1 = arith.constant 0 : i32
    return %c0_i32, %c0_i32_0 : i32, i32
  }
  func.func @transform_14(%arg0: i32) -> (i32, i32, i32) {
    %c0_i32 = arith.constant 0 : i32
    %c0_i32_0 = arith.constant 0 : i32
    %c0_i32_1 = arith.constant 0 : i32
    return %arg0, %c0_i32, %c0_i32_0 : i32, i32, i32
  }
}

</mosaic_0001>

<llo_original>
// kernel: tpu_custom_call.1
$region0: #{tpu_custom_call.1}
  #allocation0 [shape = 'u32[]', space=smem, size = 0x4, offset = 0x4, fixed_abs, tag = 'smem constant byte address 0x4 - core index']
  #allocation1 [shape = 'u32[72,128]{1,0:T(1,128)}', space=vmem, size = 0x9000, scoped, tag = 'internal scratch']
  %s0 = inlined_call_operand.vmem [shape: f32[2,28,28], index: 0, kind: input, shape index: {}]
  %s1 = inlined_call_operand.hbm [shape: bf16[3,14,28], index: 1, kind: input, shape index: {}]
  %s2 = inlined_call_operand.hbm [shape: bf16[3,28,448], index: 2, kind: input, shape index: {}]
  %s3 = inlined_call_operand.hbm [shape: f32[1,448], index: 3, kind: input, shape index: {}]
  %s4 = inlined_call_operand.hbm [shape: bf16[3,7,14], index: 4, kind: input, shape index: {}]
  %s5 = inlined_call_operand.hbm [shape: bf16[3,448,448], index: 5, kind: input, shape index: {}]
  %s6 = inlined_call_operand.hbm [shape: f32[1,448], index: 6, kind: input, shape index: {}]
  %s7 = inlined_call_operand.hbm [shape: bf16[3,4,7], index: 7, kind: input, shape index: {}]
  %s8 = inlined_call_operand.hbm [shape: bf16[3,448,512], index: 8, kind: input, shape index: {}]
  %s9 = inlined_call_operand.hbm [shape: f32[1,512], index: 9, kind: input, shape index: {}]
  %s10 = inlined_call_operand.hbm [shape: bf16[2048,128], index: 10, kind: input, shape index: {}]
  %s11 = inlined_call_operand.hbm [shape: f32[1,128], index: 11, kind: input, shape index: {}]
  %s12 = inlined_call_operand.hbm [shape: bf16[128,128], index: 12, kind: input, shape index: {}]
  %s13 = inlined_call_operand.hbm [shape: f32[1,128], index: 13, kind: input, shape index: {}]
  %s14 = inlined_call_operand.hbm [shape: f32[2,1,128], index: 14, kind: output, shape index: {}]
  %s15 = sld [smem:[#allocation0]]
  $region141: #{tpu_custom_call.1} parent=0
    _
  %s17 = ssub.s32 1, %s15
  %s18 = scalar_select 0, %s17, %s15
  $region1: #{tpu_custom_call.1} parent=0
    #allocation2 [shape = 'u8[12288]{0}', space=vmem, size = 0x3000, scoped, tag = 'input window, operand 1, single buffered']
    #allocation3 [shape = 's32[2]{0}', space=sflag, size = 0x8, scoped, tag = 'scoped memory for tpu_custom_call.1']
    #allocation4 [shape = 's32[2]{0}', space=sflag, size = 0x8, scoped, tag = 'scoped memory for tpu_custom_call.1']
    #allocation5 [shape = 'u8[98304]{0}', space=vmem, size = 0x18000, scoped, tag = 'input window, operand 2, single buffered']
    #allocation6 [shape = 's32[1]{0}', space=sflag, size = 0x4, scoped, tag = 'scoped memory for tpu_custom_call.1']
    #allocation7 [shape = 'u8[2048]{0}', space=vmem, size = 0x800, scoped, tag = 'input window, operand 3, single buffered']
    #allocation8 [shape = 'u8[6144]{0}', space=vmem, size = 0x1800, scoped, tag = 'input window, operand 4, single buffered']
    #allocation9 [shape = 's32[1]{0}', space=sflag, size = 0x4, scoped, tag = 'scoped memory for tpu_custom_call.1']
    #allocation10 [shape = 'u8[1376256]{0}', space=vmem, size = 0x150000, scoped, tag = 'input window, operand 5, single buffered']
    #allocation11 [shape = 'u8[2048]{0}', space=vmem, size = 0x800, scoped, tag = 'input window, operand 6, single buffered']
    #allocation12 [shape = 's32[1]{0}', space=sflag, size = 0x4, scoped, tag = 'scoped memory for tpu_custom_call.1']
    #allocation13 [shape = 'u8[3072]{0}', space=vmem, size = 0xc00, scoped, tag = 'input window, operand 7, single buffered']
    #allocation14 [shape = 'u8[1376256]{0}', space=vmem, size = 0x150000, scoped, tag = 'input window, operand 8, single buffered']
    #allocation15 [shape = 's32[1]{0}', space=sflag, size = 0x4, scoped, tag = 'scoped memory for tpu_custom_call.1']
    #allocation16 [shape = 'u8[2048]{0}', space=vmem, size = 0x800, scoped, tag = 'input window, operand 9, single buffered']
    #allocation17 [shape = 'u8[524288]{0}', space=vmem, size = 0x80000, scoped, tag = 'input window, operand 10, single buffered']
    #allocation18 [shape = 's32[1]{0}', space=sflag, size = 0x4, scoped, tag = 'scoped memory for tpu_custom_call.1']
    #allocation19 [shape = 'u8[512]{0}', space=vmem, size = 0x400, scoped, tag = 'input window, operand 11, single buffered']
    #allocation20 [shape = 'u8[32768]{0}', space=vmem, size = 0x8000, scoped, tag = 'input window, operand 12, single buffered']
    #allocation21 [shape = 's32[1]{0}', space=sflag, size = 0x4, scoped, tag = 'scoped memory for tpu_custom_call.1']
    #allocation22 [shape = 'u8[512]{0}', space=vmem, size = 0x400, scoped, tag = 'input window, operand 13, single buffered']
    #allocation23 [shape = 'u8[1024]{0}', space=vmem, size = 0x400, scoped, tag = 'output window, operand 0']
    %19 = vsyncpa [#allocation3], 0
    %20 = vsyncpa [#allocation6], 0
    %21 = vsyncpa [#allocation9], 0
    %22 = vsyncpa [#allocation12], 0
    %23 = vsyncpa [#allocation15], 0
    %24 = vsyncpa [#allocation18], 0
    %25 = vsyncpa [#allocation21], 0
    %26 = vsyncpa [#allocation4], 0
    %s27 = scalar_lea.sflag [#allocation4], 1
    %28 = vsyncpa %s27, 0
    loop: start=0, step=1, limit=4
    $region2: #{tpu_custom_call.1} parent=1 // loop_pre_header
      _
    $region3: #{tpu_custom_call.1} parent=1 // loop_header
      %s30 = sphi 0, %s34
      %p31 = scmp.ge.s32.totalorder %s30, 4
      %s40 = sphi 0, %s42
      %s43 = sphi 0, %s40
      %s44 = sphi 0, %s43
      %s60 = sphi 0, %s44
      %s64 = sphi 0, %s64
      %s66 = sphi 0, %s64
      %s67 = sphi 0, %s66
      %s81 = sphi 0, %s67
      %s85 = sphi 0, %s85
      %s87 = sphi 0, %s85
      %s88 = sphi 0, %s87
      %s102 = sphi 0, %s88
      %s106 = sphi 0, %s106
      %s108 = sphi 0, %s106
      %s109 = sphi 0, %s108
      %s123 = sphi 0, %s109
      %s127 = sphi 0, %s127
      %s129 = sphi 0, %s127
      %s130 = sphi 0, %s129
      %s144 = sphi 0, %s130
      %s148 = sphi 0, %s148
      %s150 = sphi 0, %s148
      %s151 = sphi 0, %s150
      %s165 = sphi 0, %s151
      %s169 = sphi 0, %s169
      %s171 = sphi 0, %s169
      %s172 = sphi 0, %s171
      %s186 = sphi 0, %s172
      %s190 = sphi 0, %s190
      %s192 = sphi 0, %s190
      %s193 = sphi 0, %s192
      %s207 = sphi 0, %s193
      %s211 = sphi 0, %s211
      %s213 = sphi 0, %s211
      %s214 = sphi 0, %s213
      %s228 = sphi 0, %s214
      %s232 = sphi 0, %s232
      %s234 = sphi 0, %s232
      %s235 = sphi 0, %s234
      %s249 = sphi 0, %s235
      %s253 = sphi 0, %s253
      %s255 = sphi 0, %s253
      %s256 = sphi 0, %s255
      %s270 = sphi 0, %s256
      %s274 = sphi 0, %s274
      %s276 = sphi 0, %s274
      %s277 = sphi 0, %s276
      %s291 = sphi 0, %s277
      %s295 = sphi 0, %s295
      %s297 = sphi 0, %s295
      %s298 = sphi 0, %s297
      %s312 = sphi 0, %s298
      %s316 = sphi 0, %s316
      %s318 = sphi 0, %s316
      %s319 = sphi 0, %s318
      %s333 = sphi 0, %s319
      %s339 = sphi 0, %s341
      %s342 = sphi 0, %s339
      %s343 = sphi 0, %s342
      %s359 = sphi 0, %s343
    $region4: #{tpu_custom_call.1} parent=1 // loop_header_branch
      %33 = sbr.rel (%p31) target = $region8
    $region5: #{tpu_custom_call.1} parent=1 // loop_body
      %s35 = ssub.s32 %s30, 1
      %s36 = ssub.s32 %s30, 2
      %s37 = sadd.s32 %s30, 1
      %s38 = ssub.s32 %s30, %s37
      %p39 = scmp.eq.s32.totalorder %s38, 0
      %s41 = sadd.s32 %s40, 1
      %s42 = scalar_select %p39, %s40, %s41
      %p45 = pneg %p39
      %p46 = scmp.eq.s32.totalorder %s30, 1
      %p47 = por %p45, %p46
      %p48 = scmp.ne.s32.totalorder %s40, %s43
      %p49 = scmp.eq.s32.totalorder %s30, 0
      %p50 = por %p48, %p49
      %p51 = scmp.ne.s32.totalorder %s40, %s43
      %p52 = scmp.eq.s32.totalorder %s35, 1
      %p53 = por %p51, %p52
      %p54 = scmp.ne.s32.totalorder %s43, %s44
      %p55 = scmp.eq.s32.totalorder %s35, 0
      %p56 = por %p54, %p55
      %p57 = scmp.ne.s32.totalorder %s43, %s44
      %p58 = scmp.eq.s32.totalorder %s36, 1
      %p59 = por %p57, %p58
      %p61 = scmp.ne.s32.totalorder %s44, %s60
      %p62 = scmp.eq.s32.totalorder %s36, 0
      %p63 = por %p61, %p62
      %s65 = sadd.s32 %s64, 1
      %p68 = scmp.eq.s32.totalorder %s30, 1
      %p69 = scmp.ne.s32.totalorder %s64, %s66
      %p70 = scmp.eq.s32.totalorder %s30, 0
      %p71 = por %p69, %p70
      %p72 = scmp.ne.s32.totalorder %s64, %s66
      %p73 = scmp.eq.s32.totalorder %s35, 1
      %p74 = por %p72, %p73
      %p75 = scmp.ne.s32.totalorder %s66, %s67
      %p76 = scmp.eq.s32.totalorder %s35, 0
      %p77 = por %p75, %p76
      %p78 = scmp.ne.s32.totalorder %s66, %s67
      %p79 = scmp.eq.s32.totalorder %s36, 1
      %p80 = por %p78, %p79
      %p82 = scmp.ne.s32.totalorder %s67, %s81
      %p83 = scmp.eq.s32.totalorder %s36, 0
      %p84 = por %p82, %p83
      %s86 = sadd.s32 %s85, 1
      %p89 = scmp.eq.s32.totalorder %s30, 1
      %p90 = scmp.ne.s32.totalorder %s85, %s87
      %p91 = scmp.eq.s32.totalorder %s30, 0
      %p92 = por %p90, %p91
      %p93 = scmp.ne.s32.totalorder %s85, %s87
      %p94 = scmp.eq.s32.totalorder %s35, 1
      %p95 = por %p93, %p94
      %p96 = scmp.ne.s32.totalorder %s87, %s88
      %p97 = scmp.eq.s32.totalorder %s35, 0
      %p98 = por %p96, %p97
      %p99 = scmp.ne.s32.totalorder %s87, %s88
      %p100 = scmp.eq.s32.totalorder %s36, 1
      %p101 = por %p99, %p100
      %p103 = scmp.ne.s32.totalorder %s88, %s102
      %p104 = scmp.eq.s32.totalorder %s36, 0
      %p105 = por %p103, %p104
      %s107 = sadd.s32 %s106, 1
      %p110 = scmp.eq.s32.totalorder %s30, 1
      %p111 = scmp.ne.s32.totalorder %s106, %s108
      %p112 = scmp.eq.s32.totalorder %s30, 0
      %p113 = por %p111, %p112
      %p114 = scmp.ne.s32.totalorder %s106, %s108
      %p115 = scmp.eq.s32.totalorder %s35, 1
      %p116 = por %p114, %p115
      %p117 = scmp.ne.s32.totalorder %s108, %s109
      %p118 = scmp.eq.s32.totalorder %s35, 0
      %p119 = por %p117, %p118
      %p120 = scmp.ne.s32.totalorder %s108, %s109
      %p121 = scmp.eq.s32.totalorder %s36, 1
      %p122 = por %p120, %p121
      %p124 = scmp.ne.s32.totalorder %s109, %s123
      %p125 = scmp.eq.s32.totalorder %s36, 0
      %p126 = por %p124, %p125
      %s128 = sadd.s32 %s127, 1
      %p131 = scmp.eq.s32.totalorder %s30, 1
      %p132 = scmp.ne.s32.totalorder %s127, %s129
      %p133 = scmp.eq.s32.totalorder %s30, 0
      %p134 = por %p132, %p133
      %p135 = scmp.ne.s32.totalorder %s127, %s129
      %p136 = scmp.eq.s32.totalorder %s35, 1
      %p137 = por %p135, %p136
      %p138 = scmp.ne.s32.totalorder %s129, %s130
      %p139 = scmp.eq.s32.totalorder %s35, 0
      %p140 = por %p138, %p139
      %p141 = scmp.ne.s32.totalorder %s129, %s130
      %p142 = scmp.eq.s32.totalorder %s36, 1
      %p143 = por %p141, %p142
      %p145 = scmp.ne.s32.totalorder %s130, %s144
      %p146 = scmp.eq.s32.totalorder %s36, 0
      %p147 = por %p145, %p146
      %s149 = sadd.s32 %s148, 1
      %p152 = scmp.eq.s32.totalorder %s30, 1
      %p153 = scmp.ne.s32.totalorder %s148, %s150
      %p154 = scmp.eq.s32.totalorder %s30, 0
      %p155 = por %p153, %p154
      %p156 = scmp.ne.s32.totalorder %s148, %s150
      %p157 = scmp.eq.s32.totalorder %s35, 1
      %p158 = por %p156, %p157
      %p159 = scmp.ne.s32.totalorder %s150, %s151
      %p160 = scmp.eq.s32.totalorder %s35, 0
      %p161 = por %p159, %p160
      %p162 = scmp.ne.s32.totalorder %s150, %s151
      %p163 = scmp.eq.s32.totalorder %s36, 1
      %p164 = por %p162, %p163
      %p166 = scmp.ne.s32.totalorder %s151, %s165
      %p167 = scmp.eq.s32.totalorder %s36, 0
      %p168 = por %p166, %p167
      %s170 = sadd.s32 %s169, 1
      %p173 = scmp.eq.s32.totalorder %s30, 1
      %p174 = scmp.ne.s32.totalorder %s169, %s171
      %p175 = scmp.eq.s32.totalorder %s30, 0
      %p176 = por %p174, %p175
      %p177 = scmp.ne.s32.totalorder %s169, %s171
      %p178 = scmp.eq.s32.totalorder %s35, 1
      %p179 = por %p177, %p178
      %p180 = scmp.ne.s32.totalorder %s171, %s172
      %p181 = scmp.eq.s32.totalorder %s35, 0
      %p182 = por %p180, %p181
      %p183 = scmp.ne.s32.totalorder %s171, %s172
      %p184 = scmp.eq.s32.totalorder %s36, 1
      %p185 = por %p183, %p184
      %p187 = scmp.ne.s32.totalorder %s172, %s186
      %p188 = scmp.eq.s32.totalorder %s36, 0
      %p189 = por %p187, %p188
      %s191 = sadd.s32 %s190, 1
      %p194 = scmp.eq.s32.totalorder %s30, 1
      %p195 = scmp.ne.s32.totalorder %s190, %s192
      %p196 = scmp.eq.s32.totalorder %s30, 0
      %p197 = por %p195, %p196
      %p198 = scmp.ne.s32.totalorder %s190, %s192
      %p199 = scmp.eq.s32.totalorder %s35, 1
      %p200 = por %p198, %p199
      %p201 = scmp.ne.s32.totalorder %s192, %s193
      %p202 = scmp.eq.s32.totalorder %s35, 0
      %p203 = por %p201, %p202
      %p204 = scmp.ne.s32.totalorder %s192, %s193
      %p205 = scmp.eq.s32.totalorder %s36, 1
      %p206 = por %p204, %p205
      %p208 = scmp.ne.s32.totalorder %s193, %s207
      %p209 = scmp.eq.s32.totalorder %s36, 0
      %p210 = por %p208, %p209
      %s212 = sadd.s32 %s211, 1
      %p215 = scmp.eq.s32.totalorder %s30, 1
      %p216 = scmp.ne.s32.totalorder %s211, %s213
      %p217 = scmp.eq.s32.totalorder %s30, 0
      %p218 = por %p216, %p217
      %p219 = scmp.ne.s32.totalorder %s211, %s213
      %p220 = scmp.eq.s32.totalorder %s35, 1
      %p221 = por %p219, %p220
      %p222 = scmp.ne.s32.totalorder %s213, %s214
      %p223 = scmp.eq.s32.totalorder %s35, 0
      %p224 = por %p222, %p223
      %p225 = scmp.ne.s32.totalorder %s213, %s214
      %p226 = scmp.eq.s32.totalorder %s36, 1
      %p227 = por %p225, %p226
      %p229 = scmp.ne.s32.totalorder %s214, %s228
      %p230 = scmp.eq.s32.totalorder %s36, 0
      %p231 = por %p229, %p230
      %s233 = sadd.s32 %s232, 1
      %p236 = scmp.eq.s32.totalorder %s30, 1
      %p237 = scmp.ne.s32.totalorder %s232, %s234
      %p238 = scmp.eq.s32.totalorder %s30, 0
      %p239 = por %p237, %p238
      %p240 = scmp.ne.s32.totalorder %s232, %s234
      %p241 = scmp.eq.s32.totalorder %s35, 1
      %p242 = por %p240, %p241
      %p243 = scmp.ne.s32.totalorder %s234, %s235
      %p244 = scmp.eq.s32.totalorder %s35, 0
      %p245 = por %p243, %p244
      %p246 = scmp.ne.s32.totalorder %s234, %s235
      %p247 = scmp.eq.s32.totalorder %s36, 1
      %p248 = por %p246, %p247
      %p250 = scmp.ne.s32.totalorder %s235, %s249
      %p251 = scmp.eq.s32.totalorder %s36, 0
      %p252 = por %p250, %p251
      %s254 = sadd.s32 %s253, 1
      %p257 = scmp.eq.s32.totalorder %s30, 1
      %p258 = scmp.ne.s32.totalorder %s253, %s255
      %p259 = scmp.eq.s32.totalorder %s30, 0
      %p260 = por %p258, %p259
      %p261 = scmp.ne.s32.totalorder %s253, %s255
      %p262 = scmp.eq.s32.totalorder %s35, 1
      %p263 = por %p261, %p262
      %p264 = scmp.ne.s32.totalorder %s255, %s256
      %p265 = scmp.eq.s32.totalorder %s35, 0
      %p266 = por %p264, %p265
      %p267 = scmp.ne.s32.totalorder %s255, %s256
      %p268 = scmp.eq.s32.totalorder %s36, 1
      %p269 = por %p267, %p268
      %p271 = scmp.ne.s32.totalorder %s256, %s270
      %p272 = scmp.eq.s32.totalorder %s36, 0
      %p273 = por %p271, %p272
      %s275 = sadd.s32 %s274, 1
      %p278 = scmp.eq.s32.totalorder %s30, 1
      %p279 = scmp.ne.s32.totalorder %s274, %s276
      %p280 = scmp.eq.s32.totalorder %s30, 0
      %p281 = por %p279, %p280
      %p282 = scmp.ne.s32.totalorder %s274, %s276
      %p283 = scmp.eq.s32.totalorder %s35, 1
      %p284 = por %p282, %p283
      %p285 = scmp.ne.s32.totalorder %s276, %s277
      %p286 = scmp.eq.s32.totalorder %s35, 0
      %p287 = por %p285, %p286
      %p288 = scmp.ne.s32.totalorder %s276, %s277
      %p289 = scmp.eq.s32.totalorder %s36, 1
      %p290 = por %p288, %p289
      %p292 = scmp.ne.s32.totalorder %s277, %s291
      %p293 = scmp.eq.s32.totalorder %s36, 0
      %p294 = por %p292, %p293
      %s296 = sadd.s32 %s295, 1
      %p299 = scmp.eq.s32.totalorder %s30, 1
      %p300 = scmp.ne.s32.totalorder %s295, %s297
      %p301 = scmp.eq.s32.totalorder %s30, 0
      %p302 = por %p300, %p301
      %p303 = scmp.ne.s32.totalorder %s295, %s297
      %p304 = scmp.eq.s32.totalorder %s35, 1
      %p305 = por %p303, %p304
      %p306 = scmp.ne.s32.totalorder %s297, %s298
      %p307 = scmp.eq.s32.totalorder %s35, 0
      %p308 = por %p306, %p307
      %p309 = scmp.ne.s32.totalorder %s297, %s298
      %p310 = scmp.eq.s32.totalorder %s36, 1
      %p311 = por %p309, %p310
      %p313 = scmp.ne.s32.totalorder %s298, %s312
      %p314 = scmp.eq.s32.totalorder %s36, 0
      %p315 = por %p313, %p314
      %s317 = sadd.s32 %s316, 1
      %p320 = scmp.eq.s32.totalorder %s30, 1
      %p321 = scmp.ne.s32.totalorder %s316, %s318
      %p322 = scmp.eq.s32.totalorder %s30, 0
      %p323 = por %p321, %p322
      %p324 = scmp.ne.s32.totalorder %s316, %s318
      %p325 = scmp.eq.s32.totalorder %s35, 1
      %p326 = por %p324, %p325
      %p327 = scmp.ne.s32.totalorder %s318, %s319
      %p328 = scmp.eq.s32.totalorder %s35, 0
      %p329 = por %p327, %p328
      %p330 = scmp.ne.s32.totalorder %s318, %s319
      %p331 = scmp.eq.s32.totalorder %s36, 1
      %p332 = por %p330, %p331
      %p334 = scmp.ne.s32.totalorder %s319, %s333
      %p335 = scmp.eq.s32.totalorder %s36, 0
      %p336 = por %p334, %p335
      %s337 = ssub.s32 %s30, %s37
      %p338 = scmp.eq.s32.totalorder %s337, 0
      %s340 = sadd.s32 %s339, 1
      %s341 = scalar_select %p338, %s339, %s340
      %p344 = pneg %p338
      %p345 = scmp.eq.s32.totalorder %s30, 1
      %p346 = por %p344, %p345
      %p347 = scmp.ne.s32.totalorder %s339, %s342
      %p348 = scmp.eq.s32.totalorder %s30, 0
      %p349 = por %p347, %p348
      %p350 = scmp.ne.s32.totalorder %s339, %s342
      %p351 = scmp.eq.s32.totalorder %s35, 1
      %p352 = por %p350, %p351
      %p353 = scmp.ne.s32.totalorder %s342, %s343
      %p354 = scmp.eq.s32.totalorder %s35, 0
      %p355 = por %p353, %p354
      %p356 = scmp.ne.s32.totalorder %s342, %s343
      %p357 = scmp.eq.s32.totalorder %s36, 1
      %p358 = por %p356, %p357
      %p360 = scmp.ne.s32.totalorder %s343, %s359
      %p361 = scmp.eq.s32.totalorder %s36, 0
      %p362 = por %p360, %p361
      %p363 = scmp.le.s32.totalorder 1, %s30
      %p364 = scmp.lt.s32.totalorder %s30, 3
      %p365 = pnand %p363, %p364
      %p366 = pneg %p365
      // Predicated region
      $region9: #{tpu_custom_call.1} parent=5 // pred_check
        _
      $region10: #{tpu_custom_call.1} parent=5 // pred_check_branch
        %368 = sbr.rel (%p365) target = $region12
      $region11: #{tpu_custom_call.1} parent=5 // pred_region
        %s369 = ssub.s32 %s30, 1
        // Predicated region
        $region13: #{tpu_custom_call.1} parent=11 // pred_check
          %p370 = pneg %p77
        $region14: #{tpu_custom_call.1} parent=11 // pred_check_branch
          %372 = sbr.rel (%p370) target = $region16
        $region15: #{tpu_custom_call.1} parent=11 // pred_region
          %374 = vsyncadd [#allocation3], 0
          %s375 = sshll.u32 %s1, 4
          %s376 = int_to_ptr.hbm [resolvable:$true] %s375
          %s377 = sshll.u32 [#allocation2], 4
          %s378 = int_to_ptr.vmem [resolvable:$true] %s377
          %383 = dma.hbm_to_vmem [thread:$0]  %s376, 384, %s378, [#allocation3], 64, 64, 4
        $region16: #{tpu_custom_call.1} parent=11 // pred_fallthru
          _
        // Predicated region
        $region17: #{tpu_custom_call.1} parent=11 // pred_check
          %p384 = pneg %p98
        $region18: #{tpu_custom_call.1} parent=11 // pred_check_branch
          %386 = sbr.rel (%p384) target = $region20
        $region19: #{tpu_custom_call.1} parent=11 // pred_region
          %388 = vsyncadd [#allocation6], 0
          %s389 = sshll.u32 %s2, 4
          %s390 = int_to_ptr.hbm [resolvable:$true] %s389
          %s391 = sshll.u32 [#allocation5], 4
          %s392 = int_to_ptr.vmem [resolvable:$true] %s391
          %397 = dma.hbm_to_vmem [thread:$0]  %s390, 3072, %s392, [#allocation6], 256, 256, 16
        $region20: #{tpu_custom_call.1} parent=11 // pred_fallthru
          _
        // Predicated region
        $region21: #{tpu_custom_call.1} parent=11 // pred_check
          %p398 = pneg %p119
        $region22: #{tpu_custom_call.1} parent=11 // pred_check_branch
          %400 = sbr.rel (%p398) target = $region24
        $region23: #{tpu_custom_call.1} parent=11 // pred_region
          %402 = vsyncadd [#allocation6], 0
          %s404 = sshll.u32 %s3, 4
          %s405 = int_to_ptr.hbm [resolvable:$true] %s404
          %s406 = sshll.u32 [#allocation7], 4
          %s407 = int_to_ptr.vmem [resolvable:$true] %s406
          %409 = dma.hbm_to_vmem [thread:$0]  %s405, 64, %s407, [#allocation6]
        $region24: #{tpu_custom_call.1} parent=11 // pred_fallthru
          _
        // Predicated region
        $region25: #{tpu_custom_call.1} parent=11 // pred_check
          %p410 = pneg %p140
        $region26: #{tpu_custom_call.1} parent=11 // pred_check_branch
          %412 = sbr.rel (%p410) target = $region28
        $region27: #{tpu_custom_call.1} parent=11 // pred_region
          %414 = vsyncadd [#allocation9], 0
          %s415 = sshll.u32 %s4, 4
          %s416 = int_to_ptr.hbm [resolvable:$true] %s415
          %s417 = sshll.u32 [#allocation8], 4
          %s418 = int_to_ptr.vmem [resolvable:$true] %s417
          %423 = dma.hbm_to_vmem [thread:$0]  %s416, 192, %s418, [#allocation9], 64, 64, 4
        $region28: #{tpu_custom_call.1} parent=11 // pred_fallthru
          _
        // Predicated region
        $region29: #{tpu_custom_call.1} parent=11 // pred_check
          %p424 = pneg %p161
        $region30: #{tpu_custom_call.1} parent=11 // pred_check_branch
          %426 = sbr.rel (%p424) target = $region32
        $region31: #{tpu_custom_call.1} parent=11 // pred_region
          %428 = vsyncadd [#allocation9], 0
          %s429 = sshll.u32 %s5, 4
          %s430 = int_to_ptr.hbm [resolvable:$true] %s429
          %s431 = sshll.u32 [#allocation10], 4
          %s432 = int_to_ptr.vmem [resolvable:$true] %s431
          %437 = dma.hbm_to_vmem [thread:$0]  %s430, 43008, %s432, [#allocation9], 256, 256, 16
        $region32: #{tpu_custom_call.1} parent=11 // pred_fallthru
          _
        // Predicated region
        $region33: #{tpu_custom_call.1} parent=11 // pred_check
          %p438 = pneg %p182
        $region34: #{tpu_custom_call.1} parent=11 // pred_check_branch
          %440 = sbr.rel (%p438) target = $region36
        $region35: #{tpu_custom_call.1} parent=11 // pred_region
          %442 = vsyncadd [#allocation12], 0
          %s444 = sshll.u32 %s6, 4
          %s445 = int_to_ptr.hbm [resolvable:$true] %s444
          %s446 = sshll.u32 [#allocation11], 4
          %s447 = int_to_ptr.vmem [resolvable:$true] %s446
          %449 = dma.hbm_to_vmem [thread:$0]  %s445, 64, %s447, [#allocation12]
        $region36: #{tpu_custom_call.1} parent=11 // pred_fallthru
          _
        // Predicated region
        $region37: #{tpu_custom_call.1} parent=11 // pred_check
          %p450 = pneg %p203
        $region38: #{tpu_custom_call.1} parent=11 // pred_check_branch
          %452 = sbr.rel (%p450) target = $region40
        $region39: #{tpu_custom_call.1} parent=11 // pred_region
          %454 = vsyncadd [#allocation12], 0
          %s455 = sshll.u32 %s7, 4
          %s456 = int_to_ptr.hbm [resolvable:$true] %s455
          %s457 = sshll.u32 [#allocation13], 4
          %s458 = int_to_ptr.vmem [resolvable:$true] %s457
          %463 = dma.hbm_to_vmem [thread:$0]  %s456, 96, %s458, [#allocation12], 32, 32, 2
        $region40: #{tpu_custom_call.1} parent=11 // pred_fallthru
          _
        // Predicated region
        $region41: #{tpu_custom_call.1} parent=11 // pred_check
          %p464 = pneg %p224
        $region42: #{tpu_custom_call.1} parent=11 // pred_check_branch
          %466 = sbr.rel (%p464) target = $region44
        $region43: #{tpu_custom_call.1} parent=11 // pred_region
          %468 = vsyncadd [#allocation15], 0
          %s469 = sshll.u32 %s8, 4
          %s470 = int_to_ptr.hbm [resolvable:$true] %s469
          %s471 = sshll.u32 [#allocation14], 4
          %s472 = int_to_ptr.vmem [resolvable:$true] %s471
          %477 = dma.hbm_to_vmem [thread:$0]  %s470, 43008, %s472, [#allocation15], 256, 256, 16
        $region44: #{tpu_custom_call.1} parent=11 // pred_fallthru
          _
        // Predicated region
        $region45: #{tpu_custom_call.1} parent=11 // pred_check
          %p478 = pneg %p245
        $region46: #{tpu_custom_call.1} parent=11 // pred_check_branch
          %480 = sbr.rel (%p478) target = $region48
        $region47: #{tpu_custom_call.1} parent=11 // pred_region
          %482 = vsyncadd [#allocation15], 0
          %s484 = sshll.u32 %s9, 4
          %s485 = int_to_ptr.hbm [resolvable:$true] %s484
          %s486 = sshll.u32 [#allocation16], 4
          %s487 = int_to_ptr.vmem [resolvable:$true] %s486
          %489 = dma.hbm_to_vmem [thread:$0]  %s485, 64, %s487, [#allocation15]
        $region48: #{tpu_custom_call.1} parent=11 // pred_fallthru
          _
        // Predicated region
        $region49: #{tpu_custom_call.1} parent=11 // pred_check
          %p490 = pneg %p266
        $region50: #{tpu_custom_call.1} parent=11 // pred_check_branch
          %492 = sbr.rel (%p490) target = $region52
        $region51: #{tpu_custom_call.1} parent=11 // pred_region
          %494 = vsyncadd [#allocation18], 0
          %s495 = sshll.u32 %s10, 4
          %s496 = int_to_ptr.hbm [resolvable:$true] %s495
          %s497 = sshll.u32 [#allocation17], 4
          %s498 = int_to_ptr.vmem [resolvable:$true] %s497
          %503 = dma.hbm_to_vmem [thread:$0]  %s496, 16384, %s498, [#allocation18], 64, 64, 4
        $region52: #{tpu_custom_call.1} parent=11 // pred_fallthru
          _
        // Predicated region
        $region53: #{tpu_custom_call.1} parent=11 // pred_check
          %p504 = pneg %p287
        $region54: #{tpu_custom_call.1} parent=11 // pred_check_branch
          %506 = sbr.rel (%p504) target = $region56
        $region55: #{tpu_custom_call.1} parent=11 // pred_region
          %508 = vsyncadd [#allocation18], 0
          %s510 = sshll.u32 %s11, 4
          %s511 = int_to_ptr.hbm [resolvable:$true] %s510
          %s512 = sshll.u32 [#allocation19], 4
          %s513 = int_to_ptr.vmem [resolvable:$true] %s512
          %515 = dma.hbm_to_vmem [thread:$0]  %s511, 16, %s513, [#allocation18]
        $region56: #{tpu_custom_call.1} parent=11 // pred_fallthru
          _
        // Predicated region
        $region57: #{tpu_custom_call.1} parent=11 // pred_check
          %p516 = pneg %p308
        $region58: #{tpu_custom_call.1} parent=11 // pred_check_branch
          %518 = sbr.rel (%p516) target = $region60
        $region59: #{tpu_custom_call.1} parent=11 // pred_region
          %520 = vsyncadd [#allocation21], 0
          %s521 = sshll.u32 %s12, 4
          %s522 = int_to_ptr.hbm [resolvable:$true] %s521
          %s523 = sshll.u32 [#allocation20], 4
          %s524 = int_to_ptr.vmem [resolvable:$true] %s523
          %529 = dma.hbm_to_vmem [thread:$0]  %s522, 1024, %s524, [#allocation21], 64, 64, 4
        $region60: #{tpu_custom_call.1} parent=11 // pred_fallthru
          _
        // Predicated region
        $region61: #{tpu_custom_call.1} parent=11 // pred_check
          %p530 = pneg %p329
        $region62: #{tpu_custom_call.1} parent=11 // pred_check_branch
          %532 = sbr.rel (%p530) target = $region64
        $region63: #{tpu_custom_call.1} parent=11 // pred_region
          %534 = vsyncadd [#allocation21], 0
          %s536 = sshll.u32 %s13, 4
          %s537 = int_to_ptr.hbm [resolvable:$true] %s536
          %s538 = sshll.u32 [#allocation22], 4
          %s539 = int_to_ptr.vmem [resolvable:$true] %s538
          %541 = dma.hbm_to_vmem [thread:$0]  %s537, 16, %s539, [#allocation21]
        $region64: #{tpu_custom_call.1} parent=11 // pred_fallthru
          _
      $region12: #{tpu_custom_call.1} parent=5 // pred_fallthru
        _
      %p542 = scmp.lt.s32.totalorder %s30, 2
      // Predicated region
      $region65: #{tpu_custom_call.1} parent=5 // pred_check
        %p543 = pneg %p542
      $region66: #{tpu_custom_call.1} parent=5 // pred_check_branch
        %545 = sbr.rel (%p543) target = $region68
      $region67: #{tpu_custom_call.1} parent=5 // pred_region
        // Predicated region
        $region69: #{tpu_custom_call.1} parent=67 // pred_check
          %p546 = pneg %p50
        $region70: #{tpu_custom_call.1} parent=67 // pred_check_branch
          %548 = sbr.rel (%p546) target = $region72
        $region71: #{tpu_custom_call.1} parent=67 // pred_region
          %p549 = scmp.lt.s32.totalorder %s30, 1
          %s550 = scalar_select %p549, %s30, 1
          %s551 = smul.addr %s550, 4
          %s552 = smul.addr %s551, 8
          %s553 = scalar_lea.vmem %s0, %s552
        $region72: #{tpu_custom_call.1} parent=67 // pred_fallthru
          _
      $region68: #{tpu_custom_call.1} parent=5 // pred_fallthru
        _
      %p554 = scmp.le.s32.totalorder 1, %s30
      %p555 = scmp.lt.s32.totalorder %s30, 3
      %p556 = pnand %p554, %p555
      %p557 = pneg %p556
      // Predicated region
      $region73: #{tpu_custom_call.1} parent=5 // pred_check
        _
      $region74: #{tpu_custom_call.1} parent=5 // pred_check_branch
        %559 = sbr.rel (%p556) target = $region76
      $region75: #{tpu_custom_call.1} parent=5 // pred_region
        %s560 = ssub.s32 %s30, 1
        // Predicated region
        $region77: #{tpu_custom_call.1} parent=75 // pred_check
          %p561 = pneg %p77
        $region78: #{tpu_custom_call.1} parent=75 // pred_check_branch
          %563 = sbr.rel (%p561) target = $region80
        $region79: #{tpu_custom_call.1} parent=75 // pred_region
          %565 = dma.done [#allocation3], 384
        $region80: #{tpu_custom_call.1} parent=75 // pred_fallthru
          _
        // Predicated region
        $region81: #{tpu_custom_call.1} parent=75 // pred_check
          %p566 = pneg %p98
        $region82: #{tpu_custom_call.1} parent=75 // pred_check_branch
          %568 = sbr.rel (%p566) target = $region84
        $region83: #{tpu_custom_call.1} parent=75 // pred_region
          %570 = dma.done [#allocation6], 3072
        $region84: #{tpu_custom_call.1} parent=75 // pred_fallthru
          _
        // Predicated region
        $region85: #{tpu_custom_call.1} parent=75 // pred_check
          %p571 = pneg %p119
        $region86: #{tpu_custom_call.1} parent=75 // pred_check_branch
          %573 = sbr.rel (%p571) target = $region88
        $region87: #{tpu_custom_call.1} parent=75 // pred_region
          %575 = dma.done [#allocation6], 64
        $region88: #{tpu_custom_call.1} parent=75 // pred_fallthru
          _
        // Predicated region
        $region89: #{tpu_custom_call.1} parent=75 // pred_check
          %p576 = pneg %p140
        $region90: #{tpu_custom_call.1} parent=75 // pred_check_branch
          %578 = sbr.rel (%p576) target = $region92
        $region91: #{tpu_custom_call.1} parent=75 // pred_region
          %580 = dma.done [#allocation9], 192
        $region92: #{tpu_custom_call.1} parent=75 // pred_fallthru
          _
        // Predicated region
        $region93: #{tpu_custom_call.1} parent=75 // pred_check
          %p581 = pneg %p161
        $region94: #{tpu_custom_call.1} parent=75 // pred_check_branch
          %583 = sbr.rel (%p581) target = $region96
        $region95: #{tpu_custom_call.1} parent=75 // pred_region
          %585 = dma.done [#allocation9], 43008
        $region96: #{tpu_custom_call.1} parent=75 // pred_fallthru
          _
        // Predicated region
        $region97: #{tpu_custom_call.1} parent=75 // pred_check
          %p586 = pneg %p182
        $region98: #{tpu_custom_call.1} parent=75 // pred_check_branch
          %588 = sbr.rel (%p586) target = $region100
        $region99: #{tpu_custom_call.1} parent=75 // pred_region
          %590 = dma.done [#allocation12], 64
        $region100: #{tpu_custom_call.1} parent=75 // pred_fallthru
          _
        // Predicated region
        $region101: #{tpu_custom_call.1} parent=75 // pred_check
          %p591 = pneg %p203
        $region102: #{tpu_custom_call.1} parent=75 // pred_check_branch
          %593 = sbr.rel (%p591) target = $region104
        $region103: #{tpu_custom_call.1} parent=75 // pred_region
          %595 = dma.done [#allocation12], 96
        $region104: #{tpu_custom_call.1} parent=75 // pred_fallthru
          _
        // Predicated region
        $region105: #{tpu_custom_call.1} parent=75 // pred_check
          %p596 = pneg %p224
        $region106: #{tpu_custom_call.1} parent=75 // pred_check_branch
          %598 = sbr.rel (%p596) target = $region108
        $region107: #{tpu_custom_call.1} parent=75 // pred_region
          %600 = dma.done [#allocation15], 43008
        $region108: #{tpu_custom_call.1} parent=75 // pred_fallthru
          _
        // Predicated region
        $region109: #{tpu_custom_call.1} parent=75 // pred_check
          %p601 = pneg %p245
        $region110: #{tpu_custom_call.1} parent=75 // pred_check_branch
          %603 = sbr.rel (%p601) target = $region112
        $region111: #{tpu_custom_call.1} parent=75 // pred_region
          %605 = dma.done [#allocation15], 64
        $region112: #{tpu_custom_call.1} parent=75 // pred_fallthru
          _
        // Predicated region
        $region113: #{tpu_custom_call.1} parent=75 // pred_check
          %p606 = pneg %p266
        $region114: #{tpu_custom_call.1} parent=75 // pred_check_branch
          %608 = sbr.rel (%p606) target = $region116
        $region115: #{tpu_custom_call.1} parent=75 // pred_region
          %610 = dma.done [#allocation18], 16384
        $region116: #{tpu_custom_call.1} parent=75 // pred_fallthru
          _
        // Predicated region
        $region117: #{tpu_custom_call.1} parent=75 // pred_check
          %p611 = pneg %p287
        $region118: #{tpu_custom_call.1} parent=75 // pred_check_branch
          %613 = sbr.rel (%p611) target = $region120
        $region119: #{tpu_custom_call.1} parent=75 // pred_region
          %615 = dma.done [#allocation18], 16
        $region120: #{tpu_custom_call.1} parent=75 // pred_fallthru
          _
        // Predicated region
        $region121: #{tpu_custom_call.1} parent=75 // pred_check
          %p616 = pneg %p308
        $region122: #{tpu_custom_call.1} parent=75 // pred_check_branch
          %618 = sbr.rel (%p616) target = $region124
        $region123: #{tpu_custom_call.1} parent=75 // pred_region
          %620 = dma.done [#allocation21], 1024
        $region124: #{tpu_custom_call.1} parent=75 // pred_fallthru
          _
        // Predicated region
        $region125: #{tpu_custom_call.1} parent=75 // pred_check
          %p621 = pneg %p329
        $region126: #{tpu_custom_call.1} parent=75 // pred_check_branch
          %623 = sbr.rel (%p621) target = $region128
        $region127: #{tpu_custom_call.1} parent=75 // pred_region
          %625 = dma.done [#allocation21], 16
        $region128: #{tpu_custom_call.1} parent=75 // pred_fallthru
          _
        %p626 = scmp.lt.s32.totalorder %s35, 1
        %s627 = scalar_select %p626, %s35, 1
        %s628 = smul.addr %s627, 4
        %s629 = smul.addr %s628, 8
        %s630 = scalar_lea.vmem %s0, %s629
        %p631 = pneg %p56
        %p632 = pneg %p53
        %p633 = pneg %p77
        %p634 = pneg %p74
        %p635 = pneg %p98
        %p636 = pneg %p95
        %p637 = pneg %p119
        %p638 = pneg %p116
        %p639 = pneg %p140
        %p640 = pneg %p137
        %p641 = pneg %p161
        %p642 = pneg %p158
        %p643 = pneg %p182
        %p644 = pneg %p179
        %p645 = pneg %p203
        %p646 = pneg %p200
        %p647 = pneg %p224
        %p648 = pneg %p221
        %p649 = pneg %p245
        %p650 = pneg %p242
        %p651 = pneg %p266
        %p652 = pneg %p263
        %p653 = pneg %p287
        %p654 = pneg %p284
        %p655 = pneg %p308
        %p656 = pneg %p305
        %p657 = pneg %p329
        %p658 = pneg %p326
        %p659 = pneg %p355
        %p660 = pneg %p352
        %s661 = sand.u32 %s342, 1
        %s662 = scalar_lea.sflag [#allocation4], %s661
        %s663 = sand.u32 %s342, 1
        %s664 = scalar_lea.vmem [#allocation23], %s663
        %p665 = scmp.lt.s32.totalorder %s35, 1
        %s666 = scalar_select %p665, %s35, 1
        %s667 = smul.addr %s666, 4
        %s668 = smul.addr %s667, 8
        %s669 = scalar_lea.vmem %s0, %s668
        %v671 = vld [vmem:[%s669] sm:$0xff]
        %v672 = vld [vmem:[%s669 + $0x8] sm:$0xff]
        %v673 = vld [vmem:[%s669 + $0x10] sm:$0xff]
        %v674 = vld [vmem:[%s669 + $0x18] sm:$0xf]
        %v675 = vpack.c.bf16 %v672, %v671
        %v676 = vpack.c.bf16 %v674, %v673
        %v677 = vld [vmem:[#allocation2] sm:$0xf]
        %v678 = vld [vmem:[#allocation2 + $0x4] sm:$0x7]
        %v681 = vunpack.c.l.b16 %v677
        %v682 = vunpack.c.l.b16 %v678
        %v683 = vpack.c.b16 %v682, %v681
        %vm684 = vcmask 228352
        %v686 = vsel %vm684, %v683, 0
        %vm688 = vcmask 1045504
        %v690 = vsel %vm688, %v676, 0
        %692 = vmatpush.bf16.msra.mxu0 0
        %693 = vmatpush.bf16.msra.mxu0 0
        %694 = vmatpush.bf16.msra.mxu0 0
        %695 = vmatpush.bf16.msra.mxu0 0
        %696 = vmatpush.bf16.msra.mxu0 0
        %697 = vmatpush.bf16.msra.mxu0 0
        %698 = vmatpush.bf16.msra.mxu0 %v690
        %699 = vmatpush.bf16.msra.mxu0 %v675
        %700 = vmatmul.bf16.gmra.mxu0 %v686
        %v701 = vpop.f32.mrf.mxu0
        %v702 = vadd.f32 0.0, %v701
        %v703 = vpop.f32.mrf.mxu0
        %v704 = vadd.f32 0.0, %v703
        %705 = vdwg.mxu0
        %v706 = vpack.c.bf16 %v704, %v702
        %v707 = vld [vmem:[#allocation5] sm:$0xff]
        %v708 = vld [vmem:[#allocation5 + $0x8] sm:$0xff]
        %v709 = vld [vmem:[#allocation5 + $0x10] sm:$0xff]
        %v710 = vld [vmem:[#allocation5 + $0x18] sm:$0xff]
        %v711 = vld [vmem:[#allocation5 + $0x20] sm:$0xff]
        %v712 = vld [vmem:[#allocation5 + $0x28] sm:$0xff]
        %v713 = vld [vmem:[#allocation5 + $0x30] sm:$0x33]
        %v714 = vld [vmem:[#allocation5 + $0x38] sm:$0x33]
        %s715 = scalar_lea.vmem [#allocation2], 8
        %v716 = vld [vmem:[%s715] sm:$0xf]
        %v717 = vld [vmem:[%s715 + $0x4] sm:$0x7]
        %v720 = vunpack.c.l.b16 %v716
        %v721 = vunpack.c.l.b16 %v717
        %v722 = vpack.c.b16 %v721, %v720
        %v724 = vsel %vm684, %v722, 0
        %726 = vmatpush.bf16.msra.mxu0 0
        %727 = vmatpush.bf16.msra.mxu0 0
        %728 = vmatpush.bf16.msra.mxu0 0
        %729 = vmatpush.bf16.msra.mxu0 0
        %730 = vmatpush.bf16.msra.mxu0 0
        %731 = vmatpush.bf16.msra.mxu0 0
        %732 = vmatpush.bf16.msra.mxu0 %v690
        %733 = vmatpush.bf16.msra.mxu0 %v675
        %734 = vmatmul.bf16.gmra.mxu0 %v724
        %v735 = vpop.f32.mrf.mxu0
        %v736 = vadd.f32 0.0, %v735
        %v737 = vpop.f32.mrf.mxu0
        %v738 = vadd.f32 0.0, %v737
        %739 = vdwg.mxu0
        %v740 = vpack.c.bf16 %v738, %v736
        %s741 = scalar_lea.vmem [#allocation5], 64
        %v742 = vld [vmem:[%s741] sm:$0xff]
        %v743 = vld [vmem:[%s741 + $0x8] sm:$0xff]
        %v744 = vld [vmem:[%s741 + $0x10] sm:$0xff]
        %v745 = vld [vmem:[%s741 + $0x18] sm:$0xff]
        %v746 = vld [vmem:[%s741 + $0x20] sm:$0xff]
        %v747 = vld [vmem:[%s741 + $0x28] sm:$0xff]
        %v748 = vld [vmem:[%s741 + $0x30] sm:$0x33]
        %v749 = vld [vmem:[%s741 + $0x38] sm:$0x33]
        %v758 = vunpack.c.l.b16 %v742
        %v759 = vunpack.c.h.b16 %v742
        %v760 = vunpack.c.l.b16 %v743
        %v761 = vunpack.c.h.b16 %v743
        %v762 = vunpack.c.l.b16 %v744
        %v763 = vunpack.c.h.b16 %v744
        %v764 = vunpack.c.l.b16 %v745
        %v765 = vunpack.c.h.b16 %v745
        %v766 = vunpack.c.l.b16 %v746
        %v767 = vunpack.c.h.b16 %v746
        %v768 = vunpack.c.l.b16 %v747
        %v769 = vunpack.c.h.b16 %v747
        %v770 = vunpack.c.l.b16 %v748
        %v771 = vunpack.c.h.b16 %v748
        %v772 = vunpack.c.l.b16 %v749
        %v773 = vunpack.c.h.b16 %v749
        %v774 = vpack.c.b16 %v762, %v758
        %v775 = vpack.c.b16 %v763, %v759
        %v776 = vpack.c.b16 %v764, %v760
        %v777 = vpack.c.b16 %v765, %v761
        %v778 = vpack.c.b16 %v770, %v766
        %v779 = vpack.c.b16 %v771, %v767
        %v780 = vpack.c.b16 %v772, %v768
        %v781 = vpack.c.b16 %v773, %v769
        %v787 = vsel %vm684, %v740, 0
        %v790 = vsel %vm688, %v778, 0
        %v793 = vsel %vm688, %v779, 0
        %v796 = vsel %vm688, %v780, 0
        %v799 = vsel %vm688, %v781, 0
        %801 = vmatpush.bf16.msra.mxu0 0
        %802 = vmatpush.bf16.msra.mxu0 0
        %803 = vmatpush.bf16.msra.mxu0 0
        %804 = vmatpush.bf16.msra.mxu0 0
        %805 = vmatpush.bf16.msra.mxu0 0
        %806 = vmatpush.bf16.msra.mxu0 0
        %807 = vmatpush.bf16.msra.mxu0 %v790
        %808 = vmatpush.bf16.msra.mxu0 %v774
        %809 = vmatmul.bf16.gmra.mxu0 %v787
        %v810 = vpop.f32.mrf.mxu0
        %v811 = vadd.f32 0.0, %v810
        %v812 = vpop.f32.mrf.mxu0
        %v813 = vadd.f32 0.0, %v812
        %814 = vdwg.mxu0
        %815 = vmatpush.bf16.msra.mxu0 0
        %816 = vmatpush.bf16.msra.mxu0 0
        %817 = vmatpush.bf16.msra.mxu0 0
        %818 = vmatpush.bf16.msra.mxu0 0
        %819 = vmatpush.bf16.msra.mxu0 0
        %820 = vmatpush.bf16.msra.mxu0 0
        %821 = vmatpush.bf16.msra.mxu0 %v793
        %822 = vmatpush.bf16.msra.mxu0 %v775
        %823 = vmatmul.bf16.gmra.mxu0 %v787
        %v824 = vpop.f32.mrf.mxu0
        %v825 = vadd.f32 0.0, %v824
        %v826 = vpop.f32.mrf.mxu0
        %v827 = vadd.f32 0.0, %v826
        %828 = vdwg.mxu0
        %829 = vmatpush.bf16.msra.mxu0 0
        %830 = vmatpush.bf16.msra.mxu0 0
        %831 = vmatpush.bf16.msra.mxu0 0
        %832 = vmatpush.bf16.msra.mxu0 0
        %833 = vmatpush.bf16.msra.mxu0 0
        %834 = vmatpush.bf16.msra.mxu0 0
        %835 = vmatpush.bf16.msra.mxu0 %v796
        %836 = vmatpush.bf16.msra.mxu0 %v776
        %837 = vmatmul.bf16.gmra.mxu0 %v787
        %v838 = vpop.f32.mrf.mxu0
        %v839 = vadd.f32 0.0, %v838
        %v840 = vpop.f32.mrf.mxu0
        %v841 = vadd.f32 0.0, %v840
        %842 = vdwg.mxu0
        %843 = vmatpush.bf16.msra.mxu0 0
        %844 = vmatpush.bf16.msra.mxu0 0
        %845 = vmatpush.bf16.msra.mxu0 0
        %846 = vmatpush.bf16.msra.mxu0 0
        %847 = vmatpush.bf16.msra.mxu0 0
        %848 = vmatpush.bf16.msra.mxu0 0
        %849 = vmatpush.bf16.msra.mxu0 %v799
        %850 = vmatpush.bf16.msra.mxu0 %v777
        %851 = vmatmul.bf16.gmra.mxu0 %v787
        %v852 = vpop.f32.mrf.mxu0
        %v853 = vadd.f32 0.0, %v852
        %v854 = vpop.f32.mrf.mxu0
        %v855 = vadd.f32 0.0, %v854
        %856 = vdwg.mxu0
        %v865 = vunpack.c.l.b16 %v707
        %v866 = vunpack.c.h.b16 %v707
        %v867 = vunpack.c.l.b16 %v708
        %v868 = vunpack.c.h.b16 %v708
        %v869 = vunpack.c.l.b16 %v709
        %v870 = vunpack.c.h.b16 %v709
        %v871 = vunpack.c.l.b16 %v710
        %v872 = vunpack.c.h.b16 %v710
        %v873 = vunpack.c.l.b16 %v711
        %v874 = vunpack.c.h.b16 %v711
        %v875 = vunpack.c.l.b16 %v712
        %v876 = vunpack.c.h.b16 %v712
        %v877 = vunpack.c.l.b16 %v713
        %v878 = vunpack.c.h.b16 %v713
        %v879 = vunpack.c.l.b16 %v714
        %v880 = vunpack.c.h.b16 %v714
        %v881 = vpack.c.b16 %v869, %v865
        %v882 = vpack.c.b16 %v870, %v866
        %v883 = vpack.c.b16 %v871, %v867
        %v884 = vpack.c.b16 %v872, %v868
        %v885 = vpack.c.b16 %v877, %v873
        %v886 = vpack.c.b16 %v878, %v874
        %v887 = vpack.c.b16 %v879, %v875
        %v888 = vpack.c.b16 %v880, %v876
        %v894 = vsel %vm684, %v706, 0
        %v897 = vsel %vm688, %v885, 0
        %v900 = vsel %vm688, %v886, 0
        %v903 = vsel %vm688, %v887, 0
        %v906 = vsel %vm688, %v888, 0
        %908 = vmatpush.bf16.msra.mxu0 0
        %909 = vmatpush.bf16.msra.mxu0 0
        %910 = vmatpush.bf16.msra.mxu0 0
        %911 = vmatpush.bf16.msra.mxu0 0
        %912 = vmatpush.bf16.msra.mxu0 0
        %913 = vmatpush.bf16.msra.mxu0 0
        %914 = vmatpush.bf16.msra.mxu0 %v897
        %915 = vmatpush.bf16.msra.mxu0 %v881
        %916 = vmatmul.bf16.gmra.mxu0 %v894
        %v917 = vpop.f32.mrf.mxu0
        %v918 = vadd.f32 %v811, %v917
        %v919 = vpop.f32.mrf.mxu0
        %v920 = vadd.f32 %v813, %v919
        %921 = vdwg.mxu0
        %922 = vmatpush.bf16.msra.mxu0 0
        %923 = vmatpush.bf16.msra.mxu0 0
        %924 = vmatpush.bf16.msra.mxu0 0
        %925 = vmatpush.bf16.msra.mxu0 0
        %926 = vmatpush.bf16.msra.mxu0 0
        %927 = vmatpush.bf16.msra.mxu0 0
        %928 = vmatpush.bf16.msra.mxu0 %v900
        %929 = vmatpush.bf16.msra.mxu0 %v882
        %930 = vmatmul.bf16.gmra.mxu0 %v894
        %v931 = vpop.f32.mrf.mxu0
        %v932 = vadd.f32 %v825, %v931
        %v933 = vpop.f32.mrf.mxu0
        %v934 = vadd.f32 %v827, %v933
        %935 = vdwg.mxu0
        %936 = vmatpush.bf16.msra.mxu0 0
        %937 = vmatpush.bf16.msra.mxu0 0
        %938 = vmatpush.bf16.msra.mxu0 0
        %939 = vmatpush.bf16.msra.mxu0 0
        %940 = vmatpush.bf16.msra.mxu0 0
        %941 = vmatpush.bf16.msra.mxu0 0
        %942 = vmatpush.bf16.msra.mxu0 %v903
        %943 = vmatpush.bf16.msra.mxu0 %v883
        %944 = vmatmul.bf16.gmra.mxu0 %v894
        %v945 = vpop.f32.mrf.mxu0
        %v946 = vadd.f32 %v839, %v945
        %v947 = vpop.f32.mrf.mxu0
        %v948 = vadd.f32 %v841, %v947
        %949 = vdwg.mxu0
        %950 = vmatpush.bf16.msra.mxu0 0
        %951 = vmatpush.bf16.msra.mxu0 0
        %952 = vmatpush.bf16.msra.mxu0 0
        %953 = vmatpush.bf16.msra.mxu0 0
        %954 = vmatpush.bf16.msra.mxu0 0
        %955 = vmatpush.bf16.msra.mxu0 0
        %956 = vmatpush.bf16.msra.mxu0 %v906
        %957 = vmatpush.bf16.msra.mxu0 %v884
        %958 = vmatmul.bf16.gmra.mxu0 %v894
        %v959 = vpop.f32.mrf.mxu0
        %v960 = vadd.f32 %v853, %v959
        %v961 = vpop.f32.mrf.mxu0
        %v962 = vadd.f32 %v855, %v961
        %963 = vdwg.mxu0
        %s964 = scalar_lea.vmem [#allocation2], 16
        %v965 = vld [vmem:[%s964] sm:$0xf]
        %v966 = vld [vmem:[%s964 + $0x4] sm:$0x7]
        %v969 = vunpack.c.l.b16 %v965
        %v970 = vunpack.c.l.b16 %v966
        %v971 = vpack.c.b16 %v970, %v969
        %v973 = vsel %vm684, %v971, 0
        %975 = vmatpush.bf16.msra.mxu0 0
        %976 = vmatpush.bf16.msra.mxu0 0
        %977 = vmatpush.bf16.msra.mxu0 0
        %978 = vmatpush.bf16.msra.mxu0 0
        %979 = vmatpush.bf16.msra.mxu0 0
        %980 = vmatpush.bf16.msra.mxu0 0
        %981 = vmatpush.bf16.msra.mxu0 %v690
        %982 = vmatpush.bf16.msra.mxu0 %v675
        %983 = vmatmul.bf16.gmra.mxu0 %v973
        %v984 = vpop.f32.mrf.mxu0
        %v985 = vadd.f32 0.0, %v984
        %v986 = vpop.f32.mrf.mxu0
        %v987 = vadd.f32 0.0, %v986
        %988 = vdwg.mxu0
        %v989 = vpack.c.bf16 %v987, %v985
        %s990 = scalar_lea.vmem [#allocation5], 128
        %v991 = vld [vmem:[%s990] sm:$0xff]
        %v992 = vld [vmem:[%s990 + $0x8] sm:$0xff]
        %v993 = vld [vmem:[%s990 + $0x10] sm:$0xff]
        %v994 = vld [vmem:[%s990 + $0x18] sm:$0xff]
        %v995 = vld [vmem:[%s990 + $0x20] sm:$0xff]
        %v996 = vld [vmem:[%s990 + $0x28] sm:$0xff]
        %v997 = vld [vmem:[%s990 + $0x30] sm:$0x33]
        %v998 = vld [vmem:[%s990 + $0x38] sm:$0x33]
        %v1007 = vunpack.c.l.b16 %v991
        %v1008 = vunpack.c.h.b16 %v991
        %v1009 = vunpack.c.l.b16 %v992
        %v1010 = vunpack.c.h.b16 %v992
        %v1011 = vunpack.c.l.b16 %v993
        %v1012 = vunpack.c.h.b16 %v993
        %v1013 = vunpack.c.l.b16 %v994
        %v1014 = vunpack.c.h.b16 %v994
        %v1015 = vunpack.c.l.b16 %v995
        %v1016 = vunpack.c.h.b16 %v995
        %v1017 = vunpack.c.l.b16 %v996
        %v1018 = vunpack.c.h.b16 %v996
        %v1019 = vunpack.c.l.b16 %v997
        %v1020 = vunpack.c.h.b16 %v997
        %v1021 = vunpack.c.l.b16 %v998
        %v1022 = vunpack.c.h.b16 %v998
        %v1023 = vpack.c.b16 %v1011, %v1007
        %v1024 = vpack.c.b16 %v1012, %v1008
        %v1025 = vpack.c.b16 %v1013, %v1009
        %v1026 = vpack.c.b16 %v1014, %v1010
        %v1027 = vpack.c.b16 %v1019, %v1015
        %v1028 = vpack.c.b16 %v1020, %v1016
        %v1029 = vpack.c.b16 %v1021, %v1017
        %v1030 = vpack.c.b16 %v1022, %v1018
        %v1036 = vsel %vm684, %v989, 0
        %v1039 = vsel %vm688, %v1027, 0
        %v1042 = vsel %vm688, %v1028, 0
        %v1045 = vsel %vm688, %v1029, 0
        %v1048 = vsel %vm688, %v1030, 0
        %1050 = vmatpush.bf16.msra.mxu0 0
        %1051 = vmatpush.bf16.msra.mxu0 0
        %1052 = vmatpush.bf16.msra.mxu0 0
        %1053 = vmatpush.bf16.msra.mxu0 0
        %1054 = vmatpush.bf16.msra.mxu0 0
        %1055 = vmatpush.bf16.msra.mxu0 0
        %1056 = vmatpush.bf16.msra.mxu0 %v1039
        %1057 = vmatpush.bf16.msra.mxu0 %v1023
        %1058 = vmatmul.bf16.gmra.mxu0 %v1036
        %v1059 = vpop.f32.mrf.mxu0
        %v1060 = vadd.f32 0.0, %v1059
        %v1061 = vpop.f32.mrf.mxu0
        %v1062 = vadd.f32 0.0, %v1061
        %1063 = vdwg.mxu0
        %1064 = vmatpush.bf16.msra.mxu0 0
        %1065 = vmatpush.bf16.msra.mxu0 0
        %1066 = vmatpush.bf16.msra.mxu0 0
        %1067 = vmatpush.bf16.msra.mxu0 0
        %1068 = vmatpush.bf16.msra.mxu0 0
        %1069 = vmatpush.bf16.msra.mxu0 0
        %1070 = vmatpush.bf16.msra.mxu0 %v1042
        %1071 = vmatpush.bf16.msra.mxu0 %v1024
        %1072 = vmatmul.bf16.gmra.mxu0 %v1036
        %v1073 = vpop.f32.mrf.mxu0
        %v1074 = vadd.f32 0.0, %v1073
        %v1075 = vpop.f32.mrf.mxu0
        %v1076 = vadd.f32 0.0, %v1075
        %1077 = vdwg.mxu0
        %1078 = vmatpush.bf16.msra.mxu0 0
        %1079 = vmatpush.bf16.msra.mxu0 0
        %1080 = vmatpush.bf16.msra.mxu0 0
        %1081 = vmatpush.bf16.msra.mxu0 0
        %1082 = vmatpush.bf16.msra.mxu0 0
        %1083 = vmatpush.bf16.msra.mxu0 0
        %1084 = vmatpush.bf16.msra.mxu0 %v1045
        %1085 = vmatpush.bf16.msra.mxu0 %v1025
        %1086 = vmatmul.bf16.gmra.mxu0 %v1036
        %v1087 = vpop.f32.mrf.mxu0
        %v1088 = vadd.f32 0.0, %v1087
        %v1089 = vpop.f32.mrf.mxu0
        %v1090 = vadd.f32 0.0, %v1089
        %1091 = vdwg.mxu0
        %1092 = vmatpush.bf16.msra.mxu0 0
        %1093 = vmatpush.bf16.msra.mxu0 0
        %1094 = vmatpush.bf16.msra.mxu0 0
        %1095 = vmatpush.bf16.msra.mxu0 0
        %1096 = vmatpush.bf16.msra.mxu0 0
        %1097 = vmatpush.bf16.msra.mxu0 0
        %1098 = vmatpush.bf16.msra.mxu0 %v1048
        %1099 = vmatpush.bf16.msra.mxu0 %v1026
        %1100 = vmatmul.bf16.gmra.mxu0 %v1036
        %v1101 = vpop.f32.mrf.mxu0
        %v1102 = vadd.f32 0.0, %v1101
        %v1103 = vpop.f32.mrf.mxu0
        %v1104 = vadd.f32 0.0, %v1103
        %1105 = vdwg.mxu0
        %v1106 = vadd.f32 %v918, %v1060
        %v1107 = vadd.f32 %v932, %v1074
        %v1108 = vadd.f32 %v946, %v1088
        %v1109 = vadd.f32 %v960, %v1102
        %v1110 = vadd.f32 %v920, %v1062
        %v1111 = vadd.f32 %v934, %v1076
        %v1112 = vadd.f32 %v948, %v1090
        %v1113 = vadd.f32 %v962, %v1104
        %v1114 = vld [vmem:[#allocation7] sm:$0xf]
        %v1116 = vperm.slane %v1114, 0
        %v1117 = vperm.slane %v1114, 1
        %v1118 = vperm.slane %v1114, 2
        %v1119 = vperm.slane %v1114, 3
        %v1124 = vadd.f32 %v1106, %v1116
        %v1125 = vadd.f32 %v1107, %v1117
        %v1126 = vadd.f32 %v1108, %v1118
        %v1127 = vadd.f32 %v1109, %v1119
        %v1128 = vadd.f32 %v1110, %v1116
        %v1129 = vadd.f32 %v1111, %v1117
        %v1130 = vadd.f32 %v1112, %v1118
        %v1131 = vadd.f32 %v1113, %v1119
        %v1132 = vmax.f32 %v1124, 0.0
        %v1133 = vmax.f32 %v1125, 0.0
        %v1134 = vmax.f32 %v1126, 0.0
        %v1135 = vmax.f32 %v1127, 0.0
        %v1136 = vmax.f32 %v1128, 0.0
        %v1137 = vmax.f32 %v1129, 0.0
        %v1138 = vmax.f32 %v1130, 0.0
        %v1139 = vmax.f32 %v1131, 0.0
        %v1140 = vpack.c.bf16 %v1136, %v1132
        %v1141 = vpack.c.bf16 %v1137, %v1133
        %v1142 = vpack.c.bf16 %v1138, %v1134
        %v1143 = vpack.c.bf16 %v1139, %v1135
        %v1144 = vld [vmem:[#allocation8] sm:$0xf]
        %vm1145 = vcmask 113664
        %v1147 = vsel %vm1145, %v1144, 0
        %vm1149 = vcmask 1046528
        %v1151 = vsel %vm1149, %v1140, 0
        %v1154 = vsel %vm1149, %v1141, 0
        %v1157 = vsel %vm1149, %v1142, 0
        %v1160 = vsel %vm1149, %v1143, 0
        %1162 = vmatpush.bf16.msra.mxu0 0
        %1163 = vmatpush.bf16.msra.mxu0 0
        %1164 = vmatpush.bf16.msra.mxu0 0
        %1165 = vmatpush.bf16.msra.mxu0 0
        %1166 = vmatpush.bf16.msra.mxu0 0
        %1167 = vmatpush.bf16.msra.mxu0 0
        %1168 = vmatpush.bf16.msra.mxu0 0
        %1169 = vmatpush.bf16.msra.mxu0 %v1151
        %1170 = vmatmul.bf16.gmra.mxu0 %v1147
        %v1171 = vpop.f32.mrf.mxu0
        %v1172 = vadd.f32 0.0, %v1171
        %v1173 = vpop.f32.mrf.mxu0
        %1174 = vdwg.mxu0
        %1175 = vmatpush.bf16.msra.mxu0 0
        %1176 = vmatpush.bf16.msra.mxu0 0
        %1177 = vmatpush.bf16.msra.mxu0 0
        %1178 = vmatpush.bf16.msra.mxu0 0
        %1179 = vmatpush.bf16.msra.mxu0 0
        %1180 = vmatpush.bf16.msra.mxu0 0
        %1181 = vmatpush.bf16.msra.mxu0 0
        %1182 = vmatpush.bf16.msra.mxu0 %v1154
        %1183 = vmatmul.bf16.gmra.mxu0 %v1147
        %v1184 = vpop.f32.mrf.mxu0
        %v1185 = vadd.f32 0.0, %v1184
        %v1186 = vpop.f32.mrf.mxu0
        %1187 = vdwg.mxu0
        %1188 = vmatpush.bf16.msra.mxu0 0
        %1189 = vmatpush.bf16.msra.mxu0 0
        %1190 = vmatpush.bf16.msra.mxu0 0
        %1191 = vmatpush.bf16.msra.mxu0 0
        %1192 = vmatpush.bf16.msra.mxu0 0
        %1193 = vmatpush.bf16.msra.mxu0 0
        %1194 = vmatpush.bf16.msra.mxu0 0
        %1195 = vmatpush.bf16.msra.mxu0 %v1157
        %1196 = vmatmul.bf16.gmra.mxu0 %v1147
        %v1197 = vpop.f32.mrf.mxu0
        %v1198 = vadd.f32 0.0, %v1197
        %v1199 = vpop.f32.mrf.mxu0
        %1200 = vdwg.mxu0
        %1201 = vmatpush.bf16.msra.mxu0 0
        %1202 = vmatpush.bf16.msra.mxu0 0
        %1203 = vmatpush.bf16.msra.mxu0 0
        %1204 = vmatpush.bf16.msra.mxu0 0
        %1205 = vmatpush.bf16.msra.mxu0 0
        %1206 = vmatpush.bf16.msra.mxu0 0
        %1207 = vmatpush.bf16.msra.mxu0 0
        %1208 = vmatpush.bf16.msra.mxu0 %v1160
        %1209 = vmatmul.bf16.gmra.mxu0 %v1147
        %v1210 = vpop.f32.mrf.mxu0
        %v1211 = vadd.f32 0.0, %v1210
        %v1212 = vpop.f32.mrf.mxu0
        %1213 = vdwg.mxu0
        %v1214 = vpack.c.bf16 %v1172, %v1172
        %v1215 = vpack.c.bf16 %v1185, %v1185
        %v1216 = vpack.c.bf16 %v1198, %v1198
        %v1217 = vpack.c.bf16 %v1211, %v1211
        %v1218 = vld [vmem:[#allocation10] sm:$0xff]
        %v1219 = vld [vmem:[#allocation10 + $0x8] sm:$0xff]
        %v1220 = vld [vmem:[#allocation10 + $0x10] sm:$0xff]
        %v1221 = vld [vmem:[#allocation10 + $0x18] sm:$0xff]
        %v1222 = vld [vmem:[#allocation10 + $0x20] sm:$0xff]
        %v1223 = vld [vmem:[#allocation10 + $0x28] sm:$0xff]
        %v1224 = vld [vmem:[#allocation10 + $0x30] sm:$0xff]
        %v1225 = vld [vmem:[#allocation10 + $0x38] sm:$0xff]
        %v1226 = vld [vmem:[#allocation10 + $0x40] sm:$0xff]
        %v1227 = vld [vmem:[#allocation10 + $0x48] sm:$0xff]
        %v1228 = vld [vmem:[#allocation10 + $0x50] sm:$0xff]
        %v1229 = vld [vmem:[#allocation10 + $0x58] sm:$0xff]
        %v1230 = vld [vmem:[#allocation10 + $0x60] sm:$0xff]
        %v1231 = vld [vmem:[#allocation10 + $0x68] sm:$0xff]
        %v1232 = vld [vmem:[#allocation10 + $0x70] sm:$0xff]
        %v1233 = vld [vmem:[#allocation10 + $0x78] sm:$0xff]
        %v1234 = vld [vmem:[#allocation10 + $0x80] sm:$0xff]
        %v1235 = vld [vmem:[#allocation10 + $0x88] sm:$0xff]
        %v1236 = vld [vmem:[#allocation10 + $0x90] sm:$0xff]
        %v1237 = vld [vmem:[#allocation10 + $0x98] sm:$0xff]
        %v1238 = vld [vmem:[#allocation10 + $0xa0] sm:$0xff]
        %v1239 = vld [vmem:[#allocation10 + $0xa8] sm:$0xff]
        %v1240 = vld [vmem:[#allocation10 + $0xb0] sm:$0xff]
        %v1241 = vld [vmem:[#allocation10 + $0xb8] sm:$0xff]
        %v1242 = vld [vmem:[#allocation10 + $0xc0] sm:$0xff]
        %v1243 = vld [vmem:[#allocation10 + $0xc8] sm:$0xff]
        %v1244 = vld [vmem:[#allocation10 + $0xd0] sm:$0xff]
        %v1245 = vld [vmem:[#allocation10 + $0xd8] sm:$0xff]
        %v1246 = vld [vmem:[#allocation10 + $0xe0] sm:$0xff]
        %v1247 = vld [vmem:[#allocation10 + $0xe8] sm:$0xff]
        %v1248 = vld [vmem:[#allocation10 + $0xf0] sm:$0xff]
        %v1249 = vld [vmem:[#allocation10 + $0xf8] sm:$0xff]
        %v1250 = vld [vmem:[#allocation10 + $0x100] sm:$0xff]
        %v1251 = vld [vmem:[#allocation10 + $0x108] sm:$0xff]
        %v1252 = vld [vmem:[#allocation10 + $0x110] sm:$0xff]
        %v1253 = vld [vmem:[#allocation10 + $0x118] sm:$0xff]
        %v1254 = vld [vmem:[#allocation10 + $0x120] sm:$0xff]
        %v1255 = vld [vmem:[#allocation10 + $0x128] sm:$0xff]
        %v1256 = vld [vmem:[#allocation10 + $0x130] sm:$0xff]
        %v1257 = vld [vmem:[#allocation10 + $0x138] sm:$0xff]
        %v1258 = vld [vmem:[#allocation10 + $0x140] sm:$0xff]
        %v1259 = vld [vmem:[#allocation10 + $0x148] sm:$0xff]
        %v1260 = vld [vmem:[#allocation10 + $0x150] sm:$0xff]
        %v1261 = vld [vmem:[#allocation10 + $0x158] sm:$0xff]
        %v1262 = vld [vmem:[#allocation10 + $0x160] sm:$0xff]
        %v1263 = vld [vmem:[#allocation10 + $0x168] sm:$0xff]
        %v1264 = vld [vmem:[#allocation10 + $0x170] sm:$0xff]
        %v1265 = vld [vmem:[#allocation10 + $0x178] sm:$0xff]
        %v1266 = vld [vmem:[#allocation10 + $0x180] sm:$0xff]
        %v1267 = vld [vmem:[#allocation10 + $0x188] sm:$0xff]
        %v1268 = vld [vmem:[#allocation10 + $0x190] sm:$0xff]
        %v1269 = vld [vmem:[#allocation10 + $0x198] sm:$0xff]
        %v1270 = vld [vmem:[#allocation10 + $0x1a0] sm:$0xff]
        %v1271 = vld [vmem:[#allocation10 + $0x1a8] sm:$0xff]
        %v1272 = vld [vmem:[#allocation10 + $0x1b0] sm:$0xff]
        %v1273 = vld [vmem:[#allocation10 + $0x1b8] sm:$0xff]
        %v1274 = vld [vmem:[#allocation10 + $0x1c0] sm:$0xff]
        %v1275 = vld [vmem:[#allocation10 + $0x1c8] sm:$0xff]
        %v1276 = vld [vmem:[#allocation10 + $0x1d0] sm:$0xff]
        %v1277 = vld [vmem:[#allocation10 + $0x1d8] sm:$0xff]
        %v1278 = vld [vmem:[#allocation10 + $0x1e0] sm:$0xff]
        %v1279 = vld [vmem:[#allocation10 + $0x1e8] sm:$0xff]
        %v1280 = vld [vmem:[#allocation10 + $0x1f0] sm:$0xff]
        %v1281 = vld [vmem:[#allocation10 + $0x1f8] sm:$0xff]
        %v1282 = vld [vmem:[#allocation10 + $0x200] sm:$0xff]
        %v1283 = vld [vmem:[#allocation10 + $0x208] sm:$0xff]
        %v1284 = vld [vmem:[#allocation10 + $0x210] sm:$0xff]
        %v1285 = vld [vmem:[#allocation10 + $0x218] sm:$0xff]
        %v1286 = vld [vmem:[#allocation10 + $0x220] sm:$0xff]
        %v1287 = vld [vmem:[#allocation10 + $0x228] sm:$0xff]
        %v1288 = vld [vmem:[#allocation10 + $0x230] sm:$0xff]
        %v1289 = vld [vmem:[#allocation10 + $0x238] sm:$0xff]
        %v1290 = vld [vmem:[#allocation10 + $0x240] sm:$0xff]
        %v1291 = vld [vmem:[#allocation10 + $0x248] sm:$0xff]
        %v1292 = vld [vmem:[#allocation10 + $0x250] sm:$0xff]
        %v1293 = vld [vmem:[#allocation10 + $0x258] sm:$0xff]
        %v1294 = vld [vmem:[#allocation10 + $0x260] sm:$0xff]
        %v1295 = vld [vmem:[#allocation10 + $0x268] sm:$0xff]
        %v1296 = vld [vmem:[#allocation10 + $0x270] sm:$0xff]
        %v1297 = vld [vmem:[#allocation10 + $0x278] sm:$0xff]
        %v1298 = vld [vmem:[#allocation10 + $0x280] sm:$0xff]
        %v1299 = vld [vmem:[#allocation10 + $0x288] sm:$0xff]
        %v1300 = vld [vmem:[#allocation10 + $0x290] sm:$0xff]
        %v1301 = vld [vmem:[#allocation10 + $0x298] sm:$0xff]
        %v1302 = vld [vmem:[#allocation10 + $0x2a0] sm:$0xff]
        %v1303 = vld [vmem:[#allocation10 + $0x2a8] sm:$0xff]
        %v1304 = vld [vmem:[#allocation10 + $0x2b0] sm:$0xff]
        %v1305 = vld [vmem:[#allocation10 + $0x2b8] sm:$0xff]
        %v1306 = vld [vmem:[#allocation10 + $0x2c0] sm:$0xff]
        %v1307 = vld [vmem:[#allocation10 + $0x2c8] sm:$0xff]
        %v1308 = vld [vmem:[#allocation10 + $0x2d0] sm:$0xff]
        %v1309 = vld [vmem:[#allocation10 + $0x2d8] sm:$0xff]
        %v1310 = vld [vmem:[#allocation10 + $0x2e0] sm:$0xff]
        %v1311 = vld [vmem:[#allocation10 + $0x2e8] sm:$0xff]
        %v1312 = vld [vmem:[#allocation10 + $0x2f0] sm:$0xff]
        %v1313 = vld [vmem:[#allocation10 + $0x2f8] sm:$0xff]
        %v1314 = vld [vmem:[#allocation10 + $0x300] sm:$0xff]
        %v1315 = vld [vmem:[#allocation10 + $0x308] sm:$0xff]
        %v1316 = vld [vmem:[#allocation10 + $0x310] sm:$0xff]
        %v1317 = vld [vmem:[#allocation10 + $0x318] sm:$0xff]
        %v1318 = vld [vmem:[#allocation10 + $0x320] sm:$0xff]
        %v1319 = vld [vmem:[#allocation10 + $0x328] sm:$0xff]
        %v1320 = vld [vmem:[#allocation10 + $0x330] sm:$0xff]
        %v1321 = vld [vmem:[#allocation10 + $0x338] sm:$0xff]
        %v1322 = vld [vmem:[#allocation10 + $0x340] sm:$0xff]
        %v1323 = vld [vmem:[#allocation10 + $0x348] sm:$0xff]
        %v1324 = vld [vmem:[#allocation10 + $0x350] sm:$0xff]
        %v1325 = vld [vmem:[#allocation10 + $0x358] sm:$0xff]
        %v1326 = vld [vmem:[#allocation10 + $0x360] sm:$0xff]
        %v1327 = vld [vmem:[#allocation10 + $0x368] sm:$0xff]
        %v1328 = vld [vmem:[#allocation10 + $0x370] sm:$0xff]
        %v1329 = vld [vmem:[#allocation10 + $0x378] sm:$0xff]
        %s1330 = scalar_lea.vmem [#allocation8], 4
        %v1331 = vld [vmem:[%s1330] sm:$0xf]
        %v1333 = vsel %vm1145, %v1331, 0
        %1335 = vmatpush.bf16.msra.mxu0 0
        %1336 = vmatpush.bf16.msra.mxu0 0
        %1337 = vmatpush.bf16.msra.mxu0 0
        %1338 = vmatpush.bf16.msra.mxu0 0
        %1339 = vmatpush.bf16.msra.mxu0 0
        %1340 = vmatpush.bf16.msra.mxu0 0
        %1341 = vmatpush.bf16.msra.mxu0 0
        %1342 = vmatpush.bf16.msra.mxu0 %v1151
        %1343 = vmatmul.bf16.gmra.mxu0 %v1333
        %v1344 = vpop.f32.mrf.mxu0
        %v1345 = vadd.f32 0.0, %v1344
        %v1346 = vpop.f32.mrf.mxu0
        %1347 = vdwg.mxu0
        %1348 = vmatpush.bf16.msra.mxu0 0
        %1349 = vmatpush.bf16.msra.mxu0 0
        %1350 = vmatpush.bf16.msra.mxu0 0
        %1351 = vmatpush.bf16.msra.mxu0 0
        %1352 = vmatpush.bf16.msra.mxu0 0
        %1353 = vmatpush.bf16.msra.mxu0 0
        %1354 = vmatpush.bf16.msra.mxu0 0
        %1355 = vmatpush.bf16.msra.mxu0 %v1154
        %1356 = vmatmul.bf16.gmra.mxu0 %v1333
        %v1357 = vpop.f32.mrf.mxu0
        %v1358 = vadd.f32 0.0, %v1357
        %v1359 = vpop.f32.mrf.mxu0
        %1360 = vdwg.mxu0
        %1361 = vmatpush.bf16.msra.mxu0 0
        %1362 = vmatpush.bf16.msra.mxu0 0
        %1363 = vmatpush.bf16.msra.mxu0 0
        %1364 = vmatpush.bf16.msra.mxu0 0
        %1365 = vmatpush.bf16.msra.mxu0 0
        %1366 = vmatpush.bf16.msra.mxu0 0
        %1367 = vmatpush.bf16.msra.mxu0 0
        %1368 = vmatpush.bf16.msra.mxu0 %v1157
        %1369 = vmatmul.bf16.gmra.mxu0 %v1333
        %v1370 = vpop.f32.mrf.mxu0
        %v1371 = vadd.f32 0.0, %v1370
        %v1372 = vpop.f32.mrf.mxu0
        %1373 = vdwg.mxu0
        %1374 = vmatpush.bf16.msra.mxu0 0
        %1375 = vmatpush.bf16.msra.mxu0 0
        %1376 = vmatpush.bf16.msra.mxu0 0
        %1377 = vmatpush.bf16.msra.mxu0 0
        %1378 = vmatpush.bf16.msra.mxu0 0
        %1379 = vmatpush.bf16.msra.mxu0 0
        %1380 = vmatpush.bf16.msra.mxu0 0
        %1381 = vmatpush.bf16.msra.mxu0 %v1160
        %1382 = vmatmul.bf16.gmra.mxu0 %v1333
        %v1383 = vpop.f32.mrf.mxu0
        %v1384 = vadd.f32 0.0, %v1383
        %v1385 = vpop.f32.mrf.mxu0
        %1386 = vdwg.mxu0
        %v1387 = vpack.c.bf16 %v1345, %v1345
        %v1388 = vpack.c.bf16 %v1358, %v1358
        %v1389 = vpack.c.bf16 %v1371, %v1371
        %v1390 = vpack.c.bf16 %v1384, %v1384
        %s1391 = scalar_lea.vmem [#allocation10], 896
        %v1392 = vld [vmem:[%s1391] sm:$0xff]
        %v1393 = vld [vmem:[%s1391 + $0x8] sm:$0xff]
        %v1394 = vld [vmem:[%s1391 + $0x10] sm:$0xff]
        %v1395 = vld [vmem:[%s1391 + $0x18] sm:$0xff]
        %v1396 = vld [vmem:[%s1391 + $0x20] sm:$0xff]
        %v1397 = vld [vmem:[%s1391 + $0x28] sm:$0xff]
        %v1398 = vld [vmem:[%s1391 + $0x30] sm:$0xff]
        %v1399 = vld [vmem:[%s1391 + $0x38] sm:$0xff]
        %v1400 = vld [vmem:[%s1391 + $0x40] sm:$0xff]
        %v1401 = vld [vmem:[%s1391 + $0x48] sm:$0xff]
        %v1402 = vld [vmem:[%s1391 + $0x50] sm:$0xff]
        %v1403 = vld [vmem:[%s1391 + $0x58] sm:$0xff]
        %v1404 = vld [vmem:[%s1391 + $0x60] sm:$0xff]
        %v1405 = vld [vmem:[%s1391 + $0x68] sm:$0xff]
        %v1406 = vld [vmem:[%s1391 + $0x70] sm:$0xff]
        %v1407 = vld [vmem:[%s1391 + $0x78] sm:$0xff]
        %v1408 = vld [vmem:[%s1391 + $0x80] sm:$0xff]
        %v1409 = vld [vmem:[%s1391 + $0x88] sm:$0xff]
        %v1410 = vld [vmem:[%s1391 + $0x90] sm:$0xff]
        %v1411 = vld [vmem:[%s1391 + $0x98] sm:$0xff]
        %v1412 = vld [vmem:[%s1391 + $0xa0] sm:$0xff]
        %v1413 = vld [vmem:[%s1391 + $0xa8] sm:$0xff]
        %v1414 = vld [vmem:[%s1391 + $0xb0] sm:$0xff]
        %v1415 = vld [vmem:[%s1391 + $0xb8] sm:$0xff]
        %v1416 = vld [vmem:[%s1391 + $0xc0] sm:$0xff]
        %v1417 = vld [vmem:[%s1391 + $0xc8] sm:$0xff]
        %v1418 = vld [vmem:[%s1391 + $0xd0] sm:$0xff]
        %v1419 = vld [vmem:[%s1391 + $0xd8] sm:$0xff]
        %v1420 = vld [vmem:[%s1391 + $0xe0] sm:$0xff]
        %v1421 = vld [vmem:[%s1391 + $0xe8] sm:$0xff]
        %v1422 = vld [vmem:[%s1391 + $0xf0] sm:$0xff]
        %v1423 = vld [vmem:[%s1391 + $0xf8] sm:$0xff]
        %v1424 = vld [vmem:[%s1391 + $0x100] sm:$0xff]
        %v1425 = vld [vmem:[%s1391 + $0x108] sm:$0xff]
        %v1426 = vld [vmem:[%s1391 + $0x110] sm:$0xff]
        %v1427 = vld [vmem:[%s1391 + $0x118] sm:$0xff]
        %v1428 = vld [vmem:[%s1391 + $0x120] sm:$0xff]
        %v1429 = vld [vmem:[%s1391 + $0x128] sm:$0xff]
        %v1430 = vld [vmem:[%s1391 + $0x130] sm:$0xff]
        %v1431 = vld [vmem:[%s1391 + $0x138] sm:$0xff]
        %v1432 = vld [vmem:[%s1391 + $0x140] sm:$0xff]
        %v1433 = vld [vmem:[%s1391 + $0x148] sm:$0xff]
        %v1434 = vld [vmem:[%s1391 + $0x150] sm:$0xff]
        %v1435 = vld [vmem:[%s1391 + $0x158] sm:$0xff]
        %v1436 = vld [vmem:[%s1391 + $0x160] sm:$0xff]
        %v1437 = vld [vmem:[%s1391 + $0x168] sm:$0xff]
        %v1438 = vld [vmem:[%s1391 + $0x170] sm:$0xff]
        %v1439 = vld [vmem:[%s1391 + $0x178] sm:$0xff]
        %v1440 = vld [vmem:[%s1391 + $0x180] sm:$0xff]
        %v1441 = vld [vmem:[%s1391 + $0x188] sm:$0xff]
        %v1442 = vld [vmem:[%s1391 + $0x190] sm:$0xff]
        %v1443 = vld [vmem:[%s1391 + $0x198] sm:$0xff]
        %v1444 = vld [vmem:[%s1391 + $0x1a0] sm:$0xff]
        %v1445 = vld [vmem:[%s1391 + $0x1a8] sm:$0xff]
        %v1446 = vld [vmem:[%s1391 + $0x1b0] sm:$0xff]
        %v1447 = vld [vmem:[%s1391 + $0x1b8] sm:$0xff]
        %v1448 = vld [vmem:[%s1391 + $0x1c0] sm:$0xff]
        %v1449 = vld [vmem:[%s1391 + $0x1c8] sm:$0xff]
        %v1450 = vld [vmem:[%s1391 + $0x1d0] sm:$0xff]
        %v1451 = vld [vmem:[%s1391 + $0x1d8] sm:$0xff]
        %v1452 = vld [vmem:[%s1391 + $0x1e0] sm:$0xff]
        %v1453 = vld [vmem:[%s1391 + $0x1e8] sm:$0xff]
        %v1454 = vld [vmem:[%s1391 + $0x1f0] sm:$0xff]
        %v1455 = vld [vmem:[%s1391 + $0x1f8] sm:$0xff]
        %v1456 = vld [vmem:[%s1391 + $0x200] sm:$0xff]
        %v1457 = vld [vmem:[%s1391 + $0x208] sm:$0xff]
        %v1458 = vld [vmem:[%s1391 + $0x210] sm:$0xff]
        %v1459 = vld [vmem:[%s1391 + $0x218] sm:$0xff]
        %v1460 = vld [vmem:[%s1391 + $0x220] sm:$0xff]
        %v1461 = vld [vmem:[%s1391 + $0x228] sm:$0xff]
        %v1462 = vld [vmem:[%s1391 + $0x230] sm:$0xff]
        %v1463 = vld [vmem:[%s1391 + $0x238] sm:$0xff]
        %v1464 = vld [vmem:[%s1391 + $0x240] sm:$0xff]
        %v1465 = vld [vmem:[%s1391 + $0x248] sm:$0xff]
        %v1466 = vld [vmem:[%s1391 + $0x250] sm:$0xff]
        %v1467 = vld [vmem:[%s1391 + $0x258] sm:$0xff]
        %v1468 = vld [vmem:[%s1391 + $0x260] sm:$0xff]
        %v1469 = vld [vmem:[%s1391 + $0x268] sm:$0xff]
        %v1470 = vld [vmem:[%s1391 + $0x270] sm:$0xff]
        %v1471 = vld [vmem:[%s1391 + $0x278] sm:$0xff]
        %v1472 = vld [vmem:[%s1391 + $0x280] sm:$0xff]
        %v1473 = vld [vmem:[%s1391 + $0x288] sm:$0xff]
        %v1474 = vld [vmem:[%s1391 + $0x290] sm:$0xff]
        %v1475 = vld [vmem:[%s1391 + $0x298] sm:$0xff]
        %v1476 = vld [vmem:[%s1391 + $0x2a0] sm:$0xff]
        %v1477 = vld [vmem:[%s1391 + $0x2a8] sm:$0xff]
        %v1478 = vld [vmem:[%s1391 + $0x2b0] sm:$0xff]
        %v1479 = vld [vmem:[%s1391 + $0x2b8] sm:$0xff]
        %v1480 = vld [vmem:[%s1391 + $0x2c0] sm:$0xff]
        %v1481 = vld [vmem:[%s1391 + $0x2c8] sm:$0xff]
        %v1482 = vld [vmem:[%s1391 + $0x2d0] sm:$0xff]
        %v1483 = vld [vmem:[%s1391 + $0x2d8] sm:$0xff]
        %v1484 = vld [vmem:[%s1391 + $0x2e0] sm:$0xff]
        %v1485 = vld [vmem:[%s1391 + $0x2e8] sm:$0xff]
        %v1486 = vld [vmem:[%s1391 + $0x2f0] sm:$0xff]
        %v1487 = vld [vmem:[%s1391 + $0x2f8] sm:$0xff]
        %v1488 = vld [vmem:[%s1391 + $0x300] sm:$0xff]
        %v1489 = vld [vmem:[%s1391 + $0x308] sm:$0xff]
        %v1490 = vld [vmem:[%s1391 + $0x310] sm:$0xff]
        %v1491 = vld [vmem:[%s1391 + $0x318] sm:$0xff]
        %v1492 = vld [vmem:[%s1391 + $0x320] sm:$0xff]
        %v1493 = vld [vmem:[%s1391 + $0x328] sm:$0xff]
        %v1494 = vld [vmem:[%s1391 + $0x330] sm:$0xff]
        %v1495 = vld [vmem:[%s1391 + $0x338] sm:$0xff]
        %v1496 = vld [vmem:[%s1391 + $0x340] sm:$0xff]
        %v1497 = vld [vmem:[%s1391 + $0x348] sm:$0xff]
        %v1498 = vld [vmem:[%s1391 + $0x350] sm:$0xff]
        %v1499 = vld [vmem:[%s1391 + $0x358] sm:$0xff]
        %v1500 = vld [vmem:[%s1391 + $0x360] sm:$0xff]
        %v1501 = vld [vmem:[%s1391 + $0x368] sm:$0xff]
        %v1502 = vld [vmem:[%s1391 + $0x370] sm:$0xff]
        %v1503 = vld [vmem:[%s1391 + $0x378] sm:$0xff]
        %v1616 = vunpack.c.l.b16 %v1392
        %v1617 = vunpack.c.h.b16 %v1392
        %v1618 = vunpack.c.l.b16 %v1393
        %v1619 = vunpack.c.h.b16 %v1393
        %v1620 = vunpack.c.l.b16 %v1394
        %v1621 = vunpack.c.h.b16 %v1394
        %v1622 = vunpack.c.l.b16 %v1395
        %v1623 = vunpack.c.h.b16 %v1395
        %v1624 = vunpack.c.l.b16 %v1396
        %v1625 = vunpack.c.h.b16 %v1396
        %v1626 = vunpack.c.l.b16 %v1397
        %v1627 = vunpack.c.h.b16 %v1397
        %v1628 = vunpack.c.l.b16 %v1398
        %v1629 = vunpack.c.h.b16 %v1398
        %v1630 = vunpack.c.l.b16 %v1399
        %v1631 = vunpack.c.h.b16 %v1399
        %v1632 = vunpack.c.l.b16 %v1400
        %v1633 = vunpack.c.h.b16 %v1400
        %v1634 = vunpack.c.l.b16 %v1401
        %v1635 = vunpack.c.h.b16 %v1401
        %v1636 = vunpack.c.l.b16 %v1402
        %v1637 = vunpack.c.h.b16 %v1402
        %v1638 = vunpack.c.l.b16 %v1403
        %v1639 = vunpack.c.h.b16 %v1403
        %v1640 = vunpack.c.l.b16 %v1404
        %v1641 = vunpack.c.h.b16 %v1404
        %v1642 = vunpack.c.l.b16 %v1405
        %v1643 = vunpack.c.h.b16 %v1405
        %v1644 = vunpack.c.l.b16 %v1406
        %v1645 = vunpack.c.h.b16 %v1406
        %v1646 = vunpack.c.l.b16 %v1407
        %v1647 = vunpack.c.h.b16 %v1407
        %v1648 = vunpack.c.l.b16 %v1408
        %v1649 = vunpack.c.h.b16 %v1408
        %v1650 = vunpack.c.l.b16 %v1409
        %v1651 = vunpack.c.h.b16 %v1409
        %v1652 = vunpack.c.l.b16 %v1410
        %v1653 = vunpack.c.h.b16 %v1410
        %v1654 = vunpack.c.l.b16 %v1411
        %v1655 = vunpack.c.h.b16 %v1411
        %v1656 = vunpack.c.l.b16 %v1412
        %v1657 = vunpack.c.h.b16 %v1412
        %v1658 = vunpack.c.l.b16 %v1413
        %v1659 = vunpack.c.h.b16 %v1413
        %v1660 = vunpack.c.l.b16 %v1414
        %v1661 = vunpack.c.h.b16 %v1414
        %v1662 = vunpack.c.l.b16 %v1415
        %v1663 = vunpack.c.h.b16 %v1415
        %v1664 = vunpack.c.l.b16 %v1416
        %v1665 = vunpack.c.h.b16 %v1416
        %v1666 = vunpack.c.l.b16 %v1417
        %v1667 = vunpack.c.h.b16 %v1417
        %v1668 = vunpack.c.l.b16 %v1418
        %v1669 = vunpack.c.h.b16 %v1418
        %v1670 = vunpack.c.l.b16 %v1419
        %v1671 = vunpack.c.h.b16 %v1419
        %v1672 = vunpack.c.l.b16 %v1420
        %v1673 = vunpack.c.h.b16 %v1420
        %v1674 = vunpack.c.l.b16 %v1421
        %v1675 = vunpack.c.h.b16 %v1421
        %v1676 = vunpack.c.l.b16 %v1422
        %v1677 = vunpack.c.h.b16 %v1422
        %v1678 = vunpack.c.l.b16 %v1423
        %v1679 = vunpack.c.h.b16 %v1423
        %v1680 = vunpack.c.l.b16 %v1424
        %v1681 = vunpack.c.h.b16 %v1424
        %v1682 = vunpack.c.l.b16 %v1425
        %v1683 = vunpack.c.h.b16 %v1425
        %v1684 = vunpack.c.l.b16 %v1426
        %v1685 = vunpack.c.h.b16 %v1426
        %v1686 = vunpack.c.l.b16 %v1427
        %v1687 = vunpack.c.h.b16 %v1427
        %v1688 = vunpack.c.l.b16 %v1428
        %v1689 = vunpack.c.h.b16 %v1428
        %v1690 = vunpack.c.l.b16 %v1429
        %v1691 = vunpack.c.h.b16 %v1429
        %v1692 = vunpack.c.l.b16 %v1430
        %v1693 = vunpack.c.h.b16 %v1430
        %v1694 = vunpack.c.l.b16 %v1431
        %v1695 = vunpack.c.h.b16 %v1431
        %v1696 = vunpack.c.l.b16 %v1432
        %v1697 = vunpack.c.h.b16 %v1432
        %v1698 = vunpack.c.l.b16 %v1433
        %v1699 = vunpack.c.h.b16 %v1433
        %v1700 = vunpack.c.l.b16 %v1434
        %v1701 = vunpack.c.h.b16 %v1434
        %v1702 = vunpack.c.l.b16 %v1435
        %v1703 = vunpack.c.h.b16 %v1435
        %v1704 = vunpack.c.l.b16 %v1436
        %v1705 = vunpack.c.h.b16 %v1436
        %v1706 = vunpack.c.l.b16 %v1437
        %v1707 = vunpack.c.h.b16 %v1437
        %v1708 = vunpack.c.l.b16 %v1438
        %v1709 = vunpack.c.h.b16 %v1438
        %v1710 = vunpack.c.l.b16 %v1439
        %v1711 = vunpack.c.h.b16 %v1439
        %v1712 = vunpack.c.l.b16 %v1440
        %v1713 = vunpack.c.h.b16 %v1440
        %v1714 = vunpack.c.l.b16 %v1441
        %v1715 = vunpack.c.h.b16 %v1441
        %v1716 = vunpack.c.l.b16 %v1442
        %v1717 = vunpack.c.h.b16 %v1442
        %v1718 = vunpack.c.l.b16 %v1443
        %v1719 = vunpack.c.h.b16 %v1443
        %v1720 = vunpack.c.l.b16 %v1444
        %v1721 = vunpack.c.h.b16 %v1444
        %v1722 = vunpack.c.l.b16 %v1445
        %v1723 = vunpack.c.h.b16 %v1445
        %v1724 = vunpack.c.l.b16 %v1446
        %v1725 = vunpack.c.h.b16 %v1446
        %v1726 = vunpack.c.l.b16 %v1447
        %v1727 = vunpack.c.h.b16 %v1447
        %v1728 = vunpack.c.l.b16 %v1448
        %v1729 = vunpack.c.h.b16 %v1448
        %v1730 = vunpack.c.l.b16 %v1449
        %v1731 = vunpack.c.h.b16 %v1449
        %v1732 = vunpack.c.l.b16 %v1450
        %v1733 = vunpack.c.h.b16 %v1450
        %v1734 = vunpack.c.l.b16 %v1451
        %v1735 = vunpack.c.h.b16 %v1451
        %v1736 = vunpack.c.l.b16 %v1452
        %v1737 = vunpack.c.h.b16 %v1452
        %v1738 = vunpack.c.l.b16 %v1453
        %v1739 = vunpack.c.h.b16 %v1453
        %v1740 = vunpack.c.l.b16 %v1454
        %v1741 = vunpack.c.h.b16 %v1454
        %v1742 = vunpack.c.l.b16 %v1455
        %v1743 = vunpack.c.h.b16 %v1455
        %v1744 = vunpack.c.l.b16 %v1456
        %v1745 = vunpack.c.h.b16 %v1456
        %v1746 = vunpack.c.l.b16 %v1457
        %v1747 = vunpack.c.h.b16 %v1457
        %v1748 = vunpack.c.l.b16 %v1458
        %v1749 = vunpack.c.h.b16 %v1458
        %v1750 = vunpack.c.l.b16 %v1459
        %v1751 = vunpack.c.h.b16 %v1459
        %v1752 = vunpack.c.l.b16 %v1460
        %v1753 = vunpack.c.h.b16 %v1460
        %v1754 = vunpack.c.l.b16 %v1461
        %v1755 = vunpack.c.h.b16 %v1461
        %v1756 = vunpack.c.l.b16 %v1462
        %v1757 = vunpack.c.h.b16 %v1462
        %v1758 = vunpack.c.l.b16 %v1463
        %v1759 = vunpack.c.h.b16 %v1463
        %v1760 = vunpack.c.l.b16 %v1464
        %v1761 = vunpack.c.h.b16 %v1464
        %v1762 = vunpack.c.l.b16 %v1465
        %v1763 = vunpack.c.h.b16 %v1465
        %v1764 = vunpack.c.l.b16 %v1466
        %v1765 = vunpack.c.h.b16 %v1466
        %v1766 = vunpack.c.l.b16 %v1467
        %v1767 = vunpack.c.h.b16 %v1467
        %v1768 = vunpack.c.l.b16 %v1468
        %v1769 = vunpack.c.h.b16 %v1468
        %v1770 = vunpack.c.l.b16 %v1469
        %v1771 = vunpack.c.h.b16 %v1469
        %v1772 = vunpack.c.l.b16 %v1470
        %v1773 = vunpack.c.h.b16 %v1470
        %v1774 = vunpack.c.l.b16 %v1471
        %v1775 = vunpack.c.h.b16 %v1471
        %v1776 = vunpack.c.l.b16 %v1472
        %v1777 = vunpack.c.h.b16 %v1472
        %v1778 = vunpack.c.l.b16 %v1473
        %v1779 = vunpack.c.h.b16 %v1473
        %v1780 = vunpack.c.l.b16 %v1474
        %v1781 = vunpack.c.h.b16 %v1474
        %v1782 = vunpack.c.l.b16 %v1475
        %v1783 = vunpack.c.h.b16 %v1475
        %v1784 = vunpack.c.l.b16 %v1476
        %v1785 = vunpack.c.h.b16 %v1476
        %v1786 = vunpack.c.l.b16 %v1477
        %v1787 = vunpack.c.h.b16 %v1477
        %v1788 = vunpack.c.l.b16 %v1478
        %v1789 = vunpack.c.h.b16 %v1478
        %v1790 = vunpack.c.l.b16 %v1479
        %v1791 = vunpack.c.h.b16 %v1479
        %v1792 = vunpack.c.l.b16 %v1480
        %v1793 = vunpack.c.h.b16 %v1480
        %v1794 = vunpack.c.l.b16 %v1481
        %v1795 = vunpack.c.h.b16 %v1481
        %v1796 = vunpack.c.l.b16 %v1482
        %v1797 = vunpack.c.h.b16 %v1482
        %v1798 = vunpack.c.l.b16 %v1483
        %v1799 = vunpack.c.h.b16 %v1483
        %v1800 = vunpack.c.l.b16 %v1484
        %v1801 = vunpack.c.h.b16 %v1484
        %v1802 = vunpack.c.l.b16 %v1485
        %v1803 = vunpack.c.h.b16 %v1485
        %v1804 = vunpack.c.l.b16 %v1486
        %v1805 = vunpack.c.h.b16 %v1486
        %v1806 = vunpack.c.l.b16 %v1487
        %v1807 = vunpack.c.h.b16 %v1487
        %v1808 = vunpack.c.l.b16 %v1488
        %v1809 = vunpack.c.h.b16 %v1488
        %v1810 = vunpack.c.l.b16 %v1489
        %v1811 = vunpack.c.h.b16 %v1489
        %v1812 = vunpack.c.l.b16 %v1490
        %v1813 = vunpack.c.h.b16 %v1490
        %v1814 = vunpack.c.l.b16 %v1491
        %v1815 = vunpack.c.h.b16 %v1491
        %v1816 = vunpack.c.l.b16 %v1492
        %v1817 = vunpack.c.h.b16 %v1492
        %v1818 = vunpack.c.l.b16 %v1493
        %v1819 = vunpack.c.h.b16 %v1493
        %v1820 = vunpack.c.l.b16 %v1494
        %v1821 = vunpack.c.h.b16 %v1494
        %v1822 = vunpack.c.l.b16 %v1495
        %v1823 = vunpack.c.h.b16 %v1495
        %v1824 = vunpack.c.l.b16 %v1496
        %v1825 = vunpack.c.h.b16 %v1496
        %v1826 = vunpack.c.l.b16 %v1497
        %v1827 = vunpack.c.h.b16 %v1497
        %v1828 = vunpack.c.l.b16 %v1498
        %v1829 = vunpack.c.h.b16 %v1498
        %v1830 = vunpack.c.l.b16 %v1499
        %v1831 = vunpack.c.h.b16 %v1499
        %v1832 = vunpack.c.l.b16 %v1500
        %v1833 = vunpack.c.h.b16 %v1500
        %v1834 = vunpack.c.l.b16 %v1501
        %v1835 = vunpack.c.h.b16 %v1501
        %v1836 = vunpack.c.l.b16 %v1502
        %v1837 = vunpack.c.h.b16 %v1502
        %v1838 = vunpack.c.l.b16 %v1503
        %v1839 = vunpack.c.h.b16 %v1503
        %v1840 = vpack.c.b16 %v1620, %v1616
        %v1841 = vpack.c.b16 %v1621, %v1617
        %v1842 = vpack.c.b16 %v1622, %v1618
        %v1843 = vpack.c.b16 %v1623, %v1619
        %v1844 = vpack.c.b16 %v1628, %v1624
        %v1845 = vpack.c.b16 %v1629, %v1625
        %v1846 = vpack.c.b16 %v1630, %v1626
        %v1847 = vpack.c.b16 %v1631, %v1627
        %v1848 = vpack.c.b16 %v1636, %v1632
        %v1849 = vpack.c.b16 %v1637, %v1633
        %v1850 = vpack.c.b16 %v1638, %v1634
        %v1851 = vpack.c.b16 %v1639, %v1635
        %v1852 = vpack.c.b16 %v1644, %v1640
        %v1853 = vpack.c.b16 %v1645, %v1641
        %v1854 = vpack.c.b16 %v1646, %v1642
        %v1855 = vpack.c.b16 %v1647, %v1643
        %v1856 = vpack.c.b16 %v1652, %v1648
        %v1857 = vpack.c.b16 %v1653, %v1649
        %v1858 = vpack.c.b16 %v1654, %v1650
        %v1859 = vpack.c.b16 %v1655, %v1651
        %v1860 = vpack.c.b16 %v1660, %v1656
        %v1861 = vpack.c.b16 %v1661, %v1657
        %v1862 = vpack.c.b16 %v1662, %v1658
        %v1863 = vpack.c.b16 %v1663, %v1659
        %v1864 = vpack.c.b16 %v1668, %v1664
        %v1865 = vpack.c.b16 %v1669, %v1665
        %v1866 = vpack.c.b16 %v1670, %v1666
        %v1867 = vpack.c.b16 %v1671, %v1667
        %v1868 = vpack.c.b16 %v1676, %v1672
        %v1869 = vpack.c.b16 %v1677, %v1673
        %v1870 = vpack.c.b16 %v1678, %v1674
        %v1871 = vpack.c.b16 %v1679, %v1675
        %v1872 = vpack.c.b16 %v1684, %v1680
        %v1873 = vpack.c.b16 %v1685, %v1681
        %v1874 = vpack.c.b16 %v1686, %v1682
        %v1875 = vpack.c.b16 %v1687, %v1683
        %v1876 = vpack.c.b16 %v1692, %v1688
        %v1877 = vpack.c.b16 %v1693, %v1689
        %v1878 = vpack.c.b16 %v1694, %v1690
        %v1879 = vpack.c.b16 %v1695, %v1691
        %v1880 = vpack.c.b16 %v1700, %v1696
        %v1881 = vpack.c.b16 %v1701, %v1697
        %v1882 = vpack.c.b16 %v1702, %v1698
        %v1883 = vpack.c.b16 %v1703, %v1699
        %v1884 = vpack.c.b16 %v1708, %v1704
        %v1885 = vpack.c.b16 %v1709, %v1705
        %v1886 = vpack.c.b16 %v1710, %v1706
        %v1887 = vpack.c.b16 %v1711, %v1707
        %v1888 = vpack.c.b16 %v1716, %v1712
        %v1889 = vpack.c.b16 %v1717, %v1713
        %v1890 = vpack.c.b16 %v1718, %v1714
        %v1891 = vpack.c.b16 %v1719, %v1715
        %v1892 = vpack.c.b16 %v1724, %v1720
        %v1893 = vpack.c.b16 %v1725, %v1721
        %v1894 = vpack.c.b16 %v1726, %v1722
        %v1895 = vpack.c.b16 %v1727, %v1723
        %v1896 = vpack.c.b16 %v1732, %v1728
        %v1897 = vpack.c.b16 %v1733, %v1729
        %v1898 = vpack.c.b16 %v1734, %v1730
        %v1899 = vpack.c.b16 %v1735, %v1731
        %v1900 = vpack.c.b16 %v1740, %v1736
        %v1901 = vpack.c.b16 %v1741, %v1737
        %v1902 = vpack.c.b16 %v1742, %v1738
        %v1903 = vpack.c.b16 %v1743, %v1739
        %v1904 = vpack.c.b16 %v1748, %v1744
        %v1905 = vpack.c.b16 %v1749, %v1745
        %v1906 = vpack.c.b16 %v1750, %v1746
        %v1907 = vpack.c.b16 %v1751, %v1747
        %v1908 = vpack.c.b16 %v1756, %v1752
        %v1909 = vpack.c.b16 %v1757, %v1753
        %v1910 = vpack.c.b16 %v1758, %v1754
        %v1911 = vpack.c.b16 %v1759, %v1755
        %v1912 = vpack.c.b16 %v1764, %v1760
        %v1913 = vpack.c.b16 %v1765, %v1761
        %v1914 = vpack.c.b16 %v1766, %v1762
        %v1915 = vpack.c.b16 %v1767, %v1763
        %v1916 = vpack.c.b16 %v1772, %v1768
        %v1917 = vpack.c.b16 %v1773, %v1769
        %v1918 = vpack.c.b16 %v1774, %v1770
        %v1919 = vpack.c.b16 %v1775, %v1771
        %v1920 = vpack.c.b16 %v1780, %v1776
        %v1921 = vpack.c.b16 %v1781, %v1777
        %v1922 = vpack.c.b16 %v1782, %v1778
        %v1923 = vpack.c.b16 %v1783, %v1779
        %v1924 = vpack.c.b16 %v1788, %v1784
        %v1925 = vpack.c.b16 %v1789, %v1785
        %v1926 = vpack.c.b16 %v1790, %v1786
        %v1927 = vpack.c.b16 %v1791, %v1787
        %v1928 = vpack.c.b16 %v1796, %v1792
        %v1929 = vpack.c.b16 %v1797, %v1793
        %v1930 = vpack.c.b16 %v1798, %v1794
        %v1931 = vpack.c.b16 %v1799, %v1795
        %v1932 = vpack.c.b16 %v1804, %v1800
        %v1933 = vpack.c.b16 %v1805, %v1801
        %v1934 = vpack.c.b16 %v1806, %v1802
        %v1935 = vpack.c.b16 %v1807, %v1803
        %v1936 = vpack.c.b16 %v1812, %v1808
        %v1937 = vpack.c.b16 %v1813, %v1809
        %v1938 = vpack.c.b16 %v1814, %v1810
        %v1939 = vpack.c.b16 %v1815, %v1811
        %v1940 = vpack.c.b16 %v1820, %v1816
        %v1941 = vpack.c.b16 %v1821, %v1817
        %v1942 = vpack.c.b16 %v1822, %v1818
        %v1943 = vpack.c.b16 %v1823, %v1819
        %v1944 = vpack.c.b16 %v1828, %v1824
        %v1945 = vpack.c.b16 %v1829, %v1825
        %v1946 = vpack.c.b16 %v1830, %v1826
        %v1947 = vpack.c.b16 %v1831, %v1827
        %v1948 = vpack.c.b16 %v1836, %v1832
        %v1949 = vpack.c.b16 %v1837, %v1833
        %v1950 = vpack.c.b16 %v1838, %v1834
        %v1951 = vpack.c.b16 %v1839, %v1835
        %vm2064 = vcmask 523264
        %v2066 = vsel %vm2064, %v1390, 0
        %2068 = vmatpush.bf16.msra.mxu0 %v1868
        %2069 = vmatpush.bf16.msra.mxu0 %v1864
        %2070 = vmatpush.bf16.msra.mxu0 %v1860
        %2071 = vmatpush.bf16.msra.mxu0 %v1856
        %2072 = vmatpush.bf16.msra.mxu0 %v1852
        %2073 = vmatpush.bf16.msra.mxu0 %v1848
        %2074 = vmatpush.bf16.msra.mxu0 %v1844
        %2075 = vmatpush.bf16.msra.mxu0 %v1840
        %2076 = vmatmul.bf16.gmra.mxu0 %v1387
        %v2077 = vpop.f32.mrf.mxu0
        %v2078 = vadd.f32 0.0, %v2077
        %v2079 = vpop.f32.mrf.mxu0
        %2080 = vdwg.mxu0
        %2081 = vmatpush.bf16.msra.mxu0 %v1900
        %2082 = vmatpush.bf16.msra.mxu0 %v1896
        %2083 = vmatpush.bf16.msra.mxu0 %v1892
        %2084 = vmatpush.bf16.msra.mxu0 %v1888
        %2085 = vmatpush.bf16.msra.mxu0 %v1884
        %2086 = vmatpush.bf16.msra.mxu0 %v1880
        %2087 = vmatpush.bf16.msra.mxu0 %v1876
        %2088 = vmatpush.bf16.msra.mxu0 %v1872
        %2089 = vmatmul.bf16.gmra.mxu0 %v1388
        %v2090 = vpop.f32.mrf.mxu0
        %v2091 = vadd.f32 %v2078, %v2090
        %v2092 = vpop.f32.mrf.mxu0
        %2093 = vdwg.mxu0
        %2094 = vmatpush.bf16.msra.mxu0 %v1932
        %2095 = vmatpush.bf16.msra.mxu0 %v1928
        %2096 = vmatpush.bf16.msra.mxu0 %v1924
        %2097 = vmatpush.bf16.msra.mxu0 %v1920
        %2098 = vmatpush.bf16.msra.mxu0 %v1916
        %2099 = vmatpush.bf16.msra.mxu0 %v1912
        %2100 = vmatpush.bf16.msra.mxu0 %v1908
        %2101 = vmatpush.bf16.msra.mxu0 %v1904
        %2102 = vmatmul.bf16.gmra.mxu0 %v1389
        %v2103 = vpop.f32.mrf.mxu0
        %v2104 = vadd.f32 %v2091, %v2103
        %v2105 = vpop.f32.mrf.mxu0
        %2106 = vdwg.mxu0
        %2107 = vmatpush.bf16.msra.mxu0 0
        %2108 = vmatpush.bf16.msra.mxu0 0
        %2109 = vmatpush.bf16.msra.mxu0 0
        %2110 = vmatpush.bf16.msra.mxu0 0
        %2111 = vmatpush.bf16.msra.mxu0 %v1948
        %2112 = vmatpush.bf16.msra.mxu0 %v1944
        %2113 = vmatpush.bf16.msra.mxu0 %v1940
        %2114 = vmatpush.bf16.msra.mxu0 %v1936
        %2115 = vmatmul.bf16.gmra.mxu0 %v2066
        %v2116 = vpop.f32.mrf.mxu0
        %v2117 = vadd.f32 %v2104, %v2116
        %v2118 = vpop.f32.mrf.mxu0
        %2119 = vdwg.mxu0
        %2120 = vmatpush.bf16.msra.mxu0 %v1869
        %2121 = vmatpush.bf16.msra.mxu0 %v1865
        %2122 = vmatpush.bf16.msra.mxu0 %v1861
        %2123 = vmatpush.bf16.msra.mxu0 %v1857
        %2124 = vmatpush.bf16.msra.mxu0 %v1853
        %2125 = vmatpush.bf16.msra.mxu0 %v1849
        %2126 = vmatpush.bf16.msra.mxu0 %v1845
        %2127 = vmatpush.bf16.msra.mxu0 %v1841
        %2128 = vmatmul.bf16.gmra.mxu0 %v1387
        %v2129 = vpop.f32.mrf.mxu0
        %v2130 = vadd.f32 0.0, %v2129
        %v2131 = vpop.f32.mrf.mxu0
        %2132 = vdwg.mxu0
        %2133 = vmatpush.bf16.msra.mxu0 %v1901
        %2134 = vmatpush.bf16.msra.mxu0 %v1897
        %2135 = vmatpush.bf16.msra.mxu0 %v1893
        %2136 = vmatpush.bf16.msra.mxu0 %v1889
        %2137 = vmatpush.bf16.msra.mxu0 %v1885
        %2138 = vmatpush.bf16.msra.mxu0 %v1881
        %2139 = vmatpush.bf16.msra.mxu0 %v1877
        %2140 = vmatpush.bf16.msra.mxu0 %v1873
        %2141 = vmatmul.bf16.gmra.mxu0 %v1388
        %v2142 = vpop.f32.mrf.mxu0
        %v2143 = vadd.f32 %v2130, %v2142
        %v2144 = vpop.f32.mrf.mxu0
        %2145 = vdwg.mxu0
        %2146 = vmatpush.bf16.msra.mxu0 %v1933
        %2147 = vmatpush.bf16.msra.mxu0 %v1929
        %2148 = vmatpush.bf16.msra.mxu0 %v1925
        %2149 = vmatpush.bf16.msra.mxu0 %v1921
        %2150 = vmatpush.bf16.msra.mxu0 %v1917
        %2151 = vmatpush.bf16.msra.mxu0 %v1913
        %2152 = vmatpush.bf16.msra.mxu0 %v1909
        %2153 = vmatpush.bf16.msra.mxu0 %v1905
        %2154 = vmatmul.bf16.gmra.mxu0 %v1389
        %v2155 = vpop.f32.mrf.mxu0
        %v2156 = vadd.f32 %v2143, %v2155
        %v2157 = vpop.f32.mrf.mxu0
        %2158 = vdwg.mxu0
        %2159 = vmatpush.bf16.msra.mxu0 0
        %2160 = vmatpush.bf16.msra.mxu0 0
        %2161 = vmatpush.bf16.msra.mxu0 0
        %2162 = vmatpush.bf16.msra.mxu0 0
        %2163 = vmatpush.bf16.msra.mxu0 %v1949
        %2164 = vmatpush.bf16.msra.mxu0 %v1945
        %2165 = vmatpush.bf16.msra.mxu0 %v1941
        %2166 = vmatpush.bf16.msra.mxu0 %v1937
        %2167 = vmatmul.bf16.gmra.mxu0 %v2066
        %v2168 = vpop.f32.mrf.mxu0
        %v2169 = vadd.f32 %v2156, %v2168
        %v2170 = vpop.f32.mrf.mxu0
        %2171 = vdwg.mxu0
        %2172 = vmatpush.bf16.msra.mxu0 %v1870
        %2173 = vmatpush.bf16.msra.mxu0 %v1866
        %2174 = vmatpush.bf16.msra.mxu0 %v1862
        %2175 = vmatpush.bf16.msra.mxu0 %v1858
        %2176 = vmatpush.bf16.msra.mxu0 %v1854
        %2177 = vmatpush.bf16.msra.mxu0 %v1850
        %2178 = vmatpush.bf16.msra.mxu0 %v1846
        %2179 = vmatpush.bf16.msra.mxu0 %v1842
        %2180 = vmatmul.bf16.gmra.mxu0 %v1387
        %v2181 = vpop.f32.mrf.mxu0
        %v2182 = vadd.f32 0.0, %v2181
        %v2183 = vpop.f32.mrf.mxu0
        %2184 = vdwg.mxu0
        %2185 = vmatpush.bf16.msra.mxu0 %v1902
        %2186 = vmatpush.bf16.msra.mxu0 %v1898
        %2187 = vmatpush.bf16.msra.mxu0 %v1894
        %2188 = vmatpush.bf16.msra.mxu0 %v1890
        %2189 = vmatpush.bf16.msra.mxu0 %v1886
        %2190 = vmatpush.bf16.msra.mxu0 %v1882
        %2191 = vmatpush.bf16.msra.mxu0 %v1878
        %2192 = vmatpush.bf16.msra.mxu0 %v1874
        %2193 = vmatmul.bf16.gmra.mxu0 %v1388
        %v2194 = vpop.f32.mrf.mxu0
        %v2195 = vadd.f32 %v2182, %v2194
        %v2196 = vpop.f32.mrf.mxu0
        %2197 = vdwg.mxu0
        %2198 = vmatpush.bf16.msra.mxu0 %v1934
        %2199 = vmatpush.bf16.msra.mxu0 %v1930
        %2200 = vmatpush.bf16.msra.mxu0 %v1926
        %2201 = vmatpush.bf16.msra.mxu0 %v1922
        %2202 = vmatpush.bf16.msra.mxu0 %v1918
        %2203 = vmatpush.bf16.msra.mxu0 %v1914
        %2204 = vmatpush.bf16.msra.mxu0 %v1910
        %2205 = vmatpush.bf16.msra.mxu0 %v1906
        %2206 = vmatmul.bf16.gmra.mxu0 %v1389
        %v2207 = vpop.f32.mrf.mxu0
        %v2208 = vadd.f32 %v2195, %v2207
        %v2209 = vpop.f32.mrf.mxu0
        %2210 = vdwg.mxu0
        %2211 = vmatpush.bf16.msra.mxu0 0
        %2212 = vmatpush.bf16.msra.mxu0 0
        %2213 = vmatpush.bf16.msra.mxu0 0
        %2214 = vmatpush.bf16.msra.mxu0 0
        %2215 = vmatpush.bf16.msra.mxu0 %v1950
        %2216 = vmatpush.bf16.msra.mxu0 %v1946
        %2217 = vmatpush.bf16.msra.mxu0 %v1942
        %2218 = vmatpush.bf16.msra.mxu0 %v1938
        %2219 = vmatmul.bf16.gmra.mxu0 %v2066
        %v2220 = vpop.f32.mrf.mxu0
        %v2221 = vadd.f32 %v2208, %v2220
        %v2222 = vpop.f32.mrf.mxu0
        %2223 = vdwg.mxu0
        %2224 = vmatpush.bf16.msra.mxu0 %v1871
        %2225 = vmatpush.bf16.msra.mxu0 %v1867
        %2226 = vmatpush.bf16.msra.mxu0 %v1863
        %2227 = vmatpush.bf16.msra.mxu0 %v1859
        %2228 = vmatpush.bf16.msra.mxu0 %v1855
        %2229 = vmatpush.bf16.msra.mxu0 %v1851
        %2230 = vmatpush.bf16.msra.mxu0 %v1847
        %2231 = vmatpush.bf16.msra.mxu0 %v1843
        %2232 = vmatmul.bf16.gmra.mxu0 %v1387
        %v2233 = vpop.f32.mrf.mxu0
        %v2234 = vadd.f32 0.0, %v2233
        %v2235 = vpop.f32.mrf.mxu0
        %2236 = vdwg.mxu0
        %2237 = vmatpush.bf16.msra.mxu0 %v1903
        %2238 = vmatpush.bf16.msra.mxu0 %v1899
        %2239 = vmatpush.bf16.msra.mxu0 %v1895
        %2240 = vmatpush.bf16.msra.mxu0 %v1891
        %2241 = vmatpush.bf16.msra.mxu0 %v1887
        %2242 = vmatpush.bf16.msra.mxu0 %v1883
        %2243 = vmatpush.bf16.msra.mxu0 %v1879
        %2244 = vmatpush.bf16.msra.mxu0 %v1875
        %2245 = vmatmul.bf16.gmra.mxu0 %v1388
        %v2246 = vpop.f32.mrf.mxu0
        %v2247 = vadd.f32 %v2234, %v2246
        %v2248 = vpop.f32.mrf.mxu0
        %2249 = vdwg.mxu0
        %2250 = vmatpush.bf16.msra.mxu0 %v1935
        %2251 = vmatpush.bf16.msra.mxu0 %v1931
        %2252 = vmatpush.bf16.msra.mxu0 %v1927
        %2253 = vmatpush.bf16.msra.mxu0 %v1923
        %2254 = vmatpush.bf16.msra.mxu0 %v1919
        %2255 = vmatpush.bf16.msra.mxu0 %v1915
        %2256 = vmatpush.bf16.msra.mxu0 %v1911
        %2257 = vmatpush.bf16.msra.mxu0 %v1907
        %2258 = vmatmul.bf16.gmra.mxu0 %v1389
        %v2259 = vpop.f32.mrf.mxu0
        %v2260 = vadd.f32 %v2247, %v2259
        %v2261 = vpop.f32.mrf.mxu0
        %2262 = vdwg.mxu0
        %2263 = vmatpush.bf16.msra.mxu0 0
        %2264 = vmatpush.bf16.msra.mxu0 0
        %2265 = vmatpush.bf16.msra.mxu0 0
        %2266 = vmatpush.bf16.msra.mxu0 0
        %2267 = vmatpush.bf16.msra.mxu0 %v1951
        %2268 = vmatpush.bf16.msra.mxu0 %v1947
        %2269 = vmatpush.bf16.msra.mxu0 %v1943
        %2270 = vmatpush.bf16.msra.mxu0 %v1939
        %2271 = vmatmul.bf16.gmra.mxu0 %v2066
        %v2272 = vpop.f32.mrf.mxu0
        %v2273 = vadd.f32 %v2260, %v2272
        %v2274 = vpop.f32.mrf.mxu0
        %2275 = vdwg.mxu0
        %v2388 = vunpack.c.l.b16 %v1218
        %v2389 = vunpack.c.h.b16 %v1218
        %v2390 = vunpack.c.l.b16 %v1219
        %v2391 = vunpack.c.h.b16 %v1219
        %v2392 = vunpack.c.l.b16 %v1220
        %v2393 = vunpack.c.h.b16 %v1220
        %v2394 = vunpack.c.l.b16 %v1221
        %v2395 = vunpack.c.h.b16 %v1221
        %v2396 = vunpack.c.l.b16 %v1222
        %v2397 = vunpack.c.h.b16 %v1222
        %v2398 = vunpack.c.l.b16 %v1223
        %v2399 = vunpack.c.h.b16 %v1223
        %v2400 = vunpack.c.l.b16 %v1224
        %v2401 = vunpack.c.h.b16 %v1224
        %v2402 = vunpack.c.l.b16 %v1225
        %v2403 = vunpack.c.h.b16 %v1225
        %v2404 = vunpack.c.l.b16 %v1226
        %v2405 = vunpack.c.h.b16 %v1226
        %v2406 = vunpack.c.l.b16 %v1227
        %v2407 = vunpack.c.h.b16 %v1227
        %v2408 = vunpack.c.l.b16 %v1228
        %v2409 = vunpack.c.h.b16 %v1228
        %v2410 = vunpack.c.l.b16 %v1229
        %v2411 = vunpack.c.h.b16 %v1229
        %v2412 = vunpack.c.l.b16 %v1230
        %v2413 = vunpack.c.h.b16 %v1230
        %v2414 = vunpack.c.l.b16 %v1231
        %v2415 = vunpack.c.h.b16 %v1231
        %v2416 = vunpack.c.l.b16 %v1232
        %v2417 = vunpack.c.h.b16 %v1232
        %v2418 = vunpack.c.l.b16 %v1233
        %v2419 = vunpack.c.h.b16 %v1233
        %v2420 = vunpack.c.l.b16 %v1234
        %v2421 = vunpack.c.h.b16 %v1234
        %v2422 = vunpack.c.l.b16 %v1235
        %v2423 = vunpack.c.h.b16 %v1235
        %v2424 = vunpack.c.l.b16 %v1236
        %v2425 = vunpack.c.h.b16 %v1236
        %v2426 = vunpack.c.l.b16 %v1237
        %v2427 = vunpack.c.h.b16 %v1237
        %v2428 = vunpack.c.l.b16 %v1238
        %v2429 = vunpack.c.h.b16 %v1238
        %v2430 = vunpack.c.l.b16 %v1239
        %v2431 = vunpack.c.h.b16 %v1239
        %v2432 = vunpack.c.l.b16 %v1240
        %v2433 = vunpack.c.h.b16 %v1240
        %v2434 = vunpack.c.l.b16 %v1241
        %v2435 = vunpack.c.h.b16 %v1241
        %v2436 = vunpack.c.l.b16 %v1242
        %v2437 = vunpack.c.h.b16 %v1242
        %v2438 = vunpack.c.l.b16 %v1243
        %v2439 = vunpack.c.h.b16 %v1243
        %v2440 = vunpack.c.l.b16 %v1244
        %v2441 = vunpack.c.h.b16 %v1244
        %v2442 = vunpack.c.l.b16 %v1245
        %v2443 = vunpack.c.h.b16 %v1245
        %v2444 = vunpack.c.l.b16 %v1246
        %v2445 = vunpack.c.h.b16 %v1246
        %v2446 = vunpack.c.l.b16 %v1247
        %v2447 = vunpack.c.h.b16 %v1247
        %v2448 = vunpack.c.l.b16 %v1248
        %v2449 = vunpack.c.h.b16 %v1248
        %v2450 = vunpack.c.l.b16 %v1249
        %v2451 = vunpack.c.h.b16 %v1249
        %v2452 = vunpack.c.l.b16 %v1250
        %v2453 = vunpack.c.h.b16 %v1250
        %v2454 = vunpack.c.l.b16 %v1251
        %v2455 = vunpack.c.h.b16 %v1251
        %v2456 = vunpack.c.l.b16 %v1252
        %v2457 = vunpack.c.h.b16 %v1252
        %v2458 = vunpack.c.l.b16 %v1253
        %v2459 = vunpack.c.h.b16 %v1253
        %v2460 = vunpack.c.l.b16 %v1254
        %v2461 = vunpack.c.h.b16 %v1254
        %v2462 = vunpack.c.l.b16 %v1255
        %v2463 = vunpack.c.h.b16 %v1255
        %v2464 = vunpack.c.l.b16 %v1256
        %v2465 = vunpack.c.h.b16 %v1256
        %v2466 = vunpack.c.l.b16 %v1257
        %v2467 = vunpack.c.h.b16 %v1257
        %v2468 = vunpack.c.l.b16 %v1258
        %v2469 = vunpack.c.h.b16 %v1258
        %v2470 = vunpack.c.l.b16 %v1259
        %v2471 = vunpack.c.h.b16 %v1259
        %v2472 = vunpack.c.l.b16 %v1260
        %v2473 = vunpack.c.h.b16 %v1260
        %v2474 = vunpack.c.l.b16 %v1261
        %v2475 = vunpack.c.h.b16 %v1261
        %v2476 = vunpack.c.l.b16 %v1262
        %v2477 = vunpack.c.h.b16 %v1262
        %v2478 = vunpack.c.l.b16 %v1263
        %v2479 = vunpack.c.h.b16 %v1263
        %v2480 = vunpack.c.l.b16 %v1264
        %v2481 = vunpack.c.h.b16 %v1264
        %v2482 = vunpack.c.l.b16 %v1265
        %v2483 = vunpack.c.h.b16 %v1265
        %v2484 = vunpack.c.l.b16 %v1266
        %v2485 = vunpack.c.h.b16 %v1266
        %v2486 = vunpack.c.l.b16 %v1267
        %v2487 = vunpack.c.h.b16 %v1267
        %v2488 = vunpack.c.l.b16 %v1268
        %v2489 = vunpack.c.h.b16 %v1268
        %v2490 = vunpack.c.l.b16 %v1269
        %v2491 = vunpack.c.h.b16 %v1269
        %v2492 = vunpack.c.l.b16 %v1270
        %v2493 = vunpack.c.h.b16 %v1270
        %v2494 = vunpack.c.l.b16 %v1271
        %v2495 = vunpack.c.h.b16 %v1271
        %v2496 = vunpack.c.l.b16 %v1272
        %v2497 = vunpack.c.h.b16 %v1272
        %v2498 = vunpack.c.l.b16 %v1273
        %v2499 = vunpack.c.h.b16 %v1273
        %v2500 = vunpack.c.l.b16 %v1274
        %v2501 = vunpack.c.h.b16 %v1274
        %v2502 = vunpack.c.l.b16 %v1275
        %v2503 = vunpack.c.h.b16 %v1275
        %v2504 = vunpack.c.l.b16 %v1276
        %v2505 = vunpack.c.h.b16 %v1276
        %v2506 = vunpack.c.l.b16 %v1277
        %v2507 = vunpack.c.h.b16 %v1277
        %v2508 = vunpack.c.l.b16 %v1278
        %v2509 = vunpack.c.h.b16 %v1278
        %v2510 = vunpack.c.l.b16 %v1279
        %v2511 = vunpack.c.h.b16 %v1279
        %v2512 = vunpack.c.l.b16 %v1280
        %v2513 = vunpack.c.h.b16 %v1280
        %v2514 = vunpack.c.l.b16 %v1281
        %v2515 = vunpack.c.h.b16 %v1281
        %v2516 = vunpack.c.l.b16 %v1282
        %v2517 = vunpack.c.h.b16 %v1282
        %v2518 = vunpack.c.l.b16 %v1283
        %v2519 = vunpack.c.h.b16 %v1283
        %v2520 = vunpack.c.l.b16 %v1284
        %v2521 = vunpack.c.h.b16 %v1284
        %v2522 = vunpack.c.l.b16 %v1285
        %v2523 = vunpack.c.h.b16 %v1285
        %v2524 = vunpack.c.l.b16 %v1286
        %v2525 = vunpack.c.h.b16 %v1286
        %v2526 = vunpack.c.l.b16 %v1287
        %v2527 = vunpack.c.h.b16 %v1287
        %v2528 = vunpack.c.l.b16 %v1288
        %v2529 = vunpack.c.h.b16 %v1288
        %v2530 = vunpack.c.l.b16 %v1289
        %v2531 = vunpack.c.h.b16 %v1289
        %v2532 = vunpack.c.l.b16 %v1290
        %v2533 = vunpack.c.h.b16 %v1290
        %v2534 = vunpack.c.l.b16 %v1291
        %v2535 = vunpack.c.h.b16 %v1291
        %v2536 = vunpack.c.l.b16 %v1292
        %v2537 = vunpack.c.h.b16 %v1292
        %v2538 = vunpack.c.l.b16 %v1293
        %v2539 = vunpack.c.h.b16 %v1293
        %v2540 = vunpack.c.l.b16 %v1294
        %v2541 = vunpack.c.h.b16 %v1294
        %v2542 = vunpack.c.l.b16 %v1295
        %v2543 = vunpack.c.h.b16 %v1295
        %v2544 = vunpack.c.l.b16 %v1296
        %v2545 = vunpack.c.h.b16 %v1296
        %v2546 = vunpack.c.l.b16 %v1297
        %v2547 = vunpack.c.h.b16 %v1297
        %v2548 = vunpack.c.l.b16 %v1298
        %v2549 = vunpack.c.h.b16 %v1298
        %v2550 = vunpack.c.l.b16 %v1299
        %v2551 = vunpack.c.h.b16 %v1299
        %v2552 = vunpack.c.l.b16 %v1300
        %v2553 = vunpack.c.h.b16 %v1300
        %v2554 = vunpack.c.l.b16 %v1301
        %v2555 = vunpack.c.h.b16 %v1301
        %v2556 = vunpack.c.l.b16 %v1302
        %v2557 = vunpack.c.h.b16 %v1302
        %v2558 = vunpack.c.l.b16 %v1303
        %v2559 = vunpack.c.h.b16 %v1303
        %v2560 = vunpack.c.l.b16 %v1304
        %v2561 = vunpack.c.h.b16 %v1304
        %v2562 = vunpack.c.l.b16 %v1305
        %v2563 = vunpack.c.h.b16 %v1305
        %v2564 = vunpack.c.l.b16 %v1306
        %v2565 = vunpack.c.h.b16 %v1306
        %v2566 = vunpack.c.l.b16 %v1307
        %v2567 = vunpack.c.h.b16 %v1307
        %v2568 = vunpack.c.l.b16 %v1308
        %v2569 = vunpack.c.h.b16 %v1308
        %v2570 = vunpack.c.l.b16 %v1309
        %v2571 = vunpack.c.h.b16 %v1309
        %v2572 = vunpack.c.l.b16 %v1310
        %v2573 = vunpack.c.h.b16 %v1310
        %v2574 = vunpack.c.l.b16 %v1311
        %v2575 = vunpack.c.h.b16 %v1311
        %v2576 = vunpack.c.l.b16 %v1312
        %v2577 = vunpack.c.h.b16 %v1312
        %v2578 = vunpack.c.l.b16 %v1313
        %v2579 = vunpack.c.h.b16 %v1313
        %v2580 = vunpack.c.l.b16 %v1314
        %v2581 = vunpack.c.h.b16 %v1314
        %v2582 = vunpack.c.l.b16 %v1315
        %v2583 = vunpack.c.h.b16 %v1315
        %v2584 = vunpack.c.l.b16 %v1316
        %v2585 = vunpack.c.h.b16 %v1316
        %v2586 = vunpack.c.l.b16 %v1317
        %v2587 = vunpack.c.h.b16 %v1317
        %v2588 = vunpack.c.l.b16 %v1318
        %v2589 = vunpack.c.h.b16 %v1318
        %v2590 = vunpack.c.l.b16 %v1319
        %v2591 = vunpack.c.h.b16 %v1319
        %v2592 = vunpack.c.l.b16 %v1320
        %v2593 = vunpack.c.h.b16 %v1320
        %v2594 = vunpack.c.l.b16 %v1321
        %v2595 = vunpack.c.h.b16 %v1321
        %v2596 = vunpack.c.l.b16 %v1322
        %v2597 = vunpack.c.h.b16 %v1322
        %v2598 = vunpack.c.l.b16 %v1323
        %v2599 = vunpack.c.h.b16 %v1323
        %v2600 = vunpack.c.l.b16 %v1324
        %v2601 = vunpack.c.h.b16 %v1324
        %v2602 = vunpack.c.l.b16 %v1325
        %v2603 = vunpack.c.h.b16 %v1325
        %v2604 = vunpack.c.l.b16 %v1326
        %v2605 = vunpack.c.h.b16 %v1326
        %v2606 = vunpack.c.l.b16 %v1327
        %v2607 = vunpack.c.h.b16 %v1327
        %v2608 = vunpack.c.l.b16 %v1328
        %v2609 = vunpack.c.h.b16 %v1328
        %v2610 = vunpack.c.l.b16 %v1329
        %v2611 = vunpack.c.h.b16 %v1329
        %v2612 = vpack.c.b16 %v2392, %v2388
        %v2613 = vpack.c.b16 %v2393, %v2389
        %v2614 = vpack.c.b16 %v2394, %v2390
        %v2615 = vpack.c.b16 %v2395, %v2391
        %v2616 = vpack.c.b16 %v2400, %v2396
        %v2617 = vpack.c.b16 %v2401, %v2397
        %v2618 = vpack.c.b16 %v2402, %v2398
        %v2619 = vpack.c.b16 %v2403, %v2399
        %v2620 = vpack.c.b16 %v2408, %v2404
        %v2621 = vpack.c.b16 %v2409, %v2405
        %v2622 = vpack.c.b16 %v2410, %v2406
        %v2623 = vpack.c.b16 %v2411, %v2407
        %v2624 = vpack.c.b16 %v2416, %v2412
        %v2625 = vpack.c.b16 %v2417, %v2413
        %v2626 = vpack.c.b16 %v2418, %v2414
        %v2627 = vpack.c.b16 %v2419, %v2415
        %v2628 = vpack.c.b16 %v2424, %v2420
        %v2629 = vpack.c.b16 %v2425, %v2421
        %v2630 = vpack.c.b16 %v2426, %v2422
        %v2631 = vpack.c.b16 %v2427, %v2423
        %v2632 = vpack.c.b16 %v2432, %v2428
        %v2633 = vpack.c.b16 %v2433, %v2429
        %v2634 = vpack.c.b16 %v2434, %v2430
        %v2635 = vpack.c.b16 %v2435, %v2431
        %v2636 = vpack.c.b16 %v2440, %v2436
        %v2637 = vpack.c.b16 %v2441, %v2437
        %v2638 = vpack.c.b16 %v2442, %v2438
        %v2639 = vpack.c.b16 %v2443, %v2439
        %v2640 = vpack.c.b16 %v2448, %v2444
        %v2641 = vpack.c.b16 %v2449, %v2445
        %v2642 = vpack.c.b16 %v2450, %v2446
        %v2643 = vpack.c.b16 %v2451, %v2447
        %v2644 = vpack.c.b16 %v2456, %v2452
        %v2645 = vpack.c.b16 %v2457, %v2453
        %v2646 = vpack.c.b16 %v2458, %v2454
        %v2647 = vpack.c.b16 %v2459, %v2455
        %v2648 = vpack.c.b16 %v2464, %v2460
        %v2649 = vpack.c.b16 %v2465, %v2461
        %v2650 = vpack.c.b16 %v2466, %v2462
        %v2651 = vpack.c.b16 %v2467, %v2463
        %v2652 = vpack.c.b16 %v2472, %v2468
        %v2653 = vpack.c.b16 %v2473, %v2469
        %v2654 = vpack.c.b16 %v2474, %v2470
        %v2655 = vpack.c.b16 %v2475, %v2471
        %v2656 = vpack.c.b16 %v2480, %v2476
        %v2657 = vpack.c.b16 %v2481, %v2477
        %v2658 = vpack.c.b16 %v2482, %v2478
        %v2659 = vpack.c.b16 %v2483, %v2479
        %v2660 = vpack.c.b16 %v2488, %v2484
        %v2661 = vpack.c.b16 %v2489, %v2485
        %v2662 = vpack.c.b16 %v2490, %v2486
        %v2663 = vpack.c.b16 %v2491, %v2487
        %v2664 = vpack.c.b16 %v2496, %v2492
        %v2665 = vpack.c.b16 %v2497, %v2493
        %v2666 = vpack.c.b16 %v2498, %v2494
        %v2667 = vpack.c.b16 %v2499, %v2495
        %v2668 = vpack.c.b16 %v2504, %v2500
        %v2669 = vpack.c.b16 %v2505, %v2501
        %v2670 = vpack.c.b16 %v2506, %v2502
        %v2671 = vpack.c.b16 %v2507, %v2503
        %v2672 = vpack.c.b16 %v2512, %v2508
        %v2673 = vpack.c.b16 %v2513, %v2509
        %v2674 = vpack.c.b16 %v2514, %v2510
        %v2675 = vpack.c.b16 %v2515, %v2511
        %v2676 = vpack.c.b16 %v2520, %v2516
        %v2677 = vpack.c.b16 %v2521, %v2517
        %v2678 = vpack.c.b16 %v2522, %v2518
        %v2679 = vpack.c.b16 %v2523, %v2519
        %v2680 = vpack.c.b16 %v2528, %v2524
        %v2681 = vpack.c.b16 %v2529, %v2525
        %v2682 = vpack.c.b16 %v2530, %v2526
        %v2683 = vpack.c.b16 %v2531, %v2527
        %v2684 = vpack.c.b16 %v2536, %v2532
        %v2685 = vpack.c.b16 %v2537, %v2533
        %v2686 = vpack.c.b16 %v2538, %v2534
        %v2687 = vpack.c.b16 %v2539, %v2535
        %v2688 = vpack.c.b16 %v2544, %v2540
        %v2689 = vpack.c.b16 %v2545, %v2541
        %v2690 = vpack.c.b16 %v2546, %v2542
        %v2691 = vpack.c.b16 %v2547, %v2543
        %v2692 = vpack.c.b16 %v2552, %v2548
        %v2693 = vpack.c.b16 %v2553, %v2549
        %v2694 = vpack.c.b16 %v2554, %v2550
        %v2695 = vpack.c.b16 %v2555, %v2551
        %v2696 = vpack.c.b16 %v2560, %v2556
        %v2697 = vpack.c.b16 %v2561, %v2557
        %v2698 = vpack.c.b16 %v2562, %v2558
        %v2699 = vpack.c.b16 %v2563, %v2559
        %v2700 = vpack.c.b16 %v2568, %v2564
        %v2701 = vpack.c.b16 %v2569, %v2565
        %v2702 = vpack.c.b16 %v2570, %v2566
        %v2703 = vpack.c.b16 %v2571, %v2567
        %v2704 = vpack.c.b16 %v2576, %v2572
        %v2705 = vpack.c.b16 %v2577, %v2573
        %v2706 = vpack.c.b16 %v2578, %v2574
        %v2707 = vpack.c.b16 %v2579, %v2575
        %v2708 = vpack.c.b16 %v2584, %v2580
        %v2709 = vpack.c.b16 %v2585, %v2581
        %v2710 = vpack.c.b16 %v2586, %v2582
        %v2711 = vpack.c.b16 %v2587, %v2583
        %v2712 = vpack.c.b16 %v2592, %v2588
        %v2713 = vpack.c.b16 %v2593, %v2589
        %v2714 = vpack.c.b16 %v2594, %v2590
        %v2715 = vpack.c.b16 %v2595, %v2591
        %v2716 = vpack.c.b16 %v2600, %v2596
        %v2717 = vpack.c.b16 %v2601, %v2597
        %v2718 = vpack.c.b16 %v2602, %v2598
        %v2719 = vpack.c.b16 %v2603, %v2599
        %v2720 = vpack.c.b16 %v2608, %v2604
        %v2721 = vpack.c.b16 %v2609, %v2605
        %v2722 = vpack.c.b16 %v2610, %v2606
        %v2723 = vpack.c.b16 %v2611, %v2607
        %v2837 = vsel %vm2064, %v1217, 0
        %2839 = vmatpush.bf16.msra.mxu0 %v2640
        %2840 = vmatpush.bf16.msra.mxu0 %v2636
        %2841 = vmatpush.bf16.msra.mxu0 %v2632
        %2842 = vmatpush.bf16.msra.mxu0 %v2628
        %2843 = vmatpush.bf16.msra.mxu0 %v2624
        %2844 = vmatpush.bf16.msra.mxu0 %v2620
        %2845 = vmatpush.bf16.msra.mxu0 %v2616
        %2846 = vmatpush.bf16.msra.mxu0 %v2612
        %2847 = vmatmul.bf16.gmra.mxu0 %v1214
        %v2848 = vpop.f32.mrf.mxu0
        %v2849 = vadd.f32 %v2117, %v2848
        %v2850 = vpop.f32.mrf.mxu0
        %2851 = vdwg.mxu0
        %2852 = vmatpush.bf16.msra.mxu0 %v2672
        %2853 = vmatpush.bf16.msra.mxu0 %v2668
        %2854 = vmatpush.bf16.msra.mxu0 %v2664
        %2855 = vmatpush.bf16.msra.mxu0 %v2660
        %2856 = vmatpush.bf16.msra.mxu0 %v2656
        %2857 = vmatpush.bf16.msra.mxu0 %v2652
        %2858 = vmatpush.bf16.msra.mxu0 %v2648
        %2859 = vmatpush.bf16.msra.mxu0 %v2644
        %2860 = vmatmul.bf16.gmra.mxu0 %v1215
        %v2861 = vpop.f32.mrf.mxu0
        %v2862 = vadd.f32 %v2849, %v2861
        %v2863 = vpop.f32.mrf.mxu0
        %2864 = vdwg.mxu0
        %2865 = vmatpush.bf16.msra.mxu0 %v2704
        %2866 = vmatpush.bf16.msra.mxu0 %v2700
        %2867 = vmatpush.bf16.msra.mxu0 %v2696
        %2868 = vmatpush.bf16.msra.mxu0 %v2692
        %2869 = vmatpush.bf16.msra.mxu0 %v2688
        %2870 = vmatpush.bf16.msra.mxu0 %v2684
        %2871 = vmatpush.bf16.msra.mxu0 %v2680
        %2872 = vmatpush.bf16.msra.mxu0 %v2676
        %2873 = vmatmul.bf16.gmra.mxu0 %v1216
        %v2874 = vpop.f32.mrf.mxu0
        %v2875 = vadd.f32 %v2862, %v2874
        %v2876 = vpop.f32.mrf.mxu0
        %2877 = vdwg.mxu0
        %2878 = vmatpush.bf16.msra.mxu0 0
        %2879 = vmatpush.bf16.msra.mxu0 0
        %2880 = vmatpush.bf16.msra.mxu0 0
        %2881 = vmatpush.bf16.msra.mxu0 0
        %2882 = vmatpush.bf16.msra.mxu0 %v2720
        %2883 = vmatpush.bf16.msra.mxu0 %v2716
        %2884 = vmatpush.bf16.msra.mxu0 %v2712
        %2885 = vmatpush.bf16.msra.mxu0 %v2708
        %2886 = vmatmul.bf16.gmra.mxu0 %v2837
        %v2887 = vpop.f32.mrf.mxu0
        %v2888 = vadd.f32 %v2875, %v2887
        %v2889 = vpop.f32.mrf.mxu0
        %2890 = vdwg.mxu0
        %2891 = vmatpush.bf16.msra.mxu0 %v2641
        %2892 = vmatpush.bf16.msra.mxu0 %v2637
        %2893 = vmatpush.bf16.msra.mxu0 %v2633
        %2894 = vmatpush.bf16.msra.mxu0 %v2629
        %2895 = vmatpush.bf16.msra.mxu0 %v2625
        %2896 = vmatpush.bf16.msra.mxu0 %v2621
        %2897 = vmatpush.bf16.msra.mxu0 %v2617
        %2898 = vmatpush.bf16.msra.mxu0 %v2613
        %2899 = vmatmul.bf16.gmra.mxu0 %v1214
        %v2900 = vpop.f32.mrf.mxu0
        %v2901 = vadd.f32 %v2169, %v2900
        %v2902 = vpop.f32.mrf.mxu0
        %2903 = vdwg.mxu0
        %2904 = vmatpush.bf16.msra.mxu0 %v2673
        %2905 = vmatpush.bf16.msra.mxu0 %v2669
        %2906 = vmatpush.bf16.msra.mxu0 %v2665
        %2907 = vmatpush.bf16.msra.mxu0 %v2661
        %2908 = vmatpush.bf16.msra.mxu0 %v2657
        %2909 = vmatpush.bf16.msra.mxu0 %v2653
        %2910 = vmatpush.bf16.msra.mxu0 %v2649
        %2911 = vmatpush.bf16.msra.mxu0 %v2645
        %2912 = vmatmul.bf16.gmra.mxu0 %v1215
        %v2913 = vpop.f32.mrf.mxu0
        %v2914 = vadd.f32 %v2901, %v2913
        %v2915 = vpop.f32.mrf.mxu0
        %2916 = vdwg.mxu0
        %2917 = vmatpush.bf16.msra.mxu0 %v2705
        %2918 = vmatpush.bf16.msra.mxu0 %v2701
        %2919 = vmatpush.bf16.msra.mxu0 %v2697
        %2920 = vmatpush.bf16.msra.mxu0 %v2693
        %2921 = vmatpush.bf16.msra.mxu0 %v2689
        %2922 = vmatpush.bf16.msra.mxu0 %v2685
        %2923 = vmatpush.bf16.msra.mxu0 %v2681
        %2924 = vmatpush.bf16.msra.mxu0 %v2677
        %2925 = vmatmul.bf16.gmra.mxu0 %v1216
        %v2926 = vpop.f32.mrf.mxu0
        %v2927 = vadd.f32 %v2914, %v2926
        %v2928 = vpop.f32.mrf.mxu0
        %2929 = vdwg.mxu0
        %2930 = vmatpush.bf16.msra.mxu0 0
        %2931 = vmatpush.bf16.msra.mxu0 0
        %2932 = vmatpush.bf16.msra.mxu0 0
        %2933 = vmatpush.bf16.msra.mxu0 0
        %2934 = vmatpush.bf16.msra.mxu0 %v2721
        %2935 = vmatpush.bf16.msra.mxu0 %v2717
        %2936 = vmatpush.bf16.msra.mxu0 %v2713
        %2937 = vmatpush.bf16.msra.mxu0 %v2709
        %2938 = vmatmul.bf16.gmra.mxu0 %v2837
        %v2939 = vpop.f32.mrf.mxu0
        %v2940 = vadd.f32 %v2927, %v2939
        %v2941 = vpop.f32.mrf.mxu0
        %2942 = vdwg.mxu0
        %2943 = vmatpush.bf16.msra.mxu0 %v2642
        %2944 = vmatpush.bf16.msra.mxu0 %v2638
        %2945 = vmatpush.bf16.msra.mxu0 %v2634
        %2946 = vmatpush.bf16.msra.mxu0 %v2630
        %2947 = vmatpush.bf16.msra.mxu0 %v2626
        %2948 = vmatpush.bf16.msra.mxu0 %v2622
        %2949 = vmatpush.bf16.msra.mxu0 %v2618
        %2950 = vmatpush.bf16.msra.mxu0 %v2614
        %2951 = vmatmul.bf16.gmra.mxu0 %v1214
        %v2952 = vpop.f32.mrf.mxu0
        %v2953 = vadd.f32 %v2221, %v2952
        %v2954 = vpop.f32.mrf.mxu0
        %2955 = vdwg.mxu0
        %2956 = vmatpush.bf16.msra.mxu0 %v2674
        %2957 = vmatpush.bf16.msra.mxu0 %v2670
        %2958 = vmatpush.bf16.msra.mxu0 %v2666
        %2959 = vmatpush.bf16.msra.mxu0 %v2662
        %2960 = vmatpush.bf16.msra.mxu0 %v2658
        %2961 = vmatpush.bf16.msra.mxu0 %v2654
        %2962 = vmatpush.bf16.msra.mxu0 %v2650
        %2963 = vmatpush.bf16.msra.mxu0 %v2646
        %2964 = vmatmul.bf16.gmra.mxu0 %v1215
        %v2965 = vpop.f32.mrf.mxu0
        %v2966 = vadd.f32 %v2953, %v2965
        %v2967 = vpop.f32.mrf.mxu0
        %2968 = vdwg.mxu0
        %2969 = vmatpush.bf16.msra.mxu0 %v2706
        %2970 = vmatpush.bf16.msra.mxu0 %v2702
        %2971 = vmatpush.bf16.msra.mxu0 %v2698
        %2972 = vmatpush.bf16.msra.mxu0 %v2694
        %2973 = vmatpush.bf16.msra.mxu0 %v2690
        %2974 = vmatpush.bf16.msra.mxu0 %v2686
        %2975 = vmatpush.bf16.msra.mxu0 %v2682
        %2976 = vmatpush.bf16.msra.mxu0 %v2678
        %2977 = vmatmul.bf16.gmra.mxu0 %v1216
        %v2978 = vpop.f32.mrf.mxu0
        %v2979 = vadd.f32 %v2966, %v2978
        %v2980 = vpop.f32.mrf.mxu0
        %2981 = vdwg.mxu0
        %2982 = vmatpush.bf16.msra.mxu0 0
        %2983 = vmatpush.bf16.msra.mxu0 0
        %2984 = vmatpush.bf16.msra.mxu0 0
        %2985 = vmatpush.bf16.msra.mxu0 0
        %2986 = vmatpush.bf16.msra.mxu0 %v2722
        %2987 = vmatpush.bf16.msra.mxu0 %v2718
        %2988 = vmatpush.bf16.msra.mxu0 %v2714
        %2989 = vmatpush.bf16.msra.mxu0 %v2710
        %2990 = vmatmul.bf16.gmra.mxu0 %v2837
        %v2991 = vpop.f32.mrf.mxu0
        %v2992 = vadd.f32 %v2979, %v2991
        %v2993 = vpop.f32.mrf.mxu0
        %2994 = vdwg.mxu0
        %2995 = vmatpush.bf16.msra.mxu0 %v2643
        %2996 = vmatpush.bf16.msra.mxu0 %v2639
        %2997 = vmatpush.bf16.msra.mxu0 %v2635
        %2998 = vmatpush.bf16.msra.mxu0 %v2631
        %2999 = vmatpush.bf16.msra.mxu0 %v2627
        %3000 = vmatpush.bf16.msra.mxu0 %v2623
        %3001 = vmatpush.bf16.msra.mxu0 %v2619
        %3002 = vmatpush.bf16.msra.mxu0 %v2615
        %3003 = vmatmul.bf16.gmra.mxu0 %v1214
        %v3004 = vpop.f32.mrf.mxu0
        %v3005 = vadd.f32 %v2273, %v3004
        %v3006 = vpop.f32.mrf.mxu0
        %3007 = vdwg.mxu0
        %3008 = vmatpush.bf16.msra.mxu0 %v2675
        %3009 = vmatpush.bf16.msra.mxu0 %v2671
        %3010 = vmatpush.bf16.msra.mxu0 %v2667
        %3011 = vmatpush.bf16.msra.mxu0 %v2663
        %3012 = vmatpush.bf16.msra.mxu0 %v2659
        %3013 = vmatpush.bf16.msra.mxu0 %v2655
        %3014 = vmatpush.bf16.msra.mxu0 %v2651
        %3015 = vmatpush.bf16.msra.mxu0 %v2647
        %3016 = vmatmul.bf16.gmra.mxu0 %v1215
        %v3017 = vpop.f32.mrf.mxu0
        %v3018 = vadd.f32 %v3005, %v3017
        %v3019 = vpop.f32.mrf.mxu0
        %3020 = vdwg.mxu0
        %3021 = vmatpush.bf16.msra.mxu0 %v2707
        %3022 = vmatpush.bf16.msra.mxu0 %v2703
        %3023 = vmatpush.bf16.msra.mxu0 %v2699
        %3024 = vmatpush.bf16.msra.mxu0 %v2695
        %3025 = vmatpush.bf16.msra.mxu0 %v2691
        %3026 = vmatpush.bf16.msra.mxu0 %v2687
        %3027 = vmatpush.bf16.msra.mxu0 %v2683
        %3028 = vmatpush.bf16.msra.mxu0 %v2679
        %3029 = vmatmul.bf16.gmra.mxu0 %v1216
        %v3030 = vpop.f32.mrf.mxu0
        %v3031 = vadd.f32 %v3018, %v3030
        %v3032 = vpop.f32.mrf.mxu0
        %3033 = vdwg.mxu0
        %3034 = vmatpush.bf16.msra.mxu0 0
        %3035 = vmatpush.bf16.msra.mxu0 0
        %3036 = vmatpush.bf16.msra.mxu0 0
        %3037 = vmatpush.bf16.msra.mxu0 0
        %3038 = vmatpush.bf16.msra.mxu0 %v2723
        %3039 = vmatpush.bf16.msra.mxu0 %v2719
        %3040 = vmatpush.bf16.msra.mxu0 %v2715
        %3041 = vmatpush.bf16.msra.mxu0 %v2711
        %3042 = vmatmul.bf16.gmra.mxu0 %v2837
        %v3043 = vpop.f32.mrf.mxu0
        %v3044 = vadd.f32 %v3031, %v3043
        %v3045 = vpop.f32.mrf.mxu0
        %3046 = vdwg.mxu0
        %s3047 = scalar_lea.vmem [#allocation8], 8
        %v3048 = vld [vmem:[%s3047] sm:$0xf]
        %v3050 = vsel %vm1145, %v3048, 0
        %3052 = vmatpush.bf16.msra.mxu0 0
        %3053 = vmatpush.bf16.msra.mxu0 0
        %3054 = vmatpush.bf16.msra.mxu0 0
        %3055 = vmatpush.bf16.msra.mxu0 0
        %3056 = vmatpush.bf16.msra.mxu0 0
        %3057 = vmatpush.bf16.msra.mxu0 0
        %3058 = vmatpush.bf16.msra.mxu0 0
        %3059 = vmatpush.bf16.msra.mxu0 %v1151
        %3060 = vmatmul.bf16.gmra.mxu0 %v3050
        %v3061 = vpop.f32.mrf.mxu0
        %v3062 = vadd.f32 0.0, %v3061
        %v3063 = vpop.f32.mrf.mxu0
        %3064 = vdwg.mxu0
        %3065 = vmatpush.bf16.msra.mxu0 0
        %3066 = vmatpush.bf16.msra.mxu0 0
        %3067 = vmatpush.bf16.msra.mxu0 0
        %3068 = vmatpush.bf16.msra.mxu0 0
        %3069 = vmatpush.bf16.msra.mxu0 0
        %3070 = vmatpush.bf16.msra.mxu0 0
        %3071 = vmatpush.bf16.msra.mxu0 0
        %3072 = vmatpush.bf16.msra.mxu0 %v1154
        %3073 = vmatmul.bf16.gmra.mxu0 %v3050
        %v3074 = vpop.f32.mrf.mxu0
        %v3075 = vadd.f32 0.0, %v3074
        %v3076 = vpop.f32.mrf.mxu0
        %3077 = vdwg.mxu0
        %3078 = vmatpush.bf16.msra.mxu0 0
        %3079 = vmatpush.bf16.msra.mxu0 0
        %3080 = vmatpush.bf16.msra.mxu0 0
        %3081 = vmatpush.bf16.msra.mxu0 0
        %3082 = vmatpush.bf16.msra.mxu0 0
        %3083 = vmatpush.bf16.msra.mxu0 0
        %3084 = vmatpush.bf16.msra.mxu0 0
        %3085 = vmatpush.bf16.msra.mxu0 %v1157
        %3086 = vmatmul.bf16.gmra.mxu0 %v3050
        %v3087 = vpop.f32.mrf.mxu0
        %v3088 = vadd.f32 0.0, %v3087
        %v3089 = vpop.f32.mrf.mxu0
        %3090 = vdwg.mxu0
        %3091 = vmatpush.bf16.msra.mxu0 0
        %3092 = vmatpush.bf16.msra.mxu0 0
        %3093 = vmatpush.bf16.msra.mxu0 0
        %3094 = vmatpush.bf16.msra.mxu0 0
        %3095 = vmatpush.bf16.msra.mxu0 0
        %3096 = vmatpush.bf16.msra.mxu0 0
        %3097 = vmatpush.bf16.msra.mxu0 0
        %3098 = vmatpush.bf16.msra.mxu0 %v1160
        %3099 = vmatmul.bf16.gmra.mxu0 %v3050
        %v3100 = vpop.f32.mrf.mxu0
        %v3101 = vadd.f32 0.0, %v3100
        %v3102 = vpop.f32.mrf.mxu0
        %3103 = vdwg.mxu0
        %v3104 = vpack.c.bf16 %v3062, %v3062
        %v3105 = vpack.c.bf16 %v3075, %v3075
        %v3106 = vpack.c.bf16 %v3088, %v3088
        %v3107 = vpack.c.bf16 %v3101, %v3101
        %s3108 = scalar_lea.vmem [#allocation10], 1792
        %v3109 = vld [vmem:[%s3108] sm:$0xff]
        %v3110 = vld [vmem:[%s3108 + $0x8] sm:$0xff]
        %v3111 = vld [vmem:[%s3108 + $0x10] sm:$0xff]
        %v3112 = vld [vmem:[%s3108 + $0x18] sm:$0xff]
        %v3113 = vld [vmem:[%s3108 + $0x20] sm:$0xff]
        %v3114 = vld [vmem:[%s3108 + $0x28] sm:$0xff]
        %v3115 = vld [vmem:[%s3108 + $0x30] sm:$0xff]
        %v3116 = vld [vmem:[%s3108 + $0x38] sm:$0xff]
        %v3117 = vld [vmem:[%s3108 + $0x40] sm:$0xff]
        %v3118 = vld [vmem:[%s3108 + $0x48] sm:$0xff]
        %v3119 = vld [vmem:[%s3108 + $0x50] sm:$0xff]
        %v3120 = vld [vmem:[%s3108 + $0x58] sm:$0xff]
        %v3121 = vld [vmem:[%s3108 + $0x60] sm:$0xff]
        %v3122 = vld [vmem:[%s3108 + $0x68] sm:$0xff]
        %v3123 = vld [vmem:[%s3108 + $0x70] sm:$0xff]
        %v3124 = vld [vmem:[%s3108 + $0x78] sm:$0xff]
        %v3125 = vld [vmem:[%s3108 + $0x80] sm:$0xff]
        %v3126 = vld [vmem:[%s3108 + $0x88] sm:$0xff]
        %v3127 = vld [vmem:[%s3108 + $0x90] sm:$0xff]
        %v3128 = vld [vmem:[%s3108 + $0x98] sm:$0xff]
        %v3129 = vld [vmem:[%s3108 + $0xa0] sm:$0xff]
        %v3130 = vld [vmem:[%s3108 + $0xa8] sm:$0xff]
        %v3131 = vld [vmem:[%s3108 + $0xb0] sm:$0xff]
        %v3132 = vld [vmem:[%s3108 + $0xb8] sm:$0xff]
        %v3133 = vld [vmem:[%s3108 + $0xc0] sm:$0xff]
        %v3134 = vld [vmem:[%s3108 + $0xc8] sm:$0xff]
        %v3135 = vld [vmem:[%s3108 + $0xd0] sm:$0xff]
        %v3136 = vld [vmem:[%s3108 + $0xd8] sm:$0xff]
        %v3137 = vld [vmem:[%s3108 + $0xe0] sm:$0xff]
        %v3138 = vld [vmem:[%s3108 + $0xe8] sm:$0xff]
        %v3139 = vld [vmem:[%s3108 + $0xf0] sm:$0xff]
        %v3140 = vld [vmem:[%s3108 + $0xf8] sm:$0xff]
        %v3141 = vld [vmem:[%s3108 + $0x100] sm:$0xff]
        %v3142 = vld [vmem:[%s3108 + $0x108] sm:$0xff]
        %v3143 = vld [vmem:[%s3108 + $0x110] sm:$0xff]
        %v3144 = vld [vmem:[%s3108 + $0x118] sm:$0xff]
        %v3145 = vld [vmem:[%s3108 + $0x120] sm:$0xff]
        %v3146 = vld [vmem:[%s3108 + $0x128] sm:$0xff]
        %v3147 = vld [vmem:[%s3108 + $0x130] sm:$0xff]
        %v3148 = vld [vmem:[%s3108 + $0x138] sm:$0xff]
        %v3149 = vld [vmem:[%s3108 + $0x140] sm:$0xff]
        %v3150 = vld [vmem:[%s3108 + $0x148] sm:$0xff]
        %v3151 = vld [vmem:[%s3108 + $0x150] sm:$0xff]
        %v3152 = vld [vmem:[%s3108 + $0x158] sm:$0xff]
        %v3153 = vld [vmem:[%s3108 + $0x160] sm:$0xff]
        %v3154 = vld [vmem:[%s3108 + $0x168] sm:$0xff]
        %v3155 = vld [vmem:[%s3108 + $0x170] sm:$0xff]
        %v3156 = vld [vmem:[%s3108 + $0x178] sm:$0xff]
        %v3157 = vld [vmem:[%s3108 + $0x180] sm:$0xff]
        %v3158 = vld [vmem:[%s3108 + $0x188] sm:$0xff]
        %v3159 = vld [vmem:[%s3108 + $0x190] sm:$0xff]
        %v3160 = vld [vmem:[%s3108 + $0x198] sm:$0xff]
        %v3161 = vld [vmem:[%s3108 + $0x1a0] sm:$0xff]
        %v3162 = vld [vmem:[%s3108 + $0x1a8] sm:$0xff]
        %v3163 = vld [vmem:[%s3108 + $0x1b0] sm:$0xff]
        %v3164 = vld [vmem:[%s3108 + $0x1b8] sm:$0xff]
        %v3165 = vld [vmem:[%s3108 + $0x1c0] sm:$0xff]
        %v3166 = vld [vmem:[%s3108 + $0x1c8] sm:$0xff]
        %v3167 = vld [vmem:[%s3108 + $0x1d0] sm:$0xff]
        %v3168 = vld [vmem:[%s3108 + $0x1d8] sm:$0xff]
        %v3169 = vld [vmem:[%s3108 + $0x1e0] sm:$0xff]
        %v3170 = vld [vmem:[%s3108 + $0x1e8] sm:$0xff]
        %v3171 = vld [vmem:[%s3108 + $0x1f0] sm:$0xff]
        %v3172 = vld [vmem:[%s3108 + $0x1f8] sm:$0xff]
        %v3173 = vld [vmem:[%s3108 + $0x200] sm:$0xff]
        %v3174 = vld [vmem:[%s3108 + $0x208] sm:$0xff]
        %v3175 = vld [vmem:[%s3108 + $0x210] sm:$0xff]
        %v3176 = vld [vmem:[%s3108 + $0x218] sm:$0xff]
        %v3177 = vld [vmem:[%s3108 + $0x220] sm:$0xff]
        %v3178 = vld [vmem:[%s3108 + $0x228] sm:$0xff]
        %v3179 = vld [vmem:[%s3108 + $0x230] sm:$0xff]
        %v3180 = vld [vmem:[%s3108 + $0x238] sm:$0xff]
        %v3181 = vld [vmem:[%s3108 + $0x240] sm:$0xff]
        %v3182 = vld [vmem:[%s3108 + $0x248] sm:$0xff]
        %v3183 = vld [vmem:[%s3108 + $0x250] sm:$0xff]
        %v3184 = vld [vmem:[%s3108 + $0x258] sm:$0xff]
        %v3185 = vld [vmem:[%s3108 + $0x260] sm:$0xff]
        %v3186 = vld [vmem:[%s3108 + $0x268] sm:$0xff]
        %v3187 = vld [vmem:[%s3108 + $0x270] sm:$0xff]
        %v3188 = vld [vmem:[%s3108 + $0x278] sm:$0xff]
        %v3189 = vld [vmem:[%s3108 + $0x280] sm:$0xff]
        %v3190 = vld [vmem:[%s3108 + $0x288] sm:$0xff]
        %v3191 = vld [vmem:[%s3108 + $0x290] sm:$0xff]
        %v3192 = vld [vmem:[%s3108 + $0x298] sm:$0xff]
        %v3193 = vld [vmem:[%s3108 + $0x2a0] sm:$0xff]
        %v3194 = vld [vmem:[%s3108 + $0x2a8] sm:$0xff]
        %v3195 = vld [vmem:[%s3108 + $0x2b0] sm:$0xff]
        %v3196 = vld [vmem:[%s3108 + $0x2b8] sm:$0xff]
        %v3197 = vld [vmem:[%s3108 + $0x2c0] sm:$0xff]
        %v3198 = vld [vmem:[%s3108 + $0x2c8] sm:$0xff]
        %v3199 = vld [vmem:[%s3108 + $0x2d0] sm:$0xff]
        %v3200 = vld [vmem:[%s3108 + $0x2d8] sm:$0xff]
        %v3201 = vld [vmem:[%s3108 + $0x2e0] sm:$0xff]
        %v3202 = vld [vmem:[%s3108 + $0x2e8] sm:$0xff]
        %v3203 = vld [vmem:[%s3108 + $0x2f0] sm:$0xff]
        %v3204 = vld [vmem:[%s3108 + $0x2f8] sm:$0xff]
        %v3205 = vld [vmem:[%s3108 + $0x300] sm:$0xff]
        %v3206 = vld [vmem:[%s3108 + $0x308] sm:$0xff]
        %v3207 = vld [vmem:[%s3108 + $0x310] sm:$0xff]
        %v3208 = vld [vmem:[%s3108 + $0x318] sm:$0xff]
        %v3209 = vld [vmem:[%s3108 + $0x320] sm:$0xff]
        %v3210 = vld [vmem:[%s3108 + $0x328] sm:$0xff]
        %v3211 = vld [vmem:[%s3108 + $0x330] sm:$0xff]
        %v3212 = vld [vmem:[%s3108 + $0x338] sm:$0xff]
        %v3213 = vld [vmem:[%s3108 + $0x340] sm:$0xff]
        %v3214 = vld [vmem:[%s3108 + $0x348] sm:$0xff]
        %v3215 = vld [vmem:[%s3108 + $0x350] sm:$0xff]
        %v3216 = vld [vmem:[%s3108 + $0x358] sm:$0xff]
        %v3217 = vld [vmem:[%s3108 + $0x360] sm:$0xff]
        %v3218 = vld [vmem:[%s3108 + $0x368] sm:$0xff]
        %v3219 = vld [vmem:[%s3108 + $0x370] sm:$0xff]
        %v3220 = vld [vmem:[%s3108 + $0x378] sm:$0xff]
        %v3333 = vunpack.c.l.b16 %v3109
        %v3334 = vunpack.c.h.b16 %v3109
        %v3335 = vunpack.c.l.b16 %v3110
        %v3336 = vunpack.c.h.b16 %v3110
        %v3337 = vunpack.c.l.b16 %v3111
        %v3338 = vunpack.c.h.b16 %v3111
        %v3339 = vunpack.c.l.b16 %v3112
        %v3340 = vunpack.c.h.b16 %v3112
        %v3341 = vunpack.c.l.b16 %v3113
        %v3342 = vunpack.c.h.b16 %v3113
        %v3343 = vunpack.c.l.b16 %v3114
        %v3344 = vunpack.c.h.b16 %v3114
        %v3345 = vunpack.c.l.b16 %v3115
        %v3346 = vunpack.c.h.b16 %v3115
        %v3347 = vunpack.c.l.b16 %v3116
        %v3348 = vunpack.c.h.b16 %v3116
        %v3349 = vunpack.c.l.b16 %v3117
        %v3350 = vunpack.c.h.b16 %v3117
        %v3351 = vunpack.c.l.b16 %v3118
        %v3352 = vunpack.c.h.b16 %v3118
        %v3353 = vunpack.c.l.b16 %v3119
        %v3354 = vunpack.c.h.b16 %v3119
        %v3355 = vunpack.c.l.b16 %v3120
        %v3356 = vunpack.c.h.b16 %v3120
        %v3357 = vunpack.c.l.b16 %v3121
        %v3358 = vunpack.c.h.b16 %v3121
        %v3359 = vunpack.c.l.b16 %v3122
        %v3360 = vunpack.c.h.b16 %v3122
        %v3361 = vunpack.c.l.b16 %v3123
        %v3362 = vunpack.c.h.b16 %v3123
        %v3363 = vunpack.c.l.b16 %v3124
        %v3364 = vunpack.c.h.b16 %v3124
        %v3365 = vunpack.c.l.b16 %v3125
        %v3366 = vunpack.c.h.b16 %v3125
        %v3367 = vunpack.c.l.b16 %v3126
        %v3368 = vunpack.c.h.b16 %v3126
        %v3369 = vunpack.c.l.b16 %v3127
        %v3370 = vunpack.c.h.b16 %v3127
        %v3371 = vunpack.c.l.b16 %v3128
        %v3372 = vunpack.c.h.b16 %v3128
        %v3373 = vunpack.c.l.b16 %v3129
        %v3374 = vunpack.c.h.b16 %v3129
        %v3375 = vunpack.c.l.b16 %v3130
        %v3376 = vunpack.c.h.b16 %v3130
        %v3377 = vunpack.c.l.b16 %v3131
        %v3378 = vunpack.c.h.b16 %v3131
        %v3379 = vunpack.c.l.b16 %v3132
        %v3380 = vunpack.c.h.b16 %v3132
        %v3381 = vunpack.c.l.b16 %v3133
        %v3382 = vunpack.c.h.b16 %v3133
        %v3383 = vunpack.c.l.b16 %v3134
        %v3384 = vunpack.c.h.b16 %v3134
        %v3385 = vunpack.c.l.b16 %v3135
        %v3386 = vunpack.c.h.b16 %v3135
        %v3387 = vunpack.c.l.b16 %v3136
        %v3388 = vunpack.c.h.b16 %v3136
        %v3389 = vunpack.c.l.b16 %v3137
        %v3390 = vunpack.c.h.b16 %v3137
        %v3391 = vunpack.c.l.b16 %v3138
        %v3392 = vunpack.c.h.b16 %v3138
        %v3393 = vunpack.c.l.b16 %v3139
        %v3394 = vunpack.c.h.b16 %v3139
        %v3395 = vunpack.c.l.b16 %v3140
        %v3396 = vunpack.c.h.b16 %v3140
        %v3397 = vunpack.c.l.b16 %v3141
        %v3398 = vunpack.c.h.b16 %v3141
        %v3399 = vunpack.c.l.b16 %v3142
        %v3400 = vunpack.c.h.b16 %v3142
        %v3401 = vunpack.c.l.b16 %v3143
        %v3402 = vunpack.c.h.b16 %v3143
        %v3403 = vunpack.c.l.b16 %v3144
        %v3404 = vunpack.c.h.b16 %v3144
        %v3405 = vunpack.c.l.b16 %v3145
        %v3406 = vunpack.c.h.b16 %v3145
        %v3407 = vunpack.c.l.b16 %v3146
        %v3408 = vunpack.c.h.b16 %v3146
        %v3409 = vunpack.c.l.b16 %v3147
        %v3410 = vunpack.c.h.b16 %v3147
        %v3411 = vunpack.c.l.b16 %v3148
        %v3412 = vunpack.c.h.b16 %v3148
        %v3413 = vunpack.c.l.b16 %v3149
        %v3414 = vunpack.c.h.b16 %v3149
        %v3415 = vunpack.c.l.b16 %v3150
        %v3416 = vunpack.c.h.b16 %v3150
        %v3417 = vunpack.c.l.b16 %v3151
        %v3418 = vunpack.c.h.b16 %v3151
        %v3419 = vunpack.c.l.b16 %v3152
        %v3420 = vunpack.c.h.b16 %v3152
        %v3421 = vunpack.c.l.b16 %v3153
        %v3422 = vunpack.c.h.b16 %v3153
        %v3423 = vunpack.c.l.b16 %v3154
        %v3424 = vunpack.c.h.b16 %v3154
        %v3425 = vunpack.c.l.b16 %v3155
        %v3426 = vunpack.c.h.b16 %v3155
        %v3427 = vunpack.c.l.b16 %v3156
        %v3428 = vunpack.c.h.b16 %v3156
        %v3429 = vunpack.c.l.b16 %v3157
        %v3430 = vunpack.c.h.b16 %v3157
        %v3431 = vunpack.c.l.b16 %v3158
        %v3432 = vunpack.c.h.b16 %v3158
        %v3433 = vunpack.c.l.b16 %v3159
        %v3434 = vunpack.c.h.b16 %v3159
        %v3435 = vunpack.c.l.b16 %v3160
        %v3436 = vunpack.c.h.b16 %v3160
        %v3437 = vunpack.c.l.b16 %v3161
        %v3438 = vunpack.c.h.b16 %v3161
        %v3439 = vunpack.c.l.b16 %v3162
        %v3440 = vunpack.c.h.b16 %v3162
        %v3441 = vunpack.c.l.b16 %v3163
        %v3442 = vunpack.c.h.b16 %v3163
        %v3443 = vunpack.c.l.b16 %v3164
        %v3444 = vunpack.c.h.b16 %v3164
        %v3445 = vunpack.c.l.b16 %v3165
        %v3446 = vunpack.c.h.b16 %v3165
        %v3447 = vunpack.c.l.b16 %v3166
        %v3448 = vunpack.c.h.b16 %v3166
        %v3449 = vunpack.c.l.b16 %v3167
        %v3450 = vunpack.c.h.b16 %v3167
        %v3451 = vunpack.c.l.b16 %v3168
        %v3452 = vunpack.c.h.b16 %v3168
        %v3453 = vunpack.c.l.b16 %v3169
        %v3454 = vunpack.c.h.b16 %v3169
        %v3455 = vunpack.c.l.b16 %v3170
        %v3456 = vunpack.c.h.b16 %v3170
        %v3457 = vunpack.c.l.b16 %v3171
        %v3458 = vunpack.c.h.b16 %v3171
        %v3459 = vunpack.c.l.b16 %v3172
        %v3460 = vunpack.c.h.b16 %v3172
        %v3461 = vunpack.c.l.b16 %v3173
        %v3462 = vunpack.c.h.b16 %v3173
        %v3463 = vunpack.c.l.b16 %v3174
        %v3464 = vunpack.c.h.b16 %v3174
        %v3465 = vunpack.c.l.b16 %v3175
        %v3466 = vunpack.c.h.b16 %v3175
        %v3467 = vunpack.c.l.b16 %v3176
        %v3468 = vunpack.c.h.b16 %v3176
        %v3469 = vunpack.c.l.b16 %v3177
        %v3470 = vunpack.c.h.b16 %v3177
        %v3471 = vunpack.c.l.b16 %v3178
        %v3472 = vunpack.c.h.b16 %v3178
        %v3473 = vunpack.c.l.b16 %v3179
        %v3474 = vunpack.c.h.b16 %v3179
        %v3475 = vunpack.c.l.b16 %v3180
        %v3476 = vunpack.c.h.b16 %v3180
        %v3477 = vunpack.c.l.b16 %v3181
        %v3478 = vunpack.c.h.b16 %v3181
        %v3479 = vunpack.c.l.b16 %v3182
        %v3480 = vunpack.c.h.b16 %v3182
        %v3481 = vunpack.c.l.b16 %v3183
        %v3482 = vunpack.c.h.b16 %v3183
        %v3483 = vunpack.c.l.b16 %v3184
        %v3484 = vunpack.c.h.b16 %v3184
        %v3485 = vunpack.c.l.b16 %v3185
        %v3486 = vunpack.c.h.b16 %v3185
        %v3487 = vunpack.c.l.b16 %v3186
        %v3488 = vunpack.c.h.b16 %v3186
        %v3489 = vunpack.c.l.b16 %v3187
        %v3490 = vunpack.c.h.b16 %v3187
        %v3491 = vunpack.c.l.b16 %v3188
        %v3492 = vunpack.c.h.b16 %v3188
        %v3493 = vunpack.c.l.b16 %v3189
        %v3494 = vunpack.c.h.b16 %v3189
        %v3495 = vunpack.c.l.b16 %v3190
        %v3496 = vunpack.c.h.b16 %v3190
        %v3497 = vunpack.c.l.b16 %v3191
        %v3498 = vunpack.c.h.b16 %v3191
        %v3499 = vunpack.c.l.b16 %v3192
        %v3500 = vunpack.c.h.b16 %v3192
        %v3501 = vunpack.c.l.b16 %v3193
        %v3502 = vunpack.c.h.b16 %v3193
        %v3503 = vunpack.c.l.b16 %v3194
        %v3504 = vunpack.c.h.b16 %v3194
        %v3505 = vunpack.c.l.b16 %v3195
        %v3506 = vunpack.c.h.b16 %v3195
        %v3507 = vunpack.c.l.b16 %v3196
        %v3508 = vunpack.c.h.b16 %v3196
        %v3509 = vunpack.c.l.b16 %v3197
        %v3510 = vunpack.c.h.b16 %v3197
        %v3511 = vunpack.c.l.b16 %v3198
        %v3512 = vunpack.c.h.b16 %v3198
        %v3513 = vunpack.c.l.b16 %v3199
        %v3514 = vunpack.c.h.b16 %v3199
        %v3515 = vunpack.c.l.b16 %v3200
        %v3516 = vunpack.c.h.b16 %v3200
        %v3517 = vunpack.c.l.b16 %v3201
        %v3518 = vunpack.c.h.b16 %v3201
        %v3519 = vunpack.c.l.b16 %v3202
        %v3520 = vunpack.c.h.b16 %v3202
        %v3521 = vunpack.c.l.b16 %v3203
        %v3522 = vunpack.c.h.b16 %v3203
        %v3523 = vunpack.c.l.b16 %v3204
        %v3524 = vunpack.c.h.b16 %v3204
        %v3525 = vunpack.c.l.b16 %v3205
        %v3526 = vunpack.c.h.b16 %v3205
        %v3527 = vunpack.c.l.b16 %v3206
        %v3528 = vunpack.c.h.b16 %v3206
        %v3529 = vunpack.c.l.b16 %v3207
        %v3530 = vunpack.c.h.b16 %v3207
        %v3531 = vunpack.c.l.b16 %v3208
        %v3532 = vunpack.c.h.b16 %v3208
        %v3533 = vunpack.c.l.b16 %v3209
        %v3534 = vunpack.c.h.b16 %v3209
        %v3535 = vunpack.c.l.b16 %v3210
        %v3536 = vunpack.c.h.b16 %v3210
        %v3537 = vunpack.c.l.b16 %v3211
        %v3538 = vunpack.c.h.b16 %v3211
        %v3539 = vunpack.c.l.b16 %v3212
        %v3540 = vunpack.c.h.b16 %v3212
        %v3541 = vunpack.c.l.b16 %v3213
        %v3542 = vunpack.c.h.b16 %v3213
        %v3543 = vunpack.c.l.b16 %v3214
        %v3544 = vunpack.c.h.b16 %v3214
        %v3545 = vunpack.c.l.b16 %v3215
        %v3546 = vunpack.c.h.b16 %v3215
        %v3547 = vunpack.c.l.b16 %v3216
        %v3548 = vunpack.c.h.b16 %v3216
        %v3549 = vunpack.c.l.b16 %v3217
        %v3550 = vunpack.c.h.b16 %v3217
        %v3551 = vunpack.c.l.b16 %v3218
        %v3552 = vunpack.c.h.b16 %v3218
        %v3553 = vunpack.c.l.b16 %v3219
        %v3554 = vunpack.c.h.b16 %v3219
        %v3555 = vunpack.c.l.b16 %v3220
        %v3556 = vunpack.c.h.b16 %v3220
        %v3557 = vpack.c.b16 %v3337, %v3333
        %v3558 = vpack.c.b16 %v3338, %v3334
        %v3559 = vpack.c.b16 %v3339, %v3335
        %v3560 = vpack.c.b16 %v3340, %v3336
        %v3561 = vpack.c.b16 %v3345, %v3341
        %v3562 = vpack.c.b16 %v3346, %v3342
        %v3563 = vpack.c.b16 %v3347, %v3343
        %v3564 = vpack.c.b16 %v3348, %v3344
        %v3565 = vpack.c.b16 %v3353, %v3349
        %v3566 = vpack.c.b16 %v3354, %v3350
        %v3567 = vpack.c.b16 %v3355, %v3351
        %v3568 = vpack.c.b16 %v3356, %v3352
        %v3569 = vpack.c.b16 %v3361, %v3357
        %v3570 = vpack.c.b16 %v3362, %v3358
        %v3571 = vpack.c.b16 %v3363, %v3359
        %v3572 = vpack.c.b16 %v3364, %v3360
        %v3573 = vpack.c.b16 %v3369, %v3365
        %v3574 = vpack.c.b16 %v3370, %v3366
        %v3575 = vpack.c.b16 %v3371, %v3367
        %v3576 = vpack.c.b16 %v3372, %v3368
        %v3577 = vpack.c.b16 %v3377, %v3373
        %v3578 = vpack.c.b16 %v3378, %v3374
        %v3579 = vpack.c.b16 %v3379, %v3375
        %v3580 = vpack.c.b16 %v3380, %v3376
        %v3581 = vpack.c.b16 %v3385, %v3381
        %v3582 = vpack.c.b16 %v3386, %v3382
        %v3583 = vpack.c.b16 %v3387, %v3383
        %v3584 = vpack.c.b16 %v3388, %v3384
        %v3585 = vpack.c.b16 %v3393, %v3389
        %v3586 = vpack.c.b16 %v3394, %v3390
        %v3587 = vpack.c.b16 %v3395, %v3391
        %v3588 = vpack.c.b16 %v3396, %v3392
        %v3589 = vpack.c.b16 %v3401, %v3397
        %v3590 = vpack.c.b16 %v3402, %v3398
        %v3591 = vpack.c.b16 %v3403, %v3399
        %v3592 = vpack.c.b16 %v3404, %v3400
        %v3593 = vpack.c.b16 %v3409, %v3405
        %v3594 = vpack.c.b16 %v3410, %v3406
        %v3595 = vpack.c.b16 %v3411, %v3407
        %v3596 = vpack.c.b16 %v3412, %v3408
        %v3597 = vpack.c.b16 %v3417, %v3413
        %v3598 = vpack.c.b16 %v3418, %v3414
        %v3599 = vpack.c.b16 %v3419, %v3415
        %v3600 = vpack.c.b16 %v3420, %v3416
        %v3601 = vpack.c.b16 %v3425, %v3421
        %v3602 = vpack.c.b16 %v3426, %v3422
        %v3603 = vpack.c.b16 %v3427, %v3423
        %v3604 = vpack.c.b16 %v3428, %v3424
        %v3605 = vpack.c.b16 %v3433, %v3429
        %v3606 = vpack.c.b16 %v3434, %v3430
        %v3607 = vpack.c.b16 %v3435, %v3431
        %v3608 = vpack.c.b16 %v3436, %v3432
        %v3609 = vpack.c.b16 %v3441, %v3437
        %v3610 = vpack.c.b16 %v3442, %v3438
        %v3611 = vpack.c.b16 %v3443, %v3439
        %v3612 = vpack.c.b16 %v3444, %v3440
        %v3613 = vpack.c.b16 %v3449, %v3445
        %v3614 = vpack.c.b16 %v3450, %v3446
        %v3615 = vpack.c.b16 %v3451, %v3447
        %v3616 = vpack.c.b16 %v3452, %v3448
        %v3617 = vpack.c.b16 %v3457, %v3453
        %v3618 = vpack.c.b16 %v3458, %v3454
        %v3619 = vpack.c.b16 %v3459, %v3455
        %v3620 = vpack.c.b16 %v3460, %v3456
        %v3621 = vpack.c.b16 %v3465, %v3461
        %v3622 = vpack.c.b16 %v3466, %v3462
        %v3623 = vpack.c.b16 %v3467, %v3463
        %v3624 = vpack.c.b16 %v3468, %v3464
        %v3625 = vpack.c.b16 %v3473, %v3469
        %v3626 = vpack.c.b16 %v3474, %v3470
        %v3627 = vpack.c.b16 %v3475, %v3471
        %v3628 = vpack.c.b16 %v3476, %v3472
        %v3629 = vpack.c.b16 %v3481, %v3477
        %v3630 = vpack.c.b16 %v3482, %v3478
        %v3631 = vpack.c.b16 %v3483, %v3479
        %v3632 = vpack.c.b16 %v3484, %v3480
        %v3633 = vpack.c.b16 %v3489, %v3485
        %v3634 = vpack.c.b16 %v3490, %v3486
        %v3635 = vpack.c.b16 %v3491, %v3487
        %v3636 = vpack.c.b16 %v3492, %v3488
        %v3637 = vpack.c.b16 %v3497, %v3493
        %v3638 = vpack.c.b16 %v3498, %v3494
        %v3639 = vpack.c.b16 %v3499, %v3495
        %v3640 = vpack.c.b16 %v3500, %v3496
        %v3641 = vpack.c.b16 %v3505, %v3501
        %v3642 = vpack.c.b16 %v3506, %v3502
        %v3643 = vpack.c.b16 %v3507, %v3503
        %v3644 = vpack.c.b16 %v3508, %v3504
        %v3645 = vpack.c.b16 %v3513, %v3509
        %v3646 = vpack.c.b16 %v3514, %v3510
        %v3647 = vpack.c.b16 %v3515, %v3511
        %v3648 = vpack.c.b16 %v3516, %v3512
        %v3649 = vpack.c.b16 %v3521, %v3517
        %v3650 = vpack.c.b16 %v3522, %v3518
        %v3651 = vpack.c.b16 %v3523, %v3519
        %v3652 = vpack.c.b16 %v3524, %v3520
        %v3653 = vpack.c.b16 %v3529, %v3525
        %v3654 = vpack.c.b16 %v3530, %v3526
        %v3655 = vpack.c.b16 %v3531, %v3527
        %v3656 = vpack.c.b16 %v3532, %v3528
        %v3657 = vpack.c.b16 %v3537, %v3533
        %v3658 = vpack.c.b16 %v3538, %v3534
        %v3659 = vpack.c.b16 %v3539, %v3535
        %v3660 = vpack.c.b16 %v3540, %v3536
        %v3661 = vpack.c.b16 %v3545, %v3541
        %v3662 = vpack.c.b16 %v3546, %v3542
        %v3663 = vpack.c.b16 %v3547, %v3543
        %v3664 = vpack.c.b16 %v3548, %v3544
        %v3665 = vpack.c.b16 %v3553, %v3549
        %v3666 = vpack.c.b16 %v3554, %v3550
        %v3667 = vpack.c.b16 %v3555, %v3551
        %v3668 = vpack.c.b16 %v3556, %v3552
        %v3782 = vsel %vm2064, %v3107, 0
        %3784 = vmatpush.bf16.msra.mxu0 %v3585
        %3785 = vmatpush.bf16.msra.mxu0 %v3581
        %3786 = vmatpush.bf16.msra.mxu0 %v3577
        %3787 = vmatpush.bf16.msra.mxu0 %v3573
        %3788 = vmatpush.bf16.msra.mxu0 %v3569
        %3789 = vmatpush.bf16.msra.mxu0 %v3565
        %3790 = vmatpush.bf16.msra.mxu0 %v3561
        %3791 = vmatpush.bf16.msra.mxu0 %v3557
        %3792 = vmatmul.bf16.gmra.mxu0 %v3104
        %v3793 = vpop.f32.mrf.mxu0
        %v3794 = vadd.f32 0.0, %v3793
        %v3795 = vpop.f32.mrf.mxu0
        %3796 = vdwg.mxu0
        %3797 = vmatpush.bf16.msra.mxu0 %v3617
        %3798 = vmatpush.bf16.msra.mxu0 %v3613
        %3799 = vmatpush.bf16.msra.mxu0 %v3609
        %3800 = vmatpush.bf16.msra.mxu0 %v3605
        %3801 = vmatpush.bf16.msra.mxu0 %v3601
        %3802 = vmatpush.bf16.msra.mxu0 %v3597
        %3803 = vmatpush.bf16.msra.mxu0 %v3593
        %3804 = vmatpush.bf16.msra.mxu0 %v3589
        %3805 = vmatmul.bf16.gmra.mxu0 %v3105
        %v3806 = vpop.f32.mrf.mxu0
        %v3807 = vadd.f32 %v3794, %v3806
        %v3808 = vpop.f32.mrf.mxu0
        %3809 = vdwg.mxu0
        %3810 = vmatpush.bf16.msra.mxu0 %v3649
        %3811 = vmatpush.bf16.msra.mxu0 %v3645
        %3812 = vmatpush.bf16.msra.mxu0 %v3641
        %3813 = vmatpush.bf16.msra.mxu0 %v3637
        %3814 = vmatpush.bf16.msra.mxu0 %v3633
        %3815 = vmatpush.bf16.msra.mxu0 %v3629
        %3816 = vmatpush.bf16.msra.mxu0 %v3625
        %3817 = vmatpush.bf16.msra.mxu0 %v3621
        %3818 = vmatmul.bf16.gmra.mxu0 %v3106
        %v3819 = vpop.f32.mrf.mxu0
        %v3820 = vadd.f32 %v3807, %v3819
        %v3821 = vpop.f32.mrf.mxu0
        %3822 = vdwg.mxu0
        %3823 = vmatpush.bf16.msra.mxu0 0
        %3824 = vmatpush.bf16.msra.mxu0 0
        %3825 = vmatpush.bf16.msra.mxu0 0
        %3826 = vmatpush.bf16.msra.mxu0 0
        %3827 = vmatpush.bf16.msra.mxu0 %v3665
        %3828 = vmatpush.bf16.msra.mxu0 %v3661
        %3829 = vmatpush.bf16.msra.mxu0 %v3657
        %3830 = vmatpush.bf16.msra.mxu0 %v3653
        %3831 = vmatmul.bf16.gmra.mxu0 %v3782
        %v3832 = vpop.f32.mrf.mxu0
        %v3833 = vadd.f32 %v3820, %v3832
        %v3834 = vpop.f32.mrf.mxu0
        %3835 = vdwg.mxu0
        %3836 = vmatpush.bf16.msra.mxu0 %v3586
        %3837 = vmatpush.bf16.msra.mxu0 %v3582
        %3838 = vmatpush.bf16.msra.mxu0 %v3578
        %3839 = vmatpush.bf16.msra.mxu0 %v3574
        %3840 = vmatpush.bf16.msra.mxu0 %v3570
        %3841 = vmatpush.bf16.msra.mxu0 %v3566
        %3842 = vmatpush.bf16.msra.mxu0 %v3562
        %3843 = vmatpush.bf16.msra.mxu0 %v3558
        %3844 = vmatmul.bf16.gmra.mxu0 %v3104
        %v3845 = vpop.f32.mrf.mxu0
        %v3846 = vadd.f32 0.0, %v3845
        %v3847 = vpop.f32.mrf.mxu0
        %3848 = vdwg.mxu0
        %3849 = vmatpush.bf16.msra.mxu0 %v3618
        %3850 = vmatpush.bf16.msra.mxu0 %v3614
        %3851 = vmatpush.bf16.msra.mxu0 %v3610
        %3852 = vmatpush.bf16.msra.mxu0 %v3606
        %3853 = vmatpush.bf16.msra.mxu0 %v3602
        %3854 = vmatpush.bf16.msra.mxu0 %v3598
        %3855 = vmatpush.bf16.msra.mxu0 %v3594
        %3856 = vmatpush.bf16.msra.mxu0 %v3590
        %3857 = vmatmul.bf16.gmra.mxu0 %v3105
        %v3858 = vpop.f32.mrf.mxu0
        %v3859 = vadd.f32 %v3846, %v3858
        %v3860 = vpop.f32.mrf.mxu0
        %3861 = vdwg.mxu0
        %3862 = vmatpush.bf16.msra.mxu0 %v3650
        %3863 = vmatpush.bf16.msra.mxu0 %v3646
        %3864 = vmatpush.bf16.msra.mxu0 %v3642
        %3865 = vmatpush.bf16.msra.mxu0 %v3638
        %3866 = vmatpush.bf16.msra.mxu0 %v3634
        %3867 = vmatpush.bf16.msra.mxu0 %v3630
        %3868 = vmatpush.bf16.msra.mxu0 %v3626
        %3869 = vmatpush.bf16.msra.mxu0 %v3622
        %3870 = vmatmul.bf16.gmra.mxu0 %v3106
        %v3871 = vpop.f32.mrf.mxu0
        %v3872 = vadd.f32 %v3859, %v3871
        %v3873 = vpop.f32.mrf.mxu0
        %3874 = vdwg.mxu0
        %3875 = vmatpush.bf16.msra.mxu0 0
        %3876 = vmatpush.bf16.msra.mxu0 0
        %3877 = vmatpush.bf16.msra.mxu0 0
        %3878 = vmatpush.bf16.msra.mxu0 0
        %3879 = vmatpush.bf16.msra.mxu0 %v3666
        %3880 = vmatpush.bf16.msra.mxu0 %v3662
        %3881 = vmatpush.bf16.msra.mxu0 %v3658
        %3882 = vmatpush.bf16.msra.mxu0 %v3654
        %3883 = vmatmul.bf16.gmra.mxu0 %v3782
        %v3884 = vpop.f32.mrf.mxu0
        %v3885 = vadd.f32 %v3872, %v3884
        %v3886 = vpop.f32.mrf.mxu0
        %3887 = vdwg.mxu0
        %3888 = vmatpush.bf16.msra.mxu0 %v3587
        %3889 = vmatpush.bf16.msra.mxu0 %v3583
        %3890 = vmatpush.bf16.msra.mxu0 %v3579
        %3891 = vmatpush.bf16.msra.mxu0 %v3575
        %3892 = vmatpush.bf16.msra.mxu0 %v3571
        %3893 = vmatpush.bf16.msra.mxu0 %v3567
        %3894 = vmatpush.bf16.msra.mxu0 %v3563
        %3895 = vmatpush.bf16.msra.mxu0 %v3559
        %3896 = vmatmul.bf16.gmra.mxu0 %v3104
        %v3897 = vpop.f32.mrf.mxu0
        %v3898 = vadd.f32 0.0, %v3897
        %v3899 = vpop.f32.mrf.mxu0
        %3900 = vdwg.mxu0
        %3901 = vmatpush.bf16.msra.mxu0 %v3619
        %3902 = vmatpush.bf16.msra.mxu0 %v3615
        %3903 = vmatpush.bf16.msra.mxu0 %v3611
        %3904 = vmatpush.bf16.msra.mxu0 %v3607
        %3905 = vmatpush.bf16.msra.mxu0 %v3603
        %3906 = vmatpush.bf16.msra.mxu0 %v3599
        %3907 = vmatpush.bf16.msra.mxu0 %v3595
        %3908 = vmatpush.bf16.msra.mxu0 %v3591
        %3909 = vmatmul.bf16.gmra.mxu0 %v3105
        %v3910 = vpop.f32.mrf.mxu0
        %v3911 = vadd.f32 %v3898, %v3910
        %v3912 = vpop.f32.mrf.mxu0
        %3913 = vdwg.mxu0
        %3914 = vmatpush.bf16.msra.mxu0 %v3651
        %3915 = vmatpush.bf16.msra.mxu0 %v3647
        %3916 = vmatpush.bf16.msra.mxu0 %v3643
        %3917 = vmatpush.bf16.msra.mxu0 %v3639
        %3918 = vmatpush.bf16.msra.mxu0 %v3635
        %3919 = vmatpush.bf16.msra.mxu0 %v3631
        %3920 = vmatpush.bf16.msra.mxu0 %v3627
        %3921 = vmatpush.bf16.msra.mxu0 %v3623
        %3922 = vmatmul.bf16.gmra.mxu0 %v3106
        %v3923 = vpop.f32.mrf.mxu0
        %v3924 = vadd.f32 %v3911, %v3923
        %v3925 = vpop.f32.mrf.mxu0
        %3926 = vdwg.mxu0
        %3927 = vmatpush.bf16.msra.mxu0 0
        %3928 = vmatpush.bf16.msra.mxu0 0
        %3929 = vmatpush.bf16.msra.mxu0 0
        %3930 = vmatpush.bf16.msra.mxu0 0
        %3931 = vmatpush.bf16.msra.mxu0 %v3667
        %3932 = vmatpush.bf16.msra.mxu0 %v3663
        %3933 = vmatpush.bf16.msra.mxu0 %v3659
        %3934 = vmatpush.bf16.msra.mxu0 %v3655
        %3935 = vmatmul.bf16.gmra.mxu0 %v3782
        %v3936 = vpop.f32.mrf.mxu0
        %v3937 = vadd.f32 %v3924, %v3936
        %v3938 = vpop.f32.mrf.mxu0
        %3939 = vdwg.mxu0
        %3940 = vmatpush.bf16.msra.mxu0 %v3588
        %3941 = vmatpush.bf16.msra.mxu0 %v3584
        %3942 = vmatpush.bf16.msra.mxu0 %v3580
        %3943 = vmatpush.bf16.msra.mxu0 %v3576
        %3944 = vmatpush.bf16.msra.mxu0 %v3572
        %3945 = vmatpush.bf16.msra.mxu0 %v3568
        %3946 = vmatpush.bf16.msra.mxu0 %v3564
        %3947 = vmatpush.bf16.msra.mxu0 %v3560
        %3948 = vmatmul.bf16.gmra.mxu0 %v3104
        %v3949 = vpop.f32.mrf.mxu0
        %v3950 = vadd.f32 0.0, %v3949
        %v3951 = vpop.f32.mrf.mxu0
        %3952 = vdwg.mxu0
        %3953 = vmatpush.bf16.msra.mxu0 %v3620
        %3954 = vmatpush.bf16.msra.mxu0 %v3616
        %3955 = vmatpush.bf16.msra.mxu0 %v3612
        %3956 = vmatpush.bf16.msra.mxu0 %v3608
        %3957 = vmatpush.bf16.msra.mxu0 %v3604
        %3958 = vmatpush.bf16.msra.mxu0 %v3600
        %3959 = vmatpush.bf16.msra.mxu0 %v3596
        %3960 = vmatpush.bf16.msra.mxu0 %v3592
        %3961 = vmatmul.bf16.gmra.mxu0 %v3105
        %v3962 = vpop.f32.mrf.mxu0
        %v3963 = vadd.f32 %v3950, %v3962
        %v3964 = vpop.f32.mrf.mxu0
        %3965 = vdwg.mxu0
        %3966 = vmatpush.bf16.msra.mxu0 %v3652
        %3967 = vmatpush.bf16.msra.mxu0 %v3648
        %3968 = vmatpush.bf16.msra.mxu0 %v3644
        %3969 = vmatpush.bf16.msra.mxu0 %v3640
        %3970 = vmatpush.bf16.msra.mxu0 %v3636
        %3971 = vmatpush.bf16.msra.mxu0 %v3632
        %3972 = vmatpush.bf16.msra.mxu0 %v3628
        %3973 = vmatpush.bf16.msra.mxu0 %v3624
        %3974 = vmatmul.bf16.gmra.mxu0 %v3106
        %v3975 = vpop.f32.mrf.mxu0
        %v3976 = vadd.f32 %v3963, %v3975
        %v3977 = vpop.f32.mrf.mxu0
        %3978 = vdwg.mxu0
        %3979 = vmatpush.bf16.msra.mxu0 0
        %3980 = vmatpush.bf16.msra.mxu0 0
        %3981 = vmatpush.bf16.msra.mxu0 0
        %3982 = vmatpush.bf16.msra.mxu0 0
        %3983 = vmatpush.bf16.msra.mxu0 %v3668
        %3984 = vmatpush.bf16.msra.mxu0 %v3664
        %3985 = vmatpush.bf16.msra.mxu0 %v3660
        %3986 = vmatpush.bf16.msra.mxu0 %v3656
        %3987 = vmatmul.bf16.gmra.mxu0 %v3782
        %v3988 = vpop.f32.mrf.mxu0
        %v3989 = vadd.f32 %v3976, %v3988
        %v3990 = vpop.f32.mrf.mxu0
        %3991 = vdwg.mxu0
        %v3992 = vadd.f32 %v2888, %v3833
        %v3993 = vadd.f32 %v2940, %v3885
        %v3994 = vadd.f32 %v2992, %v3937
        %v3995 = vadd.f32 %v3044, %v3989
        %v3996 = vld [vmem:[#allocation11] sm:$0xf]
        %v3998 = vperm.slane %v3996, 0
        %v3999 = vperm.slane %v3996, 1
        %v4000 = vperm.slane %v3996, 2
        %v4001 = vperm.slane %v3996, 3
        %v4006 = vadd.f32 %v3992, %v3998
        %v4007 = vadd.f32 %v3993, %v3999
        %v4008 = vadd.f32 %v3994, %v4000
        %v4009 = vadd.f32 %v3995, %v4001
        %v4010 = vmax.f32 %v4006, 0.0
        %v4011 = vmax.f32 %v4007, 0.0
        %v4012 = vmax.f32 %v4008, 0.0
        %v4013 = vmax.f32 %v4009, 0.0
        %v4014 = vpack.c.bf16 %v4010, %v4010
        %v4015 = vpack.c.bf16 %v4011, %v4011
        %v4016 = vpack.c.bf16 %v4012, %v4012
        %v4017 = vpack.c.bf16 %v4013, %v4013
        %v4018 = vld [vmem:[#allocation13] sm:$0x3]
        %vm4019 = vcmask 56320
        %v4021 = vsel %vm4019, %v4018, 0
        %vm4023 = vcmask 1042432
        %vm4024 = vcmask 1043456
        %v4025 = vsel %vm4023, 4294967295, 65535
        %v4026 = vsel %vm4024, %v4025, 0
        %v4028 = vand.u32 %v4014, %v4026
        %v4031 = vand.u32 %v4015, %v4026
        %v4034 = vand.u32 %v4016, %v4026
        %v4037 = vand.u32 %v4017, %v4026
        %4039 = vmatpush.bf16.msra.mxu0 0
        %4040 = vmatpush.bf16.msra.mxu0 0
        %4041 = vmatpush.bf16.msra.mxu0 0
        %4042 = vmatpush.bf16.msra.mxu0 0
        %4043 = vmatpush.bf16.msra.mxu0 0
        %4044 = vmatpush.bf16.msra.mxu0 0
        %4045 = vmatpush.bf16.msra.mxu0 0
        %4046 = vmatpush.bf16.msra.mxu0 %v4028
        %4047 = vmatmul.bf16.gmra.mxu0 %v4021
        %v4048 = vpop.f32.mrf.mxu0
        %v4049 = vadd.f32 0.0, %v4048
        %v4050 = vpop.f32.mrf.mxu0
        %4051 = vdwg.mxu0
        %4052 = vmatpush.bf16.msra.mxu0 0
        %4053 = vmatpush.bf16.msra.mxu0 0
        %4054 = vmatpush.bf16.msra.mxu0 0
        %4055 = vmatpush.bf16.msra.mxu0 0
        %4056 = vmatpush.bf16.msra.mxu0 0
        %4057 = vmatpush.bf16.msra.mxu0 0
        %4058 = vmatpush.bf16.msra.mxu0 0
        %4059 = vmatpush.bf16.msra.mxu0 %v4031
        %4060 = vmatmul.bf16.gmra.mxu0 %v4021
        %v4061 = vpop.f32.mrf.mxu0
        %v4062 = vadd.f32 0.0, %v4061
        %v4063 = vpop.f32.mrf.mxu0
        %4064 = vdwg.mxu0
        %4065 = vmatpush.bf16.msra.mxu0 0
        %4066 = vmatpush.bf16.msra.mxu0 0
        %4067 = vmatpush.bf16.msra.mxu0 0
        %4068 = vmatpush.bf16.msra.mxu0 0
        %4069 = vmatpush.bf16.msra.mxu0 0
        %4070 = vmatpush.bf16.msra.mxu0 0
        %4071 = vmatpush.bf16.msra.mxu0 0
        %4072 = vmatpush.bf16.msra.mxu0 %v4034
        %4073 = vmatmul.bf16.gmra.mxu0 %v4021
        %v4074 = vpop.f32.mrf.mxu0
        %v4075 = vadd.f32 0.0, %v4074
        %v4076 = vpop.f32.mrf.mxu0
        %4077 = vdwg.mxu0
        %4078 = vmatpush.bf16.msra.mxu0 0
        %4079 = vmatpush.bf16.msra.mxu0 0
        %4080 = vmatpush.bf16.msra.mxu0 0
        %4081 = vmatpush.bf16.msra.mxu0 0
        %4082 = vmatpush.bf16.msra.mxu0 0
        %4083 = vmatpush.bf16.msra.mxu0 0
        %4084 = vmatpush.bf16.msra.mxu0 0
        %4085 = vmatpush.bf16.msra.mxu0 %v4037
        %4086 = vmatmul.bf16.gmra.mxu0 %v4021
        %v4087 = vpop.f32.mrf.mxu0
        %v4088 = vadd.f32 0.0, %v4087
        %v4089 = vpop.f32.mrf.mxu0
        %4090 = vdwg.mxu0
        %v4091 = vpack.c.bf16 %v4049, %v4049
        %v4092 = vpack.c.bf16 %v4062, %v4062
        %v4093 = vpack.c.bf16 %v4075, %v4075
        %v4094 = vpack.c.bf16 %v4088, %v4088
        %v4095 = vld [vmem:[#allocation14] sm:$0xff]
        %v4096 = vld [vmem:[#allocation14 + $0x8] sm:$0xff]
        %v4097 = vld [vmem:[#allocation14 + $0x10] sm:$0xff]
        %v4098 = vld [vmem:[#allocation14 + $0x18] sm:$0xff]
        %v4099 = vld [vmem:[#allocation14 + $0x20] sm:$0xff]
        %v4100 = vld [vmem:[#allocation14 + $0x28] sm:$0xff]
        %v4101 = vld [vmem:[#allocation14 + $0x30] sm:$0xff]
        %v4102 = vld [vmem:[#allocation14 + $0x38] sm:$0xff]
        %v4103 = vld [vmem:[#allocation14 + $0x40] sm:$0xff]
        %v4104 = vld [vmem:[#allocation14 + $0x48] sm:$0xff]
        %v4105 = vld [vmem:[#allocation14 + $0x50] sm:$0xff]
        %v4106 = vld [vmem:[#allocation14 + $0x58] sm:$0xff]
        %v4107 = vld [vmem:[#allocation14 + $0x60] sm:$0xff]
        %v4108 = vld [vmem:[#allocation14 + $0x68] sm:$0xff]
        %v4109 = vld [vmem:[#allocation14 + $0x70] sm:$0xff]
        %v4110 = vld [vmem:[#allocation14 + $0x78] sm:$0xff]
        %v4111 = vld [vmem:[#allocation14 + $0x80] sm:$0xff]
        %v4112 = vld [vmem:[#allocation14 + $0x88] sm:$0xff]
        %v4113 = vld [vmem:[#allocation14 + $0x90] sm:$0xff]
        %v4114 = vld [vmem:[#allocation14 + $0x98] sm:$0xff]
        %v4115 = vld [vmem:[#allocation14 + $0xa0] sm:$0xff]
        %v4116 = vld [vmem:[#allocation14 + $0xa8] sm:$0xff]
        %v4117 = vld [vmem:[#allocation14 + $0xb0] sm:$0xff]
        %v4118 = vld [vmem:[#allocation14 + $0xb8] sm:$0xff]
        %v4119 = vld [vmem:[#allocation14 + $0xc0] sm:$0xff]
        %v4120 = vld [vmem:[#allocation14 + $0xc8] sm:$0xff]
        %v4121 = vld [vmem:[#allocation14 + $0xd0] sm:$0xff]
        %v4122 = vld [vmem:[#allocation14 + $0xd8] sm:$0xff]
        %v4123 = vld [vmem:[#allocation14 + $0xe0] sm:$0xff]
        %v4124 = vld [vmem:[#allocation14 + $0xe8] sm:$0xff]
        %v4125 = vld [vmem:[#allocation14 + $0xf0] sm:$0xff]
        %v4126 = vld [vmem:[#allocation14 + $0xf8] sm:$0xff]
        %v4127 = vld [vmem:[#allocation14 + $0x100] sm:$0xff]
        %v4128 = vld [vmem:[#allocation14 + $0x108] sm:$0xff]
        %v4129 = vld [vmem:[#allocation14 + $0x110] sm:$0xff]
        %v4130 = vld [vmem:[#allocation14 + $0x118] sm:$0xff]
        %v4131 = vld [vmem:[#allocation14 + $0x120] sm:$0xff]
        %v4132 = vld [vmem:[#allocation14 + $0x128] sm:$0xff]
        %v4133 = vld [vmem:[#allocation14 + $0x130] sm:$0xff]
        %v4134 = vld [vmem:[#allocation14 + $0x138] sm:$0xff]
        %v4135 = vld [vmem:[#allocation14 + $0x140] sm:$0xff]
        %v4136 = vld [vmem:[#allocation14 + $0x148] sm:$0xff]
        %v4137 = vld [vmem:[#allocation14 + $0x150] sm:$0xff]
        %v4138 = vld [vmem:[#allocation14 + $0x158] sm:$0xff]
        %v4139 = vld [vmem:[#allocation14 + $0x160] sm:$0xff]
        %v4140 = vld [vmem:[#allocation14 + $0x168] sm:$0xff]
        %v4141 = vld [vmem:[#allocation14 + $0x170] sm:$0xff]
        %v4142 = vld [vmem:[#allocation14 + $0x178] sm:$0xff]
        %v4143 = vld [vmem:[#allocation14 + $0x180] sm:$0xff]
        %v4144 = vld [vmem:[#allocation14 + $0x188] sm:$0xff]
        %v4145 = vld [vmem:[#allocation14 + $0x190] sm:$0xff]
        %v4146 = vld [vmem:[#allocation14 + $0x198] sm:$0xff]
        %v4147 = vld [vmem:[#allocation14 + $0x1a0] sm:$0xff]
        %v4148 = vld [vmem:[#allocation14 + $0x1a8] sm:$0xff]
        %v4149 = vld [vmem:[#allocation14 + $0x1b0] sm:$0xff]
        %v4150 = vld [vmem:[#allocation14 + $0x1b8] sm:$0xff]
        %v4151 = vld [vmem:[#allocation14 + $0x1c0] sm:$0xff]
        %v4152 = vld [vmem:[#allocation14 + $0x1c8] sm:$0xff]
        %v4153 = vld [vmem:[#allocation14 + $0x1d0] sm:$0xff]
        %v4154 = vld [vmem:[#allocation14 + $0x1d8] sm:$0xff]
        %v4155 = vld [vmem:[#allocation14 + $0x1e0] sm:$0xff]
        %v4156 = vld [vmem:[#allocation14 + $0x1e8] sm:$0xff]
        %v4157 = vld [vmem:[#allocation14 + $0x1f0] sm:$0xff]
        %v4158 = vld [vmem:[#allocation14 + $0x1f8] sm:$0xff]
        %v4159 = vld [vmem:[#allocation14 + $0x200] sm:$0xff]
        %v4160 = vld [vmem:[#allocation14 + $0x208] sm:$0xff]
        %v4161 = vld [vmem:[#allocation14 + $0x210] sm:$0xff]
        %v4162 = vld [vmem:[#allocation14 + $0x218] sm:$0xff]
        %v4163 = vld [vmem:[#allocation14 + $0x220] sm:$0xff]
        %v4164 = vld [vmem:[#allocation14 + $0x228] sm:$0xff]
        %v4165 = vld [vmem:[#allocation14 + $0x230] sm:$0xff]
        %v4166 = vld [vmem:[#allocation14 + $0x238] sm:$0xff]
        %v4167 = vld [vmem:[#allocation14 + $0x240] sm:$0xff]
        %v4168 = vld [vmem:[#allocation14 + $0x248] sm:$0xff]
        %v4169 = vld [vmem:[#allocation14 + $0x250] sm:$0xff]
        %v4170 = vld [vmem:[#allocation14 + $0x258] sm:$0xff]
        %v4171 = vld [vmem:[#allocation14 + $0x260] sm:$0xff]
        %v4172 = vld [vmem:[#allocation14 + $0x268] sm:$0xff]
        %v4173 = vld [vmem:[#allocation14 + $0x270] sm:$0xff]
        %v4174 = vld [vmem:[#allocation14 + $0x278] sm:$0xff]
        %v4175 = vld [vmem:[#allocation14 + $0x280] sm:$0xff]
        %v4176 = vld [vmem:[#allocation14 + $0x288] sm:$0xff]
        %v4177 = vld [vmem:[#allocation14 + $0x290] sm:$0xff]
        %v4178 = vld [vmem:[#allocation14 + $0x298] sm:$0xff]
        %v4179 = vld [vmem:[#allocation14 + $0x2a0] sm:$0xff]
        %v4180 = vld [vmem:[#allocation14 + $0x2a8] sm:$0xff]
        %v4181 = vld [vmem:[#allocation14 + $0x2b0] sm:$0xff]
        %v4182 = vld [vmem:[#allocation14 + $0x2b8] sm:$0xff]
        %v4183 = vld [vmem:[#allocation14 + $0x2c0] sm:$0xff]
        %v4184 = vld [vmem:[#allocation14 + $0x2c8] sm:$0xff]
        %v4185 = vld [vmem:[#allocation14 + $0x2d0] sm:$0xff]
        %v4186 = vld [vmem:[#allocation14 + $0x2d8] sm:$0xff]
        %v4187 = vld [vmem:[#allocation14 + $0x2e0] sm:$0xff]
        %v4188 = vld [vmem:[#allocation14 + $0x2e8] sm:$0xff]
        %v4189 = vld [vmem:[#allocation14 + $0x2f0] sm:$0xff]
        %v4190 = vld [vmem:[#allocation14 + $0x2f8] sm:$0xff]
        %v4191 = vld [vmem:[#allocation14 + $0x300] sm:$0xff]
        %v4192 = vld [vmem:[#allocation14 + $0x308] sm:$0xff]
        %v4193 = vld [vmem:[#allocation14 + $0x310] sm:$0xff]
        %v4194 = vld [vmem:[#allocation14 + $0x318] sm:$0xff]
        %v4195 = vld [vmem:[#allocation14 + $0x320] sm:$0xff]
        %v4196 = vld [vmem:[#allocation14 + $0x328] sm:$0xff]
        %v4197 = vld [vmem:[#allocation14 + $0x330] sm:$0xff]
        %v4198 = vld [vmem:[#allocation14 + $0x338] sm:$0xff]
        %v4199 = vld [vmem:[#allocation14 + $0x340] sm:$0xff]
        %v4200 = vld [vmem:[#allocation14 + $0x348] sm:$0xff]
        %v4201 = vld [vmem:[#allocation14 + $0x350] sm:$0xff]
        %v4202 = vld [vmem:[#allocation14 + $0x358] sm:$0xff]
        %v4203 = vld [vmem:[#allocation14 + $0x360] sm:$0xff]
        %v4204 = vld [vmem:[#allocation14 + $0x368] sm:$0xff]
        %v4205 = vld [vmem:[#allocation14 + $0x370] sm:$0xff]
        %v4206 = vld [vmem:[#allocation14 + $0x378] sm:$0xff]
        %s4207 = scalar_lea.vmem [#allocation13], 2
        %v4208 = vld [vmem:[%s4207] sm:$0x3]
        %v4210 = vsel %vm4019, %v4208, 0
        %4212 = vmatpush.bf16.msra.mxu0 0
        %4213 = vmatpush.bf16.msra.mxu0 0
        %4214 = vmatpush.bf16.msra.mxu0 0
        %4215 = vmatpush.bf16.msra.mxu0 0
        %4216 = vmatpush.bf16.msra.mxu0 0
        %4217 = vmatpush.bf16.msra.mxu0 0
        %4218 = vmatpush.bf16.msra.mxu0 0
        %4219 = vmatpush.bf16.msra.mxu0 %v4028
        %4220 = vmatmul.bf16.gmra.mxu0 %v4210
        %v4221 = vpop.f32.mrf.mxu0
        %v4222 = vadd.f32 0.0, %v4221
        %v4223 = vpop.f32.mrf.mxu0
        %4224 = vdwg.mxu0
        %4225 = vmatpush.bf16.msra.mxu0 0
        %4226 = vmatpush.bf16.msra.mxu0 0
        %4227 = vmatpush.bf16.msra.mxu0 0
        %4228 = vmatpush.bf16.msra.mxu0 0
        %4229 = vmatpush.bf16.msra.mxu0 0
        %4230 = vmatpush.bf16.msra.mxu0 0
        %4231 = vmatpush.bf16.msra.mxu0 0
        %4232 = vmatpush.bf16.msra.mxu0 %v4031
        %4233 = vmatmul.bf16.gmra.mxu0 %v4210
        %v4234 = vpop.f32.mrf.mxu0
        %v4235 = vadd.f32 0.0, %v4234
        %v4236 = vpop.f32.mrf.mxu0
        %4237 = vdwg.mxu0
        %4238 = vmatpush.bf16.msra.mxu0 0
        %4239 = vmatpush.bf16.msra.mxu0 0
        %4240 = vmatpush.bf16.msra.mxu0 0
        %4241 = vmatpush.bf16.msra.mxu0 0
        %4242 = vmatpush.bf16.msra.mxu0 0
        %4243 = vmatpush.bf16.msra.mxu0 0
        %4244 = vmatpush.bf16.msra.mxu0 0
        %4245 = vmatpush.bf16.msra.mxu0 %v4034
        %4246 = vmatmul.bf16.gmra.mxu0 %v4210
        %v4247 = vpop.f32.mrf.mxu0
        %v4248 = vadd.f32 0.0, %v4247
        %v4249 = vpop.f32.mrf.mxu0
        %4250 = vdwg.mxu0
        %4251 = vmatpush.bf16.msra.mxu0 0
        %4252 = vmatpush.bf16.msra.mxu0 0
        %4253 = vmatpush.bf16.msra.mxu0 0
        %4254 = vmatpush.bf16.msra.mxu0 0
        %4255 = vmatpush.bf16.msra.mxu0 0
        %4256 = vmatpush.bf16.msra.mxu0 0
        %4257 = vmatpush.bf16.msra.mxu0 0
        %4258 = vmatpush.bf16.msra.mxu0 %v4037
        %4259 = vmatmul.bf16.gmra.mxu0 %v4210
        %v4260 = vpop.f32.mrf.mxu0
        %v4261 = vadd.f32 0.0, %v4260
        %v4262 = vpop.f32.mrf.mxu0
        %4263 = vdwg.mxu0
        %v4264 = vpack.c.bf16 %v4222, %v4222
        %v4265 = vpack.c.bf16 %v4235, %v4235
        %v4266 = vpack.c.bf16 %v4248, %v4248
        %v4267 = vpack.c.bf16 %v4261, %v4261
        %s4268 = scalar_lea.vmem [#allocation14], 896
        %v4269 = vld [vmem:[%s4268] sm:$0xff]
        %v4270 = vld [vmem:[%s4268 + $0x8] sm:$0xff]
        %v4271 = vld [vmem:[%s4268 + $0x10] sm:$0xff]
        %v4272 = vld [vmem:[%s4268 + $0x18] sm:$0xff]
        %v4273 = vld [vmem:[%s4268 + $0x20] sm:$0xff]
        %v4274 = vld [vmem:[%s4268 + $0x28] sm:$0xff]
        %v4275 = vld [vmem:[%s4268 + $0x30] sm:$0xff]
        %v4276 = vld [vmem:[%s4268 + $0x38] sm:$0xff]
        %v4277 = vld [vmem:[%s4268 + $0x40] sm:$0xff]
        %v4278 = vld [vmem:[%s4268 + $0x48] sm:$0xff]
        %v4279 = vld [vmem:[%s4268 + $0x50] sm:$0xff]
        %v4280 = vld [vmem:[%s4268 + $0x58] sm:$0xff]
        %v4281 = vld [vmem:[%s4268 + $0x60] sm:$0xff]
        %v4282 = vld [vmem:[%s4268 + $0x68] sm:$0xff]
        %v4283 = vld [vmem:[%s4268 + $0x70] sm:$0xff]
        %v4284 = vld [vmem:[%s4268 + $0x78] sm:$0xff]
        %v4285 = vld [vmem:[%s4268 + $0x80] sm:$0xff]
        %v4286 = vld [vmem:[%s4268 + $0x88] sm:$0xff]
        %v4287 = vld [vmem:[%s4268 + $0x90] sm:$0xff]
        %v4288 = vld [vmem:[%s4268 + $0x98] sm:$0xff]
        %v4289 = vld [vmem:[%s4268 + $0xa0] sm:$0xff]
        %v4290 = vld [vmem:[%s4268 + $0xa8] sm:$0xff]
        %v4291 = vld [vmem:[%s4268 + $0xb0] sm:$0xff]
        %v4292 = vld [vmem:[%s4268 + $0xb8] sm:$0xff]
        %v4293 = vld [vmem:[%s4268 + $0xc0] sm:$0xff]
        %v4294 = vld [vmem:[%s4268 + $0xc8] sm:$0xff]
        %v4295 = vld [vmem:[%s4268 + $0xd0] sm:$0xff]
        %v4296 = vld [vmem:[%s4268 + $0xd8] sm:$0xff]
        %v4297 = vld [vmem:[%s4268 + $0xe0] sm:$0xff]
        %v4298 = vld [vmem:[%s4268 + $0xe8] sm:$0xff]
        %v4299 = vld [vmem:[%s4268 + $0xf0] sm:$0xff]
        %v4300 = vld [vmem:[%s4268 + $0xf8] sm:$0xff]
        %v4301 = vld [vmem:[%s4268 + $0x100] sm:$0xff]
        %v4302 = vld [vmem:[%s4268 + $0x108] sm:$0xff]
        %v4303 = vld [vmem:[%s4268 + $0x110] sm:$0xff]
        %v4304 = vld [vmem:[%s4268 + $0x118] sm:$0xff]
        %v4305 = vld [vmem:[%s4268 + $0x120] sm:$0xff]
        %v4306 = vld [vmem:[%s4268 + $0x128] sm:$0xff]
        %v4307 = vld [vmem:[%s4268 + $0x130] sm:$0xff]
        %v4308 = vld [vmem:[%s4268 + $0x138] sm:$0xff]
        %v4309 = vld [vmem:[%s4268 + $0x140] sm:$0xff]
        %v4310 = vld [vmem:[%s4268 + $0x148] sm:$0xff]
        %v4311 = vld [vmem:[%s4268 + $0x150] sm:$0xff]
        %v4312 = vld [vmem:[%s4268 + $0x158] sm:$0xff]
        %v4313 = vld [vmem:[%s4268 + $0x160] sm:$0xff]
        %v4314 = vld [vmem:[%s4268 + $0x168] sm:$0xff]
        %v4315 = vld [vmem:[%s4268 + $0x170] sm:$0xff]
        %v4316 = vld [vmem:[%s4268 + $0x178] sm:$0xff]
        %v4317 = vld [vmem:[%s4268 + $0x180] sm:$0xff]
        %v4318 = vld [vmem:[%s4268 + $0x188] sm:$0xff]
        %v4319 = vld [vmem:[%s4268 + $0x190] sm:$0xff]
        %v4320 = vld [vmem:[%s4268 + $0x198] sm:$0xff]
        %v4321 = vld [vmem:[%s4268 + $0x1a0] sm:$0xff]
        %v4322 = vld [vmem:[%s4268 + $0x1a8] sm:$0xff]
        %v4323 = vld [vmem:[%s4268 + $0x1b0] sm:$0xff]
        %v4324 = vld [vmem:[%s4268 + $0x1b8] sm:$0xff]
        %v4325 = vld [vmem:[%s4268 + $0x1c0] sm:$0xff]
        %v4326 = vld [vmem:[%s4268 + $0x1c8] sm:$0xff]
        %v4327 = vld [vmem:[%s4268 + $0x1d0] sm:$0xff]
        %v4328 = vld [vmem:[%s4268 + $0x1d8] sm:$0xff]
        %v4329 = vld [vmem:[%s4268 + $0x1e0] sm:$0xff]
        %v4330 = vld [vmem:[%s4268 + $0x1e8] sm:$0xff]
        %v4331 = vld [vmem:[%s4268 + $0x1f0] sm:$0xff]
        %v4332 = vld [vmem:[%s4268 + $0x1f8] sm:$0xff]
        %v4333 = vld [vmem:[%s4268 + $0x200] sm:$0xff]
        %v4334 = vld [vmem:[%s4268 + $0x208] sm:$0xff]
        %v4335 = vld [vmem:[%s4268 + $0x210] sm:$0xff]
        %v4336 = vld [vmem:[%s4268 + $0x218] sm:$0xff]
        %v4337 = vld [vmem:[%s4268 + $0x220] sm:$0xff]
        %v4338 = vld [vmem:[%s4268 + $0x228] sm:$0xff]
        %v4339 = vld [vmem:[%s4268 + $0x230] sm:$0xff]
        %v4340 = vld [vmem:[%s4268 + $0x238] sm:$0xff]
        %v4341 = vld [vmem:[%s4268 + $0x240] sm:$0xff]
        %v4342 = vld [vmem:[%s4268 + $0x248] sm:$0xff]
        %v4343 = vld [vmem:[%s4268 + $0x250] sm:$0xff]
        %v4344 = vld [vmem:[%s4268 + $0x258] sm:$0xff]
        %v4345 = vld [vmem:[%s4268 + $0x260] sm:$0xff]
        %v4346 = vld [vmem:[%s4268 + $0x268] sm:$0xff]
        %v4347 = vld [vmem:[%s4268 + $0x270] sm:$0xff]
        %v4348 = vld [vmem:[%s4268 + $0x278] sm:$0xff]
        %v4349 = vld [vmem:[%s4268 + $0x280] sm:$0xff]
        %v4350 = vld [vmem:[%s4268 + $0x288] sm:$0xff]
        %v4351 = vld [vmem:[%s4268 + $0x290] sm:$0xff]
        %v4352 = vld [vmem:[%s4268 + $0x298] sm:$0xff]
        %v4353 = vld [vmem:[%s4268 + $0x2a0] sm:$0xff]
        %v4354 = vld [vmem:[%s4268 + $0x2a8] sm:$0xff]
        %v4355 = vld [vmem:[%s4268 + $0x2b0] sm:$0xff]
        %v4356 = vld [vmem:[%s4268 + $0x2b8] sm:$0xff]
        %v4357 = vld [vmem:[%s4268 + $0x2c0] sm:$0xff]
        %v4358 = vld [vmem:[%s4268 + $0x2c8] sm:$0xff]
        %v4359 = vld [vmem:[%s4268 + $0x2d0] sm:$0xff]
        %v4360 = vld [vmem:[%s4268 + $0x2d8] sm:$0xff]
        %v4361 = vld [vmem:[%s4268 + $0x2e0] sm:$0xff]
        %v4362 = vld [vmem:[%s4268 + $0x2e8] sm:$0xff]
        %v4363 = vld [vmem:[%s4268 + $0x2f0] sm:$0xff]
        %v4364 = vld [vmem:[%s4268 + $0x2f8] sm:$0xff]
        %v4365 = vld [vmem:[%s4268 + $0x300] sm:$0xff]
        %v4366 = vld [vmem:[%s4268 + $0x308] sm:$0xff]
        %v4367 = vld [vmem:[%s4268 + $0x310] sm:$0xff]
        %v4368 = vld [vmem:[%s4268 + $0x318] sm:$0xff]
        %v4369 = vld [vmem:[%s4268 + $0x320] sm:$0xff]
        %v4370 = vld [vmem:[%s4268 + $0x328] sm:$0xff]
        %v4371 = vld [vmem:[%s4268 + $0x330] sm:$0xff]
        %v4372 = vld [vmem:[%s4268 + $0x338] sm:$0xff]
        %v4373 = vld [vmem:[%s4268 + $0x340] sm:$0xff]
        %v4374 = vld [vmem:[%s4268 + $0x348] sm:$0xff]
        %v4375 = vld [vmem:[%s4268 + $0x350] sm:$0xff]
        %v4376 = vld [vmem:[%s4268 + $0x358] sm:$0xff]
        %v4377 = vld [vmem:[%s4268 + $0x360] sm:$0xff]
        %v4378 = vld [vmem:[%s4268 + $0x368] sm:$0xff]
        %v4379 = vld [vmem:[%s4268 + $0x370] sm:$0xff]
        %v4380 = vld [vmem:[%s4268 + $0x378] sm:$0xff]
        %v4493 = vunpack.c.l.b16 %v4269
        %v4494 = vunpack.c.h.b16 %v4269
        %v4495 = vunpack.c.l.b16 %v4270
        %v4496 = vunpack.c.h.b16 %v4270
        %v4497 = vunpack.c.l.b16 %v4271
        %v4498 = vunpack.c.h.b16 %v4271
        %v4499 = vunpack.c.l.b16 %v4272
        %v4500 = vunpack.c.h.b16 %v4272
        %v4501 = vunpack.c.l.b16 %v4273
        %v4502 = vunpack.c.h.b16 %v4273
        %v4503 = vunpack.c.l.b16 %v4274
        %v4504 = vunpack.c.h.b16 %v4274
        %v4505 = vunpack.c.l.b16 %v4275
        %v4506 = vunpack.c.h.b16 %v4275
        %v4507 = vunpack.c.l.b16 %v4276
        %v4508 = vunpack.c.h.b16 %v4276
        %v4509 = vunpack.c.l.b16 %v4277
        %v4510 = vunpack.c.h.b16 %v4277
        %v4511 = vunpack.c.l.b16 %v4278
        %v4512 = vunpack.c.h.b16 %v4278
        %v4513 = vunpack.c.l.b16 %v4279
        %v4514 = vunpack.c.h.b16 %v4279
        %v4515 = vunpack.c.l.b16 %v4280
        %v4516 = vunpack.c.h.b16 %v4280
        %v4517 = vunpack.c.l.b16 %v4281
        %v4518 = vunpack.c.h.b16 %v4281
        %v4519 = vunpack.c.l.b16 %v4282
        %v4520 = vunpack.c.h.b16 %v4282
        %v4521 = vunpack.c.l.b16 %v4283
        %v4522 = vunpack.c.h.b16 %v4283
        %v4523 = vunpack.c.l.b16 %v4284
        %v4524 = vunpack.c.h.b16 %v4284
        %v4525 = vunpack.c.l.b16 %v4285
        %v4526 = vunpack.c.h.b16 %v4285
        %v4527 = vunpack.c.l.b16 %v4286
        %v4528 = vunpack.c.h.b16 %v4286
        %v4529 = vunpack.c.l.b16 %v4287
        %v4530 = vunpack.c.h.b16 %v4287
        %v4531 = vunpack.c.l.b16 %v4288
        %v4532 = vunpack.c.h.b16 %v4288
        %v4533 = vunpack.c.l.b16 %v4289
        %v4534 = vunpack.c.h.b16 %v4289
        %v4535 = vunpack.c.l.b16 %v4290
        %v4536 = vunpack.c.h.b16 %v4290
        %v4537 = vunpack.c.l.b16 %v4291
        %v4538 = vunpack.c.h.b16 %v4291
        %v4539 = vunpack.c.l.b16 %v4292
        %v4540 = vunpack.c.h.b16 %v4292
        %v4541 = vunpack.c.l.b16 %v4293
        %v4542 = vunpack.c.h.b16 %v4293
        %v4543 = vunpack.c.l.b16 %v4294
        %v4544 = vunpack.c.h.b16 %v4294
        %v4545 = vunpack.c.l.b16 %v4295
        %v4546 = vunpack.c.h.b16 %v4295
        %v4547 = vunpack.c.l.b16 %v4296
        %v4548 = vunpack.c.h.b16 %v4296
        %v4549 = vunpack.c.l.b16 %v4297
        %v4550 = vunpack.c.h.b16 %v4297
        %v4551 = vunpack.c.l.b16 %v4298
        %v4552 = vunpack.c.h.b16 %v4298
        %v4553 = vunpack.c.l.b16 %v4299
        %v4554 = vunpack.c.h.b16 %v4299
        %v4555 = vunpack.c.l.b16 %v4300
        %v4556 = vunpack.c.h.b16 %v4300
        %v4557 = vunpack.c.l.b16 %v4301
        %v4558 = vunpack.c.h.b16 %v4301
        %v4559 = vunpack.c.l.b16 %v4302
        %v4560 = vunpack.c.h.b16 %v4302
        %v4561 = vunpack.c.l.b16 %v4303
        %v4562 = vunpack.c.h.b16 %v4303
        %v4563 = vunpack.c.l.b16 %v4304
        %v4564 = vunpack.c.h.b16 %v4304
        %v4565 = vunpack.c.l.b16 %v4305
        %v4566 = vunpack.c.h.b16 %v4305
        %v4567 = vunpack.c.l.b16 %v4306
        %v4568 = vunpack.c.h.b16 %v4306
        %v4569 = vunpack.c.l.b16 %v4307
        %v4570 = vunpack.c.h.b16 %v4307
        %v4571 = vunpack.c.l.b16 %v4308
        %v4572 = vunpack.c.h.b16 %v4308
        %v4573 = vunpack.c.l.b16 %v4309
        %v4574 = vunpack.c.h.b16 %v4309
        %v4575 = vunpack.c.l.b16 %v4310
        %v4576 = vunpack.c.h.b16 %v4310
        %v4577 = vunpack.c.l.b16 %v4311
        %v4578 = vunpack.c.h.b16 %v4311
        %v4579 = vunpack.c.l.b16 %v4312
        %v4580 = vunpack.c.h.b16 %v4312
        %v4581 = vunpack.c.l.b16 %v4313
        %v4582 = vunpack.c.h.b16 %v4313
        %v4583 = vunpack.c.l.b16 %v4314
        %v4584 = vunpack.c.h.b16 %v4314
        %v4585 = vunpack.c.l.b16 %v4315
        %v4586 = vunpack.c.h.b16 %v4315
        %v4587 = vunpack.c.l.b16 %v4316
        %v4588 = vunpack.c.h.b16 %v4316
        %v4589 = vunpack.c.l.b16 %v4317
        %v4590 = vunpack.c.h.b16 %v4317
        %v4591 = vunpack.c.l.b16 %v4318
        %v4592 = vunpack.c.h.b16 %v4318
        %v4593 = vunpack.c.l.b16 %v4319
        %v4594 = vunpack.c.h.b16 %v4319
        %v4595 = vunpack.c.l.b16 %v4320
        %v4596 = vunpack.c.h.b16 %v4320
        %v4597 = vunpack.c.l.b16 %v4321
        %v4598 = vunpack.c.h.b16 %v4321
        %v4599 = vunpack.c.l.b16 %v4322
        %v4600 = vunpack.c.h.b16 %v4322
        %v4601 = vunpack.c.l.b16 %v4323
        %v4602 = vunpack.c.h.b16 %v4323
        %v4603 = vunpack.c.l.b16 %v4324
        %v4604 = vunpack.c.h.b16 %v4324
        %v4605 = vunpack.c.l.b16 %v4325
        %v4606 = vunpack.c.h.b16 %v4325
        %v4607 = vunpack.c.l.b16 %v4326
        %v4608 = vunpack.c.h.b16 %v4326
        %v4609 = vunpack.c.l.b16 %v4327
        %v4610 = vunpack.c.h.b16 %v4327
        %v4611 = vunpack.c.l.b16 %v4328
        %v4612 = vunpack.c.h.b16 %v4328
        %v4613 = vunpack.c.l.b16 %v4329
        %v4614 = vunpack.c.h.b16 %v4329
        %v4615 = vunpack.c.l.b16 %v4330
        %v4616 = vunpack.c.h.b16 %v4330
        %v4617 = vunpack.c.l.b16 %v4331
        %v4618 = vunpack.c.h.b16 %v4331
        %v4619 = vunpack.c.l.b16 %v4332
        %v4620 = vunpack.c.h.b16 %v4332
        %v4621 = vunpack.c.l.b16 %v4333
        %v4622 = vunpack.c.h.b16 %v4333
        %v4623 = vunpack.c.l.b16 %v4334
        %v4624 = vunpack.c.h.b16 %v4334
        %v4625 = vunpack.c.l.b16 %v4335
        %v4626 = vunpack.c.h.b16 %v4335
        %v4627 = vunpack.c.l.b16 %v4336
        %v4628 = vunpack.c.h.b16 %v4336
        %v4629 = vunpack.c.l.b16 %v4337
        %v4630 = vunpack.c.h.b16 %v4337
        %v4631 = vunpack.c.l.b16 %v4338
        %v4632 = vunpack.c.h.b16 %v4338
        %v4633 = vunpack.c.l.b16 %v4339
        %v4634 = vunpack.c.h.b16 %v4339
        %v4635 = vunpack.c.l.b16 %v4340
        %v4636 = vunpack.c.h.b16 %v4340
        %v4637 = vunpack.c.l.b16 %v4341
        %v4638 = vunpack.c.h.b16 %v4341
        %v4639 = vunpack.c.l.b16 %v4342
        %v4640 = vunpack.c.h.b16 %v4342
        %v4641 = vunpack.c.l.b16 %v4343
        %v4642 = vunpack.c.h.b16 %v4343
        %v4643 = vunpack.c.l.b16 %v4344
        %v4644 = vunpack.c.h.b16 %v4344
        %v4645 = vunpack.c.l.b16 %v4345
        %v4646 = vunpack.c.h.b16 %v4345
        %v4647 = vunpack.c.l.b16 %v4346
        %v4648 = vunpack.c.h.b16 %v4346
        %v4649 = vunpack.c.l.b16 %v4347
        %v4650 = vunpack.c.h.b16 %v4347
        %v4651 = vunpack.c.l.b16 %v4348
        %v4652 = vunpack.c.h.b16 %v4348
        %v4653 = vunpack.c.l.b16 %v4349
        %v4654 = vunpack.c.h.b16 %v4349
        %v4655 = vunpack.c.l.b16 %v4350
        %v4656 = vunpack.c.h.b16 %v4350
        %v4657 = vunpack.c.l.b16 %v4351
        %v4658 = vunpack.c.h.b16 %v4351
        %v4659 = vunpack.c.l.b16 %v4352
        %v4660 = vunpack.c.h.b16 %v4352
        %v4661 = vunpack.c.l.b16 %v4353
        %v4662 = vunpack.c.h.b16 %v4353
        %v4663 = vunpack.c.l.b16 %v4354
        %v4664 = vunpack.c.h.b16 %v4354
        %v4665 = vunpack.c.l.b16 %v4355
        %v4666 = vunpack.c.h.b16 %v4355
        %v4667 = vunpack.c.l.b16 %v4356
        %v4668 = vunpack.c.h.b16 %v4356
        %v4669 = vunpack.c.l.b16 %v4357
        %v4670 = vunpack.c.h.b16 %v4357
        %v4671 = vunpack.c.l.b16 %v4358
        %v4672 = vunpack.c.h.b16 %v4358
        %v4673 = vunpack.c.l.b16 %v4359
        %v4674 = vunpack.c.h.b16 %v4359
        %v4675 = vunpack.c.l.b16 %v4360
        %v4676 = vunpack.c.h.b16 %v4360
        %v4677 = vunpack.c.l.b16 %v4361
        %v4678 = vunpack.c.h.b16 %v4361
        %v4679 = vunpack.c.l.b16 %v4362
        %v4680 = vunpack.c.h.b16 %v4362
        %v4681 = vunpack.c.l.b16 %v4363
        %v4682 = vunpack.c.h.b16 %v4363
        %v4683 = vunpack.c.l.b16 %v4364
        %v4684 = vunpack.c.h.b16 %v4364
        %v4685 = vunpack.c.l.b16 %v4365
        %v4686 = vunpack.c.h.b16 %v4365
        %v4687 = vunpack.c.l.b16 %v4366
        %v4688 = vunpack.c.h.b16 %v4366
        %v4689 = vunpack.c.l.b16 %v4367
        %v4690 = vunpack.c.h.b16 %v4367
        %v4691 = vunpack.c.l.b16 %v4368
        %v4692 = vunpack.c.h.b16 %v4368
        %v4693 = vunpack.c.l.b16 %v4369
        %v4694 = vunpack.c.h.b16 %v4369
        %v4695 = vunpack.c.l.b16 %v4370
        %v4696 = vunpack.c.h.b16 %v4370
        %v4697 = vunpack.c.l.b16 %v4371
        %v4698 = vunpack.c.h.b16 %v4371
        %v4699 = vunpack.c.l.b16 %v4372
        %v4700 = vunpack.c.h.b16 %v4372
        %v4701 = vunpack.c.l.b16 %v4373
        %v4702 = vunpack.c.h.b16 %v4373
        %v4703 = vunpack.c.l.b16 %v4374
        %v4704 = vunpack.c.h.b16 %v4374
        %v4705 = vunpack.c.l.b16 %v4375
        %v4706 = vunpack.c.h.b16 %v4375
        %v4707 = vunpack.c.l.b16 %v4376
        %v4708 = vunpack.c.h.b16 %v4376
        %v4709 = vunpack.c.l.b16 %v4377
        %v4710 = vunpack.c.h.b16 %v4377
        %v4711 = vunpack.c.l.b16 %v4378
        %v4712 = vunpack.c.h.b16 %v4378
        %v4713 = vunpack.c.l.b16 %v4379
        %v4714 = vunpack.c.h.b16 %v4379
        %v4715 = vunpack.c.l.b16 %v4380
        %v4716 = vunpack.c.h.b16 %v4380
        %v4717 = vpack.c.b16 %v4497, %v4493
        %v4718 = vpack.c.b16 %v4498, %v4494
        %v4719 = vpack.c.b16 %v4499, %v4495
        %v4720 = vpack.c.b16 %v4500, %v4496
        %v4721 = vpack.c.b16 %v4505, %v4501
        %v4722 = vpack.c.b16 %v4506, %v4502
        %v4723 = vpack.c.b16 %v4507, %v4503
        %v4724 = vpack.c.b16 %v4508, %v4504
        %v4725 = vpack.c.b16 %v4513, %v4509
        %v4726 = vpack.c.b16 %v4514, %v4510
        %v4727 = vpack.c.b16 %v4515, %v4511
        %v4728 = vpack.c.b16 %v4516, %v4512
        %v4729 = vpack.c.b16 %v4521, %v4517
        %v4730 = vpack.c.b16 %v4522, %v4518
        %v4731 = vpack.c.b16 %v4523, %v4519
        %v4732 = vpack.c.b16 %v4524, %v4520
        %v4733 = vpack.c.b16 %v4529, %v4525
        %v4734 = vpack.c.b16 %v4530, %v4526
        %v4735 = vpack.c.b16 %v4531, %v4527
        %v4736 = vpack.c.b16 %v4532, %v4528
        %v4737 = vpack.c.b16 %v4537, %v4533
        %v4738 = vpack.c.b16 %v4538, %v4534
        %v4739 = vpack.c.b16 %v4539, %v4535
        %v4740 = vpack.c.b16 %v4540, %v4536
        %v4741 = vpack.c.b16 %v4545, %v4541
        %v4742 = vpack.c.b16 %v4546, %v4542
        %v4743 = vpack.c.b16 %v4547, %v4543
        %v4744 = vpack.c.b16 %v4548, %v4544
        %v4745 = vpack.c.b16 %v4553, %v4549
        %v4746 = vpack.c.b16 %v4554, %v4550
        %v4747 = vpack.c.b16 %v4555, %v4551
        %v4748 = vpack.c.b16 %v4556, %v4552
        %v4749 = vpack.c.b16 %v4561, %v4557
        %v4750 = vpack.c.b16 %v4562, %v4558
        %v4751 = vpack.c.b16 %v4563, %v4559
        %v4752 = vpack.c.b16 %v4564, %v4560
        %v4753 = vpack.c.b16 %v4569, %v4565
        %v4754 = vpack.c.b16 %v4570, %v4566
        %v4755 = vpack.c.b16 %v4571, %v4567
        %v4756 = vpack.c.b16 %v4572, %v4568
        %v4757 = vpack.c.b16 %v4577, %v4573
        %v4758 = vpack.c.b16 %v4578, %v4574
        %v4759 = vpack.c.b16 %v4579, %v4575
        %v4760 = vpack.c.b16 %v4580, %v4576
        %v4761 = vpack.c.b16 %v4585, %v4581
        %v4762 = vpack.c.b16 %v4586, %v4582
        %v4763 = vpack.c.b16 %v4587, %v4583
        %v4764 = vpack.c.b16 %v4588, %v4584
        %v4765 = vpack.c.b16 %v4593, %v4589
        %v4766 = vpack.c.b16 %v4594, %v4590
        %v4767 = vpack.c.b16 %v4595, %v4591
        %v4768 = vpack.c.b16 %v4596, %v4592
        %v4769 = vpack.c.b16 %v4601, %v4597
        %v4770 = vpack.c.b16 %v4602, %v4598
        %v4771 = vpack.c.b16 %v4603, %v4599
        %v4772 = vpack.c.b16 %v4604, %v4600
        %v4773 = vpack.c.b16 %v4609, %v4605
        %v4774 = vpack.c.b16 %v4610, %v4606
        %v4775 = vpack.c.b16 %v4611, %v4607
        %v4776 = vpack.c.b16 %v4612, %v4608
        %v4777 = vpack.c.b16 %v4617, %v4613
        %v4778 = vpack.c.b16 %v4618, %v4614
        %v4779 = vpack.c.b16 %v4619, %v4615
        %v4780 = vpack.c.b16 %v4620, %v4616
        %v4781 = vpack.c.b16 %v4625, %v4621
        %v4782 = vpack.c.b16 %v4626, %v4622
        %v4783 = vpack.c.b16 %v4627, %v4623
        %v4784 = vpack.c.b16 %v4628, %v4624
        %v4785 = vpack.c.b16 %v4633, %v4629
        %v4786 = vpack.c.b16 %v4634, %v4630
        %v4787 = vpack.c.b16 %v4635, %v4631
        %v4788 = vpack.c.b16 %v4636, %v4632
        %v4789 = vpack.c.b16 %v4641, %v4637
        %v4790 = vpack.c.b16 %v4642, %v4638
        %v4791 = vpack.c.b16 %v4643, %v4639
        %v4792 = vpack.c.b16 %v4644, %v4640
        %v4793 = vpack.c.b16 %v4649, %v4645
        %v4794 = vpack.c.b16 %v4650, %v4646
        %v4795 = vpack.c.b16 %v4651, %v4647
        %v4796 = vpack.c.b16 %v4652, %v4648
        %v4797 = vpack.c.b16 %v4657, %v4653
        %v4798 = vpack.c.b16 %v4658, %v4654
        %v4799 = vpack.c.b16 %v4659, %v4655
        %v4800 = vpack.c.b16 %v4660, %v4656
        %v4801 = vpack.c.b16 %v4665, %v4661
        %v4802 = vpack.c.b16 %v4666, %v4662
        %v4803 = vpack.c.b16 %v4667, %v4663
        %v4804 = vpack.c.b16 %v4668, %v4664
        %v4805 = vpack.c.b16 %v4673, %v4669
        %v4806 = vpack.c.b16 %v4674, %v4670
        %v4807 = vpack.c.b16 %v4675, %v4671
        %v4808 = vpack.c.b16 %v4676, %v4672
        %v4809 = vpack.c.b16 %v4681, %v4677
        %v4810 = vpack.c.b16 %v4682, %v4678
        %v4811 = vpack.c.b16 %v4683, %v4679
        %v4812 = vpack.c.b16 %v4684, %v4680
        %v4813 = vpack.c.b16 %v4689, %v4685
        %v4814 = vpack.c.b16 %v4690, %v4686
        %v4815 = vpack.c.b16 %v4691, %v4687
        %v4816 = vpack.c.b16 %v4692, %v4688
        %v4817 = vpack.c.b16 %v4697, %v4693
        %v4818 = vpack.c.b16 %v4698, %v4694
        %v4819 = vpack.c.b16 %v4699, %v4695
        %v4820 = vpack.c.b16 %v4700, %v4696
        %v4821 = vpack.c.b16 %v4705, %v4701
        %v4822 = vpack.c.b16 %v4706, %v4702
        %v4823 = vpack.c.b16 %v4707, %v4703
        %v4824 = vpack.c.b16 %v4708, %v4704
        %v4825 = vpack.c.b16 %v4713, %v4709
        %v4826 = vpack.c.b16 %v4714, %v4710
        %v4827 = vpack.c.b16 %v4715, %v4711
        %v4828 = vpack.c.b16 %v4716, %v4712
        %v4942 = vsel %vm2064, %v4267, 0
        %4944 = vmatpush.bf16.msra.mxu0 %v4745
        %4945 = vmatpush.bf16.msra.mxu0 %v4741
        %4946 = vmatpush.bf16.msra.mxu0 %v4737
        %4947 = vmatpush.bf16.msra.mxu0 %v4733
        %4948 = vmatpush.bf16.msra.mxu0 %v4729
        %4949 = vmatpush.bf16.msra.mxu0 %v4725
        %4950 = vmatpush.bf16.msra.mxu0 %v4721
        %4951 = vmatpush.bf16.msra.mxu0 %v4717
        %4952 = vmatmul.bf16.gmra.mxu0 %v4264
        %v4953 = vpop.f32.mrf.mxu0
        %v4954 = vadd.f32 0.0, %v4953
        %v4955 = vpop.f32.mrf.mxu0
        %4956 = vdwg.mxu0
        %4957 = vmatpush.bf16.msra.mxu0 %v4777
        %4958 = vmatpush.bf16.msra.mxu0 %v4773
        %4959 = vmatpush.bf16.msra.mxu0 %v4769
        %4960 = vmatpush.bf16.msra.mxu0 %v4765
        %4961 = vmatpush.bf16.msra.mxu0 %v4761
        %4962 = vmatpush.bf16.msra.mxu0 %v4757
        %4963 = vmatpush.bf16.msra.mxu0 %v4753
        %4964 = vmatpush.bf16.msra.mxu0 %v4749
        %4965 = vmatmul.bf16.gmra.mxu0 %v4265
        %v4966 = vpop.f32.mrf.mxu0
        %v4967 = vadd.f32 %v4954, %v4966
        %v4968 = vpop.f32.mrf.mxu0
        %4969 = vdwg.mxu0
        %4970 = vmatpush.bf16.msra.mxu0 %v4809
        %4971 = vmatpush.bf16.msra.mxu0 %v4805
        %4972 = vmatpush.bf16.msra.mxu0 %v4801
        %4973 = vmatpush.bf16.msra.mxu0 %v4797
        %4974 = vmatpush.bf16.msra.mxu0 %v4793
        %4975 = vmatpush.bf16.msra.mxu0 %v4789
        %4976 = vmatpush.bf16.msra.mxu0 %v4785
        %4977 = vmatpush.bf16.msra.mxu0 %v4781
        %4978 = vmatmul.bf16.gmra.mxu0 %v4266
        %v4979 = vpop.f32.mrf.mxu0
        %v4980 = vadd.f32 %v4967, %v4979
        %v4981 = vpop.f32.mrf.mxu0
        %4982 = vdwg.mxu0
        %4983 = vmatpush.bf16.msra.mxu0 0
        %4984 = vmatpush.bf16.msra.mxu0 0
        %4985 = vmatpush.bf16.msra.mxu0 0
        %4986 = vmatpush.bf16.msra.mxu0 0
        %4987 = vmatpush.bf16.msra.mxu0 %v4825
        %4988 = vmatpush.bf16.msra.mxu0 %v4821
        %4989 = vmatpush.bf16.msra.mxu0 %v4817
        %4990 = vmatpush.bf16.msra.mxu0 %v4813
        %4991 = vmatmul.bf16.gmra.mxu0 %v4942
        %v4992 = vpop.f32.mrf.mxu0
        %v4993 = vadd.f32 %v4980, %v4992
        %v4994 = vpop.f32.mrf.mxu0
        %4995 = vdwg.mxu0
        %4996 = vmatpush.bf16.msra.mxu0 %v4746
        %4997 = vmatpush.bf16.msra.mxu0 %v4742
        %4998 = vmatpush.bf16.msra.mxu0 %v4738
        %4999 = vmatpush.bf16.msra.mxu0 %v4734
        %5000 = vmatpush.bf16.msra.mxu0 %v4730
        %5001 = vmatpush.bf16.msra.mxu0 %v4726
        %5002 = vmatpush.bf16.msra.mxu0 %v4722
        %5003 = vmatpush.bf16.msra.mxu0 %v4718
        %5004 = vmatmul.bf16.gmra.mxu0 %v4264
        %v5005 = vpop.f32.mrf.mxu0
        %v5006 = vadd.f32 0.0, %v5005
        %v5007 = vpop.f32.mrf.mxu0
        %5008 = vdwg.mxu0
        %5009 = vmatpush.bf16.msra.mxu0 %v4778
        %5010 = vmatpush.bf16.msra.mxu0 %v4774
        %5011 = vmatpush.bf16.msra.mxu0 %v4770
        %5012 = vmatpush.bf16.msra.mxu0 %v4766
        %5013 = vmatpush.bf16.msra.mxu0 %v4762
        %5014 = vmatpush.bf16.msra.mxu0 %v4758
        %5015 = vmatpush.bf16.msra.mxu0 %v4754
        %5016 = vmatpush.bf16.msra.mxu0 %v4750
        %5017 = vmatmul.bf16.gmra.mxu0 %v4265
        %v5018 = vpop.f32.mrf.mxu0
        %v5019 = vadd.f32 %v5006, %v5018
        %v5020 = vpop.f32.mrf.mxu0
        %5021 = vdwg.mxu0
        %5022 = vmatpush.bf16.msra.mxu0 %v4810
        %5023 = vmatpush.bf16.msra.mxu0 %v4806
        %5024 = vmatpush.bf16.msra.mxu0 %v4802
        %5025 = vmatpush.bf16.msra.mxu0 %v4798
        %5026 = vmatpush.bf16.msra.mxu0 %v4794
        %5027 = vmatpush.bf16.msra.mxu0 %v4790
        %5028 = vmatpush.bf16.msra.mxu0 %v4786
        %5029 = vmatpush.bf16.msra.mxu0 %v4782
        %5030 = vmatmul.bf16.gmra.mxu0 %v4266
        %v5031 = vpop.f32.mrf.mxu0
        %v5032 = vadd.f32 %v5019, %v5031
        %v5033 = vpop.f32.mrf.mxu0
        %5034 = vdwg.mxu0
        %5035 = vmatpush.bf16.msra.mxu0 0
        %5036 = vmatpush.bf16.msra.mxu0 0
        %5037 = vmatpush.bf16.msra.mxu0 0
        %5038 = vmatpush.bf16.msra.mxu0 0
        %5039 = vmatpush.bf16.msra.mxu0 %v4826
        %5040 = vmatpush.bf16.msra.mxu0 %v4822
        %5041 = vmatpush.bf16.msra.mxu0 %v4818
        %5042 = vmatpush.bf16.msra.mxu0 %v4814
        %5043 = vmatmul.bf16.gmra.mxu0 %v4942
        %v5044 = vpop.f32.mrf.mxu0
        %v5045 = vadd.f32 %v5032, %v5044
        %v5046 = vpop.f32.mrf.mxu0
        %5047 = vdwg.mxu0
        %5048 = vmatpush.bf16.msra.mxu0 %v4747
        %5049 = vmatpush.bf16.msra.mxu0 %v4743
        %5050 = vmatpush.bf16.msra.mxu0 %v4739
        %5051 = vmatpush.bf16.msra.mxu0 %v4735
        %5052 = vmatpush.bf16.msra.mxu0 %v4731
        %5053 = vmatpush.bf16.msra.mxu0 %v4727
        %5054 = vmatpush.bf16.msra.mxu0 %v4723
        %5055 = vmatpush.bf16.msra.mxu0 %v4719
        %5056 = vmatmul.bf16.gmra.mxu0 %v4264
        %v5057 = vpop.f32.mrf.mxu0
        %v5058 = vadd.f32 0.0, %v5057
        %v5059 = vpop.f32.mrf.mxu0
        %5060 = vdwg.mxu0
        %5061 = vmatpush.bf16.msra.mxu0 %v4779
        %5062 = vmatpush.bf16.msra.mxu0 %v4775
        %5063 = vmatpush.bf16.msra.mxu0 %v4771
        %5064 = vmatpush.bf16.msra.mxu0 %v4767
        %5065 = vmatpush.bf16.msra.mxu0 %v4763
        %5066 = vmatpush.bf16.msra.mxu0 %v4759
        %5067 = vmatpush.bf16.msra.mxu0 %v4755
        %5068 = vmatpush.bf16.msra.mxu0 %v4751
        %5069 = vmatmul.bf16.gmra.mxu0 %v4265
        %v5070 = vpop.f32.mrf.mxu0
        %v5071 = vadd.f32 %v5058, %v5070
        %v5072 = vpop.f32.mrf.mxu0
        %5073 = vdwg.mxu0
        %5074 = vmatpush.bf16.msra.mxu0 %v4811
        %5075 = vmatpush.bf16.msra.mxu0 %v4807
        %5076 = vmatpush.bf16.msra.mxu0 %v4803
        %5077 = vmatpush.bf16.msra.mxu0 %v4799
        %5078 = vmatpush.bf16.msra.mxu0 %v4795
        %5079 = vmatpush.bf16.msra.mxu0 %v4791
        %5080 = vmatpush.bf16.msra.mxu0 %v4787
        %5081 = vmatpush.bf16.msra.mxu0 %v4783
        %5082 = vmatmul.bf16.gmra.mxu0 %v4266
        %v5083 = vpop.f32.mrf.mxu0
        %v5084 = vadd.f32 %v5071, %v5083
        %v5085 = vpop.f32.mrf.mxu0
        %5086 = vdwg.mxu0
        %5087 = vmatpush.bf16.msra.mxu0 0
        %5088 = vmatpush.bf16.msra.mxu0 0
        %5089 = vmatpush.bf16.msra.mxu0 0
        %5090 = vmatpush.bf16.msra.mxu0 0
        %5091 = vmatpush.bf16.msra.mxu0 %v4827
        %5092 = vmatpush.bf16.msra.mxu0 %v4823
        %5093 = vmatpush.bf16.msra.mxu0 %v4819
        %5094 = vmatpush.bf16.msra.mxu0 %v4815
        %5095 = vmatmul.bf16.gmra.mxu0 %v4942
        %v5096 = vpop.f32.mrf.mxu0
        %v5097 = vadd.f32 %v5084, %v5096
        %v5098 = vpop.f32.mrf.mxu0
        %5099 = vdwg.mxu0
        %5100 = vmatpush.bf16.msra.mxu0 %v4748
        %5101 = vmatpush.bf16.msra.mxu0 %v4744
        %5102 = vmatpush.bf16.msra.mxu0 %v4740
        %5103 = vmatpush.bf16.msra.mxu0 %v4736
        %5104 = vmatpush.bf16.msra.mxu0 %v4732
        %5105 = vmatpush.bf16.msra.mxu0 %v4728
        %5106 = vmatpush.bf16.msra.mxu0 %v4724
        %5107 = vmatpush.bf16.msra.mxu0 %v4720
        %5108 = vmatmul.bf16.gmra.mxu0 %v4264
        %v5109 = vpop.f32.mrf.mxu0
        %v5110 = vadd.f32 0.0, %v5109
        %v5111 = vpop.f32.mrf.mxu0
        %5112 = vdwg.mxu0
        %5113 = vmatpush.bf16.msra.mxu0 %v4780
        %5114 = vmatpush.bf16.msra.mxu0 %v4776
        %5115 = vmatpush.bf16.msra.mxu0 %v4772
        %5116 = vmatpush.bf16.msra.mxu0 %v4768
        %5117 = vmatpush.bf16.msra.mxu0 %v4764
        %5118 = vmatpush.bf16.msra.mxu0 %v4760
        %5119 = vmatpush.bf16.msra.mxu0 %v4756
        %5120 = vmatpush.bf16.msra.mxu0 %v4752
        %5121 = vmatmul.bf16.gmra.mxu0 %v4265
        %v5122 = vpop.f32.mrf.mxu0
        %v5123 = vadd.f32 %v5110, %v5122
        %v5124 = vpop.f32.mrf.mxu0
        %5125 = vdwg.mxu0
        %5126 = vmatpush.bf16.msra.mxu0 %v4812
        %5127 = vmatpush.bf16.msra.mxu0 %v4808
        %5128 = vmatpush.bf16.msra.mxu0 %v4804
        %5129 = vmatpush.bf16.msra.mxu0 %v4800
        %5130 = vmatpush.bf16.msra.mxu0 %v4796
        %5131 = vmatpush.bf16.msra.mxu0 %v4792
        %5132 = vmatpush.bf16.msra.mxu0 %v4788
        %5133 = vmatpush.bf16.msra.mxu0 %v4784
        %5134 = vmatmul.bf16.gmra.mxu0 %v4266
        %v5135 = vpop.f32.mrf.mxu0
        %v5136 = vadd.f32 %v5123, %v5135
        %v5137 = vpop.f32.mrf.mxu0
        %5138 = vdwg.mxu0
        %5139 = vmatpush.bf16.msra.mxu0 0
        %5140 = vmatpush.bf16.msra.mxu0 0
        %5141 = vmatpush.bf16.msra.mxu0 0
        %5142 = vmatpush.bf16.msra.mxu0 0
        %5143 = vmatpush.bf16.msra.mxu0 %v4828
        %5144 = vmatpush.bf16.msra.mxu0 %v4824
        %5145 = vmatpush.bf16.msra.mxu0 %v4820
        %5146 = vmatpush.bf16.msra.mxu0 %v4816
        %5147 = vmatmul.bf16.gmra.mxu0 %v4942
        %v5148 = vpop.f32.mrf.mxu0
        %v5149 = vadd.f32 %v5136, %v5148
        %v5150 = vpop.f32.mrf.mxu0
        %5151 = vdwg.mxu0
        %v5264 = vunpack.c.l.b16 %v4095
        %v5265 = vunpack.c.h.b16 %v4095
        %v5266 = vunpack.c.l.b16 %v4096
        %v5267 = vunpack.c.h.b16 %v4096
        %v5268 = vunpack.c.l.b16 %v4097
        %v5269 = vunpack.c.h.b16 %v4097
        %v5270 = vunpack.c.l.b16 %v4098
        %v5271 = vunpack.c.h.b16 %v4098
        %v5272 = vunpack.c.l.b16 %v4099
        %v5273 = vunpack.c.h.b16 %v4099
        %v5274 = vunpack.c.l.b16 %v4100
        %v5275 = vunpack.c.h.b16 %v4100
        %v5276 = vunpack.c.l.b16 %v4101
        %v5277 = vunpack.c.h.b16 %v4101
        %v5278 = vunpack.c.l.b16 %v4102
        %v5279 = vunpack.c.h.b16 %v4102
        %v5280 = vunpack.c.l.b16 %v4103
        %v5281 = vunpack.c.h.b16 %v4103
        %v5282 = vunpack.c.l.b16 %v4104
        %v5283 = vunpack.c.h.b16 %v4104
        %v5284 = vunpack.c.l.b16 %v4105
        %v5285 = vunpack.c.h.b16 %v4105
        %v5286 = vunpack.c.l.b16 %v4106
        %v5287 = vunpack.c.h.b16 %v4106
        %v5288 = vunpack.c.l.b16 %v4107
        %v5289 = vunpack.c.h.b16 %v4107
        %v5290 = vunpack.c.l.b16 %v4108
        %v5291 = vunpack.c.h.b16 %v4108
        %v5292 = vunpack.c.l.b16 %v4109
        %v5293 = vunpack.c.h.b16 %v4109
        %v5294 = vunpack.c.l.b16 %v4110
        %v5295 = vunpack.c.h.b16 %v4110
        %v5296 = vunpack.c.l.b16 %v4111
        %v5297 = vunpack.c.h.b16 %v4111
        %v5298 = vunpack.c.l.b16 %v4112
        %v5299 = vunpack.c.h.b16 %v4112
        %v5300 = vunpack.c.l.b16 %v4113
        %v5301 = vunpack.c.h.b16 %v4113
        %v5302 = vunpack.c.l.b16 %v4114
        %v5303 = vunpack.c.h.b16 %v4114
        %v5304 = vunpack.c.l.b16 %v4115
        %v5305 = vunpack.c.h.b16 %v4115
        %v5306 = vunpack.c.l.b16 %v4116
        %v5307 = vunpack.c.h.b16 %v4116
        %v5308 = vunpack.c.l.b16 %v4117
        %v5309 = vunpack.c.h.b16 %v4117
        %v5310 = vunpack.c.l.b16 %v4118
        %v5311 = vunpack.c.h.b16 %v4118
        %v5312 = vunpack.c.l.b16 %v4119
        %v5313 = vunpack.c.h.b16 %v4119
        %v5314 = vunpack.c.l.b16 %v4120
        %v5315 = vunpack.c.h.b16 %v4120
        %v5316 = vunpack.c.l.b16 %v4121
        %v5317 = vunpack.c.h.b16 %v4121
        %v5318 = vunpack.c.l.b16 %v4122
        %v5319 = vunpack.c.h.b16 %v4122
        %v5320 = vunpack.c.l.b16 %v4123
        %v5321 = vunpack.c.h.b16 %v4123
        %v5322 = vunpack.c.l.b16 %v4124
        %v5323 = vunpack.c.h.b16 %v4124
        %v5324 = vunpack.c.l.b16 %v4125
        %v5325 = vunpack.c.h.b16 %v4125
        %v5326 = vunpack.c.l.b16 %v4126
        %v5327 = vunpack.c.h.b16 %v4126
        %v5328 = vunpack.c.l.b16 %v4127
        %v5329 = vunpack.c.h.b16 %v4127
        %v5330 = vunpack.c.l.b16 %v4128
        %v5331 = vunpack.c.h.b16 %v4128
        %v5332 = vunpack.c.l.b16 %v4129
        %v5333 = vunpack.c.h.b16 %v4129
        %v5334 = vunpack.c.l.b16 %v4130
        %v5335 = vunpack.c.h.b16 %v4130
        %v5336 = vunpack.c.l.b16 %v4131
        %v5337 = vunpack.c.h.b16 %v4131
        %v5338 = vunpack.c.l.b16 %v4132
        %v5339 = vunpack.c.h.b16 %v4132
        %v5340 = vunpack.c.l.b16 %v4133
        %v5341 = vunpack.c.h.b16 %v4133
        %v5342 = vunpack.c.l.b16 %v4134
        %v5343 = vunpack.c.h.b16 %v4134
        %v5344 = vunpack.c.l.b16 %v4135
        %v5345 = vunpack.c.h.b16 %v4135
        %v5346 = vunpack.c.l.b16 %v4136
        %v5347 = vunpack.c.h.b16 %v4136
        %v5348 = vunpack.c.l.b16 %v4137
        %v5349 = vunpack.c.h.b16 %v4137
        %v5350 = vunpack.c.l.b16 %v4138
        %v5351 = vunpack.c.h.b16 %v4138
        %v5352 = vunpack.c.l.b16 %v4139
        %v5353 = vunpack.c.h.b16 %v4139
        %v5354 = vunpack.c.l.b16 %v4140
        %v5355 = vunpack.c.h.b16 %v4140
        %v5356 = vunpack.c.l.b16 %v4141
        %v5357 = vunpack.c.h.b16 %v4141
        %v5358 = vunpack.c.l.b16 %v4142
        %v5359 = vunpack.c.h.b16 %v4142
        %v5360 = vunpack.c.l.b16 %v4143
        %v5361 = vunpack.c.h.b16 %v4143
        %v5362 = vunpack.c.l.b16 %v4144
        %v5363 = vunpack.c.h.b16 %v4144
        %v5364 = vunpack.c.l.b16 %v4145
        %v5365 = vunpack.c.h.b16 %v4145
        %v5366 = vunpack.c.l.b16 %v4146
        %v5367 = vunpack.c.h.b16 %v4146
        %v5368 = vunpack.c.l.b16 %v4147
        %v5369 = vunpack.c.h.b16 %v4147
        %v5370 = vunpack.c.l.b16 %v4148
        %v5371 = vunpack.c.h.b16 %v4148
        %v5372 = vunpack.c.l.b16 %v4149
        %v5373 = vunpack.c.h.b16 %v4149
        %v5374 = vunpack.c.l.b16 %v4150
        %v5375 = vunpack.c.h.b16 %v4150
        %v5376 = vunpack.c.l.b16 %v4151
        %v5377 = vunpack.c.h.b16 %v4151
        %v5378 = vunpack.c.l.b16 %v4152
        %v5379 = vunpack.c.h.b16 %v4152
        %v5380 = vunpack.c.l.b16 %v4153
        %v5381 = vunpack.c.h.b16 %v4153
        %v5382 = vunpack.c.l.b16 %v4154
        %v5383 = vunpack.c.h.b16 %v4154
        %v5384 = vunpack.c.l.b16 %v4155
        %v5385 = vunpack.c.h.b16 %v4155
        %v5386 = vunpack.c.l.b16 %v4156
        %v5387 = vunpack.c.h.b16 %v4156
        %v5388 = vunpack.c.l.b16 %v4157
        %v5389 = vunpack.c.h.b16 %v4157
        %v5390 = vunpack.c.l.b16 %v4158
        %v5391 = vunpack.c.h.b16 %v4158
        %v5392 = vunpack.c.l.b16 %v4159
        %v5393 = vunpack.c.h.b16 %v4159
        %v5394 = vunpack.c.l.b16 %v4160
        %v5395 = vunpack.c.h.b16 %v4160
        %v5396 = vunpack.c.l.b16 %v4161
        %v5397 = vunpack.c.h.b16 %v4161
        %v5398 = vunpack.c.l.b16 %v4162
        %v5399 = vunpack.c.h.b16 %v4162
        %v5400 = vunpack.c.l.b16 %v4163
        %v5401 = vunpack.c.h.b16 %v4163
        %v5402 = vunpack.c.l.b16 %v4164
        %v5403 = vunpack.c.h.b16 %v4164
        %v5404 = vunpack.c.l.b16 %v4165
        %v5405 = vunpack.c.h.b16 %v4165
        %v5406 = vunpack.c.l.b16 %v4166
        %v5407 = vunpack.c.h.b16 %v4166
        %v5408 = vunpack.c.l.b16 %v4167
        %v5409 = vunpack.c.h.b16 %v4167
        %v5410 = vunpack.c.l.b16 %v4168
        %v5411 = vunpack.c.h.b16 %v4168
        %v5412 = vunpack.c.l.b16 %v4169
        %v5413 = vunpack.c.h.b16 %v4169
        %v5414 = vunpack.c.l.b16 %v4170
        %v5415 = vunpack.c.h.b16 %v4170
        %v5416 = vunpack.c.l.b16 %v4171
        %v5417 = vunpack.c.h.b16 %v4171
        %v5418 = vunpack.c.l.b16 %v4172
        %v5419 = vunpack.c.h.b16 %v4172
        %v5420 = vunpack.c.l.b16 %v4173
        %v5421 = vunpack.c.h.b16 %v4173
        %v5422 = vunpack.c.l.b16 %v4174
        %v5423 = vunpack.c.h.b16 %v4174
        %v5424 = vunpack.c.l.b16 %v4175
        %v5425 = vunpack.c.h.b16 %v4175
        %v5426 = vunpack.c.l.b16 %v4176
        %v5427 = vunpack.c.h.b16 %v4176
        %v5428 = vunpack.c.l.b16 %v4177
        %v5429 = vunpack.c.h.b16 %v4177
        %v5430 = vunpack.c.l.b16 %v4178
        %v5431 = vunpack.c.h.b16 %v4178
        %v5432 = vunpack.c.l.b16 %v4179
        %v5433 = vunpack.c.h.b16 %v4179
        %v5434 = vunpack.c.l.b16 %v4180
        %v5435 = vunpack.c.h.b16 %v4180
        %v5436 = vunpack.c.l.b16 %v4181
        %v5437 = vunpack.c.h.b16 %v4181
        %v5438 = vunpack.c.l.b16 %v4182
        %v5439 = vunpack.c.h.b16 %v4182
        %v5440 = vunpack.c.l.b16 %v4183
        %v5441 = vunpack.c.h.b16 %v4183
        %v5442 = vunpack.c.l.b16 %v4184
        %v5443 = vunpack.c.h.b16 %v4184
        %v5444 = vunpack.c.l.b16 %v4185
        %v5445 = vunpack.c.h.b16 %v4185
        %v5446 = vunpack.c.l.b16 %v4186
        %v5447 = vunpack.c.h.b16 %v4186
        %v5448 = vunpack.c.l.b16 %v4187
        %v5449 = vunpack.c.h.b16 %v4187
        %v5450 = vunpack.c.l.b16 %v4188
        %v5451 = vunpack.c.h.b16 %v4188
        %v5452 = vunpack.c.l.b16 %v4189
        %v5453 = vunpack.c.h.b16 %v4189
        %v5454 = vunpack.c.l.b16 %v4190
        %v5455 = vunpack.c.h.b16 %v4190
        %v5456 = vunpack.c.l.b16 %v4191
        %v5457 = vunpack.c.h.b16 %v4191
        %v5458 = vunpack.c.l.b16 %v4192
        %v5459 = vunpack.c.h.b16 %v4192
        %v5460 = vunpack.c.l.b16 %v4193
        %v5461 = vunpack.c.h.b16 %v4193
        %v5462 = vunpack.c.l.b16 %v4194
        %v5463 = vunpack.c.h.b16 %v4194
        %v5464 = vunpack.c.l.b16 %v4195
        %v5465 = vunpack.c.h.b16 %v4195
        %v5466 = vunpack.c.l.b16 %v4196
        %v5467 = vunpack.c.h.b16 %v4196
        %v5468 = vunpack.c.l.b16 %v4197
        %v5469 = vunpack.c.h.b16 %v4197
        %v5470 = vunpack.c.l.b16 %v4198
        %v5471 = vunpack.c.h.b16 %v4198
        %v5472 = vunpack.c.l.b16 %v4199
        %v5473 = vunpack.c.h.b16 %v4199
        %v5474 = vunpack.c.l.b16 %v4200
        %v5475 = vunpack.c.h.b16 %v4200
        %v5476 = vunpack.c.l.b16 %v4201
        %v5477 = vunpack.c.h.b16 %v4201
        %v5478 = vunpack.c.l.b16 %v4202
        %v5479 = vunpack.c.h.b16 %v4202
        %v5480 = vunpack.c.l.b16 %v4203
        %v5481 = vunpack.c.h.b16 %v4203
        %v5482 = vunpack.c.l.b16 %v4204
        %v5483 = vunpack.c.h.b16 %v4204
        %v5484 = vunpack.c.l.b16 %v4205
        %v5485 = vunpack.c.h.b16 %v4205
        %v5486 = vunpack.c.l.b16 %v4206
        %v5487 = vunpack.c.h.b16 %v4206
        %v5488 = vpack.c.b16 %v5268, %v5264
        %v5489 = vpack.c.b16 %v5269, %v5265
        %v5490 = vpack.c.b16 %v5270, %v5266
        %v5491 = vpack.c.b16 %v5271, %v5267
        %v5492 = vpack.c.b16 %v5276, %v5272
        %v5493 = vpack.c.b16 %v5277, %v5273
        %v5494 = vpack.c.b16 %v5278, %v5274
        %v5495 = vpack.c.b16 %v5279, %v5275
        %v5496 = vpack.c.b16 %v5284, %v5280
        %v5497 = vpack.c.b16 %v5285, %v5281
        %v5498 = vpack.c.b16 %v5286, %v5282
        %v5499 = vpack.c.b16 %v5287, %v5283
        %v5500 = vpack.c.b16 %v5292, %v5288
        %v5501 = vpack.c.b16 %v5293, %v5289
        %v5502 = vpack.c.b16 %v5294, %v5290
        %v5503 = vpack.c.b16 %v5295, %v5291
        %v5504 = vpack.c.b16 %v5300, %v5296
        %v5505 = vpack.c.b16 %v5301, %v5297
        %v5506 = vpack.c.b16 %v5302, %v5298
        %v5507 = vpack.c.b16 %v5303, %v5299
        %v5508 = vpack.c.b16 %v5308, %v5304
        %v5509 = vpack.c.b16 %v5309, %v5305
        %v5510 = vpack.c.b16 %v5310, %v5306
        %v5511 = vpack.c.b16 %v5311, %v5307
        %v5512 = vpack.c.b16 %v5316, %v5312
        %v5513 = vpack.c.b16 %v5317, %v5313
        %v5514 = vpack.c.b16 %v5318, %v5314
        %v5515 = vpack.c.b16 %v5319, %v5315
        %v5516 = vpack.c.b16 %v5324, %v5320
        %v5517 = vpack.c.b16 %v5325, %v5321
        %v5518 = vpack.c.b16 %v5326, %v5322
        %v5519 = vpack.c.b16 %v5327, %v5323
        %v5520 = vpack.c.b16 %v5332, %v5328
        %v5521 = vpack.c.b16 %v5333, %v5329
        %v5522 = vpack.c.b16 %v5334, %v5330
        %v5523 = vpack.c.b16 %v5335, %v5331
        %v5524 = vpack.c.b16 %v5340, %v5336
        %v5525 = vpack.c.b16 %v5341, %v5337
        %v5526 = vpack.c.b16 %v5342, %v5338
        %v5527 = vpack.c.b16 %v5343, %v5339
        %v5528 = vpack.c.b16 %v5348, %v5344
        %v5529 = vpack.c.b16 %v5349, %v5345
        %v5530 = vpack.c.b16 %v5350, %v5346
        %v5531 = vpack.c.b16 %v5351, %v5347
        %v5532 = vpack.c.b16 %v5356, %v5352
        %v5533 = vpack.c.b16 %v5357, %v5353
        %v5534 = vpack.c.b16 %v5358, %v5354
        %v5535 = vpack.c.b16 %v5359, %v5355
        %v5536 = vpack.c.b16 %v5364, %v5360
        %v5537 = vpack.c.b16 %v5365, %v5361
        %v5538 = vpack.c.b16 %v5366, %v5362
        %v5539 = vpack.c.b16 %v5367, %v5363
        %v5540 = vpack.c.b16 %v5372, %v5368
        %v5541 = vpack.c.b16 %v5373, %v5369
        %v5542 = vpack.c.b16 %v5374, %v5370
        %v5543 = vpack.c.b16 %v5375, %v5371
        %v5544 = vpack.c.b16 %v5380, %v5376
        %v5545 = vpack.c.b16 %v5381, %v5377
        %v5546 = vpack.c.b16 %v5382, %v5378
        %v5547 = vpack.c.b16 %v5383, %v5379
        %v5548 = vpack.c.b16 %v5388, %v5384
        %v5549 = vpack.c.b16 %v5389, %v5385
        %v5550 = vpack.c.b16 %v5390, %v5386
        %v5551 = vpack.c.b16 %v5391, %v5387
        %v5552 = vpack.c.b16 %v5396, %v5392
        %v5553 = vpack.c.b16 %v5397, %v5393
        %v5554 = vpack.c.b16 %v5398, %v5394
        %v5555 = vpack.c.b16 %v5399, %v5395
        %v5556 = vpack.c.b16 %v5404, %v5400
        %v5557 = vpack.c.b16 %v5405, %v5401
        %v5558 = vpack.c.b16 %v5406, %v5402
        %v5559 = vpack.c.b16 %v5407, %v5403
        %v5560 = vpack.c.b16 %v5412, %v5408
        %v5561 = vpack.c.b16 %v5413, %v5409
        %v5562 = vpack.c.b16 %v5414, %v5410
        %v5563 = vpack.c.b16 %v5415, %v5411
        %v5564 = vpack.c.b16 %v5420, %v5416
        %v5565 = vpack.c.b16 %v5421, %v5417
        %v5566 = vpack.c.b16 %v5422, %v5418
        %v5567 = vpack.c.b16 %v5423, %v5419
        %v5568 = vpack.c.b16 %v5428, %v5424
        %v5569 = vpack.c.b16 %v5429, %v5425
        %v5570 = vpack.c.b16 %v5430, %v5426
        %v5571 = vpack.c.b16 %v5431, %v5427
        %v5572 = vpack.c.b16 %v5436, %v5432
        %v5573 = vpack.c.b16 %v5437, %v5433
        %v5574 = vpack.c.b16 %v5438, %v5434
        %v5575 = vpack.c.b16 %v5439, %v5435
        %v5576 = vpack.c.b16 %v5444, %v5440
        %v5577 = vpack.c.b16 %v5445, %v5441
        %v5578 = vpack.c.b16 %v5446, %v5442
        %v5579 = vpack.c.b16 %v5447, %v5443
        %v5580 = vpack.c.b16 %v5452, %v5448
        %v5581 = vpack.c.b16 %v5453, %v5449
        %v5582 = vpack.c.b16 %v5454, %v5450
        %v5583 = vpack.c.b16 %v5455, %v5451
        %v5584 = vpack.c.b16 %v5460, %v5456
        %v5585 = vpack.c.b16 %v5461, %v5457
        %v5586 = vpack.c.b16 %v5462, %v5458
        %v5587 = vpack.c.b16 %v5463, %v5459
        %v5588 = vpack.c.b16 %v5468, %v5464
        %v5589 = vpack.c.b16 %v5469, %v5465
        %v5590 = vpack.c.b16 %v5470, %v5466
        %v5591 = vpack.c.b16 %v5471, %v5467
        %v5592 = vpack.c.b16 %v5476, %v5472
        %v5593 = vpack.c.b16 %v5477, %v5473
        %v5594 = vpack.c.b16 %v5478, %v5474
        %v5595 = vpack.c.b16 %v5479, %v5475
        %v5596 = vpack.c.b16 %v5484, %v5480
        %v5597 = vpack.c.b16 %v5485, %v5481
        %v5598 = vpack.c.b16 %v5486, %v5482
        %v5599 = vpack.c.b16 %v5487, %v5483
        %v5713 = vsel %vm2064, %v4094, 0
        %5715 = vmatpush.bf16.msra.mxu0 %v5516
        %5716 = vmatpush.bf16.msra.mxu0 %v5512
        %5717 = vmatpush.bf16.msra.mxu0 %v5508
        %5718 = vmatpush.bf16.msra.mxu0 %v5504
        %5719 = vmatpush.bf16.msra.mxu0 %v5500
        %5720 = vmatpush.bf16.msra.mxu0 %v5496
        %5721 = vmatpush.bf16.msra.mxu0 %v5492
        %5722 = vmatpush.bf16.msra.mxu0 %v5488
        %5723 = vmatmul.bf16.gmra.mxu0 %v4091
        %v5724 = vpop.f32.mrf.mxu0
        %v5725 = vadd.f32 %v4993, %v5724
        %v5726 = vpop.f32.mrf.mxu0
        %5727 = vdwg.mxu0
        %5728 = vmatpush.bf16.msra.mxu0 %v5548
        %5729 = vmatpush.bf16.msra.mxu0 %v5544
        %5730 = vmatpush.bf16.msra.mxu0 %v5540
        %5731 = vmatpush.bf16.msra.mxu0 %v5536
        %5732 = vmatpush.bf16.msra.mxu0 %v5532
        %5733 = vmatpush.bf16.msra.mxu0 %v5528
        %5734 = vmatpush.bf16.msra.mxu0 %v5524
        %5735 = vmatpush.bf16.msra.mxu0 %v5520
        %5736 = vmatmul.bf16.gmra.mxu0 %v4092
        %v5737 = vpop.f32.mrf.mxu0
        %v5738 = vadd.f32 %v5725, %v5737
        %v5739 = vpop.f32.mrf.mxu0
        %5740 = vdwg.mxu0
        %5741 = vmatpush.bf16.msra.mxu0 %v5580
        %5742 = vmatpush.bf16.msra.mxu0 %v5576
        %5743 = vmatpush.bf16.msra.mxu0 %v5572
        %5744 = vmatpush.bf16.msra.mxu0 %v5568
        %5745 = vmatpush.bf16.msra.mxu0 %v5564
        %5746 = vmatpush.bf16.msra.mxu0 %v5560
        %5747 = vmatpush.bf16.msra.mxu0 %v5556
        %5748 = vmatpush.bf16.msra.mxu0 %v5552
        %5749 = vmatmul.bf16.gmra.mxu0 %v4093
        %v5750 = vpop.f32.mrf.mxu0
        %v5751 = vadd.f32 %v5738, %v5750
        %v5752 = vpop.f32.mrf.mxu0
        %5753 = vdwg.mxu0
        %5754 = vmatpush.bf16.msra.mxu0 0
        %5755 = vmatpush.bf16.msra.mxu0 0
        %5756 = vmatpush.bf16.msra.mxu0 0
        %5757 = vmatpush.bf16.msra.mxu0 0
        %5758 = vmatpush.bf16.msra.mxu0 %v5596
        %5759 = vmatpush.bf16.msra.mxu0 %v5592
        %5760 = vmatpush.bf16.msra.mxu0 %v5588
        %5761 = vmatpush.bf16.msra.mxu0 %v5584
        %5762 = vmatmul.bf16.gmra.mxu0 %v5713
        %v5763 = vpop.f32.mrf.mxu0
        %v5764 = vadd.f32 %v5751, %v5763
        %v5765 = vpop.f32.mrf.mxu0
        %5766 = vdwg.mxu0
        %5767 = vmatpush.bf16.msra.mxu0 %v5517
        %5768 = vmatpush.bf16.msra.mxu0 %v5513
        %5769 = vmatpush.bf16.msra.mxu0 %v5509
        %5770 = vmatpush.bf16.msra.mxu0 %v5505
        %5771 = vmatpush.bf16.msra.mxu0 %v5501
        %5772 = vmatpush.bf16.msra.mxu0 %v5497
        %5773 = vmatpush.bf16.msra.mxu0 %v5493
        %5774 = vmatpush.bf16.msra.mxu0 %v5489
        %5775 = vmatmul.bf16.gmra.mxu0 %v4091
        %v5776 = vpop.f32.mrf.mxu0
        %v5777 = vadd.f32 %v5045, %v5776
        %v5778 = vpop.f32.mrf.mxu0
        %5779 = vdwg.mxu0
        %5780 = vmatpush.bf16.msra.mxu0 %v5549
        %5781 = vmatpush.bf16.msra.mxu0 %v5545
        %5782 = vmatpush.bf16.msra.mxu0 %v5541
        %5783 = vmatpush.bf16.msra.mxu0 %v5537
        %5784 = vmatpush.bf16.msra.mxu0 %v5533
        %5785 = vmatpush.bf16.msra.mxu0 %v5529
        %5786 = vmatpush.bf16.msra.mxu0 %v5525
        %5787 = vmatpush.bf16.msra.mxu0 %v5521
        %5788 = vmatmul.bf16.gmra.mxu0 %v4092
        %v5789 = vpop.f32.mrf.mxu0
        %v5790 = vadd.f32 %v5777, %v5789
        %v5791 = vpop.f32.mrf.mxu0
        %5792 = vdwg.mxu0
        %5793 = vmatpush.bf16.msra.mxu0 %v5581
        %5794 = vmatpush.bf16.msra.mxu0 %v5577
        %5795 = vmatpush.bf16.msra.mxu0 %v5573
        %5796 = vmatpush.bf16.msra.mxu0 %v5569
        %5797 = vmatpush.bf16.msra.mxu0 %v5565
        %5798 = vmatpush.bf16.msra.mxu0 %v5561
        %5799 = vmatpush.bf16.msra.mxu0 %v5557
        %5800 = vmatpush.bf16.msra.mxu0 %v5553
        %5801 = vmatmul.bf16.gmra.mxu0 %v4093
        %v5802 = vpop.f32.mrf.mxu0
        %v5803 = vadd.f32 %v5790, %v5802
        %v5804 = vpop.f32.mrf.mxu0
        %5805 = vdwg.mxu0
        %5806 = vmatpush.bf16.msra.mxu0 0
        %5807 = vmatpush.bf16.msra.mxu0 0
        %5808 = vmatpush.bf16.msra.mxu0 0
        %5809 = vmatpush.bf16.msra.mxu0 0
        %5810 = vmatpush.bf16.msra.mxu0 %v5597
        %5811 = vmatpush.bf16.msra.mxu0 %v5593
        %5812 = vmatpush.bf16.msra.mxu0 %v5589
        %5813 = vmatpush.bf16.msra.mxu0 %v5585
        %5814 = vmatmul.bf16.gmra.mxu0 %v5713
        %v5815 = vpop.f32.mrf.mxu0
        %v5816 = vadd.f32 %v5803, %v5815
        %v5817 = vpop.f32.mrf.mxu0
        %5818 = vdwg.mxu0
        %5819 = vmatpush.bf16.msra.mxu0 %v5518
        %5820 = vmatpush.bf16.msra.mxu0 %v5514
        %5821 = vmatpush.bf16.msra.mxu0 %v5510
        %5822 = vmatpush.bf16.msra.mxu0 %v5506
        %5823 = vmatpush.bf16.msra.mxu0 %v5502
        %5824 = vmatpush.bf16.msra.mxu0 %v5498
        %5825 = vmatpush.bf16.msra.mxu0 %v5494
        %5826 = vmatpush.bf16.msra.mxu0 %v5490
        %5827 = vmatmul.bf16.gmra.mxu0 %v4091
        %v5828 = vpop.f32.mrf.mxu0
        %v5829 = vadd.f32 %v5097, %v5828
        %v5830 = vpop.f32.mrf.mxu0
        %5831 = vdwg.mxu0
        %5832 = vmatpush.bf16.msra.mxu0 %v5550
        %5833 = vmatpush.bf16.msra.mxu0 %v5546
        %5834 = vmatpush.bf16.msra.mxu0 %v5542
        %5835 = vmatpush.bf16.msra.mxu0 %v5538
        %5836 = vmatpush.bf16.msra.mxu0 %v5534
        %5837 = vmatpush.bf16.msra.mxu0 %v5530
        %5838 = vmatpush.bf16.msra.mxu0 %v5526
        %5839 = vmatpush.bf16.msra.mxu0 %v5522
        %5840 = vmatmul.bf16.gmra.mxu0 %v4092
        %v5841 = vpop.f32.mrf.mxu0
        %v5842 = vadd.f32 %v5829, %v5841
        %v5843 = vpop.f32.mrf.mxu0
        %5844 = vdwg.mxu0
        %5845 = vmatpush.bf16.msra.mxu0 %v5582
        %5846 = vmatpush.bf16.msra.mxu0 %v5578
        %5847 = vmatpush.bf16.msra.mxu0 %v5574
        %5848 = vmatpush.bf16.msra.mxu0 %v5570
        %5849 = vmatpush.bf16.msra.mxu0 %v5566
        %5850 = vmatpush.bf16.msra.mxu0 %v5562
        %5851 = vmatpush.bf16.msra.mxu0 %v5558
        %5852 = vmatpush.bf16.msra.mxu0 %v5554
        %5853 = vmatmul.bf16.gmra.mxu0 %v4093
        %v5854 = vpop.f32.mrf.mxu0
        %v5855 = vadd.f32 %v5842, %v5854
        %v5856 = vpop.f32.mrf.mxu0
        %5857 = vdwg.mxu0
        %5858 = vmatpush.bf16.msra.mxu0 0
        %5859 = vmatpush.bf16.msra.mxu0 0
        %5860 = vmatpush.bf16.msra.mxu0 0
        %5861 = vmatpush.bf16.msra.mxu0 0
        %5862 = vmatpush.bf16.msra.mxu0 %v5598
        %5863 = vmatpush.bf16.msra.mxu0 %v5594
        %5864 = vmatpush.bf16.msra.mxu0 %v5590
        %5865 = vmatpush.bf16.msra.mxu0 %v5586
        %5866 = vmatmul.bf16.gmra.mxu0 %v5713
        %v5867 = vpop.f32.mrf.mxu0
        %v5868 = vadd.f32 %v5855, %v5867
        %v5869 = vpop.f32.mrf.mxu0
        %5870 = vdwg.mxu0
        %5871 = vmatpush.bf16.msra.mxu0 %v5519
        %5872 = vmatpush.bf16.msra.mxu0 %v5515
        %5873 = vmatpush.bf16.msra.mxu0 %v5511
        %5874 = vmatpush.bf16.msra.mxu0 %v5507
        %5875 = vmatpush.bf16.msra.mxu0 %v5503
        %5876 = vmatpush.bf16.msra.mxu0 %v5499
        %5877 = vmatpush.bf16.msra.mxu0 %v5495
        %5878 = vmatpush.bf16.msra.mxu0 %v5491
        %5879 = vmatmul.bf16.gmra.mxu0 %v4091
        %v5880 = vpop.f32.mrf.mxu0
        %v5881 = vadd.f32 %v5149, %v5880
        %v5882 = vpop.f32.mrf.mxu0
        %5883 = vdwg.mxu0
        %5884 = vmatpush.bf16.msra.mxu0 %v5551
        %5885 = vmatpush.bf16.msra.mxu0 %v5547
        %5886 = vmatpush.bf16.msra.mxu0 %v5543
        %5887 = vmatpush.bf16.msra.mxu0 %v5539
        %5888 = vmatpush.bf16.msra.mxu0 %v5535
        %5889 = vmatpush.bf16.msra.mxu0 %v5531
        %5890 = vmatpush.bf16.msra.mxu0 %v5527
        %5891 = vmatpush.bf16.msra.mxu0 %v5523
        %5892 = vmatmul.bf16.gmra.mxu0 %v4092
        %v5893 = vpop.f32.mrf.mxu0
        %v5894 = vadd.f32 %v5881, %v5893
        %v5895 = vpop.f32.mrf.mxu0
        %5896 = vdwg.mxu0
        %5897 = vmatpush.bf16.msra.mxu0 %v5583
        %5898 = vmatpush.bf16.msra.mxu0 %v5579
        %5899 = vmatpush.bf16.msra.mxu0 %v5575
        %5900 = vmatpush.bf16.msra.mxu0 %v5571
        %5901 = vmatpush.bf16.msra.mxu0 %v5567
        %5902 = vmatpush.bf16.msra.mxu0 %v5563
        %5903 = vmatpush.bf16.msra.mxu0 %v5559
        %5904 = vmatpush.bf16.msra.mxu0 %v5555
        %5905 = vmatmul.bf16.gmra.mxu0 %v4093
        %v5906 = vpop.f32.mrf.mxu0
        %v5907 = vadd.f32 %v5894, %v5906
        %v5908 = vpop.f32.mrf.mxu0
        %5909 = vdwg.mxu0
        %5910 = vmatpush.bf16.msra.mxu0 0
        %5911 = vmatpush.bf16.msra.mxu0 0
        %5912 = vmatpush.bf16.msra.mxu0 0
        %5913 = vmatpush.bf16.msra.mxu0 0
        %5914 = vmatpush.bf16.msra.mxu0 %v5599
        %5915 = vmatpush.bf16.msra.mxu0 %v5595
        %5916 = vmatpush.bf16.msra.mxu0 %v5591
        %5917 = vmatpush.bf16.msra.mxu0 %v5587
        %5918 = vmatmul.bf16.gmra.mxu0 %v5713
        %v5919 = vpop.f32.mrf.mxu0
        %v5920 = vadd.f32 %v5907, %v5919
        %v5921 = vpop.f32.mrf.mxu0
        %5922 = vdwg.mxu0
        %s5923 = scalar_lea.vmem [#allocation13], 4
        %v5924 = vld [vmem:[%s5923] sm:$0x3]
        %v5926 = vsel %vm4019, %v5924, 0
        %5928 = vmatpush.bf16.msra.mxu0 0
        %5929 = vmatpush.bf16.msra.mxu0 0
        %5930 = vmatpush.bf16.msra.mxu0 0
        %5931 = vmatpush.bf16.msra.mxu0 0
        %5932 = vmatpush.bf16.msra.mxu0 0
        %5933 = vmatpush.bf16.msra.mxu0 0
        %5934 = vmatpush.bf16.msra.mxu0 0
        %5935 = vmatpush.bf16.msra.mxu0 %v4028
        %5936 = vmatmul.bf16.gmra.mxu0 %v5926
        %v5937 = vpop.f32.mrf.mxu0
        %v5938 = vadd.f32 0.0, %v5937
        %v5939 = vpop.f32.mrf.mxu0
        %5940 = vdwg.mxu0
        %5941 = vmatpush.bf16.msra.mxu0 0
        %5942 = vmatpush.bf16.msra.mxu0 0
        %5943 = vmatpush.bf16.msra.mxu0 0
        %5944 = vmatpush.bf16.msra.mxu0 0
        %5945 = vmatpush.bf16.msra.mxu0 0
        %5946 = vmatpush.bf16.msra.mxu0 0
        %5947 = vmatpush.bf16.msra.mxu0 0
        %5948 = vmatpush.bf16.msra.mxu0 %v4031
        %5949 = vmatmul.bf16.gmra.mxu0 %v5926
        %v5950 = vpop.f32.mrf.mxu0
        %v5951 = vadd.f32 0.0, %v5950
        %v5952 = vpop.f32.mrf.mxu0
        %5953 = vdwg.mxu0
        %5954 = vmatpush.bf16.msra.mxu0 0
        %5955 = vmatpush.bf16.msra.mxu0 0
        %5956 = vmatpush.bf16.msra.mxu0 0
        %5957 = vmatpush.bf16.msra.mxu0 0
        %5958 = vmatpush.bf16.msra.mxu0 0
        %5959 = vmatpush.bf16.msra.mxu0 0
        %5960 = vmatpush.bf16.msra.mxu0 0
        %5961 = vmatpush.bf16.msra.mxu0 %v4034
        %5962 = vmatmul.bf16.gmra.mxu0 %v5926
        %v5963 = vpop.f32.mrf.mxu0
        %v5964 = vadd.f32 0.0, %v5963
        %v5965 = vpop.f32.mrf.mxu0
        %5966 = vdwg.mxu0
        %5967 = vmatpush.bf16.msra.mxu0 0
        %5968 = vmatpush.bf16.msra.mxu0 0
        %5969 = vmatpush.bf16.msra.mxu0 0
        %5970 = vmatpush.bf16.msra.mxu0 0
        %5971 = vmatpush.bf16.msra.mxu0 0
        %5972 = vmatpush.bf16.msra.mxu0 0
        %5973 = vmatpush.bf16.msra.mxu0 0
        %5974 = vmatpush.bf16.msra.mxu0 %v4037
        %5975 = vmatmul.bf16.gmra.mxu0 %v5926
        %v5976 = vpop.f32.mrf.mxu0
        %v5977 = vadd.f32 0.0, %v5976
        %v5978 = vpop.f32.mrf.mxu0
        %5979 = vdwg.mxu0
        %v5980 = vpack.c.bf16 %v5938, %v5938
        %v5981 = vpack.c.bf16 %v5951, %v5951
        %v5982 = vpack.c.bf16 %v5964, %v5964
        %v5983 = vpack.c.bf16 %v5977, %v5977
        %s5984 = scalar_lea.vmem [#allocation14], 1792
        %v5985 = vld [vmem:[%s5984] sm:$0xff]
        %v5986 = vld [vmem:[%s5984 + $0x8] sm:$0xff]
        %v5987 = vld [vmem:[%s5984 + $0x10] sm:$0xff]
        %v5988 = vld [vmem:[%s5984 + $0x18] sm:$0xff]
        %v5989 = vld [vmem:[%s5984 + $0x20] sm:$0xff]
        %v5990 = vld [vmem:[%s5984 + $0x28] sm:$0xff]
        %v5991 = vld [vmem:[%s5984 + $0x30] sm:$0xff]
        %v5992 = vld [vmem:[%s5984 + $0x38] sm:$0xff]
        %v5993 = vld [vmem:[%s5984 + $0x40] sm:$0xff]
        %v5994 = vld [vmem:[%s5984 + $0x48] sm:$0xff]
        %v5995 = vld [vmem:[%s5984 + $0x50] sm:$0xff]
        %v5996 = vld [vmem:[%s5984 + $0x58] sm:$0xff]
        %v5997 = vld [vmem:[%s5984 + $0x60] sm:$0xff]
        %v5998 = vld [vmem:[%s5984 + $0x68] sm:$0xff]
        %v5999 = vld [vmem:[%s5984 + $0x70] sm:$0xff]
        %v6000 = vld [vmem:[%s5984 + $0x78] sm:$0xff]
        %v6001 = vld [vmem:[%s5984 + $0x80] sm:$0xff]
        %v6002 = vld [vmem:[%s5984 + $0x88] sm:$0xff]
        %v6003 = vld [vmem:[%s5984 + $0x90] sm:$0xff]
        %v6004 = vld [vmem:[%s5984 + $0x98] sm:$0xff]
        %v6005 = vld [vmem:[%s5984 + $0xa0] sm:$0xff]
        %v6006 = vld [vmem:[%s5984 + $0xa8] sm:$0xff]
        %v6007 = vld [vmem:[%s5984 + $0xb0] sm:$0xff]
        %v6008 = vld [vmem:[%s5984 + $0xb8] sm:$0xff]
        %v6009 = vld [vmem:[%s5984 + $0xc0] sm:$0xff]
        %v6010 = vld [vmem:[%s5984 + $0xc8] sm:$0xff]
        %v6011 = vld [vmem:[%s5984 + $0xd0] sm:$0xff]
        %v6012 = vld [vmem:[%s5984 + $0xd8] sm:$0xff]
        %v6013 = vld [vmem:[%s5984 + $0xe0] sm:$0xff]
        %v6014 = vld [vmem:[%s5984 + $0xe8] sm:$0xff]
        %v6015 = vld [vmem:[%s5984 + $0xf0] sm:$0xff]
        %v6016 = vld [vmem:[%s5984 + $0xf8] sm:$0xff]
        %v6017 = vld [vmem:[%s5984 + $0x100] sm:$0xff]
        %v6018 = vld [vmem:[%s5984 + $0x108] sm:$0xff]
        %v6019 = vld [vmem:[%s5984 + $0x110] sm:$0xff]
        %v6020 = vld [vmem:[%s5984 + $0x118] sm:$0xff]
        %v6021 = vld [vmem:[%s5984 + $0x120] sm:$0xff]
        %v6022 = vld [vmem:[%s5984 + $0x128] sm:$0xff]
        %v6023 = vld [vmem:[%s5984 + $0x130] sm:$0xff]
        %v6024 = vld [vmem:[%s5984 + $0x138] sm:$0xff]
        %v6025 = vld [vmem:[%s5984 + $0x140] sm:$0xff]
        %v6026 = vld [vmem:[%s5984 + $0x148] sm:$0xff]
        %v6027 = vld [vmem:[%s5984 + $0x150] sm:$0xff]
        %v6028 = vld [vmem:[%s5984 + $0x158] sm:$0xff]
        %v6029 = vld [vmem:[%s5984 + $0x160] sm:$0xff]
        %v6030 = vld [vmem:[%s5984 + $0x168] sm:$0xff]
        %v6031 = vld [vmem:[%s5984 + $0x170] sm:$0xff]
        %v6032 = vld [vmem:[%s5984 + $0x178] sm:$0xff]
        %v6033 = vld [vmem:[%s5984 + $0x180] sm:$0xff]
        %v6034 = vld [vmem:[%s5984 + $0x188] sm:$0xff]
        %v6035 = vld [vmem:[%s5984 + $0x190] sm:$0xff]
        %v6036 = vld [vmem:[%s5984 + $0x198] sm:$0xff]
        %v6037 = vld [vmem:[%s5984 + $0x1a0] sm:$0xff]
        %v6038 = vld [vmem:[%s5984 + $0x1a8] sm:$0xff]
        %v6039 = vld [vmem:[%s5984 + $0x1b0] sm:$0xff]
        %v6040 = vld [vmem:[%s5984 + $0x1b8] sm:$0xff]
        %v6041 = vld [vmem:[%s5984 + $0x1c0] sm:$0xff]
        %v6042 = vld [vmem:[%s5984 + $0x1c8] sm:$0xff]
        %v6043 = vld [vmem:[%s5984 + $0x1d0] sm:$0xff]
        %v6044 = vld [vmem:[%s5984 + $0x1d8] sm:$0xff]
        %v6045 = vld [vmem:[%s5984 + $0x1e0] sm:$0xff]
        %v6046 = vld [vmem:[%s5984 + $0x1e8] sm:$0xff]
        %v6047 = vld [vmem:[%s5984 + $0x1f0] sm:$0xff]
        %v6048 = vld [vmem:[%s5984 + $0x1f8] sm:$0xff]
        %v6049 = vld [vmem:[%s5984 + $0x200] sm:$0xff]
        %v6050 = vld [vmem:[%s5984 + $0x208] sm:$0xff]
        %v6051 = vld [vmem:[%s5984 + $0x210] sm:$0xff]
        %v6052 = vld [vmem:[%s5984 + $0x218] sm:$0xff]
        %v6053 = vld [vmem:[%s5984 + $0x220] sm:$0xff]
        %v6054 = vld [vmem:[%s5984 + $0x228] sm:$0xff]
        %v6055 = vld [vmem:[%s5984 + $0x230] sm:$0xff]
        %v6056 = vld [vmem:[%s5984 + $0x238] sm:$0xff]
        %v6057 = vld [vmem:[%s5984 + $0x240] sm:$0xff]
        %v6058 = vld [vmem:[%s5984 + $0x248] sm:$0xff]
        %v6059 = vld [vmem:[%s5984 + $0x250] sm:$0xff]
        %v6060 = vld [vmem:[%s5984 + $0x258] sm:$0xff]
        %v6061 = vld [vmem:[%s5984 + $0x260] sm:$0xff]
        %v6062 = vld [vmem:[%s5984 + $0x268] sm:$0xff]
        %v6063 = vld [vmem:[%s5984 + $0x270] sm:$0xff]
        %v6064 = vld [vmem:[%s5984 + $0x278] sm:$0xff]
        %v6065 = vld [vmem:[%s5984 + $0x280] sm:$0xff]
        %v6066 = vld [vmem:[%s5984 + $0x288] sm:$0xff]
        %v6067 = vld [vmem:[%s5984 + $0x290] sm:$0xff]
        %v6068 = vld [vmem:[%s5984 + $0x298] sm:$0xff]
        %v6069 = vld [vmem:[%s5984 + $0x2a0] sm:$0xff]
        %v6070 = vld [vmem:[%s5984 + $0x2a8] sm:$0xff]
        %v6071 = vld [vmem:[%s5984 + $0x2b0] sm:$0xff]
        %v6072 = vld [vmem:[%s5984 + $0x2b8] sm:$0xff]
        %v6073 = vld [vmem:[%s5984 + $0x2c0] sm:$0xff]
        %v6074 = vld [vmem:[%s5984 + $0x2c8] sm:$0xff]
        %v6075 = vld [vmem:[%s5984 + $0x2d0] sm:$0xff]
        %v6076 = vld [vmem:[%s5984 + $0x2d8] sm:$0xff]
        %v6077 = vld [vmem:[%s5984 + $0x2e0] sm:$0xff]
        %v6078 = vld [vmem:[%s5984 + $0x2e8] sm:$0xff]
        %v6079 = vld [vmem:[%s5984 + $0x2f0] sm:$0xff]
        %v6080 = vld [vmem:[%s5984 + $0x2f8] sm:$0xff]
        %v6081 = vld [vmem:[%s5984 + $0x300] sm:$0xff]
        %v6082 = vld [vmem:[%s5984 + $0x308] sm:$0xff]
        %v6083 = vld [vmem:[%s5984 + $0x310] sm:$0xff]
        %v6084 = vld [vmem:[%s5984 + $0x318] sm:$0xff]
        %v6085 = vld [vmem:[%s5984 + $0x320] sm:$0xff]
        %v6086 = vld [vmem:[%s5984 + $0x328] sm:$0xff]
        %v6087 = vld [vmem:[%s5984 + $0x330] sm:$0xff]
        %v6088 = vld [vmem:[%s5984 + $0x338] sm:$0xff]
        %v6089 = vld [vmem:[%s5984 + $0x340] sm:$0xff]
        %v6090 = vld [vmem:[%s5984 + $0x348] sm:$0xff]
        %v6091 = vld [vmem:[%s5984 + $0x350] sm:$0xff]
        %v6092 = vld [vmem:[%s5984 + $0x358] sm:$0xff]
        %v6093 = vld [vmem:[%s5984 + $0x360] sm:$0xff]
        %v6094 = vld [vmem:[%s5984 + $0x368] sm:$0xff]
        %v6095 = vld [vmem:[%s5984 + $0x370] sm:$0xff]
        %v6096 = vld [vmem:[%s5984 + $0x378] sm:$0xff]
        %v6209 = vunpack.c.l.b16 %v5985
        %v6210 = vunpack.c.h.b16 %v5985
        %v6211 = vunpack.c.l.b16 %v5986
        %v6212 = vunpack.c.h.b16 %v5986
        %v6213 = vunpack.c.l.b16 %v5987
        %v6214 = vunpack.c.h.b16 %v5987
        %v6215 = vunpack.c.l.b16 %v5988
        %v6216 = vunpack.c.h.b16 %v5988
        %v6217 = vunpack.c.l.b16 %v5989
        %v6218 = vunpack.c.h.b16 %v5989
        %v6219 = vunpack.c.l.b16 %v5990
        %v6220 = vunpack.c.h.b16 %v5990
        %v6221 = vunpack.c.l.b16 %v5991
        %v6222 = vunpack.c.h.b16 %v5991
        %v6223 = vunpack.c.l.b16 %v5992
        %v6224 = vunpack.c.h.b16 %v5992
        %v6225 = vunpack.c.l.b16 %v5993
        %v6226 = vunpack.c.h.b16 %v5993
        %v6227 = vunpack.c.l.b16 %v5994
        %v6228 = vunpack.c.h.b16 %v5994
        %v6229 = vunpack.c.l.b16 %v5995
        %v6230 = vunpack.c.h.b16 %v5995
        %v6231 = vunpack.c.l.b16 %v5996
        %v6232 = vunpack.c.h.b16 %v5996
        %v6233 = vunpack.c.l.b16 %v5997
        %v6234 = vunpack.c.h.b16 %v5997
        %v6235 = vunpack.c.l.b16 %v5998
        %v6236 = vunpack.c.h.b16 %v5998
        %v6237 = vunpack.c.l.b16 %v5999
        %v6238 = vunpack.c.h.b16 %v5999
        %v6239 = vunpack.c.l.b16 %v6000
        %v6240 = vunpack.c.h.b16 %v6000
        %v6241 = vunpack.c.l.b16 %v6001
        %v6242 = vunpack.c.h.b16 %v6001
        %v6243 = vunpack.c.l.b16 %v6002
        %v6244 = vunpack.c.h.b16 %v6002
        %v6245 = vunpack.c.l.b16 %v6003
        %v6246 = vunpack.c.h.b16 %v6003
        %v6247 = vunpack.c.l.b16 %v6004
        %v6248 = vunpack.c.h.b16 %v6004
        %v6249 = vunpack.c.l.b16 %v6005
        %v6250 = vunpack.c.h.b16 %v6005
        %v6251 = vunpack.c.l.b16 %v6006
        %v6252 = vunpack.c.h.b16 %v6006
        %v6253 = vunpack.c.l.b16 %v6007
        %v6254 = vunpack.c.h.b16 %v6007
        %v6255 = vunpack.c.l.b16 %v6008
        %v6256 = vunpack.c.h.b16 %v6008
        %v6257 = vunpack.c.l.b16 %v6009
        %v6258 = vunpack.c.h.b16 %v6009
        %v6259 = vunpack.c.l.b16 %v6010
        %v6260 = vunpack.c.h.b16 %v6010
        %v6261 = vunpack.c.l.b16 %v6011
        %v6262 = vunpack.c.h.b16 %v6011
        %v6263 = vunpack.c.l.b16 %v6012
        %v6264 = vunpack.c.h.b16 %v6012
        %v6265 = vunpack.c.l.b16 %v6013
        %v6266 = vunpack.c.h.b16 %v6013
        %v6267 = vunpack.c.l.b16 %v6014
        %v6268 = vunpack.c.h.b16 %v6014
        %v6269 = vunpack.c.l.b16 %v6015
        %v6270 = vunpack.c.h.b16 %v6015
        %v6271 = vunpack.c.l.b16 %v6016
        %v6272 = vunpack.c.h.b16 %v6016
        %v6273 = vunpack.c.l.b16 %v6017
        %v6274 = vunpack.c.h.b16 %v6017
        %v6275 = vunpack.c.l.b16 %v6018
        %v6276 = vunpack.c.h.b16 %v6018
        %v6277 = vunpack.c.l.b16 %v6019
        %v6278 = vunpack.c.h.b16 %v6019
        %v6279 = vunpack.c.l.b16 %v6020
        %v6280 = vunpack.c.h.b16 %v6020
        %v6281 = vunpack.c.l.b16 %v6021
        %v6282 = vunpack.c.h.b16 %v6021
        %v6283 = vunpack.c.l.b16 %v6022
        %v6284 = vunpack.c.h.b16 %v6022
        %v6285 = vunpack.c.l.b16 %v6023
        %v6286 = vunpack.c.h.b16 %v6023
        %v6287 = vunpack.c.l.b16 %v6024
        %v6288 = vunpack.c.h.b16 %v6024
        %v6289 = vunpack.c.l.b16 %v6025
        %v6290 = vunpack.c.h.b16 %v6025
        %v6291 = vunpack.c.l.b16 %v6026
        %v6292 = vunpack.c.h.b16 %v6026
        %v6293 = vunpack.c.l.b16 %v6027
        %v6294 = vunpack.c.h.b16 %v6027
        %v6295 = vunpack.c.l.b16 %v6028
        %v6296 = vunpack.c.h.b16 %v6028
        %v6297 = vunpack.c.l.b16 %v6029
        %v6298 = vunpack.c.h.b16 %v6029
        %v6299 = vunpack.c.l.b16 %v6030
        %v6300 = vunpack.c.h.b16 %v6030
        %v6301 = vunpack.c.l.b16 %v6031
        %v6302 = vunpack.c.h.b16 %v6031
        %v6303 = vunpack.c.l.b16 %v6032
        %v6304 = vunpack.c.h.b16 %v6032
        %v6305 = vunpack.c.l.b16 %v6033
        %v6306 = vunpack.c.h.b16 %v6033
        %v6307 = vunpack.c.l.b16 %v6034
        %v6308 = vunpack.c.h.b16 %v6034
        %v6309 = vunpack.c.l.b16 %v6035
        %v6310 = vunpack.c.h.b16 %v6035
        %v6311 = vunpack.c.l.b16 %v6036
        %v6312 = vunpack.c.h.b16 %v6036
        %v6313 = vunpack.c.l.b16 %v6037
        %v6314 = vunpack.c.h.b16 %v6037
        %v6315 = vunpack.c.l.b16 %v6038
        %v6316 = vunpack.c.h.b16 %v6038
        %v6317 = vunpack.c.l.b16 %v6039
        %v6318 = vunpack.c.h.b16 %v6039
        %v6319 = vunpack.c.l.b16 %v6040
        %v6320 = vunpack.c.h.b16 %v6040
        %v6321 = vunpack.c.l.b16 %v6041
        %v6322 = vunpack.c.h.b16 %v6041
        %v6323 = vunpack.c.l.b16 %v6042
        %v6324 = vunpack.c.h.b16 %v6042
        %v6325 = vunpack.c.l.b16 %v6043
        %v6326 = vunpack.c.h.b16 %v6043
        %v6327 = vunpack.c.l.b16 %v6044
        %v6328 = vunpack.c.h.b16 %v6044
        %v6329 = vunpack.c.l.b16 %v6045
        %v6330 = vunpack.c.h.b16 %v6045
        %v6331 = vunpack.c.l.b16 %v6046
        %v6332 = vunpack.c.h.b16 %v6046
        %v6333 = vunpack.c.l.b16 %v6047
        %v6334 = vunpack.c.h.b16 %v6047
        %v6335 = vunpack.c.l.b16 %v6048
        %v6336 = vunpack.c.h.b16 %v6048
        %v6337 = vunpack.c.l.b16 %v6049
        %v6338 = vunpack.c.h.b16 %v6049
        %v6339 = vunpack.c.l.b16 %v6050
        %v6340 = vunpack.c.h.b16 %v6050
        %v6341 = vunpack.c.l.b16 %v6051
        %v6342 = vunpack.c.h.b16 %v6051
        %v6343 = vunpack.c.l.b16 %v6052
        %v6344 = vunpack.c.h.b16 %v6052
        %v6345 = vunpack.c.l.b16 %v6053
        %v6346 = vunpack.c.h.b16 %v6053
        %v6347 = vunpack.c.l.b16 %v6054
        %v6348 = vunpack.c.h.b16 %v6054
        %v6349 = vunpack.c.l.b16 %v6055
        %v6350 = vunpack.c.h.b16 %v6055
        %v6351 = vunpack.c.l.b16 %v6056
        %v6352 = vunpack.c.h.b16 %v6056
        %v6353 = vunpack.c.l.b16 %v6057
        %v6354 = vunpack.c.h.b16 %v6057
        %v6355 = vunpack.c.l.b16 %v6058
        %v6356 = vunpack.c.h.b16 %v6058
        %v6357 = vunpack.c.l.b16 %v6059
        %v6358 = vunpack.c.h.b16 %v6059
        %v6359 = vunpack.c.l.b16 %v6060
        %v6360 = vunpack.c.h.b16 %v6060
        %v6361 = vunpack.c.l.b16 %v6061
        %v6362 = vunpack.c.h.b16 %v6061
        %v6363 = vunpack.c.l.b16 %v6062
        %v6364 = vunpack.c.h.b16 %v6062
        %v6365 = vunpack.c.l.b16 %v6063
        %v6366 = vunpack.c.h.b16 %v6063
        %v6367 = vunpack.c.l.b16 %v6064
        %v6368 = vunpack.c.h.b16 %v6064
        %v6369 = vunpack.c.l.b16 %v6065
        %v6370 = vunpack.c.h.b16 %v6065
        %v6371 = vunpack.c.l.b16 %v6066
        %v6372 = vunpack.c.h.b16 %v6066
        %v6373 = vunpack.c.l.b16 %v6067
        %v6374 = vunpack.c.h.b16 %v6067
        %v6375 = vunpack.c.l.b16 %v6068
        %v6376 = vunpack.c.h.b16 %v6068
        %v6377 = vunpack.c.l.b16 %v6069
        %v6378 = vunpack.c.h.b16 %v6069
        %v6379 = vunpack.c.l.b16 %v6070
        %v6380 = vunpack.c.h.b16 %v6070
        %v6381 = vunpack.c.l.b16 %v6071
        %v6382 = vunpack.c.h.b16 %v6071
        %v6383 = vunpack.c.l.b16 %v6072
        %v6384 = vunpack.c.h.b16 %v6072
        %v6385 = vunpack.c.l.b16 %v6073
        %v6386 = vunpack.c.h.b16 %v6073
        %v6387 = vunpack.c.l.b16 %v6074
        %v6388 = vunpack.c.h.b16 %v6074
        %v6389 = vunpack.c.l.b16 %v6075
        %v6390 = vunpack.c.h.b16 %v6075
        %v6391 = vunpack.c.l.b16 %v6076
        %v6392 = vunpack.c.h.b16 %v6076
        %v6393 = vunpack.c.l.b16 %v6077
        %v6394 = vunpack.c.h.b16 %v6077
        %v6395 = vunpack.c.l.b16 %v6078
        %v6396 = vunpack.c.h.b16 %v6078
        %v6397 = vunpack.c.l.b16 %v6079
        %v6398 = vunpack.c.h.b16 %v6079
        %v6399 = vunpack.c.l.b16 %v6080
        %v6400 = vunpack.c.h.b16 %v6080
        %v6401 = vunpack.c.l.b16 %v6081
        %v6402 = vunpack.c.h.b16 %v6081
        %v6403 = vunpack.c.l.b16 %v6082
        %v6404 = vunpack.c.h.b16 %v6082
        %v6405 = vunpack.c.l.b16 %v6083
        %v6406 = vunpack.c.h.b16 %v6083
        %v6407 = vunpack.c.l.b16 %v6084
        %v6408 = vunpack.c.h.b16 %v6084
        %v6409 = vunpack.c.l.b16 %v6085
        %v6410 = vunpack.c.h.b16 %v6085
        %v6411 = vunpack.c.l.b16 %v6086
        %v6412 = vunpack.c.h.b16 %v6086
        %v6413 = vunpack.c.l.b16 %v6087
        %v6414 = vunpack.c.h.b16 %v6087
        %v6415 = vunpack.c.l.b16 %v6088
        %v6416 = vunpack.c.h.b16 %v6088
        %v6417 = vunpack.c.l.b16 %v6089
        %v6418 = vunpack.c.h.b16 %v6089
        %v6419 = vunpack.c.l.b16 %v6090
        %v6420 = vunpack.c.h.b16 %v6090
        %v6421 = vunpack.c.l.b16 %v6091
        %v6422 = vunpack.c.h.b16 %v6091
        %v6423 = vunpack.c.l.b16 %v6092
        %v6424 = vunpack.c.h.b16 %v6092
        %v6425 = vunpack.c.l.b16 %v6093
        %v6426 = vunpack.c.h.b16 %v6093
        %v6427 = vunpack.c.l.b16 %v6094
        %v6428 = vunpack.c.h.b16 %v6094
        %v6429 = vunpack.c.l.b16 %v6095
        %v6430 = vunpack.c.h.b16 %v6095
        %v6431 = vunpack.c.l.b16 %v6096
        %v6432 = vunpack.c.h.b16 %v6096
        %v6433 = vpack.c.b16 %v6213, %v6209
        %v6434 = vpack.c.b16 %v6214, %v6210
        %v6435 = vpack.c.b16 %v6215, %v6211
        %v6436 = vpack.c.b16 %v6216, %v6212
        %v6437 = vpack.c.b16 %v6221, %v6217
        %v6438 = vpack.c.b16 %v6222, %v6218
        %v6439 = vpack.c.b16 %v6223, %v6219
        %v6440 = vpack.c.b16 %v6224, %v6220
        %v6441 = vpack.c.b16 %v6229, %v6225
        %v6442 = vpack.c.b16 %v6230, %v6226
        %v6443 = vpack.c.b16 %v6231, %v6227
        %v6444 = vpack.c.b16 %v6232, %v6228
        %v6445 = vpack.c.b16 %v6237, %v6233
        %v6446 = vpack.c.b16 %v6238, %v6234
        %v6447 = vpack.c.b16 %v6239, %v6235
        %v6448 = vpack.c.b16 %v6240, %v6236
        %v6449 = vpack.c.b16 %v6245, %v6241
        %v6450 = vpack.c.b16 %v6246, %v6242
        %v6451 = vpack.c.b16 %v6247, %v6243
        %v6452 = vpack.c.b16 %v6248, %v6244
        %v6453 = vpack.c.b16 %v6253, %v6249
        %v6454 = vpack.c.b16 %v6254, %v6250
        %v6455 = vpack.c.b16 %v6255, %v6251
        %v6456 = vpack.c.b16 %v6256, %v6252
        %v6457 = vpack.c.b16 %v6261, %v6257
        %v6458 = vpack.c.b16 %v6262, %v6258
        %v6459 = vpack.c.b16 %v6263, %v6259
        %v6460 = vpack.c.b16 %v6264, %v6260
        %v6461 = vpack.c.b16 %v6269, %v6265
        %v6462 = vpack.c.b16 %v6270, %v6266
        %v6463 = vpack.c.b16 %v6271, %v6267
        %v6464 = vpack.c.b16 %v6272, %v6268
        %v6465 = vpack.c.b16 %v6277, %v6273
        %v6466 = vpack.c.b16 %v6278, %v6274
        %v6467 = vpack.c.b16 %v6279, %v6275
        %v6468 = vpack.c.b16 %v6280, %v6276
        %v6469 = vpack.c.b16 %v6285, %v6281
        %v6470 = vpack.c.b16 %v6286, %v6282
        %v6471 = vpack.c.b16 %v6287, %v6283
        %v6472 = vpack.c.b16 %v6288, %v6284
        %v6473 = vpack.c.b16 %v6293, %v6289
        %v6474 = vpack.c.b16 %v6294, %v6290
        %v6475 = vpack.c.b16 %v6295, %v6291
        %v6476 = vpack.c.b16 %v6296, %v6292
        %v6477 = vpack.c.b16 %v6301, %v6297
        %v6478 = vpack.c.b16 %v6302, %v6298
        %v6479 = vpack.c.b16 %v6303, %v6299
        %v6480 = vpack.c.b16 %v6304, %v6300
        %v6481 = vpack.c.b16 %v6309, %v6305
        %v6482 = vpack.c.b16 %v6310, %v6306
        %v6483 = vpack.c.b16 %v6311, %v6307
        %v6484 = vpack.c.b16 %v6312, %v6308
        %v6485 = vpack.c.b16 %v6317, %v6313
        %v6486 = vpack.c.b16 %v6318, %v6314
        %v6487 = vpack.c.b16 %v6319, %v6315
        %v6488 = vpack.c.b16 %v6320, %v6316
        %v6489 = vpack.c.b16 %v6325, %v6321
        %v6490 = vpack.c.b16 %v6326, %v6322
        %v6491 = vpack.c.b16 %v6327, %v6323
        %v6492 = vpack.c.b16 %v6328, %v6324
        %v6493 = vpack.c.b16 %v6333, %v6329
        %v6494 = vpack.c.b16 %v6334, %v6330
        %v6495 = vpack.c.b16 %v6335, %v6331
        %v6496 = vpack.c.b16 %v6336, %v6332
        %v6497 = vpack.c.b16 %v6341, %v6337
        %v6498 = vpack.c.b16 %v6342, %v6338
        %v6499 = vpack.c.b16 %v6343, %v6339
        %v6500 = vpack.c.b16 %v6344, %v6340
        %v6501 = vpack.c.b16 %v6349, %v6345
        %v6502 = vpack.c.b16 %v6350, %v6346
        %v6503 = vpack.c.b16 %v6351, %v6347
        %v6504 = vpack.c.b16 %v6352, %v6348
        %v6505 = vpack.c.b16 %v6357, %v6353
        %v6506 = vpack.c.b16 %v6358, %v6354
        %v6507 = vpack.c.b16 %v6359, %v6355
        %v6508 = vpack.c.b16 %v6360, %v6356
        %v6509 = vpack.c.b16 %v6365, %v6361
        %v6510 = vpack.c.b16 %v6366, %v6362
        %v6511 = vpack.c.b16 %v6367, %v6363
        %v6512 = vpack.c.b16 %v6368, %v6364
        %v6513 = vpack.c.b16 %v6373, %v6369
        %v6514 = vpack.c.b16 %v6374, %v6370
        %v6515 = vpack.c.b16 %v6375, %v6371
        %v6516 = vpack.c.b16 %v6376, %v6372
        %v6517 = vpack.c.b16 %v6381, %v6377
        %v6518 = vpack.c.b16 %v6382, %v6378
        %v6519 = vpack.c.b16 %v6383, %v6379
        %v6520 = vpack.c.b16 %v6384, %v6380
        %v6521 = vpack.c.b16 %v6389, %v6385
        %v6522 = vpack.c.b16 %v6390, %v6386
        %v6523 = vpack.c.b16 %v6391, %v6387
        %v6524 = vpack.c.b16 %v6392, %v6388
        %v6525 = vpack.c.b16 %v6397, %v6393
        %v6526 = vpack.c.b16 %v6398, %v6394
        %v6527 = vpack.c.b16 %v6399, %v6395
        %v6528 = vpack.c.b16 %v6400, %v6396
        %v6529 = vpack.c.b16 %v6405, %v6401
        %v6530 = vpack.c.b16 %v6406, %v6402
        %v6531 = vpack.c.b16 %v6407, %v6403
        %v6532 = vpack.c.b16 %v6408, %v6404
        %v6533 = vpack.c.b16 %v6413, %v6409
        %v6534 = vpack.c.b16 %v6414, %v6410
        %v6535 = vpack.c.b16 %v6415, %v6411
        %v6536 = vpack.c.b16 %v6416, %v6412
        %v6537 = vpack.c.b16 %v6421, %v6417
        %v6538 = vpack.c.b16 %v6422, %v6418
        %v6539 = vpack.c.b16 %v6423, %v6419
        %v6540 = vpack.c.b16 %v6424, %v6420
        %v6541 = vpack.c.b16 %v6429, %v6425
        %v6542 = vpack.c.b16 %v6430, %v6426
        %v6543 = vpack.c.b16 %v6431, %v6427
        %v6544 = vpack.c.b16 %v6432, %v6428
        %v6658 = vsel %vm2064, %v5983, 0
        %6660 = vmatpush.bf16.msra.mxu0 %v6461
        %6661 = vmatpush.bf16.msra.mxu0 %v6457
        %6662 = vmatpush.bf16.msra.mxu0 %v6453
        %6663 = vmatpush.bf16.msra.mxu0 %v6449
        %6664 = vmatpush.bf16.msra.mxu0 %v6445
        %6665 = vmatpush.bf16.msra.mxu0 %v6441
        %6666 = vmatpush.bf16.msra.mxu0 %v6437
        %6667 = vmatpush.bf16.msra.mxu0 %v6433
        %6668 = vmatmul.bf16.gmra.mxu0 %v5980
        %v6669 = vpop.f32.mrf.mxu0
        %v6670 = vadd.f32 0.0, %v6669
        %v6671 = vpop.f32.mrf.mxu0
        %6672 = vdwg.mxu0
        %6673 = vmatpush.bf16.msra.mxu0 %v6493
        %6674 = vmatpush.bf16.msra.mxu0 %v6489
        %6675 = vmatpush.bf16.msra.mxu0 %v6485
        %6676 = vmatpush.bf16.msra.mxu0 %v6481
        %6677 = vmatpush.bf16.msra.mxu0 %v6477
        %6678 = vmatpush.bf16.msra.mxu0 %v6473
        %6679 = vmatpush.bf16.msra.mxu0 %v6469
        %6680 = vmatpush.bf16.msra.mxu0 %v6465
        %6681 = vmatmul.bf16.gmra.mxu0 %v5981
        %v6682 = vpop.f32.mrf.mxu0
        %v6683 = vadd.f32 %v6670, %v6682
        %v6684 = vpop.f32.mrf.mxu0
        %6685 = vdwg.mxu0
        %6686 = vmatpush.bf16.msra.mxu0 %v6525
        %6687 = vmatpush.bf16.msra.mxu0 %v6521
        %6688 = vmatpush.bf16.msra.mxu0 %v6517
        %6689 = vmatpush.bf16.msra.mxu0 %v6513
        %6690 = vmatpush.bf16.msra.mxu0 %v6509
        %6691 = vmatpush.bf16.msra.mxu0 %v6505
        %6692 = vmatpush.bf16.msra.mxu0 %v6501
        %6693 = vmatpush.bf16.msra.mxu0 %v6497
        %6694 = vmatmul.bf16.gmra.mxu0 %v5982
        %v6695 = vpop.f32.mrf.mxu0
        %v6696 = vadd.f32 %v6683, %v6695
        %v6697 = vpop.f32.mrf.mxu0
        %6698 = vdwg.mxu0
        %6699 = vmatpush.bf16.msra.mxu0 0
        %6700 = vmatpush.bf16.msra.mxu0 0
        %6701 = vmatpush.bf16.msra.mxu0 0
        %6702 = vmatpush.bf16.msra.mxu0 0
        %6703 = vmatpush.bf16.msra.mxu0 %v6541
        %6704 = vmatpush.bf16.msra.mxu0 %v6537
        %6705 = vmatpush.bf16.msra.mxu0 %v6533
        %6706 = vmatpush.bf16.msra.mxu0 %v6529
        %6707 = vmatmul.bf16.gmra.mxu0 %v6658
        %v6708 = vpop.f32.mrf.mxu0
        %v6709 = vadd.f32 %v6696, %v6708
        %v6710 = vpop.f32.mrf.mxu0
        %6711 = vdwg.mxu0
        %6712 = vmatpush.bf16.msra.mxu0 %v6462
        %6713 = vmatpush.bf16.msra.mxu0 %v6458
        %6714 = vmatpush.bf16.msra.mxu0 %v6454
        %6715 = vmatpush.bf16.msra.mxu0 %v6450
        %6716 = vmatpush.bf16.msra.mxu0 %v6446
        %6717 = vmatpush.bf16.msra.mxu0 %v6442
        %6718 = vmatpush.bf16.msra.mxu0 %v6438
        %6719 = vmatpush.bf16.msra.mxu0 %v6434
        %6720 = vmatmul.bf16.gmra.mxu0 %v5980
        %v6721 = vpop.f32.mrf.mxu0
        %v6722 = vadd.f32 0.0, %v6721
        %v6723 = vpop.f32.mrf.mxu0
        %6724 = vdwg.mxu0
        %6725 = vmatpush.bf16.msra.mxu0 %v6494
        %6726 = vmatpush.bf16.msra.mxu0 %v6490
        %6727 = vmatpush.bf16.msra.mxu0 %v6486
        %6728 = vmatpush.bf16.msra.mxu0 %v6482
        %6729 = vmatpush.bf16.msra.mxu0 %v6478
        %6730 = vmatpush.bf16.msra.mxu0 %v6474
        %6731 = vmatpush.bf16.msra.mxu0 %v6470
        %6732 = vmatpush.bf16.msra.mxu0 %v6466
        %6733 = vmatmul.bf16.gmra.mxu0 %v5981
        %v6734 = vpop.f32.mrf.mxu0
        %v6735 = vadd.f32 %v6722, %v6734
        %v6736 = vpop.f32.mrf.mxu0
        %6737 = vdwg.mxu0
        %6738 = vmatpush.bf16.msra.mxu0 %v6526
        %6739 = vmatpush.bf16.msra.mxu0 %v6522
        %6740 = vmatpush.bf16.msra.mxu0 %v6518
        %6741 = vmatpush.bf16.msra.mxu0 %v6514
        %6742 = vmatpush.bf16.msra.mxu0 %v6510
        %6743 = vmatpush.bf16.msra.mxu0 %v6506
        %6744 = vmatpush.bf16.msra.mxu0 %v6502
        %6745 = vmatpush.bf16.msra.mxu0 %v6498
        %6746 = vmatmul.bf16.gmra.mxu0 %v5982
        %v6747 = vpop.f32.mrf.mxu0
        %v6748 = vadd.f32 %v6735, %v6747
        %v6749 = vpop.f32.mrf.mxu0
        %6750 = vdwg.mxu0
        %6751 = vmatpush.bf16.msra.mxu0 0
        %6752 = vmatpush.bf16.msra.mxu0 0
        %6753 = vmatpush.bf16.msra.mxu0 0
        %6754 = vmatpush.bf16.msra.mxu0 0
        %6755 = vmatpush.bf16.msra.mxu0 %v6542
        %6756 = vmatpush.bf16.msra.mxu0 %v6538
        %6757 = vmatpush.bf16.msra.mxu0 %v6534
        %6758 = vmatpush.bf16.msra.mxu0 %v6530
        %6759 = vmatmul.bf16.gmra.mxu0 %v6658
        %v6760 = vpop.f32.mrf.mxu0
        %v6761 = vadd.f32 %v6748, %v6760
        %v6762 = vpop.f32.mrf.mxu0
        %6763 = vdwg.mxu0
        %6764 = vmatpush.bf16.msra.mxu0 %v6463
        %6765 = vmatpush.bf16.msra.mxu0 %v6459
        %6766 = vmatpush.bf16.msra.mxu0 %v6455
        %6767 = vmatpush.bf16.msra.mxu0 %v6451
        %6768 = vmatpush.bf16.msra.mxu0 %v6447
        %6769 = vmatpush.bf16.msra.mxu0 %v6443
        %6770 = vmatpush.bf16.msra.mxu0 %v6439
        %6771 = vmatpush.bf16.msra.mxu0 %v6435
        %6772 = vmatmul.bf16.gmra.mxu0 %v5980
        %v6773 = vpop.f32.mrf.mxu0
        %v6774 = vadd.f32 0.0, %v6773
        %v6775 = vpop.f32.mrf.mxu0
        %6776 = vdwg.mxu0
        %6777 = vmatpush.bf16.msra.mxu0 %v6495
        %6778 = vmatpush.bf16.msra.mxu0 %v6491
        %6779 = vmatpush.bf16.msra.mxu0 %v6487
        %6780 = vmatpush.bf16.msra.mxu0 %v6483
        %6781 = vmatpush.bf16.msra.mxu0 %v6479
        %6782 = vmatpush.bf16.msra.mxu0 %v6475
        %6783 = vmatpush.bf16.msra.mxu0 %v6471
        %6784 = vmatpush.bf16.msra.mxu0 %v6467
        %6785 = vmatmul.bf16.gmra.mxu0 %v5981
        %v6786 = vpop.f32.mrf.mxu0
        %v6787 = vadd.f32 %v6774, %v6786
        %v6788 = vpop.f32.mrf.mxu0
        %6789 = vdwg.mxu0
        %6790 = vmatpush.bf16.msra.mxu0 %v6527
        %6791 = vmatpush.bf16.msra.mxu0 %v6523
        %6792 = vmatpush.bf16.msra.mxu0 %v6519
        %6793 = vmatpush.bf16.msra.mxu0 %v6515
        %6794 = vmatpush.bf16.msra.mxu0 %v6511
        %6795 = vmatpush.bf16.msra.mxu0 %v6507
        %6796 = vmatpush.bf16.msra.mxu0 %v6503
        %6797 = vmatpush.bf16.msra.mxu0 %v6499
        %6798 = vmatmul.bf16.gmra.mxu0 %v5982
        %v6799 = vpop.f32.mrf.mxu0
        %v6800 = vadd.f32 %v6787, %v6799
        %v6801 = vpop.f32.mrf.mxu0
        %6802 = vdwg.mxu0
        %6803 = vmatpush.bf16.msra.mxu0 0
        %6804 = vmatpush.bf16.msra.mxu0 0
        %6805 = vmatpush.bf16.msra.mxu0 0
        %6806 = vmatpush.bf16.msra.mxu0 0
        %6807 = vmatpush.bf16.msra.mxu0 %v6543
        %6808 = vmatpush.bf16.msra.mxu0 %v6539
        %6809 = vmatpush.bf16.msra.mxu0 %v6535
        %6810 = vmatpush.bf16.msra.mxu0 %v6531
        %6811 = vmatmul.bf16.gmra.mxu0 %v6658
        %v6812 = vpop.f32.mrf.mxu0
        %v6813 = vadd.f32 %v6800, %v6812
        %v6814 = vpop.f32.mrf.mxu0
        %6815 = vdwg.mxu0
        %6816 = vmatpush.bf16.msra.mxu0 %v6464
        %6817 = vmatpush.bf16.msra.mxu0 %v6460
        %6818 = vmatpush.bf16.msra.mxu0 %v6456
        %6819 = vmatpush.bf16.msra.mxu0 %v6452
        %6820 = vmatpush.bf16.msra.mxu0 %v6448
        %6821 = vmatpush.bf16.msra.mxu0 %v6444
        %6822 = vmatpush.bf16.msra.mxu0 %v6440
        %6823 = vmatpush.bf16.msra.mxu0 %v6436
        %6824 = vmatmul.bf16.gmra.mxu0 %v5980
        %v6825 = vpop.f32.mrf.mxu0
        %v6826 = vadd.f32 0.0, %v6825
        %v6827 = vpop.f32.mrf.mxu0
        %6828 = vdwg.mxu0
        %6829 = vmatpush.bf16.msra.mxu0 %v6496
        %6830 = vmatpush.bf16.msra.mxu0 %v6492
        %6831 = vmatpush.bf16.msra.mxu0 %v6488
        %6832 = vmatpush.bf16.msra.mxu0 %v6484
        %6833 = vmatpush.bf16.msra.mxu0 %v6480
        %6834 = vmatpush.bf16.msra.mxu0 %v6476
        %6835 = vmatpush.bf16.msra.mxu0 %v6472
        %6836 = vmatpush.bf16.msra.mxu0 %v6468
        %6837 = vmatmul.bf16.gmra.mxu0 %v5981
        %v6838 = vpop.f32.mrf.mxu0
        %v6839 = vadd.f32 %v6826, %v6838
        %v6840 = vpop.f32.mrf.mxu0
        %6841 = vdwg.mxu0
        %6842 = vmatpush.bf16.msra.mxu0 %v6528
        %6843 = vmatpush.bf16.msra.mxu0 %v6524
        %6844 = vmatpush.bf16.msra.mxu0 %v6520
        %6845 = vmatpush.bf16.msra.mxu0 %v6516
        %6846 = vmatpush.bf16.msra.mxu0 %v6512
        %6847 = vmatpush.bf16.msra.mxu0 %v6508
        %6848 = vmatpush.bf16.msra.mxu0 %v6504
        %6849 = vmatpush.bf16.msra.mxu0 %v6500
        %6850 = vmatmul.bf16.gmra.mxu0 %v5982
        %v6851 = vpop.f32.mrf.mxu0
        %v6852 = vadd.f32 %v6839, %v6851
        %v6853 = vpop.f32.mrf.mxu0
        %6854 = vdwg.mxu0
        %6855 = vmatpush.bf16.msra.mxu0 0
        %6856 = vmatpush.bf16.msra.mxu0 0
        %6857 = vmatpush.bf16.msra.mxu0 0
        %6858 = vmatpush.bf16.msra.mxu0 0
        %6859 = vmatpush.bf16.msra.mxu0 %v6544
        %6860 = vmatpush.bf16.msra.mxu0 %v6540
        %6861 = vmatpush.bf16.msra.mxu0 %v6536
        %6862 = vmatpush.bf16.msra.mxu0 %v6532
        %6863 = vmatmul.bf16.gmra.mxu0 %v6658
        %v6864 = vpop.f32.mrf.mxu0
        %v6865 = vadd.f32 %v6852, %v6864
        %v6866 = vpop.f32.mrf.mxu0
        %6867 = vdwg.mxu0
        %v6868 = vadd.f32 %v5764, %v6709
        %v6869 = vadd.f32 %v5816, %v6761
        %v6870 = vadd.f32 %v5868, %v6813
        %v6871 = vadd.f32 %v5920, %v6865
        %v6872 = vld [vmem:[#allocation16] sm:$0xf]
        %v6874 = vperm.slane %v6872, 0
        %v6875 = vperm.slane %v6872, 1
        %v6876 = vperm.slane %v6872, 2
        %v6877 = vperm.slane %v6872, 3
        %v6882 = vadd.f32 %v6868, %v6874
        %v6883 = vadd.f32 %v6869, %v6875
        %v6884 = vadd.f32 %v6870, %v6876
        %v6885 = vadd.f32 %v6871, %v6877
        %v6886 = vmax.f32 %v6882, 0.0
        %v6887 = vmax.f32 %v6883, 0.0
        %v6888 = vmax.f32 %v6884, 0.0
        %v6889 = vmax.f32 %v6885, 0.0
        %v6890 = vpack.c.bf16 %v6887, %v6886
        %v6891 = vpack.c.bf16 %v6889, %v6888
        %v6892 = vld [vmem:[#allocation17] sm:$0xf]
        %v6893 = vld [vmem:[#allocation17 + $0x4] sm:$0xf]
        %v6894 = vld [vmem:[#allocation17 + $0x8] sm:$0xf]
        %v6895 = vld [vmem:[#allocation17 + $0xc] sm:$0xf]
        %v6896 = vld [vmem:[#allocation17 + $0x10] sm:$0xf]
        %v6897 = vld [vmem:[#allocation17 + $0x14] sm:$0xf]
        %v6898 = vld [vmem:[#allocation17 + $0x18] sm:$0xf]
        %v6899 = vld [vmem:[#allocation17 + $0x1c] sm:$0xf]
        %v6900 = vld [vmem:[#allocation17 + $0x20] sm:$0xf]
        %v6901 = vld [vmem:[#allocation17 + $0x24] sm:$0xf]
        %v6902 = vld [vmem:[#allocation17 + $0x28] sm:$0xf]
        %v6903 = vld [vmem:[#allocation17 + $0x2c] sm:$0xf]
        %v6904 = vld [vmem:[#allocation17 + $0x30] sm:$0xf]
        %v6905 = vld [vmem:[#allocation17 + $0x34] sm:$0xf]
        %v6906 = vld [vmem:[#allocation17 + $0x38] sm:$0xf]
        %v6907 = vld [vmem:[#allocation17 + $0x3c] sm:$0xf]
        %v6908 = vld [vmem:[#allocation17 + $0x40] sm:$0xf]
        %v6909 = vld [vmem:[#allocation17 + $0x44] sm:$0xf]
        %v6910 = vld [vmem:[#allocation17 + $0x48] sm:$0xf]
        %v6911 = vld [vmem:[#allocation17 + $0x4c] sm:$0xf]
        %v6912 = vld [vmem:[#allocation17 + $0x50] sm:$0xf]
        %v6913 = vld [vmem:[#allocation17 + $0x54] sm:$0xf]
        %v6914 = vld [vmem:[#allocation17 + $0x58] sm:$0xf]
        %v6915 = vld [vmem:[#allocation17 + $0x5c] sm:$0xf]
        %v6916 = vld [vmem:[#allocation17 + $0x60] sm:$0xf]
        %v6917 = vld [vmem:[#allocation17 + $0x64] sm:$0xf]
        %v6918 = vld [vmem:[#allocation17 + $0x68] sm:$0xf]
        %v6919 = vld [vmem:[#allocation17 + $0x6c] sm:$0xf]
        %v6920 = vld [vmem:[#allocation17 + $0x70] sm:$0xf]
        %v6921 = vld [vmem:[#allocation17 + $0x74] sm:$0xf]
        %v6922 = vld [vmem:[#allocation17 + $0x78] sm:$0xf]
        %v6923 = vld [vmem:[#allocation17 + $0x7c] sm:$0xf]
        %v6924 = vld [vmem:[#allocation17 + $0x80] sm:$0xf]
        %v6925 = vld [vmem:[#allocation17 + $0x84] sm:$0xf]
        %v6926 = vld [vmem:[#allocation17 + $0x88] sm:$0xf]
        %v6927 = vld [vmem:[#allocation17 + $0x8c] sm:$0xf]
        %v6928 = vld [vmem:[#allocation17 + $0x90] sm:$0xf]
        %v6929 = vld [vmem:[#allocation17 + $0x94] sm:$0xf]
        %v6930 = vld [vmem:[#allocation17 + $0x98] sm:$0xf]
        %v6931 = vld [vmem:[#allocation17 + $0x9c] sm:$0xf]
        %v6932 = vld [vmem:[#allocation17 + $0xa0] sm:$0xf]
        %v6933 = vld [vmem:[#allocation17 + $0xa4] sm:$0xf]
        %v6934 = vld [vmem:[#allocation17 + $0xa8] sm:$0xf]
        %v6935 = vld [vmem:[#allocation17 + $0xac] sm:$0xf]
        %v6936 = vld [vmem:[#allocation17 + $0xb0] sm:$0xf]
        %v6937 = vld [vmem:[#allocation17 + $0xb4] sm:$0xf]
        %v6938 = vld [vmem:[#allocation17 + $0xb8] sm:$0xf]
        %v6939 = vld [vmem:[#allocation17 + $0xbc] sm:$0xf]
        %v6940 = vld [vmem:[#allocation17 + $0xc0] sm:$0xf]
        %v6941 = vld [vmem:[#allocation17 + $0xc4] sm:$0xf]
        %v6942 = vld [vmem:[#allocation17 + $0xc8] sm:$0xf]
        %v6943 = vld [vmem:[#allocation17 + $0xcc] sm:$0xf]
        %v6944 = vld [vmem:[#allocation17 + $0xd0] sm:$0xf]
        %v6945 = vld [vmem:[#allocation17 + $0xd4] sm:$0xf]
        %v6946 = vld [vmem:[#allocation17 + $0xd8] sm:$0xf]
        %v6947 = vld [vmem:[#allocation17 + $0xdc] sm:$0xf]
        %v6948 = vld [vmem:[#allocation17 + $0xe0] sm:$0xf]
        %v6949 = vld [vmem:[#allocation17 + $0xe4] sm:$0xf]
        %v6950 = vld [vmem:[#allocation17 + $0xe8] sm:$0xf]
        %v6951 = vld [vmem:[#allocation17 + $0xec] sm:$0xf]
        %v6952 = vld [vmem:[#allocation17 + $0xf0] sm:$0xf]
        %v6953 = vld [vmem:[#allocation17 + $0xf4] sm:$0xf]
        %v6954 = vld [vmem:[#allocation17 + $0xf8] sm:$0xf]
        %v6955 = vld [vmem:[#allocation17 + $0xfc] sm:$0xf]
        %v6956 = vld [vmem:[#allocation17 + $0x100] sm:$0xf]
        %v6957 = vld [vmem:[#allocation17 + $0x104] sm:$0xf]
        %v6958 = vld [vmem:[#allocation17 + $0x108] sm:$0xf]
        %v6959 = vld [vmem:[#allocation17 + $0x10c] sm:$0xf]
        %v6960 = vld [vmem:[#allocation17 + $0x110] sm:$0xf]
        %v6961 = vld [vmem:[#allocation17 + $0x114] sm:$0xf]
        %v6962 = vld [vmem:[#allocation17 + $0x118] sm:$0xf]
        %v6963 = vld [vmem:[#allocation17 + $0x11c] sm:$0xf]
        %v6964 = vld [vmem:[#allocation17 + $0x120] sm:$0xf]
        %v6965 = vld [vmem:[#allocation17 + $0x124] sm:$0xf]
        %v6966 = vld [vmem:[#allocation17 + $0x128] sm:$0xf]
        %v6967 = vld [vmem:[#allocation17 + $0x12c] sm:$0xf]
        %v6968 = vld [vmem:[#allocation17 + $0x130] sm:$0xf]
        %v6969 = vld [vmem:[#allocation17 + $0x134] sm:$0xf]
        %v6970 = vld [vmem:[#allocation17 + $0x138] sm:$0xf]
        %v6971 = vld [vmem:[#allocation17 + $0x13c] sm:$0xf]
        %v6972 = vld [vmem:[#allocation17 + $0x140] sm:$0xf]
        %v6973 = vld [vmem:[#allocation17 + $0x144] sm:$0xf]
        %v6974 = vld [vmem:[#allocation17 + $0x148] sm:$0xf]
        %v6975 = vld [vmem:[#allocation17 + $0x14c] sm:$0xf]
        %v6976 = vld [vmem:[#allocation17 + $0x150] sm:$0xf]
        %v6977 = vld [vmem:[#allocation17 + $0x154] sm:$0xf]
        %v6978 = vld [vmem:[#allocation17 + $0x158] sm:$0xf]
        %v6979 = vld [vmem:[#allocation17 + $0x15c] sm:$0xf]
        %v6980 = vld [vmem:[#allocation17 + $0x160] sm:$0xf]
        %v6981 = vld [vmem:[#allocation17 + $0x164] sm:$0xf]
        %v6982 = vld [vmem:[#allocation17 + $0x168] sm:$0xf]
        %v6983 = vld [vmem:[#allocation17 + $0x16c] sm:$0xf]
        %v6984 = vld [vmem:[#allocation17 + $0x170] sm:$0xf]
        %v6985 = vld [vmem:[#allocation17 + $0x174] sm:$0xf]
        %v6986 = vld [vmem:[#allocation17 + $0x178] sm:$0xf]
        %v6987 = vld [vmem:[#allocation17 + $0x17c] sm:$0xf]
        %v6988 = vld [vmem:[#allocation17 + $0x180] sm:$0xf]
        %v6989 = vld [vmem:[#allocation17 + $0x184] sm:$0xf]
        %v6990 = vld [vmem:[#allocation17 + $0x188] sm:$0xf]
        %v6991 = vld [vmem:[#allocation17 + $0x18c] sm:$0xf]
        %v6992 = vld [vmem:[#allocation17 + $0x190] sm:$0xf]
        %v6993 = vld [vmem:[#allocation17 + $0x194] sm:$0xf]
        %v6994 = vld [vmem:[#allocation17 + $0x198] sm:$0xf]
        %v6995 = vld [vmem:[#allocation17 + $0x19c] sm:$0xf]
        %v6996 = vld [vmem:[#allocation17 + $0x1a0] sm:$0xf]
        %v6997 = vld [vmem:[#allocation17 + $0x1a4] sm:$0xf]
        %v6998 = vld [vmem:[#allocation17 + $0x1a8] sm:$0xf]
        %v6999 = vld [vmem:[#allocation17 + $0x1ac] sm:$0xf]
        %v7000 = vld [vmem:[#allocation17 + $0x1b0] sm:$0xf]
        %v7001 = vld [vmem:[#allocation17 + $0x1b4] sm:$0xf]
        %v7002 = vld [vmem:[#allocation17 + $0x1b8] sm:$0xf]
        %v7003 = vld [vmem:[#allocation17 + $0x1bc] sm:$0xf]
        %v7004 = vld [vmem:[#allocation17 + $0x1c0] sm:$0xf]
        %v7005 = vld [vmem:[#allocation17 + $0x1c4] sm:$0xf]
        %v7006 = vld [vmem:[#allocation17 + $0x1c8] sm:$0xf]
        %v7007 = vld [vmem:[#allocation17 + $0x1cc] sm:$0xf]
        %v7008 = vld [vmem:[#allocation17 + $0x1d0] sm:$0xf]
        %v7009 = vld [vmem:[#allocation17 + $0x1d4] sm:$0xf]
        %v7010 = vld [vmem:[#allocation17 + $0x1d8] sm:$0xf]
        %v7011 = vld [vmem:[#allocation17 + $0x1dc] sm:$0xf]
        %v7012 = vld [vmem:[#allocation17 + $0x1e0] sm:$0xf]
        %v7013 = vld [vmem:[#allocation17 + $0x1e4] sm:$0xf]
        %v7014 = vld [vmem:[#allocation17 + $0x1e8] sm:$0xf]
        %v7015 = vld [vmem:[#allocation17 + $0x1ec] sm:$0xf]
        %v7016 = vld [vmem:[#allocation17 + $0x1f0] sm:$0xf]
        %v7017 = vld [vmem:[#allocation17 + $0x1f4] sm:$0xf]
        %v7018 = vld [vmem:[#allocation17 + $0x1f8] sm:$0xf]
        %v7019 = vld [vmem:[#allocation17 + $0x1fc] sm:$0xf]
        %v7022 = vunpack.c.l.b16 %v6890
        %v7023 = vunpack.c.h.b16 %v6890
        %v7024 = vunpack.c.l.b16 %v6891
        %v7025 = vunpack.c.h.b16 %v6891
        %v7026 = vpack.c.b16 %v7022, %v7022
        %v7027 = vpack.c.b16 %v7023, %v7023
        %v7028 = vpack.c.b16 %v7024, %v7024
        %v7029 = vpack.c.b16 %v7025, %v7025
        %v7031 = vshrl.u32 %v7026, 16
        %v7034 = vshrl.u32 %v7027, 16
        %v7037 = vshrl.u32 %v7028, 16
        %v7040 = vshrl.u32 %v7029, 16
        %v7110 = vunpack.c.l.b16 %v6956
        %v7111 = vunpack.c.l.b16 %v6957
        %v7112 = vunpack.c.l.b16 %v6958
        %v7113 = vunpack.c.l.b16 %v6959
        %v7114 = vunpack.c.l.b16 %v6960
        %v7115 = vunpack.c.l.b16 %v6961
        %v7116 = vunpack.c.l.b16 %v6962
        %v7117 = vunpack.c.l.b16 %v6963
        %v7118 = vunpack.c.l.b16 %v6964
        %v7119 = vunpack.c.l.b16 %v6965
        %v7120 = vunpack.c.l.b16 %v6966
        %v7121 = vunpack.c.l.b16 %v6967
        %v7122 = vunpack.c.l.b16 %v6968
        %v7123 = vunpack.c.l.b16 %v6969
        %v7124 = vunpack.c.l.b16 %v6970
        %v7125 = vunpack.c.l.b16 %v6971
        %v7126 = vunpack.c.l.b16 %v6972
        %v7127 = vunpack.c.l.b16 %v6973
        %v7128 = vunpack.c.l.b16 %v6974
        %v7129 = vunpack.c.l.b16 %v6975
        %v7130 = vunpack.c.l.b16 %v6976
        %v7131 = vunpack.c.l.b16 %v6977
        %v7132 = vunpack.c.l.b16 %v6978
        %v7133 = vunpack.c.l.b16 %v6979
        %v7134 = vunpack.c.l.b16 %v6980
        %v7135 = vunpack.c.l.b16 %v6981
        %v7136 = vunpack.c.l.b16 %v6982
        %v7137 = vunpack.c.l.b16 %v6983
        %v7138 = vunpack.c.l.b16 %v6984
        %v7139 = vunpack.c.l.b16 %v6985
        %v7140 = vunpack.c.l.b16 %v6986
        %v7141 = vunpack.c.l.b16 %v6987
        %v7142 = vunpack.c.l.b16 %v6988
        %v7143 = vunpack.c.l.b16 %v6989
        %v7144 = vunpack.c.l.b16 %v6990
        %v7145 = vunpack.c.l.b16 %v6991
        %v7146 = vunpack.c.l.b16 %v6992
        %v7147 = vunpack.c.l.b16 %v6993
        %v7148 = vunpack.c.l.b16 %v6994
        %v7149 = vunpack.c.l.b16 %v6995
        %v7150 = vunpack.c.l.b16 %v6996
        %v7151 = vunpack.c.l.b16 %v6997
        %v7152 = vunpack.c.l.b16 %v6998
        %v7153 = vunpack.c.l.b16 %v6999
        %v7154 = vunpack.c.l.b16 %v7000
        %v7155 = vunpack.c.l.b16 %v7001
        %v7156 = vunpack.c.l.b16 %v7002
        %v7157 = vunpack.c.l.b16 %v7003
        %v7158 = vunpack.c.l.b16 %v7004
        %v7159 = vunpack.c.l.b16 %v7005
        %v7160 = vunpack.c.l.b16 %v7006
        %v7161 = vunpack.c.l.b16 %v7007
        %v7162 = vunpack.c.l.b16 %v7008
        %v7163 = vunpack.c.l.b16 %v7009
        %v7164 = vunpack.c.l.b16 %v7010
        %v7165 = vunpack.c.l.b16 %v7011
        %v7166 = vunpack.c.l.b16 %v7012
        %v7167 = vunpack.c.l.b16 %v7013
        %v7168 = vunpack.c.l.b16 %v7014
        %v7169 = vunpack.c.l.b16 %v7015
        %v7170 = vunpack.c.l.b16 %v7016
        %v7171 = vunpack.c.l.b16 %v7017
        %v7172 = vunpack.c.l.b16 %v7018
        %v7173 = vunpack.c.l.b16 %v7019
        %v7174 = vpack.c.b16 %v7111, %v7110
        %v7175 = vpack.c.b16 %v7113, %v7112
        %v7176 = vpack.c.b16 %v7115, %v7114
        %v7177 = vpack.c.b16 %v7117, %v7116
        %v7178 = vpack.c.b16 %v7119, %v7118
        %v7179 = vpack.c.b16 %v7121, %v7120
        %v7180 = vpack.c.b16 %v7123, %v7122
        %v7181 = vpack.c.b16 %v7125, %v7124
        %v7182 = vpack.c.b16 %v7127, %v7126
        %v7183 = vpack.c.b16 %v7129, %v7128
        %v7184 = vpack.c.b16 %v7131, %v7130
        %v7185 = vpack.c.b16 %v7133, %v7132
        %v7186 = vpack.c.b16 %v7135, %v7134
        %v7187 = vpack.c.b16 %v7137, %v7136
        %v7188 = vpack.c.b16 %v7139, %v7138
        %v7189 = vpack.c.b16 %v7141, %v7140
        %v7190 = vpack.c.b16 %v7143, %v7142
        %v7191 = vpack.c.b16 %v7145, %v7144
        %v7192 = vpack.c.b16 %v7147, %v7146
        %v7193 = vpack.c.b16 %v7149, %v7148
        %v7194 = vpack.c.b16 %v7151, %v7150
        %v7195 = vpack.c.b16 %v7153, %v7152
        %v7196 = vpack.c.b16 %v7155, %v7154
        %v7197 = vpack.c.b16 %v7157, %v7156
        %v7198 = vpack.c.b16 %v7159, %v7158
        %v7199 = vpack.c.b16 %v7161, %v7160
        %v7200 = vpack.c.b16 %v7163, %v7162
        %v7201 = vpack.c.b16 %v7165, %v7164
        %v7202 = vpack.c.b16 %v7167, %v7166
        %v7203 = vpack.c.b16 %v7169, %v7168
        %v7204 = vpack.c.b16 %v7171, %v7170
        %v7205 = vpack.c.b16 %v7173, %v7172
        %7238 = vmatpush.bf16.msra.mxu0 %v7181
        %7239 = vmatpush.bf16.msra.mxu0 %v7180
        %7240 = vmatpush.bf16.msra.mxu0 %v7179
        %7241 = vmatpush.bf16.msra.mxu0 %v7178
        %7242 = vmatpush.bf16.msra.mxu0 %v7177
        %7243 = vmatpush.bf16.msra.mxu0 %v7176
        %7244 = vmatpush.bf16.msra.mxu0 %v7175
        %7245 = vmatpush.bf16.msra.mxu0 %v7174
        %7246 = vmatmul.bf16.gmra.mxu0 %v7031
        %v7247 = vpop.f32.mrf.mxu0
        %v7248 = vadd.f32 0.0, %v7247
        %v7249 = vpop.f32.mrf.mxu0
        %7250 = vdwg.mxu0
        %7251 = vmatpush.bf16.msra.mxu0 %v7189
        %7252 = vmatpush.bf16.msra.mxu0 %v7188
        %7253 = vmatpush.bf16.msra.mxu0 %v7187
        %7254 = vmatpush.bf16.msra.mxu0 %v7186
        %7255 = vmatpush.bf16.msra.mxu0 %v7185
        %7256 = vmatpush.bf16.msra.mxu0 %v7184
        %7257 = vmatpush.bf16.msra.mxu0 %v7183
        %7258 = vmatpush.bf16.msra.mxu0 %v7182
        %7259 = vmatmul.bf16.gmra.mxu0 %v7034
        %v7260 = vpop.f32.mrf.mxu0
        %v7261 = vadd.f32 %v7248, %v7260
        %v7262 = vpop.f32.mrf.mxu0
        %7263 = vdwg.mxu0
        %7264 = vmatpush.bf16.msra.mxu0 %v7197
        %7265 = vmatpush.bf16.msra.mxu0 %v7196
        %7266 = vmatpush.bf16.msra.mxu0 %v7195
        %7267 = vmatpush.bf16.msra.mxu0 %v7194
        %7268 = vmatpush.bf16.msra.mxu0 %v7193
        %7269 = vmatpush.bf16.msra.mxu0 %v7192
        %7270 = vmatpush.bf16.msra.mxu0 %v7191
        %7271 = vmatpush.bf16.msra.mxu0 %v7190
        %7272 = vmatmul.bf16.gmra.mxu0 %v7037
        %v7273 = vpop.f32.mrf.mxu0
        %v7274 = vadd.f32 %v7261, %v7273
        %v7275 = vpop.f32.mrf.mxu0
        %7276 = vdwg.mxu0
        %7277 = vmatpush.bf16.msra.mxu0 %v7205
        %7278 = vmatpush.bf16.msra.mxu0 %v7204
        %7279 = vmatpush.bf16.msra.mxu0 %v7203
        %7280 = vmatpush.bf16.msra.mxu0 %v7202
        %7281 = vmatpush.bf16.msra.mxu0 %v7201
        %7282 = vmatpush.bf16.msra.mxu0 %v7200
        %7283 = vmatpush.bf16.msra.mxu0 %v7199
        %7284 = vmatpush.bf16.msra.mxu0 %v7198
        %7285 = vmatmul.bf16.gmra.mxu0 %v7040
        %v7286 = vpop.f32.mrf.mxu0
        %v7287 = vadd.f32 %v7274, %v7286
        %v7288 = vpop.f32.mrf.mxu0
        %7289 = vdwg.mxu0
        %v7358 = vunpack.c.l.b16 %v6892
        %v7359 = vunpack.c.l.b16 %v6893
        %v7360 = vunpack.c.l.b16 %v6894
        %v7361 = vunpack.c.l.b16 %v6895
        %v7362 = vunpack.c.l.b16 %v6896
        %v7363 = vunpack.c.l.b16 %v6897
        %v7364 = vunpack.c.l.b16 %v6898
        %v7365 = vunpack.c.l.b16 %v6899
        %v7366 = vunpack.c.l.b16 %v6900
        %v7367 = vunpack.c.l.b16 %v6901
        %v7368 = vunpack.c.l.b16 %v6902
        %v7369 = vunpack.c.l.b16 %v6903
        %v7370 = vunpack.c.l.b16 %v6904
        %v7371 = vunpack.c.l.b16 %v6905
        %v7372 = vunpack.c.l.b16 %v6906
        %v7373 = vunpack.c.l.b16 %v6907
        %v7374 = vunpack.c.l.b16 %v6908
        %v7375 = vunpack.c.l.b16 %v6909
        %v7376 = vunpack.c.l.b16 %v6910
        %v7377 = vunpack.c.l.b16 %v6911
        %v7378 = vunpack.c.l.b16 %v6912
        %v7379 = vunpack.c.l.b16 %v6913
        %v7380 = vunpack.c.l.b16 %v6914
        %v7381 = vunpack.c.l.b16 %v6915
        %v7382 = vunpack.c.l.b16 %v6916
        %v7383 = vunpack.c.l.b16 %v6917
        %v7384 = vunpack.c.l.b16 %v6918
        %v7385 = vunpack.c.l.b16 %v6919
        %v7386 = vunpack.c.l.b16 %v6920
        %v7387 = vunpack.c.l.b16 %v6921
        %v7388 = vunpack.c.l.b16 %v6922
        %v7389 = vunpack.c.l.b16 %v6923
        %v7390 = vunpack.c.l.b16 %v6924
        %v7391 = vunpack.c.l.b16 %v6925
        %v7392 = vunpack.c.l.b16 %v6926
        %v7393 = vunpack.c.l.b16 %v6927
        %v7394 = vunpack.c.l.b16 %v6928
        %v7395 = vunpack.c.l.b16 %v6929
        %v7396 = vunpack.c.l.b16 %v6930
        %v7397 = vunpack.c.l.b16 %v6931
        %v7398 = vunpack.c.l.b16 %v6932
        %v7399 = vunpack.c.l.b16 %v6933
        %v7400 = vunpack.c.l.b16 %v6934
        %v7401 = vunpack.c.l.b16 %v6935
        %v7402 = vunpack.c.l.b16 %v6936
        %v7403 = vunpack.c.l.b16 %v6937
        %v7404 = vunpack.c.l.b16 %v6938
        %v7405 = vunpack.c.l.b16 %v6939
        %v7406 = vunpack.c.l.b16 %v6940
        %v7407 = vunpack.c.l.b16 %v6941
        %v7408 = vunpack.c.l.b16 %v6942
        %v7409 = vunpack.c.l.b16 %v6943
        %v7410 = vunpack.c.l.b16 %v6944
        %v7411 = vunpack.c.l.b16 %v6945
        %v7412 = vunpack.c.l.b16 %v6946
        %v7413 = vunpack.c.l.b16 %v6947
        %v7414 = vunpack.c.l.b16 %v6948
        %v7415 = vunpack.c.l.b16 %v6949
        %v7416 = vunpack.c.l.b16 %v6950
        %v7417 = vunpack.c.l.b16 %v6951
        %v7418 = vunpack.c.l.b16 %v6952
        %v7419 = vunpack.c.l.b16 %v6953
        %v7420 = vunpack.c.l.b16 %v6954
        %v7421 = vunpack.c.l.b16 %v6955
        %v7422 = vpack.c.b16 %v7359, %v7358
        %v7423 = vpack.c.b16 %v7361, %v7360
        %v7424 = vpack.c.b16 %v7363, %v7362
        %v7425 = vpack.c.b16 %v7365, %v7364
        %v7426 = vpack.c.b16 %v7367, %v7366
        %v7427 = vpack.c.b16 %v7369, %v7368
        %v7428 = vpack.c.b16 %v7371, %v7370
        %v7429 = vpack.c.b16 %v7373, %v7372
        %v7430 = vpack.c.b16 %v7375, %v7374
        %v7431 = vpack.c.b16 %v7377, %v7376
        %v7432 = vpack.c.b16 %v7379, %v7378
        %v7433 = vpack.c.b16 %v7381, %v7380
        %v7434 = vpack.c.b16 %v7383, %v7382
        %v7435 = vpack.c.b16 %v7385, %v7384
        %v7436 = vpack.c.b16 %v7387, %v7386
        %v7437 = vpack.c.b16 %v7389, %v7388
        %v7438 = vpack.c.b16 %v7391, %v7390
        %v7439 = vpack.c.b16 %v7393, %v7392
        %v7440 = vpack.c.b16 %v7395, %v7394
        %v7441 = vpack.c.b16 %v7397, %v7396
        %v7442 = vpack.c.b16 %v7399, %v7398
        %v7443 = vpack.c.b16 %v7401, %v7400
        %v7444 = vpack.c.b16 %v7403, %v7402
        %v7445 = vpack.c.b16 %v7405, %v7404
        %v7446 = vpack.c.b16 %v7407, %v7406
        %v7447 = vpack.c.b16 %v7409, %v7408
        %v7448 = vpack.c.b16 %v7411, %v7410
        %v7449 = vpack.c.b16 %v7413, %v7412
        %v7450 = vpack.c.b16 %v7415, %v7414
        %v7451 = vpack.c.b16 %v7417, %v7416
        %v7452 = vpack.c.b16 %v7419, %v7418
        %v7453 = vpack.c.b16 %v7421, %v7420
        %7486 = vmatpush.bf16.msra.mxu0 %v7429
        %7487 = vmatpush.bf16.msra.mxu0 %v7428
        %7488 = vmatpush.bf16.msra.mxu0 %v7427
        %7489 = vmatpush.bf16.msra.mxu0 %v7426
        %7490 = vmatpush.bf16.msra.mxu0 %v7425
        %7491 = vmatpush.bf16.msra.mxu0 %v7424
        %7492 = vmatpush.bf16.msra.mxu0 %v7423
        %7493 = vmatpush.bf16.msra.mxu0 %v7422
        %7494 = vmatmul.bf16.gmra.mxu0 %v7026
        %v7495 = vpop.f32.mrf.mxu0
        %v7496 = vadd.f32 %v7287, %v7495
        %v7497 = vpop.f32.mrf.mxu0
        %7498 = vdwg.mxu0
        %7499 = vmatpush.bf16.msra.mxu0 %v7437
        %7500 = vmatpush.bf16.msra.mxu0 %v7436
        %7501 = vmatpush.bf16.msra.mxu0 %v7435
        %7502 = vmatpush.bf16.msra.mxu0 %v7434
        %7503 = vmatpush.bf16.msra.mxu0 %v7433
        %7504 = vmatpush.bf16.msra.mxu0 %v7432
        %7505 = vmatpush.bf16.msra.mxu0 %v7431
        %7506 = vmatpush.bf16.msra.mxu0 %v7430
        %7507 = vmatmul.bf16.gmra.mxu0 %v7027
        %v7508 = vpop.f32.mrf.mxu0
        %v7509 = vadd.f32 %v7496, %v7508
        %v7510 = vpop.f32.mrf.mxu0
        %7511 = vdwg.mxu0
        %7512 = vmatpush.bf16.msra.mxu0 %v7445
        %7513 = vmatpush.bf16.msra.mxu0 %v7444
        %7514 = vmatpush.bf16.msra.mxu0 %v7443
        %7515 = vmatpush.bf16.msra.mxu0 %v7442
        %7516 = vmatpush.bf16.msra.mxu0 %v7441
        %7517 = vmatpush.bf16.msra.mxu0 %v7440
        %7518 = vmatpush.bf16.msra.mxu0 %v7439
        %7519 = vmatpush.bf16.msra.mxu0 %v7438
        %7520 = vmatmul.bf16.gmra.mxu0 %v7028
        %v7521 = vpop.f32.mrf.mxu0
        %v7522 = vadd.f32 %v7509, %v7521
        %v7523 = vpop.f32.mrf.mxu0
        %7524 = vdwg.mxu0
        %7525 = vmatpush.bf16.msra.mxu0 %v7453
        %7526 = vmatpush.bf16.msra.mxu0 %v7452
        %7527 = vmatpush.bf16.msra.mxu0 %v7451
        %7528 = vmatpush.bf16.msra.mxu0 %v7450
        %7529 = vmatpush.bf16.msra.mxu0 %v7449
        %7530 = vmatpush.bf16.msra.mxu0 %v7448
        %7531 = vmatpush.bf16.msra.mxu0 %v7447
        %7532 = vmatpush.bf16.msra.mxu0 %v7446
        %7533 = vmatmul.bf16.gmra.mxu0 %v7029
        %v7534 = vpop.f32.mrf.mxu0
        %v7535 = vadd.f32 %v7522, %v7534
        %v7536 = vpop.f32.mrf.mxu0
        %7537 = vdwg.mxu0
        %v7538 = vld [vmem:[#allocation17 + $0x200] sm:$0xf]
        %v7539 = vld [vmem:[#allocation17 + $0x204] sm:$0xf]
        %v7540 = vld [vmem:[#allocation17 + $0x208] sm:$0xf]
        %v7541 = vld [vmem:[#allocation17 + $0x20c] sm:$0xf]
        %v7542 = vld [vmem:[#allocation17 + $0x210] sm:$0xf]
        %v7543 = vld [vmem:[#allocation17 + $0x214] sm:$0xf]
        %v7544 = vld [vmem:[#allocation17 + $0x218] sm:$0xf]
        %v7545 = vld [vmem:[#allocation17 + $0x21c] sm:$0xf]
        %v7546 = vld [vmem:[#allocation17 + $0x220] sm:$0xf]
        %v7547 = vld [vmem:[#allocation17 + $0x224] sm:$0xf]
        %v7548 = vld [vmem:[#allocation17 + $0x228] sm:$0xf]
        %v7549 = vld [vmem:[#allocation17 + $0x22c] sm:$0xf]
        %v7550 = vld [vmem:[#allocation17 + $0x230] sm:$0xf]
        %v7551 = vld [vmem:[#allocation17 + $0x234] sm:$0xf]
        %v7552 = vld [vmem:[#allocation17 + $0x238] sm:$0xf]
        %v7553 = vld [vmem:[#allocation17 + $0x23c] sm:$0xf]
        %v7554 = vld [vmem:[#allocation17 + $0x240] sm:$0xf]
        %v7555 = vld [vmem:[#allocation17 + $0x244] sm:$0xf]
        %v7556 = vld [vmem:[#allocation17 + $0x248] sm:$0xf]
        %v7557 = vld [vmem:[#allocation17 + $0x24c] sm:$0xf]
        %v7558 = vld [vmem:[#allocation17 + $0x250] sm:$0xf]
        %v7559 = vld [vmem:[#allocation17 + $0x254] sm:$0xf]
        %v7560 = vld [vmem:[#allocation17 + $0x258] sm:$0xf]
        %v7561 = vld [vmem:[#allocation17 + $0x25c] sm:$0xf]
        %v7562 = vld [vmem:[#allocation17 + $0x260] sm:$0xf]
        %v7563 = vld [vmem:[#allocation17 + $0x264] sm:$0xf]
        %v7564 = vld [vmem:[#allocation17 + $0x268] sm:$0xf]
        %v7565 = vld [vmem:[#allocation17 + $0x26c] sm:$0xf]
        %v7566 = vld [vmem:[#allocation17 + $0x270] sm:$0xf]
        %v7567 = vld [vmem:[#allocation17 + $0x274] sm:$0xf]
        %v7568 = vld [vmem:[#allocation17 + $0x278] sm:$0xf]
        %v7569 = vld [vmem:[#allocation17 + $0x27c] sm:$0xf]
        %v7570 = vld [vmem:[#allocation17 + $0x280] sm:$0xf]
        %v7571 = vld [vmem:[#allocation17 + $0x284] sm:$0xf]
        %v7572 = vld [vmem:[#allocation17 + $0x288] sm:$0xf]
        %v7573 = vld [vmem:[#allocation17 + $0x28c] sm:$0xf]
        %v7574 = vld [vmem:[#allocation17 + $0x290] sm:$0xf]
        %v7575 = vld [vmem:[#allocation17 + $0x294] sm:$0xf]
        %v7576 = vld [vmem:[#allocation17 + $0x298] sm:$0xf]
        %v7577 = vld [vmem:[#allocation17 + $0x29c] sm:$0xf]
        %v7578 = vld [vmem:[#allocation17 + $0x2a0] sm:$0xf]
        %v7579 = vld [vmem:[#allocation17 + $0x2a4] sm:$0xf]
        %v7580 = vld [vmem:[#allocation17 + $0x2a8] sm:$0xf]
        %v7581 = vld [vmem:[#allocation17 + $0x2ac] sm:$0xf]
        %v7582 = vld [vmem:[#allocation17 + $0x2b0] sm:$0xf]
        %v7583 = vld [vmem:[#allocation17 + $0x2b4] sm:$0xf]
        %v7584 = vld [vmem:[#allocation17 + $0x2b8] sm:$0xf]
        %v7585 = vld [vmem:[#allocation17 + $0x2bc] sm:$0xf]
        %v7586 = vld [vmem:[#allocation17 + $0x2c0] sm:$0xf]
        %v7587 = vld [vmem:[#allocation17 + $0x2c4] sm:$0xf]
        %v7588 = vld [vmem:[#allocation17 + $0x2c8] sm:$0xf]
        %v7589 = vld [vmem:[#allocation17 + $0x2cc] sm:$0xf]
        %v7590 = vld [vmem:[#allocation17 + $0x2d0] sm:$0xf]
        %v7591 = vld [vmem:[#allocation17 + $0x2d4] sm:$0xf]
        %v7592 = vld [vmem:[#allocation17 + $0x2d8] sm:$0xf]
        %v7593 = vld [vmem:[#allocation17 + $0x2dc] sm:$0xf]
        %v7594 = vld [vmem:[#allocation17 + $0x2e0] sm:$0xf]
        %v7595 = vld [vmem:[#allocation17 + $0x2e4] sm:$0xf]
        %v7596 = vld [vmem:[#allocation17 + $0x2e8] sm:$0xf]
        %v7597 = vld [vmem:[#allocation17 + $0x2ec] sm:$0xf]
        %v7598 = vld [vmem:[#allocation17 + $0x2f0] sm:$0xf]
        %v7599 = vld [vmem:[#allocation17 + $0x2f4] sm:$0xf]
        %v7600 = vld [vmem:[#allocation17 + $0x2f8] sm:$0xf]
        %v7601 = vld [vmem:[#allocation17 + $0x2fc] sm:$0xf]
        %v7602 = vrot.slane %v7026, 1
        %v7603 = vrot.slane %v7027, 1
        %v7604 = vrot.slane %v7028, 1
        %v7605 = vrot.slane %v7029, 1
        %v7674 = vunpack.c.l.b16 %v7538
        %v7675 = vunpack.c.l.b16 %v7539
        %v7676 = vunpack.c.l.b16 %v7540
        %v7677 = vunpack.c.l.b16 %v7541
        %v7678 = vunpack.c.l.b16 %v7542
        %v7679 = vunpack.c.l.b16 %v7543
        %v7680 = vunpack.c.l.b16 %v7544
        %v7681 = vunpack.c.l.b16 %v7545
        %v7682 = vunpack.c.l.b16 %v7546
        %v7683 = vunpack.c.l.b16 %v7547
        %v7684 = vunpack.c.l.b16 %v7548
        %v7685 = vunpack.c.l.b16 %v7549
        %v7686 = vunpack.c.l.b16 %v7550
        %v7687 = vunpack.c.l.b16 %v7551
        %v7688 = vunpack.c.l.b16 %v7552
        %v7689 = vunpack.c.l.b16 %v7553
        %v7690 = vunpack.c.l.b16 %v7554
        %v7691 = vunpack.c.l.b16 %v7555
        %v7692 = vunpack.c.l.b16 %v7556
        %v7693 = vunpack.c.l.b16 %v7557
        %v7694 = vunpack.c.l.b16 %v7558
        %v7695 = vunpack.c.l.b16 %v7559
        %v7696 = vunpack.c.l.b16 %v7560
        %v7697 = vunpack.c.l.b16 %v7561
        %v7698 = vunpack.c.l.b16 %v7562
        %v7699 = vunpack.c.l.b16 %v7563
        %v7700 = vunpack.c.l.b16 %v7564
        %v7701 = vunpack.c.l.b16 %v7565
        %v7702 = vunpack.c.l.b16 %v7566
        %v7703 = vunpack.c.l.b16 %v7567
        %v7704 = vunpack.c.l.b16 %v7568
        %v7705 = vunpack.c.l.b16 %v7569
        %v7706 = vunpack.c.l.b16 %v7570
        %v7707 = vunpack.c.l.b16 %v7571
        %v7708 = vunpack.c.l.b16 %v7572
        %v7709 = vunpack.c.l.b16 %v7573
        %v7710 = vunpack.c.l.b16 %v7574
        %v7711 = vunpack.c.l.b16 %v7575
        %v7712 = vunpack.c.l.b16 %v7576
        %v7713 = vunpack.c.l.b16 %v7577
        %v7714 = vunpack.c.l.b16 %v7578
        %v7715 = vunpack.c.l.b16 %v7579
        %v7716 = vunpack.c.l.b16 %v7580
        %v7717 = vunpack.c.l.b16 %v7581
        %v7718 = vunpack.c.l.b16 %v7582
        %v7719 = vunpack.c.l.b16 %v7583
        %v7720 = vunpack.c.l.b16 %v7584
        %v7721 = vunpack.c.l.b16 %v7585
        %v7722 = vunpack.c.l.b16 %v7586
        %v7723 = vunpack.c.l.b16 %v7587
        %v7724 = vunpack.c.l.b16 %v7588
        %v7725 = vunpack.c.l.b16 %v7589
        %v7726 = vunpack.c.l.b16 %v7590
        %v7727 = vunpack.c.l.b16 %v7591
        %v7728 = vunpack.c.l.b16 %v7592
        %v7729 = vunpack.c.l.b16 %v7593
        %v7730 = vunpack.c.l.b16 %v7594
        %v7731 = vunpack.c.l.b16 %v7595
        %v7732 = vunpack.c.l.b16 %v7596
        %v7733 = vunpack.c.l.b16 %v7597
        %v7734 = vunpack.c.l.b16 %v7598
        %v7735 = vunpack.c.l.b16 %v7599
        %v7736 = vunpack.c.l.b16 %v7600
        %v7737 = vunpack.c.l.b16 %v7601
        %v7738 = vpack.c.b16 %v7675, %v7674
        %v7739 = vpack.c.b16 %v7677, %v7676
        %v7740 = vpack.c.b16 %v7679, %v7678
        %v7741 = vpack.c.b16 %v7681, %v7680
        %v7742 = vpack.c.b16 %v7683, %v7682
        %v7743 = vpack.c.b16 %v7685, %v7684
        %v7744 = vpack.c.b16 %v7687, %v7686
        %v7745 = vpack.c.b16 %v7689, %v7688
        %v7746 = vpack.c.b16 %v7691, %v7690
        %v7747 = vpack.c.b16 %v7693, %v7692
        %v7748 = vpack.c.b16 %v7695, %v7694
        %v7749 = vpack.c.b16 %v7697, %v7696
        %v7750 = vpack.c.b16 %v7699, %v7698
        %v7751 = vpack.c.b16 %v7701, %v7700
        %v7752 = vpack.c.b16 %v7703, %v7702
        %v7753 = vpack.c.b16 %v7705, %v7704
        %v7754 = vpack.c.b16 %v7707, %v7706
        %v7755 = vpack.c.b16 %v7709, %v7708
        %v7756 = vpack.c.b16 %v7711, %v7710
        %v7757 = vpack.c.b16 %v7713, %v7712
        %v7758 = vpack.c.b16 %v7715, %v7714
        %v7759 = vpack.c.b16 %v7717, %v7716
        %v7760 = vpack.c.b16 %v7719, %v7718
        %v7761 = vpack.c.b16 %v7721, %v7720
        %v7762 = vpack.c.b16 %v7723, %v7722
        %v7763 = vpack.c.b16 %v7725, %v7724
        %v7764 = vpack.c.b16 %v7727, %v7726
        %v7765 = vpack.c.b16 %v7729, %v7728
        %v7766 = vpack.c.b16 %v7731, %v7730
        %v7767 = vpack.c.b16 %v7733, %v7732
        %v7768 = vpack.c.b16 %v7735, %v7734
        %v7769 = vpack.c.b16 %v7737, %v7736
        %7802 = vmatpush.bf16.msra.mxu0 %v7745
        %7803 = vmatpush.bf16.msra.mxu0 %v7744
        %7804 = vmatpush.bf16.msra.mxu0 %v7743
        %7805 = vmatpush.bf16.msra.mxu0 %v7742
        %7806 = vmatpush.bf16.msra.mxu0 %v7741
        %7807 = vmatpush.bf16.msra.mxu0 %v7740
        %7808 = vmatpush.bf16.msra.mxu0 %v7739
        %7809 = vmatpush.bf16.msra.mxu0 %v7738
        %7810 = vmatmul.bf16.gmra.mxu0 %v7602
        %v7811 = vpop.f32.mrf.mxu0
        %v7812 = vadd.f32 0.0, %v7811
        %v7813 = vpop.f32.mrf.mxu0
        %7814 = vdwg.mxu0
        %7815 = vmatpush.bf16.msra.mxu0 %v7753
        %7816 = vmatpush.bf16.msra.mxu0 %v7752
        %7817 = vmatpush.bf16.msra.mxu0 %v7751
        %7818 = vmatpush.bf16.msra.mxu0 %v7750
        %7819 = vmatpush.bf16.msra.mxu0 %v7749
        %7820 = vmatpush.bf16.msra.mxu0 %v7748
        %7821 = vmatpush.bf16.msra.mxu0 %v7747
        %7822 = vmatpush.bf16.msra.mxu0 %v7746
        %7823 = vmatmul.bf16.gmra.mxu0 %v7603
        %v7824 = vpop.f32.mrf.mxu0
        %v7825 = vadd.f32 %v7812, %v7824
        %v7826 = vpop.f32.mrf.mxu0
        %7827 = vdwg.mxu0
        %7828 = vmatpush.bf16.msra.mxu0 %v7761
        %7829 = vmatpush.bf16.msra.mxu0 %v7760
        %7830 = vmatpush.bf16.msra.mxu0 %v7759
        %7831 = vmatpush.bf16.msra.mxu0 %v7758
        %7832 = vmatpush.bf16.msra.mxu0 %v7757
        %7833 = vmatpush.bf16.msra.mxu0 %v7756
        %7834 = vmatpush.bf16.msra.mxu0 %v7755
        %7835 = vmatpush.bf16.msra.mxu0 %v7754
        %7836 = vmatmul.bf16.gmra.mxu0 %v7604
        %v7837 = vpop.f32.mrf.mxu0
        %v7838 = vadd.f32 %v7825, %v7837
        %v7839 = vpop.f32.mrf.mxu0
        %7840 = vdwg.mxu0
        %7841 = vmatpush.bf16.msra.mxu0 %v7769
        %7842 = vmatpush.bf16.msra.mxu0 %v7768
        %7843 = vmatpush.bf16.msra.mxu0 %v7767
        %7844 = vmatpush.bf16.msra.mxu0 %v7766
        %7845 = vmatpush.bf16.msra.mxu0 %v7765
        %7846 = vmatpush.bf16.msra.mxu0 %v7764
        %7847 = vmatpush.bf16.msra.mxu0 %v7763
        %7848 = vmatpush.bf16.msra.mxu0 %v7762
        %7849 = vmatmul.bf16.gmra.mxu0 %v7605
        %v7850 = vpop.f32.mrf.mxu0
        %v7851 = vadd.f32 %v7838, %v7850
        %v7852 = vpop.f32.mrf.mxu0
        %7853 = vdwg.mxu0
        %v7854 = vadd.f32 %v7535, %v7851
        %v7855 = vld [vmem:[#allocation17 + $0x300] sm:$0xf]
        %v7856 = vld [vmem:[#allocation17 + $0x304] sm:$0xf]
        %v7857 = vld [vmem:[#allocation17 + $0x308] sm:$0xf]
        %v7858 = vld [vmem:[#allocation17 + $0x30c] sm:$0xf]
        %v7859 = vld [vmem:[#allocation17 + $0x310] sm:$0xf]
        %v7860 = vld [vmem:[#allocation17 + $0x314] sm:$0xf]
        %v7861 = vld [vmem:[#allocation17 + $0x318] sm:$0xf]
        %v7862 = vld [vmem:[#allocation17 + $0x31c] sm:$0xf]
        %v7863 = vld [vmem:[#allocation17 + $0x320] sm:$0xf]
        %v7864 = vld [vmem:[#allocation17 + $0x324] sm:$0xf]
        %v7865 = vld [vmem:[#allocation17 + $0x328] sm:$0xf]
        %v7866 = vld [vmem:[#allocation17 + $0x32c] sm:$0xf]
        %v7867 = vld [vmem:[#allocation17 + $0x330] sm:$0xf]
        %v7868 = vld [vmem:[#allocation17 + $0x334] sm:$0xf]
        %v7869 = vld [vmem:[#allocation17 + $0x338] sm:$0xf]
        %v7870 = vld [vmem:[#allocation17 + $0x33c] sm:$0xf]
        %v7871 = vld [vmem:[#allocation17 + $0x340] sm:$0xf]
        %v7872 = vld [vmem:[#allocation17 + $0x344] sm:$0xf]
        %v7873 = vld [vmem:[#allocation17 + $0x348] sm:$0xf]
        %v7874 = vld [vmem:[#allocation17 + $0x34c] sm:$0xf]
        %v7875 = vld [vmem:[#allocation17 + $0x350] sm:$0xf]
        %v7876 = vld [vmem:[#allocation17 + $0x354] sm:$0xf]
        %v7877 = vld [vmem:[#allocation17 + $0x358] sm:$0xf]
        %v7878 = vld [vmem:[#allocation17 + $0x35c] sm:$0xf]
        %v7879 = vld [vmem:[#allocation17 + $0x360] sm:$0xf]
        %v7880 = vld [vmem:[#allocation17 + $0x364] sm:$0xf]
        %v7881 = vld [vmem:[#allocation17 + $0x368] sm:$0xf]
        %v7882 = vld [vmem:[#allocation17 + $0x36c] sm:$0xf]
        %v7883 = vld [vmem:[#allocation17 + $0x370] sm:$0xf]
        %v7884 = vld [vmem:[#allocation17 + $0x374] sm:$0xf]
        %v7885 = vld [vmem:[#allocation17 + $0x378] sm:$0xf]
        %v7886 = vld [vmem:[#allocation17 + $0x37c] sm:$0xf]
        %v7887 = vld [vmem:[#allocation17 + $0x380] sm:$0xf]
        %v7888 = vld [vmem:[#allocation17 + $0x384] sm:$0xf]
        %v7889 = vld [vmem:[#allocation17 + $0x388] sm:$0xf]
        %v7890 = vld [vmem:[#allocation17 + $0x38c] sm:$0xf]
        %v7891 = vld [vmem:[#allocation17 + $0x390] sm:$0xf]
        %v7892 = vld [vmem:[#allocation17 + $0x394] sm:$0xf]
        %v7893 = vld [vmem:[#allocation17 + $0x398] sm:$0xf]
        %v7894 = vld [vmem:[#allocation17 + $0x39c] sm:$0xf]
        %v7895 = vld [vmem:[#allocation17 + $0x3a0] sm:$0xf]
        %v7896 = vld [vmem:[#allocation17 + $0x3a4] sm:$0xf]
        %v7897 = vld [vmem:[#allocation17 + $0x3a8] sm:$0xf]
        %v7898 = vld [vmem:[#allocation17 + $0x3ac] sm:$0xf]
        %v7899 = vld [vmem:[#allocation17 + $0x3b0] sm:$0xf]
        %v7900 = vld [vmem:[#allocation17 + $0x3b4] sm:$0xf]
        %v7901 = vld [vmem:[#allocation17 + $0x3b8] sm:$0xf]
        %v7902 = vld [vmem:[#allocation17 + $0x3bc] sm:$0xf]
        %v7903 = vld [vmem:[#allocation17 + $0x3c0] sm:$0xf]
        %v7904 = vld [vmem:[#allocation17 + $0x3c4] sm:$0xf]
        %v7905 = vld [vmem:[#allocation17 + $0x3c8] sm:$0xf]
        %v7906 = vld [vmem:[#allocation17 + $0x3cc] sm:$0xf]
        %v7907 = vld [vmem:[#allocation17 + $0x3d0] sm:$0xf]
        %v7908 = vld [vmem:[#allocation17 + $0x3d4] sm:$0xf]
        %v7909 = vld [vmem:[#allocation17 + $0x3d8] sm:$0xf]
        %v7910 = vld [vmem:[#allocation17 + $0x3dc] sm:$0xf]
        %v7911 = vld [vmem:[#allocation17 + $0x3e0] sm:$0xf]
        %v7912 = vld [vmem:[#allocation17 + $0x3e4] sm:$0xf]
        %v7913 = vld [vmem:[#allocation17 + $0x3e8] sm:$0xf]
        %v7914 = vld [vmem:[#allocation17 + $0x3ec] sm:$0xf]
        %v7915 = vld [vmem:[#allocation17 + $0x3f0] sm:$0xf]
        %v7916 = vld [vmem:[#allocation17 + $0x3f4] sm:$0xf]
        %v7917 = vld [vmem:[#allocation17 + $0x3f8] sm:$0xf]
        %v7918 = vld [vmem:[#allocation17 + $0x3fc] sm:$0xf]
        %v7919 = vrot.slane %v7031, 1
        %v7920 = vrot.slane %v7034, 1
        %v7921 = vrot.slane %v7037, 1
        %v7922 = vrot.slane %v7040, 1
        %v7991 = vunpack.c.l.b16 %v7855
        %v7992 = vunpack.c.l.b16 %v7856
        %v7993 = vunpack.c.l.b16 %v7857
        %v7994 = vunpack.c.l.b16 %v7858
        %v7995 = vunpack.c.l.b16 %v7859
        %v7996 = vunpack.c.l.b16 %v7860
        %v7997 = vunpack.c.l.b16 %v7861
        %v7998 = vunpack.c.l.b16 %v7862
        %v7999 = vunpack.c.l.b16 %v7863
        %v8000 = vunpack.c.l.b16 %v7864
        %v8001 = vunpack.c.l.b16 %v7865
        %v8002 = vunpack.c.l.b16 %v7866
        %v8003 = vunpack.c.l.b16 %v7867
        %v8004 = vunpack.c.l.b16 %v7868
        %v8005 = vunpack.c.l.b16 %v7869
        %v8006 = vunpack.c.l.b16 %v7870
        %v8007 = vunpack.c.l.b16 %v7871
        %v8008 = vunpack.c.l.b16 %v7872
        %v8009 = vunpack.c.l.b16 %v7873
        %v8010 = vunpack.c.l.b16 %v7874
        %v8011 = vunpack.c.l.b16 %v7875
        %v8012 = vunpack.c.l.b16 %v7876
        %v8013 = vunpack.c.l.b16 %v7877
        %v8014 = vunpack.c.l.b16 %v7878
        %v8015 = vunpack.c.l.b16 %v7879
        %v8016 = vunpack.c.l.b16 %v7880
        %v8017 = vunpack.c.l.b16 %v7881
        %v8018 = vunpack.c.l.b16 %v7882
        %v8019 = vunpack.c.l.b16 %v7883
        %v8020 = vunpack.c.l.b16 %v7884
        %v8021 = vunpack.c.l.b16 %v7885
        %v8022 = vunpack.c.l.b16 %v7886
        %v8023 = vunpack.c.l.b16 %v7887
        %v8024 = vunpack.c.l.b16 %v7888
        %v8025 = vunpack.c.l.b16 %v7889
        %v8026 = vunpack.c.l.b16 %v7890
        %v8027 = vunpack.c.l.b16 %v7891
        %v8028 = vunpack.c.l.b16 %v7892
        %v8029 = vunpack.c.l.b16 %v7893
        %v8030 = vunpack.c.l.b16 %v7894
        %v8031 = vunpack.c.l.b16 %v7895
        %v8032 = vunpack.c.l.b16 %v7896
        %v8033 = vunpack.c.l.b16 %v7897
        %v8034 = vunpack.c.l.b16 %v7898
        %v8035 = vunpack.c.l.b16 %v7899
        %v8036 = vunpack.c.l.b16 %v7900
        %v8037 = vunpack.c.l.b16 %v7901
        %v8038 = vunpack.c.l.b16 %v7902
        %v8039 = vunpack.c.l.b16 %v7903
        %v8040 = vunpack.c.l.b16 %v7904
        %v8041 = vunpack.c.l.b16 %v7905
        %v8042 = vunpack.c.l.b16 %v7906
        %v8043 = vunpack.c.l.b16 %v7907
        %v8044 = vunpack.c.l.b16 %v7908
        %v8045 = vunpack.c.l.b16 %v7909
        %v8046 = vunpack.c.l.b16 %v7910
        %v8047 = vunpack.c.l.b16 %v7911
        %v8048 = vunpack.c.l.b16 %v7912
        %v8049 = vunpack.c.l.b16 %v7913
        %v8050 = vunpack.c.l.b16 %v7914
        %v8051 = vunpack.c.l.b16 %v7915
        %v8052 = vunpack.c.l.b16 %v7916
        %v8053 = vunpack.c.l.b16 %v7917
        %v8054 = vunpack.c.l.b16 %v7918
        %v8055 = vpack.c.b16 %v7992, %v7991
        %v8056 = vpack.c.b16 %v7994, %v7993
        %v8057 = vpack.c.b16 %v7996, %v7995
        %v8058 = vpack.c.b16 %v7998, %v7997
        %v8059 = vpack.c.b16 %v8000, %v7999
        %v8060 = vpack.c.b16 %v8002, %v8001
        %v8061 = vpack.c.b16 %v8004, %v8003
        %v8062 = vpack.c.b16 %v8006, %v8005
        %v8063 = vpack.c.b16 %v8008, %v8007
        %v8064 = vpack.c.b16 %v8010, %v8009
        %v8065 = vpack.c.b16 %v8012, %v8011
        %v8066 = vpack.c.b16 %v8014, %v8013
        %v8067 = vpack.c.b16 %v8016, %v8015
        %v8068 = vpack.c.b16 %v8018, %v8017
        %v8069 = vpack.c.b16 %v8020, %v8019
        %v8070 = vpack.c.b16 %v8022, %v8021
        %v8071 = vpack.c.b16 %v8024, %v8023
        %v8072 = vpack.c.b16 %v8026, %v8025
        %v8073 = vpack.c.b16 %v8028, %v8027
        %v8074 = vpack.c.b16 %v8030, %v8029
        %v8075 = vpack.c.b16 %v8032, %v8031
        %v8076 = vpack.c.b16 %v8034, %v8033
        %v8077 = vpack.c.b16 %v8036, %v8035
        %v8078 = vpack.c.b16 %v8038, %v8037
        %v8079 = vpack.c.b16 %v8040, %v8039
        %v8080 = vpack.c.b16 %v8042, %v8041
        %v8081 = vpack.c.b16 %v8044, %v8043
        %v8082 = vpack.c.b16 %v8046, %v8045
        %v8083 = vpack.c.b16 %v8048, %v8047
        %v8084 = vpack.c.b16 %v8050, %v8049
        %v8085 = vpack.c.b16 %v8052, %v8051
        %v8086 = vpack.c.b16 %v8054, %v8053
        %8119 = vmatpush.bf16.msra.mxu0 %v8062
        %8120 = vmatpush.bf16.msra.mxu0 %v8061
        %8121 = vmatpush.bf16.msra.mxu0 %v8060
        %8122 = vmatpush.bf16.msra.mxu0 %v8059
        %8123 = vmatpush.bf16.msra.mxu0 %v8058
        %8124 = vmatpush.bf16.msra.mxu0 %v8057
        %8125 = vmatpush.bf16.msra.mxu0 %v8056
        %8126 = vmatpush.bf16.msra.mxu0 %v8055
        %8127 = vmatmul.bf16.gmra.mxu0 %v7919
        %v8128 = vpop.f32.mrf.mxu0
        %v8129 = vadd.f32 0.0, %v8128
        %v8130 = vpop.f32.mrf.mxu0
        %8131 = vdwg.mxu0
        %8132 = vmatpush.bf16.msra.mxu0 %v8070
        %8133 = vmatpush.bf16.msra.mxu0 %v8069
        %8134 = vmatpush.bf16.msra.mxu0 %v8068
        %8135 = vmatpush.bf16.msra.mxu0 %v8067
        %8136 = vmatpush.bf16.msra.mxu0 %v8066
        %8137 = vmatpush.bf16.msra.mxu0 %v8065
        %8138 = vmatpush.bf16.msra.mxu0 %v8064
        %8139 = vmatpush.bf16.msra.mxu0 %v8063
        %8140 = vmatmul.bf16.gmra.mxu0 %v7920
        %v8141 = vpop.f32.mrf.mxu0
        %v8142 = vadd.f32 %v8129, %v8141
        %v8143 = vpop.f32.mrf.mxu0
        %8144 = vdwg.mxu0
        %8145 = vmatpush.bf16.msra.mxu0 %v8078
        %8146 = vmatpush.bf16.msra.mxu0 %v8077
        %8147 = vmatpush.bf16.msra.mxu0 %v8076
        %8148 = vmatpush.bf16.msra.mxu0 %v8075
        %8149 = vmatpush.bf16.msra.mxu0 %v8074
        %8150 = vmatpush.bf16.msra.mxu0 %v8073
        %8151 = vmatpush.bf16.msra.mxu0 %v8072
        %8152 = vmatpush.bf16.msra.mxu0 %v8071
        %8153 = vmatmul.bf16.gmra.mxu0 %v7921
        %v8154 = vpop.f32.mrf.mxu0
        %v8155 = vadd.f32 %v8142, %v8154
        %v8156 = vpop.f32.mrf.mxu0
        %8157 = vdwg.mxu0
        %8158 = vmatpush.bf16.msra.mxu0 %v8086
        %8159 = vmatpush.bf16.msra.mxu0 %v8085
        %8160 = vmatpush.bf16.msra.mxu0 %v8084
        %8161 = vmatpush.bf16.msra.mxu0 %v8083
        %8162 = vmatpush.bf16.msra.mxu0 %v8082
        %8163 = vmatpush.bf16.msra.mxu0 %v8081
        %8164 = vmatpush.bf16.msra.mxu0 %v8080
        %8165 = vmatpush.bf16.msra.mxu0 %v8079
        %8166 = vmatmul.bf16.gmra.mxu0 %v7922
        %v8167 = vpop.f32.mrf.mxu0
        %v8168 = vadd.f32 %v8155, %v8167
        %v8169 = vpop.f32.mrf.mxu0
        %8170 = vdwg.mxu0
        %v8171 = vadd.f32 %v7854, %v8168
        %v8172 = vld [vmem:[#allocation19] sm:$0x1]
        %v8173 = vadd.f32 %v8171, %v8172
        %v8174 = vmax.f32 %v8173, 0.0
        %v8175 = vpack.c.bf16 %v8174, %v8174
        %v8176 = vld [vmem:[#allocation20] sm:$0xf]
        %v8177 = vld [vmem:[#allocation20 + $0x4] sm:$0xf]
        %v8178 = vld [vmem:[#allocation20 + $0x8] sm:$0xf]
        %v8179 = vld [vmem:[#allocation20 + $0xc] sm:$0xf]
        %v8180 = vld [vmem:[#allocation20 + $0x10] sm:$0xf]
        %v8181 = vld [vmem:[#allocation20 + $0x14] sm:$0xf]
        %v8182 = vld [vmem:[#allocation20 + $0x18] sm:$0xf]
        %v8183 = vld [vmem:[#allocation20 + $0x1c] sm:$0xf]
        %v8184 = vld [vmem:[#allocation20 + $0x20] sm:$0xf]
        %v8185 = vld [vmem:[#allocation20 + $0x24] sm:$0xf]
        %v8186 = vld [vmem:[#allocation20 + $0x28] sm:$0xf]
        %v8187 = vld [vmem:[#allocation20 + $0x2c] sm:$0xf]
        %v8188 = vld [vmem:[#allocation20 + $0x30] sm:$0xf]
        %v8189 = vld [vmem:[#allocation20 + $0x34] sm:$0xf]
        %v8190 = vld [vmem:[#allocation20 + $0x38] sm:$0xf]
        %v8191 = vld [vmem:[#allocation20 + $0x3c] sm:$0xf]
        %v8192 = vld [vmem:[#allocation22] sm:$0x1]
        %v8209 = vunpack.c.l.b16 %v8176
        %v8210 = vunpack.c.l.b16 %v8177
        %v8211 = vunpack.c.l.b16 %v8178
        %v8212 = vunpack.c.l.b16 %v8179
        %v8213 = vunpack.c.l.b16 %v8180
        %v8214 = vunpack.c.l.b16 %v8181
        %v8215 = vunpack.c.l.b16 %v8182
        %v8216 = vunpack.c.l.b16 %v8183
        %v8217 = vunpack.c.l.b16 %v8184
        %v8218 = vunpack.c.l.b16 %v8185
        %v8219 = vunpack.c.l.b16 %v8186
        %v8220 = vunpack.c.l.b16 %v8187
        %v8221 = vunpack.c.l.b16 %v8188
        %v8222 = vunpack.c.l.b16 %v8189
        %v8223 = vunpack.c.l.b16 %v8190
        %v8224 = vunpack.c.l.b16 %v8191
        %v8225 = vpack.c.b16 %v8210, %v8209
        %v8226 = vpack.c.b16 %v8212, %v8211
        %v8227 = vpack.c.b16 %v8214, %v8213
        %v8228 = vpack.c.b16 %v8216, %v8215
        %v8229 = vpack.c.b16 %v8218, %v8217
        %v8230 = vpack.c.b16 %v8220, %v8219
        %v8231 = vpack.c.b16 %v8222, %v8221
        %v8232 = vpack.c.b16 %v8224, %v8223
        %8241 = vmatpush.bf16.msra.mxu0 %v8232
        %8242 = vmatpush.bf16.msra.mxu0 %v8231
        %8243 = vmatpush.bf16.msra.mxu0 %v8230
        %8244 = vmatpush.bf16.msra.mxu0 %v8229
        %8245 = vmatpush.bf16.msra.mxu0 %v8228
        %8246 = vmatpush.bf16.msra.mxu0 %v8227
        %8247 = vmatpush.bf16.msra.mxu0 %v8226
        %8248 = vmatpush.bf16.msra.mxu0 %v8225
        %8249 = vmatmul.bf16.gmra.mxu0 %v8175
        %v8250 = vpop.f32.mrf.mxu0
        %v8251 = vadd.f32 %v8192, %v8250
        %v8252 = vpop.f32.mrf.mxu0
        %8253 = vdwg.mxu0
        %8254 = vst [vmem:[%s664] sm:$0x1] %v8251
        %s8255 = sand.u32 %s342, 1
        %s8256 = scalar_lea.sflag [#allocation4], %s8255
        %s8257 = sand.u32 %s342, 1
        %s8258 = scalar_lea.vmem [#allocation23], %s8257
        // Predicated region
        $region129: #{tpu_custom_call.1} parent=75 // pred_check
          %p8259 = pneg %p352
        $region130: #{tpu_custom_call.1} parent=75 // pred_check_branch
          %8261 = sbr.rel (%p8259) target = $region132
        $region131: #{tpu_custom_call.1} parent=75 // pred_region
          %8263 = vsyncadd %s8256, 0
          %s8264 = scalar_lea.hbm %s14, %s35
          %s8266 = sshll.u32 %s8258, 4
          %s8267 = int_to_ptr.vmem [resolvable:$true] %s8266
          %s8268 = sshll.u32 %s8264, 4
          %s8269 = int_to_ptr.hbm [resolvable:$true] %s8268
          %8271 = dma.vmem_to_hbm [thread:$0]  %s8267, 16, %s8269, %s8256
        $region132: #{tpu_custom_call.1} parent=75 // pred_fallthru
          _
      $region76: #{tpu_custom_call.1} parent=5 // pred_fallthru
        _
      %p8272 = scmp.le.s32.totalorder 2, %s30
      // Predicated region
      $region133: #{tpu_custom_call.1} parent=5 // pred_check
        %p8273 = pneg %p8272
      $region134: #{tpu_custom_call.1} parent=5 // pred_check_branch
        %8275 = sbr.rel (%p8273) target = $region136
      $region135: #{tpu_custom_call.1} parent=5 // pred_region
        %s8276 = ssub.s32 %s30, 2
        // Predicated region
        $region137: #{tpu_custom_call.1} parent=135 // pred_check
          %p8277 = pneg %p358
        $region138: #{tpu_custom_call.1} parent=135 // pred_check_branch
          %8279 = sbr.rel (%p8277) target = $region140
        $region139: #{tpu_custom_call.1} parent=135 // pred_region
          %s8280 = sand.u32 %s343, 1
          %s8281 = scalar_lea.sflag [#allocation4], %s8280
          %s8282 = sand.u32 %s343, 1
          %s8283 = scalar_lea.vmem [#allocation23], %s8282
          %8285 = dma.done %s8281, 16
        $region140: #{tpu_custom_call.1} parent=135 // pred_fallthru
          _
      $region136: #{tpu_custom_call.1} parent=5 // pred_fallthru
        _
    $region6: #{tpu_custom_call.1} parent=1 // loop_footer
      %s34 = sadd.s32 1, %s30
    $region7: #{tpu_custom_call.1} parent=1 // loop_footer_branch
      %29 = sbr.rel target = $region3
    $region8: #{tpu_custom_call.1} parent=1 // loop_exit
      _
    %8286 = vsyncpa [#allocation3], 1
    %s8287 = scalar_lea.sflag [#allocation3], 1
    %8288 = vsyncpa %s8287, 1
    %8289 = vsyncpa [#allocation6], 1
    %8290 = vsyncpa [#allocation9], 1
    %8291 = vsyncpa [#allocation12], 1
    %8292 = vsyncpa [#allocation15], 1
    %8293 = vsyncpa [#allocation18], 1
    %8294 = vsyncpa [#allocation21], 1
    %8295 = vsyncpa [#allocation4], 1
    %s8296 = scalar_lea.sflag [#allocation4], 1
    %8297 = vsyncpa %s8296, 1

</llo_original>
